<compile_context>
chip_gen: v7x
topology: tpu7x:2x2x1
jax: 0.10.0
libtpu: 0.0.40
codegen_flags: <defaults>
</compile_context>

<pallas_src>
import jax
import jax.numpy as jnp
import numpy as np
from jax.experimental import pallas as pl
from jax.experimental.pallas import tpu as pltpu


# ----------------------------- fused stage kernel ---------------------------

def _full_spec(shape):
    ndim = len(shape)
    return pl.BlockSpec(shape, lambda i, _n=ndim: (0,) * _n)


def _make_stage_kernel(n_groups, n_pieces, num_res, skip_flags):
    """One refinement stage, fully fused.

    Input-ref order (must match the wrapper's arg assembly):
      verts, adj,
      [vert_feats]                        (iff n_pieces == 3)
      for each group: S, F_slab, Wb_rows
      bottleneck bias,
      res gconv 0:  w0 pieces (n_pieces), b0, w1 pieces (n_pieces), b1,
                    gc2 (w0, b0, w1, b1),
                    skip w pieces (n_pieces), skip b
      res gconv i>0: gc1 (w0, b0, w1, b1), gc2 (w0, b0, w1, b1), [skip w, b]
      final gconv:  w0, b0, w1, b1
    Outputs: verts_out (V,3), vert_feats_out (V,hidden)
    """
    assert num_res >= 1 and skip_flags[0]

    def kernel(*refs):
        verts_out_ref, vf_out_ref = refs[-2], refs[-1]
        it = iter(refs[:-2])

        def nxt():
            return next(it)[...]

        def dot(a, b):
            return jnp.dot(a, b, preferred_element_type=jnp.float32)

        verts = nxt()
        adj = nxt()

        pieces = []
        if n_pieces == 3:
            pieces.append(nxt())          # vert_feats from previous stage

        # vert_align (sampling matmul) fused with the bottleneck linear.
        img_pre = None
        for _ in range(n_groups):
            s = nxt(); f = nxt(); wb = nxt()
            contrib = dot(dot(s, f), wb)
            img_pre = contrib if img_pre is None else img_pre + contrib
        bb = nxt()
        img = jnp.maximum(img_pre + bb, 0.0)
        pieces.append(img)
        pieces.append(verts)              # x = [vert_feats? | img | verts]

        def graph_conv(xps, w0s, b0, w1s, b1):
            h0 = b0
            h1 = b1
            for xp, w0p, w1p in zip(xps, w0s, w1s):
                h0 = h0 + dot(xp, w0p)
                h1 = h1 + dot(xp, w1p)
            return h0 + dot(adj, h1)

        x = None
        for i in range(num_res):
            if i == 0:
                # relu distributes over the column pieces; the inplace relu in
                # PyTorch means the skip path also sees relu(x).
                xr = [jnp.maximum(p, 0.0) for p in pieces]
                w0s = [nxt() for _ in range(n_pieces)]; b0 = nxt()
                w1s = [nxt() for _ in range(n_pieces)]; b1 = nxt()
                h1 = graph_conv(xr, w0s, b0, w1s, b1)
                g2w0 = nxt(); g2b0 = nxt(); g2w1 = nxt(); g2b1 = nxt()
                h2 = graph_conv([jnp.maximum(h1, 0.0)], [g2w0], g2b0,
                                [g2w1], g2b1)
                wss = [nxt() for _ in range(n_pieces)]; bs = nxt()
                skip = bs
                for xp, wsp in zip(xr, wss):
                    skip = skip + dot(xp, wsp)
                x = h2 + skip
            else:
                xr = jnp.maximum(x, 0.0)
                w0 = nxt(); b0 = nxt(); w1 = nxt(); b1 = nxt()
                h1 = graph_conv([xr], [w0], b0, [w1], b1)
                g2w0 = nxt(); g2b0 = nxt(); g2w1 = nxt(); g2b1 = nxt()
                h2 = graph_conv([jnp.maximum(h1, 0.0)], [g2w0], g2b0,
                                [g2w1], g2b1)
                if skip_flags[i]:
                    ws = nxt(); bs = nxt()
                    skip = dot(xr, ws) + bs
                else:
                    skip = xr
                x = h2 + skip

        fw0 = nxt(); fb0 = nxt(); fw1 = nxt(); fb1 = nxt()
        deform = jnp.tanh(graph_conv([x], [fw0], fb0, [fw1], fb1))
        verts_out_ref[...] = (verts + deform).astype(verts_out_ref.dtype)
        vf_out_ref[...] = x.astype(vf_out_ref.dtype)

    return kernel


def stage_forward(groups, verts, adj, vert_feats, sp):
    """Run one refinement stage as a single fused pallas_call.

    groups: list of (S, F_slab, Wb_rows) per distinct spatial size.
    """
    V = verts.shape[0]
    hidden = sp["bottleneck"][0].shape[1]
    has_vf = vert_feats is not None
    piece_dims = ([vert_feats.shape[1]] if has_vf else []) + [hidden, 3]
    n_pieces = len(piece_dims)
    bounds = [0]
    for d in piece_dims:
        bounds.append(bounds[-1] + d)

    def split_rows(w):
        assert w.shape[0] == bounds[-1]
        return [w[bounds[k]:bounds[k + 1], :] for k in range(n_pieces)]

    args = [verts, adj]
    if has_vf:
        args.append(vert_feats)
    for (S, F_slab, wb) in groups:
        args.extend([S, F_slab, wb])
    args.append(sp["bottleneck"][1])

    skip_flags = []
    res_list = sp["res_gconvs"]
    for i, rp in enumerate(res_list):
        w0, b0, w1, b1 = rp["gc1"]
        if i == 0:
            args.extend(split_rows(w0)); args.append(b0)
            args.extend(split_rows(w1)); args.append(b1)
        else:
            args.extend([w0, b0, w1, b1])
        args.extend(list(rp["gc2"]))
        has_skip = rp["skip"] is not None
        skip_flags.append(has_skip)
        if has_skip:
            ws, bs = rp["skip"]
            if i == 0:
                args.extend(split_rows(ws)); args.append(bs)
            else:
                args.extend([ws, bs])
    args.extend(list(sp["gconv"]))
    assert skip_flags[0], "first ResGraphConv must have a skip projection"

    kernel = _make_stage_kernel(len(groups), n_pieces, len(res_list),
                                tuple(skip_flags))

    out_shape = (jax.ShapeDtypeStruct((V, 3), jnp.float32),
                 jax.ShapeDtypeStruct((V, hidden), jnp.float32))
    return pl.pallas_call(
        kernel,
        out_shape=out_shape,
        grid=(1,),
        in_specs=[_full_spec(a.shape) for a in args],
        out_specs=(_full_spec((V, 3)), _full_spec((V, hidden))),
        compiler_params=pltpu.CompilerParams(
            dimension_semantics=("arbitrary",)),
    )(*args)


# ------------------------------- glue (JAX) --------------------------------

def build_sampling_matrix(verts, H, W):
    """Bilinear grid_sample weights (align_corners=True, padding_mode='border')."""
    gx, gy = verts[:, 0], verts[:, 1]
    ix = jnp.clip((gx + 1.0) * 0.5 * (W - 1), 0.0, float(W - 1))
    iy = jnp.clip((gy + 1.0) * 0.5 * (H - 1), 0.0, float(H - 1))
    x0 = jnp.floor(ix)
    y0 = jnp.floor(iy)
    wx = ix - x0
    wy = iy - y0
    x0i = x0.astype(jnp.int32)
    y0i = y0.astype(jnp.int32)
    x1i = jnp.minimum(x0i + 1, W - 1)
    y1i = jnp.minimum(y0i + 1, H - 1)
    V = verts.shape[0]
    rows = jnp.arange(V)
    S = jnp.zeros((V, H * W), jnp.float32)
    S = S.at[rows, y0i * W + x0i].add((1 - wx) * (1 - wy))
    S = S.at[rows, y0i * W + x1i].add(wx * (1 - wy))
    S = S.at[rows, y1i * W + x0i].add((1 - wx) * wy)
    S = S.at[rows, y1i * W + x1i].add(wx * wy)
    return S


def build_adjacency(edges, V):
    # undirected gather_scatter: neighbor_sums[i] += h[j], neighbor_sums[j] += h[i]
    A = jnp.zeros((V, V), jnp.float32)
    A = A.at[edges[:, 0], edges[:, 1]].add(1.0)
    A = A.at[edges[:, 1], edges[:, 0]].add(1.0)
    return A


def mesh_head_forward(feats, verts, edges, params):
    # TODO(synk): mesh.isempty() / Meshes container not modeled; mesh == (verts, fixed edges).
    V = verts.shape[0]
    adj = build_adjacency(edges, V)

    # Channel-major (H*W, C) slabs, grouped by spatial size so each distinct
    # (H, W) gets exactly one sampling matrix per stage.
    group_defs = {}
    c0 = 0
    for f in feats:
        _, C, H, W = f.shape
        slab = f[0].reshape(C, H * W).T
        group_defs.setdefault((H, W), []).append((slab, c0, C))
        c0 += C
    group_meta = []
    for (H, W), items in group_defs.items():
        F_slab = jnp.concatenate([s for (s, _, _) in items], axis=1)
        ch = [(cs, C) for (_, cs, C) in items]
        group_meta.append((H, W, F_slab, ch))

    meshes, vert_feats = [], None
    for sp in params["stages"]:
        wb_full = sp["bottleneck"][0]
        groups = []
        for (H, W, F_slab, ch) in group_meta:
            S = build_sampling_matrix(verts, H, W)        # once per spatial size
            wb = jnp.concatenate([wb_full[cs:cs + C, :] for (cs, C) in ch],
                                 axis=0)
            groups.append((S, F_slab, wb))
        verts, vert_feats = stage_forward(groups, verts, adj, vert_feats, sp)
        meshes.append(verts)
    return meshes


# --------------------------- parameter construction ------------------------

def init_linear_params(key, din, dout):
    kw, kb = jax.random.split(key)
    w = 0.05 * jax.random.normal(kw, (din, dout), jnp.float32)   # stored as weight.T
    b = 0.01 * jax.random.normal(kb, (1, dout), jnp.float32)
    return w, b


def init_graph_conv(key, din, dout):
    k0, k1 = jax.random.split(key)
    w0, b0 = init_linear_params(k0, din, dout)
    w1, b1 = init_linear_params(k1, din, dout)
    return (w0, b0, w1, b1)


def init_params(key, input_channels, hidden_dim, num_stages, num_res_gconvs):
    stages = []
    for s in range(num_stages):
        key, kb, kg = jax.random.split(key, 3)
        vert_feat_dim = 0 if s == 0 else hidden_dim
        stage = {"bottleneck": init_linear_params(kb, sum(input_channels), hidden_dim)}
        rgs = []
        for i in range(num_res_gconvs):
            key, k1, k2, k3 = jax.random.split(key, 4)
            din = hidden_dim + vert_feat_dim + 3 if i == 0 else hidden_dim
            rgs.append({
                "gc1": init_graph_conv(k1, din, hidden_dim),
                "gc2": init_graph_conv(k2, hidden_dim, hidden_dim),
                "skip": (init_linear_params(k3, din, hidden_dim)
                         if din != hidden_dim else None),
            })
        stage["res_gconvs"] = rgs
        stage["gconv"] = init_graph_conv(kg, hidden_dim, 3)
        stages.append(stage)
    return {"stages": stages}


# ----------------------------- pure-JAX reference --------------------------

def ref_forward(feats, verts, edges, params):
    HIGH = jax.lax.Precision.HIGHEST

    def lin(x, wb):
        return jnp.dot(x, wb[0], precision=HIGH) + wb[1]

    def gc(x, adj, p):
        w0, b0, w1, b1 = p
        h0 = jnp.dot(x, w0, precision=HIGH) + b0
        h1 = jnp.dot(x, w1, precision=HIGH) + b1
        return h0 + jnp.dot(adj, h1, precision=HIGH)

    def va(f, v):
        _, C, H, W = f.shape
        S = build_sampling_matrix(v, H, W)
        return jnp.dot(S, f[0].reshape(C, H * W).T, precision=HIGH)

    adj = build_adjacency(edges, verts.shape[0])
    meshes, vert_feats = [], None
    for sp in params["stages"]:
        img = jnp.concatenate([va(f, verts) for f in feats], axis=1)
        img = jnp.maximum(lin(img, sp["bottleneck"]), 0.0)
        vf = (jnp.concatenate([img, verts], axis=1) if vert_feats is None
              else jnp.concatenate([vert_feats, img, verts], axis=1))
        for rp in sp["res_gconvs"]:
            xr = jnp.maximum(vf, 0.0)
            h1 = gc(xr, adj, rp["gc1"])
            h2 = gc(jnp.maximum(h1, 0.0), adj, rp["gc2"])
            skip = xr if rp["skip"] is None else lin(xr, rp["skip"])
            vf = h2 + skip
        verts = verts + jnp.tanh(gc(vf, adj, sp["gconv"]))
        vert_feats = vf
        meshes.append(verts)
    return meshes


# ----------------------------------- main -----------------------------------

if __name__ == "__main__":
    key = jax.random.PRNGKey(0)
    V, E, H, W = 64, 96, 16, 16
    input_channels = [4, 4, 4, 4]          # conv2_3, conv3_4, conv4_6, conv5_3
    hidden_dim, num_stages, num_res = 32, 2, 2

    k_feat, k_v, k_e1, k_e2, k_p = jax.random.split(key, 5)
    feat_keys = jax.random.split(k_feat, 4)
    feats = [jax.random.normal(fk, (1, c, H, W), jnp.float32)   # NCHW, N=1
             for fk, c in zip(feat_keys, input_channels)]
    verts = jax.random.uniform(k_v, (V, 3), jnp.float32, minval=-1.0, maxval=1.0)
    e0 = jax.random.randint(k_e1, (E,), 0, V, dtype=jnp.int32)
    e1 = jax.random.randint(k_e2, (E,), 0, V, dtype=jnp.int32)
    e1 = jnp.where(e1 == e0, (e1 + 1) % V, e1)
    edges = jnp.stack([e0, e1], axis=1)

    params = init_params(k_p, input_channels, hidden_dim, num_stages, num_res)

    fwd = jax.jit(mesh_head_forward)
    meshes = fwd(feats, verts, edges, params)
    jax.block_until_ready(meshes[-1])

    refs = ref_forward(feats, verts, edges, params)
    for got, want in zip(meshes, refs):
        np.testing.assert_allclose(np.asarray(got), np.asarray(want),
                                   atol=1e-2, rtol=1e-2)
    print("KERNEL_OK")
</pallas_src>

<mosaic_0001>
module attributes {stable_mosaic.version = 11 : i64} {
  func.func private @main(%arg0: i32) attributes {dimension_semantics = [#tpu.dimension_semantics<core_parallel>], iteration_bounds = array<i64: 2>, tpu.core_type = #tpu.core_type<sc_scalar_subcore>, window_params = []} {
    return
  }
}

module attributes {stable_mosaic.version = 11 : i64} {
  func.func private @main(%arg0: i32) attributes {dimension_semantics = [#tpu.dimension_semantics<core_parallel>], iteration_bounds = array<i64: 2>, tpu.core_type = #tpu.core_type<sc_scalar_subcore>, window_params = []} {
    return
  }
}

module attributes {stable_mosaic.version = 11 : i64} {
  func.func @kernel(%arg0: i32, %arg1: memref<64x3xf32, #tpu.memory_space<vmem>>, %arg2: memref<64x64xf32, #tpu.memory_space<vmem>>, %arg3: memref<64x256xf32, #tpu.memory_space<vmem>>, %arg4: memref<256x16xf32, #tpu.memory_space<vmem>>, %arg5: memref<16x32xf32, #tpu.memory_space<vmem>>, %arg6: memref<1x32xf32, #tpu.memory_space<vmem>>, %arg7: memref<32x32xf32, #tpu.memory_space<vmem>>, %arg8: memref<3x32xf32, #tpu.memory_space<vmem>>, %arg9: memref<1x32xf32, #tpu.memory_space<vmem>>, %arg10: memref<32x32xf32, #tpu.memory_space<vmem>>, %arg11: memref<3x32xf32, #tpu.memory_space<vmem>>, %arg12: memref<1x32xf32, #tpu.memory_space<vmem>>, %arg13: memref<32x32xf32, #tpu.memory_space<vmem>>, %arg14: memref<1x32xf32, #tpu.memory_space<vmem>>, %arg15: memref<32x32xf32, #tpu.memory_space<vmem>>, %arg16: memref<1x32xf32, #tpu.memory_space<vmem>>, %arg17: memref<32x32xf32, #tpu.memory_space<vmem>>, %arg18: memref<3x32xf32, #tpu.memory_space<vmem>>, %arg19: memref<1x32xf32, #tpu.memory_space<vmem>>, %arg20: memref<32x32xf32, #tpu.memory_space<vmem>>, %arg21: memref<1x32xf32, #tpu.memory_space<vmem>>, %arg22: memref<32x32xf32, #tpu.memory_space<vmem>>, %arg23: memref<1x32xf32, #tpu.memory_space<vmem>>, %arg24: memref<32x32xf32, #tpu.memory_space<vmem>>, %arg25: memref<1x32xf32, #tpu.memory_space<vmem>>, %arg26: memref<32x32xf32, #tpu.memory_space<vmem>>, %arg27: memref<1x32xf32, #tpu.memory_space<vmem>>, %arg28: memref<32x3xf32, #tpu.memory_space<vmem>>, %arg29: memref<1x3xf32, #tpu.memory_space<vmem>>, %arg30: memref<32x3xf32, #tpu.memory_space<vmem>>, %arg31: memref<1x3xf32, #tpu.memory_space<vmem>>, %arg32: memref<64x3xf32, #tpu.memory_space<vmem>>, %arg33: memref<64x32xf32, #tpu.memory_space<vmem>>) attributes {dimension_semantics = [#tpu.dimension_semantics<arbitrary>], iteration_bounds = array<i64: 1>, scalar_prefetch = 0 : i64, scratch_operands = 0 : i64, tpu.core_type = #tpu.core_type<tc>, window_params = [{pipeline_mode = #tpu.pipeline_mode<synchronous>, transform_indices = @transform_0, window_bounds = array<i64: 64, 3>}, {pipeline_mode = #tpu.pipeline_mode<synchronous>, transform_indices = @transform_1, window_bounds = array<i64: 64, 64>}, {pipeline_mode = #tpu.pipeline_mode<synchronous>, transform_indices = @transform_2, window_bounds = array<i64: 64, 256>}, {pipeline_mode = #tpu.pipeline_mode<synchronous>, transform_indices = @transform_3, window_bounds = array<i64: 256, 16>}, {pipeline_mode = #tpu.pipeline_mode<synchronous>, transform_indices = @transform_4, window_bounds = array<i64: 16, 32>}, {pipeline_mode = #tpu.pipeline_mode<synchronous>, transform_indices = @transform_5, window_bounds = array<i64: 1, 32>}, {pipeline_mode = #tpu.pipeline_mode<synchronous>, transform_indices = @transform_6, window_bounds = array<i64: 32, 32>}, {pipeline_mode = #tpu.pipeline_mode<synchronous>, transform_indices = @transform_7, window_bounds = array<i64: 3, 32>}, {pipeline_mode = #tpu.pipeline_mode<synchronous>, transform_indices = @transform_8, window_bounds = array<i64: 1, 32>}, {pipeline_mode = #tpu.pipeline_mode<synchronous>, transform_indices = @transform_9, window_bounds = array<i64: 32, 32>}, {pipeline_mode = #tpu.pipeline_mode<synchronous>, transform_indices = @transform_10, window_bounds = array<i64: 3, 32>}, {pipeline_mode = #tpu.pipeline_mode<synchronous>, transform_indices = @transform_11, window_bounds = array<i64: 1, 32>}, {pipeline_mode = #tpu.pipeline_mode<synchronous>, transform_indices = @transform_12, window_bounds = array<i64: 32, 32>}, {pipeline_mode = #tpu.pipeline_mode<synchronous>, transform_indices = @transform_13, window_bounds = array<i64: 1, 32>}, {pipeline_mode = #tpu.pipeline_mode<synchronous>, transform_indices = @transform_14, window_bounds = array<i64: 32, 32>}, {pipeline_mode = #tpu.pipeline_mode<synchronous>, transform_indices = @transform_15, window_bounds = array<i64: 1, 32>}, {pipeline_mode = #tpu.pipeline_mode<synchronous>, transform_indices = @transform_16, window_bounds = array<i64: 32, 32>}, {pipeline_mode = #tpu.pipeline_mode<synchronous>, transform_indices = @transform_17, window_bounds = array<i64: 3, 32>}, {pipeline_mode = #tpu.pipeline_mode<synchronous>, transform_indices = @transform_18, window_bounds = array<i64: 1, 32>}, {pipeline_mode = #tpu.pipeline_mode<synchronous>, transform_indices = @transform_19, window_bounds = array<i64: 32, 32>}, {pipeline_mode = #tpu.pipeline_mode<synchronous>, transform_indices = @transform_20, window_bounds = array<i64: 1, 32>}, {pipeline_mode = #tpu.pipeline_mode<synchronous>, transform_indices = @transform_21, window_bounds = array<i64: 32, 32>}, {pipeline_mode = #tpu.pipeline_mode<synchronous>, transform_indices = @transform_22, window_bounds = array<i64: 1, 32>}, {pipeline_mode = #tpu.pipeline_mode<synchronous>, transform_indices = @transform_23, window_bounds = array<i64: 32, 32>}, {pipeline_mode = #tpu.pipeline_mode<synchronous>, transform_indices = @transform_24, window_bounds = array<i64: 1, 32>}, {pipeline_mode = #tpu.pipeline_mode<synchronous>, transform_indices = @transform_25, window_bounds = array<i64: 32, 32>}, {pipeline_mode = #tpu.pipeline_mode<synchronous>, transform_indices = @transform_26, window_bounds = array<i64: 1, 32>}, {pipeline_mode = #tpu.pipeline_mode<synchronous>, transform_indices = @transform_27, window_bounds = array<i64: 32, 3>}, {pipeline_mode = #tpu.pipeline_mode<synchronous>, transform_indices = @transform_28, window_bounds = array<i64: 1, 3>}, {pipeline_mode = #tpu.pipeline_mode<synchronous>, transform_indices = @transform_29, window_bounds = array<i64: 32, 3>}, {pipeline_mode = #tpu.pipeline_mode<synchronous>, transform_indices = @transform_30, window_bounds = array<i64: 1, 3>}, {pipeline_mode = #tpu.pipeline_mode<synchronous>, transform_indices = @transform_31, window_bounds = array<i64: 64, 3>}, {pipeline_mode = #tpu.pipeline_mode<synchronous>, transform_indices = @transform_32, window_bounds = array<i64: 64, 32>}]} {
    %c0 = arith.constant 0 : index
    %c0_0 = arith.constant 0 : index
    %0 = vector.load %arg1[%c0, %c0_0] : memref<64x3xf32, #tpu.memory_space<vmem>>, vector<64x3xf32>
    %c0_1 = arith.constant 0 : index
    %c0_2 = arith.constant 0 : index
    %1 = vector.load %arg2[%c0_1, %c0_2] : memref<64x64xf32, #tpu.memory_space<vmem>>, vector<64x64xf32>
    %c0_3 = arith.constant 0 : index
    %c0_4 = arith.constant 0 : index
    %2 = vector.load %arg3[%c0_3, %c0_4] : memref<64x256xf32, #tpu.memory_space<vmem>>, vector<64x256xf32>
    %c0_5 = arith.constant 0 : index
    %c0_6 = arith.constant 0 : index
    %3 = vector.load %arg4[%c0_5, %c0_6] : memref<256x16xf32, #tpu.memory_space<vmem>>, vector<256x16xf32>
    %c0_7 = arith.constant 0 : index
    %c0_8 = arith.constant 0 : index
    %4 = vector.load %arg5[%c0_7, %c0_8] : memref<16x32xf32, #tpu.memory_space<vmem>>, vector<16x32xf32>
    %cst = arith.constant dense<0.000000e+00> : vector<64x16xf32>
    %5 = tpu.matmul %2, %3, %cst {dimension_numbers = #tpu.dot_dimension_numbers<[1], [0], [0], [1], [0, 0, 1, 1], [], []>} : vector<64x256xf32>, vector<256x16xf32>, vector<64x16xf32> -> vector<64x16xf32>
    %cst_9 = arith.constant dense<0.000000e+00> : vector<64x32xf32>
    %6 = tpu.matmul %5, %4, %cst_9 {dimension_numbers = #tpu.dot_dimension_numbers<[1], [0], [0], [1], [0, 0, 1, 1], [], []>} : vector<64x16xf32>, vector<16x32xf32>, vector<64x32xf32> -> vector<64x32xf32>
    %c0_10 = arith.constant 0 : index
    %c0_11 = arith.constant 0 : index
    %7 = vector.load %arg6[%c0_10, %c0_11] : memref<1x32xf32, #tpu.memory_space<vmem>>, vector<1x32xf32>
    %8 = vector.broadcast %7 : vector<1x32xf32> to vector<64x32xf32>
    %9 = arith.addf %6, %8 : vector<64x32xf32>
    %cst_12 = arith.constant 0.000000e+00 : f32
    %10 = vector.broadcast %cst_12 : f32 to vector<64x32xf32>
    %11 = arith.maximumf %9, %10 : vector<64x32xf32>
    %cst_13 = arith.constant 0.000000e+00 : f32
    %12 = vector.broadcast %cst_13 : f32 to vector<64x32xf32>
    %13 = arith.maximumf %11, %12 : vector<64x32xf32>
    %cst_14 = arith.constant 0.000000e+00 : f32
    %14 = vector.broadcast %cst_14 : f32 to vector<64x3xf32>
    %15 = arith.maximumf %0, %14 : vector<64x3xf32>
    %c0_15 = arith.constant 0 : index
    %c0_16 = arith.constant 0 : index
    %16 = vector.load %arg7[%c0_15, %c0_16] : memref<32x32xf32, #tpu.memory_space<vmem>>, vector<32x32xf32>
    %c0_17 = arith.constant 0 : index
    %c0_18 = arith.constant 0 : index
    %17 = vector.load %arg8[%c0_17, %c0_18] : memref<3x32xf32, #tpu.memory_space<vmem>>, vector<3x32xf32>
    %c0_19 = arith.constant 0 : index
    %c0_20 = arith.constant 0 : index
    %18 = vector.load %arg9[%c0_19, %c0_20] : memref<1x32xf32, #tpu.memory_space<vmem>>, vector<1x32xf32>
    %c0_21 = arith.constant 0 : index
    %c0_22 = arith.constant 0 : index
    %19 = vector.load %arg10[%c0_21, %c0_22] : memref<32x32xf32, #tpu.memory_space<vmem>>, vector<32x32xf32>
    %c0_23 = arith.constant 0 : index
    %c0_24 = arith.constant 0 : index
    %20 = vector.load %arg11[%c0_23, %c0_24] : memref<3x32xf32, #tpu.memory_space<vmem>>, vector<3x32xf32>
    %c0_25 = arith.constant 0 : index
    %c0_26 = arith.constant 0 : index
    %21 = vector.load %arg12[%c0_25, %c0_26] : memref<1x32xf32, #tpu.memory_space<vmem>>, vector<1x32xf32>
    %cst_27 = arith.constant dense<0.000000e+00> : vector<64x32xf32>
    %22 = tpu.matmul %13, %16, %cst_27 {dimension_numbers = #tpu.dot_dimension_numbers<[1], [0], [0], [1], [0, 0, 1, 1], [], []>} : vector<64x32xf32>, vector<32x32xf32>, vector<64x32xf32> -> vector<64x32xf32>
    %23 = vector.broadcast %18 : vector<1x32xf32> to vector<64x32xf32>
    %24 = arith.addf %23, %22 : vector<64x32xf32>
    %cst_28 = arith.constant dense<0.000000e+00> : vector<64x32xf32>
    %25 = tpu.matmul %13, %19, %cst_28 {dimension_numbers = #tpu.dot_dimension_numbers<[1], [0], [0], [1], [0, 0, 1, 1], [], []>} : vector<64x32xf32>, vector<32x32xf32>, vector<64x32xf32> -> vector<64x32xf32>
    %26 = vector.broadcast %21 : vector<1x32xf32> to vector<64x32xf32>
    %27 = arith.addf %26, %25 : vector<64x32xf32>
    %cst_29 = arith.constant dense<0.000000e+00> : vector<64x32xf32>
    %28 = tpu.matmul %15, %17, %cst_29 {dimension_numbers = #tpu.dot_dimension_numbers<[1], [0], [0], [1], [0, 0, 1, 1], [], []>} : vector<64x3xf32>, vector<3x32xf32>, vector<64x32xf32> -> vector<64x32xf32>
    %29 = arith.addf %24, %28 : vector<64x32xf32>
    %cst_30 = arith.constant dense<0.000000e+00> : vector<64x32xf32>
    %30 = tpu.matmul %15, %20, %cst_30 {dimension_numbers = #tpu.dot_dimension_numbers<[1], [0], [0], [1], [0, 0, 1, 1], [], []>} : vector<64x3xf32>, vector<3x32xf32>, vector<64x32xf32> -> vector<64x32xf32>
    %31 = arith.addf %27, %30 : vector<64x32xf32>
    %cst_31 = arith.constant dense<0.000000e+00> : vector<64x32xf32>
    %32 = tpu.matmul %1, %31, %cst_31 {dimension_numbers = #tpu.dot_dimension_numbers<[1], [0], [0], [1], [0, 0, 1, 1], [], []>} : vector<64x64xf32>, vector<64x32xf32>, vector<64x32xf32> -> vector<64x32xf32>
    %33 = arith.addf %29, %32 : vector<64x32xf32>
    %c0_32 = arith.constant 0 : index
    %c0_33 = arith.constant 0 : index
    %34 = vector.load %arg13[%c0_32, %c0_33] : memref<32x32xf32, #tpu.memory_space<vmem>>, vector<32x32xf32>
    %c0_34 = arith.constant 0 : index
    %c0_35 = arith.constant 0 : index
    %35 = vector.load %arg14[%c0_34, %c0_35] : memref<1x32xf32, #tpu.memory_space<vmem>>, vector<1x32xf32>
    %c0_36 = arith.constant 0 : index
    %c0_37 = arith.constant 0 : index
    %36 = vector.load %arg15[%c0_36, %c0_37] : memref<32x32xf32, #tpu.memory_space<vmem>>, vector<32x32xf32>
    %c0_38 = arith.constant 0 : index
    %c0_39 = arith.constant 0 : index
    %37 = vector.load %arg16[%c0_38, %c0_39] : memref<1x32xf32, #tpu.memory_space<vmem>>, vector<1x32xf32>
    %cst_40 = arith.constant 0.000000e+00 : f32
    %38 = vector.broadcast %cst_40 : f32 to vector<64x32xf32>
    %39 = arith.maximumf %33, %38 : vector<64x32xf32>
    %cst_41 = arith.constant dense<0.000000e+00> : vector<64x32xf32>
    %40 = tpu.matmul %39, %34, %cst_41 {dimension_numbers = #tpu.dot_dimension_numbers<[1], [0], [0], [1], [0, 0, 1, 1], [], []>} : vector<64x32xf32>, vector<32x32xf32>, vector<64x32xf32> -> vector<64x32xf32>
    %41 = vector.broadcast %35 : vector<1x32xf32> to vector<64x32xf32>
    %42 = arith.addf %41, %40 : vector<64x32xf32>
    %cst_42 = arith.constant dense<0.000000e+00> : vector<64x32xf32>
    %43 = tpu.matmul %39, %36, %cst_42 {dimension_numbers = #tpu.dot_dimension_numbers<[1], [0], [0], [1], [0, 0, 1, 1], [], []>} : vector<64x32xf32>, vector<32x32xf32>, vector<64x32xf32> -> vector<64x32xf32>
    %44 = vector.broadcast %37 : vector<1x32xf32> to vector<64x32xf32>
    %45 = arith.addf %44, %43 : vector<64x32xf32>
    %cst_43 = arith.constant dense<0.000000e+00> : vector<64x32xf32>
    %46 = tpu.matmul %1, %45, %cst_43 {dimension_numbers = #tpu.dot_dimension_numbers<[1], [0], [0], [1], [0, 0, 1, 1], [], []>} : vector<64x64xf32>, vector<64x32xf32>, vector<64x32xf32> -> vector<64x32xf32>
    %47 = arith.addf %42, %46 : vector<64x32xf32>
    %c0_44 = arith.constant 0 : index
    %c0_45 = arith.constant 0 : index
    %48 = vector.load %arg17[%c0_44, %c0_45] : memref<32x32xf32, #tpu.memory_space<vmem>>, vector<32x32xf32>
    %c0_46 = arith.constant 0 : index
    %c0_47 = arith.constant 0 : index
    %49 = vector.load %arg18[%c0_46, %c0_47] : memref<3x32xf32, #tpu.memory_space<vmem>>, vector<3x32xf32>
    %c0_48 = arith.constant 0 : index
    %c0_49 = arith.constant 0 : index
    %50 = vector.load %arg19[%c0_48, %c0_49] : memref<1x32xf32, #tpu.memory_space<vmem>>, vector<1x32xf32>
    %cst_50 = arith.constant dense<0.000000e+00> : vector<64x32xf32>
    %51 = tpu.matmul %13, %48, %cst_50 {dimension_numbers = #tpu.dot_dimension_numbers<[1], [0], [0], [1], [0, 0, 1, 1], [], []>} : vector<64x32xf32>, vector<32x32xf32>, vector<64x32xf32> -> vector<64x32xf32>
    %52 = vector.broadcast %50 : vector<1x32xf32> to vector<64x32xf32>
    %53 = arith.addf %52, %51 : vector<64x32xf32>
    %cst_51 = arith.constant dense<0.000000e+00> : vector<64x32xf32>
    %54 = tpu.matmul %15, %49, %cst_51 {dimension_numbers = #tpu.dot_dimension_numbers<[1], [0], [0], [1], [0, 0, 1, 1], [], []>} : vector<64x3xf32>, vector<3x32xf32>, vector<64x32xf32> -> vector<64x32xf32>
    %55 = arith.addf %53, %54 : vector<64x32xf32>
    %56 = arith.addf %47, %55 : vector<64x32xf32>
    %cst_52 = arith.constant 0.000000e+00 : f32
    %57 = vector.broadcast %cst_52 : f32 to vector<64x32xf32>
    %58 = arith.maximumf %56, %57 : vector<64x32xf32>
    %c0_53 = arith.constant 0 : index
    %c0_54 = arith.constant 0 : index
    %59 = vector.load %arg20[%c0_53, %c0_54] : memref<32x32xf32, #tpu.memory_space<vmem>>, vector<32x32xf32>
    %c0_55 = arith.constant 0 : index
    %c0_56 = arith.constant 0 : index
    %60 = vector.load %arg21[%c0_55, %c0_56] : memref<1x32xf32, #tpu.memory_space<vmem>>, vector<1x32xf32>
    %c0_57 = arith.constant 0 : index
    %c0_58 = arith.constant 0 : index
    %61 = vector.load %arg22[%c0_57, %c0_58] : memref<32x32xf32, #tpu.memory_space<vmem>>, vector<32x32xf32>
    %c0_59 = arith.constant 0 : index
    %c0_60 = arith.constant 0 : index
    %62 = vector.load %arg23[%c0_59, %c0_60] : memref<1x32xf32, #tpu.memory_space<vmem>>, vector<1x32xf32>
    %cst_61 = arith.constant dense<0.000000e+00> : vector<64x32xf32>
    %63 = tpu.matmul %58, %59, %cst_61 {dimension_numbers = #tpu.dot_dimension_numbers<[1], [0], [0], [1], [0, 0, 1, 1], [], []>} : vector<64x32xf32>, vector<32x32xf32>, vector<64x32xf32> -> vector<64x32xf32>
    %64 = vector.broadcast %60 : vector<1x32xf32> to vector<64x32xf32>
    %65 = arith.addf %64, %63 : vector<64x32xf32>
    %cst_62 = arith.constant dense<0.000000e+00> : vector<64x32xf32>
    %66 = tpu.matmul %58, %61, %cst_62 {dimension_numbers = #tpu.dot_dimension_numbers<[1], [0], [0], [1], [0, 0, 1, 1], [], []>} : vector<64x32xf32>, vector<32x32xf32>, vector<64x32xf32> -> vector<64x32xf32>
    %67 = vector.broadcast %62 : vector<1x32xf32> to vector<64x32xf32>
    %68 = arith.addf %67, %66 : vector<64x32xf32>
    %cst_63 = arith.constant dense<0.000000e+00> : vector<64x32xf32>
    %69 = tpu.matmul %1, %68, %cst_63 {dimension_numbers = #tpu.dot_dimension_numbers<[1], [0], [0], [1], [0, 0, 1, 1], [], []>} : vector<64x64xf32>, vector<64x32xf32>, vector<64x32xf32> -> vector<64x32xf32>
    %70 = arith.addf %65, %69 : vector<64x32xf32>
    %c0_64 = arith.constant 0 : index
    %c0_65 = arith.constant 0 : index
    %71 = vector.load %arg24[%c0_64, %c0_65] : memref<32x32xf32, #tpu.memory_space<vmem>>, vector<32x32xf32>
    %c0_66 = arith.constant 0 : index
    %c0_67 = arith.constant 0 : index
    %72 = vector.load %arg25[%c0_66, %c0_67] : memref<1x32xf32, #tpu.memory_space<vmem>>, vector<1x32xf32>
    %c0_68 = arith.constant 0 : index
    %c0_69 = arith.constant 0 : index
    %73 = vector.load %arg26[%c0_68, %c0_69] : memref<32x32xf32, #tpu.memory_space<vmem>>, vector<32x32xf32>
    %c0_70 = arith.constant 0 : index
    %c0_71 = arith.constant 0 : index
    %74 = vector.load %arg27[%c0_70, %c0_71] : memref<1x32xf32, #tpu.memory_space<vmem>>, vector<1x32xf32>
    %cst_72 = arith.constant 0.000000e+00 : f32
    %75 = vector.broadcast %cst_72 : f32 to vector<64x32xf32>
    %76 = arith.maximumf %70, %75 : vector<64x32xf32>
    %cst_73 = arith.constant dense<0.000000e+00> : vector<64x32xf32>
    %77 = tpu.matmul %76, %71, %cst_73 {dimension_numbers = #tpu.dot_dimension_numbers<[1], [0], [0], [1], [0, 0, 1, 1], [], []>} : vector<64x32xf32>, vector<32x32xf32>, vector<64x32xf32> -> vector<64x32xf32>
    %78 = vector.broadcast %72 : vector<1x32xf32> to vector<64x32xf32>
    %79 = arith.addf %78, %77 : vector<64x32xf32>
    %cst_74 = arith.constant dense<0.000000e+00> : vector<64x32xf32>
    %80 = tpu.matmul %76, %73, %cst_74 {dimension_numbers = #tpu.dot_dimension_numbers<[1], [0], [0], [1], [0, 0, 1, 1], [], []>} : vector<64x32xf32>, vector<32x32xf32>, vector<64x32xf32> -> vector<64x32xf32>
    %81 = vector.broadcast %74 : vector<1x32xf32> to vector<64x32xf32>
    %82 = arith.addf %81, %80 : vector<64x32xf32>
    %cst_75 = arith.constant dense<0.000000e+00> : vector<64x32xf32>
    %83 = tpu.matmul %1, %82, %cst_75 {dimension_numbers = #tpu.dot_dimension_numbers<[1], [0], [0], [1], [0, 0, 1, 1], [], []>} : vector<64x64xf32>, vector<64x32xf32>, vector<64x32xf32> -> vector<64x32xf32>
    %84 = arith.addf %79, %83 : vector<64x32xf32>
    %85 = arith.addf %84, %58 : vector<64x32xf32>
    %c0_76 = arith.constant 0 : index
    %c0_77 = arith.constant 0 : index
    %86 = vector.load %arg28[%c0_76, %c0_77] : memref<32x3xf32, #tpu.memory_space<vmem>>, vector<32x3xf32>
    %c0_78 = arith.constant 0 : index
    %c0_79 = arith.constant 0 : index
    %87 = vector.load %arg29[%c0_78, %c0_79] : memref<1x3xf32, #tpu.memory_space<vmem>>, vector<1x3xf32>
    %c0_80 = arith.constant 0 : index
    %c0_81 = arith.constant 0 : index
    %88 = vector.load %arg30[%c0_80, %c0_81] : memref<32x3xf32, #tpu.memory_space<vmem>>, vector<32x3xf32>
    %c0_82 = arith.constant 0 : index
    %c0_83 = arith.constant 0 : index
    %89 = vector.load %arg31[%c0_82, %c0_83] : memref<1x3xf32, #tpu.memory_space<vmem>>, vector<1x3xf32>
    %cst_84 = arith.constant dense<0.000000e+00> : vector<64x3xf32>
    %90 = tpu.matmul %85, %86, %cst_84 {dimension_numbers = #tpu.dot_dimension_numbers<[1], [0], [0], [1], [0, 0, 1, 1], [], []>} : vector<64x32xf32>, vector<32x3xf32>, vector<64x3xf32> -> vector<64x3xf32>
    %91 = vector.broadcast %87 : vector<1x3xf32> to vector<64x3xf32>
    %92 = arith.addf %91, %90 : vector<64x3xf32>
    %cst_85 = arith.constant dense<0.000000e+00> : vector<64x3xf32>
    %93 = tpu.matmul %85, %88, %cst_85 {dimension_numbers = #tpu.dot_dimension_numbers<[1], [0], [0], [1], [0, 0, 1, 1], [], []>} : vector<64x32xf32>, vector<32x3xf32>, vector<64x3xf32> -> vector<64x3xf32>
    %94 = vector.broadcast %89 : vector<1x3xf32> to vector<64x3xf32>
    %95 = arith.addf %94, %93 : vector<64x3xf32>
    %cst_86 = arith.constant dense<0.000000e+00> : vector<64x3xf32>
    %96 = tpu.matmul %1, %95, %cst_86 {dimension_numbers = #tpu.dot_dimension_numbers<[1], [0], [0], [1], [0, 0, 1, 1], [], []>} : vector<64x64xf32>, vector<64x3xf32>, vector<64x3xf32> -> vector<64x3xf32>
    %97 = arith.addf %92, %96 : vector<64x3xf32>
    %98 = math.tanh %97 : vector<64x3xf32>
    %99 = arith.addf %0, %98 : vector<64x3xf32>
    %c0_87 = arith.constant 0 : index
    %c0_88 = arith.constant 0 : index
    %100 = vector.load %arg32[%c0_87, %c0_88] : memref<64x3xf32, #tpu.memory_space<vmem>>, vector<64x3xf32>
    tpu.vector_store %arg32[%c0_87, %c0_88], %99 {strides = array<i32>} : memref<64x3xf32, #tpu.memory_space<vmem>>, vector<64x3xf32>,
    %c0_89 = arith.constant 0 : index
    %c0_90 = arith.constant 0 : index
    %101 = vector.load %arg33[%c0_89, %c0_90] : memref<64x32xf32, #tpu.memory_space<vmem>>, vector<64x32xf32>
    tpu.vector_store %arg33[%c0_89, %c0_90], %85 {strides = array<i32>} : memref<64x32xf32, #tpu.memory_space<vmem>>, vector<64x32xf32>,
    return
  }
  func.func @transform_0(%arg0: i32) -> (i32, i32) {
    %c0_i32 = arith.constant 0 : i32
    %c0_i32_0 = arith.constant 0 : i32
    %c0_i32_1 = arith.constant 0 : i32
    return %c0_i32, %c0_i32_0 : i32, i32
  }
  func.func @transform_1(%arg0: i32) -> (i32, i32) {
    %c0_i32 = arith.constant 0 : i32
    %c0_i32_0 = arith.constant 0 : i32
    %c0_i32_1 = arith.constant 0 : i32
    return %c0_i32, %c0_i32_0 : i32, i32
  }
  func.func @transform_2(%arg0: i32) -> (i32, i32) {
    %c0_i32 = arith.constant 0 : i32
    %c0_i32_0 = arith.constant 0 : i32
    %c0_i32_1 = arith.constant 0 : i32
    return %c0_i32, %c0_i32_0 : i32, i32
  }
  func.func @transform_3(%arg0: i32) -> (i32, i32) {
    %c0_i32 = arith.constant 0 : i32
    %c0_i32_0 = arith.constant 0 : i32
    %c0_i32_1 = arith.constant 0 : i32
    return %c0_i32, %c0_i32_0 : i32, i32
  }
  func.func @transform_4(%arg0: i32) -> (i32, i32) {
    %c0_i32 = arith.constant 0 : i32
    %c0_i32_0 = arith.constant 0 : i32
    %c0_i32_1 = arith.constant 0 : i32
    return %c0_i32, %c0_i32_0 : i32, i32
  }
  func.func @transform_5(%arg0: i32) -> (i32, i32) {
    %c0_i32 = arith.constant 0 : i32
    %c0_i32_0 = arith.constant 0 : i32
    %c0_i32_1 = arith.constant 0 : i32
    return %c0_i32, %c0_i32_0 : i32, i32
  }
  func.func @transform_6(%arg0: i32) -> (i32, i32) {
    %c0_i32 = arith.constant 0 : i32
    %c0_i32_0 = arith.constant 0 : i32
    %c0_i32_1 = arith.constant 0 : i32
    return %c0_i32, %c0_i32_0 : i32, i32
  }
  func.func @transform_7(%arg0: i32) -> (i32, i32) {
    %c0_i32 = arith.constant 0 : i32
    %c0_i32_0 = arith.constant 0 : i32
    %c0_i32_1 = arith.constant 0 : i32
    return %c0_i32, %c0_i32_0 : i32, i32
  }
  func.func @transform_8(%arg0: i32) -> (i32, i32) {
    %c0_i32 = arith.constant 0 : i32
    %c0_i32_0 = arith.constant 0 : i32
    %c0_i32_1 = arith.constant 0 : i32
    return %c0_i32, %c0_i32_0 : i32, i32
  }
  func.func @transform_9(%arg0: i32) -> (i32, i32) {
    %c0_i32 = arith.constant 0 : i32
    %c0_i32_0 = arith.constant 0 : i32
    %c0_i32_1 = arith.constant 0 : i32
    return %c0_i32, %c0_i32_0 : i32, i32
  }
  func.func @transform_10(%arg0: i32) -> (i32, i32) {
    %c0_i32 = arith.constant 0 : i32
    %c0_i32_0 = arith.constant 0 : i32
    %c0_i32_1 = arith.constant 0 : i32
    return %c0_i32, %c0_i32_0 : i32, i32
  }
  func.func @transform_11(%arg0: i32) -> (i32, i32) {
    %c0_i32 = arith.constant 0 : i32
    %c0_i32_0 = arith.constant 0 : i32
    %c0_i32_1 = arith.constant 0 : i32
    return %c0_i32, %c0_i32_0 : i32, i32
  }
  func.func @transform_12(%arg0: i32) -> (i32, i32) {
    %c0_i32 = arith.constant 0 : i32
    %c0_i32_0 = arith.constant 0 : i32
    %c0_i32_1 = arith.constant 0 : i32
    return %c0_i32, %c0_i32_0 : i32, i32
  }
  func.func @transform_13(%arg0: i32) -> (i32, i32) {
    %c0_i32 = arith.constant 0 : i32
    %c0_i32_0 = arith.constant 0 : i32
    %c0_i32_1 = arith.constant 0 : i32
    return %c0_i32, %c0_i32_0 : i32, i32
  }
  func.func @transform_14(%arg0: i32) -> (i32, i32) {
    %c0_i32 = arith.constant 0 : i32
    %c0_i32_0 = arith.constant 0 : i32
    %c0_i32_1 = arith.constant 0 : i32
    return %c0_i32, %c0_i32_0 : i32, i32
  }
  func.func @transform_15(%arg0: i32) -> (i32, i32) {
    %c0_i32 = arith.constant 0 : i32
    %c0_i32_0 = arith.constant 0 : i32
    %c0_i32_1 = arith.constant 0 : i32
    return %c0_i32, %c0_i32_0 : i32, i32
  }
  func.func @transform_16(%arg0: i32) -> (i32, i32) {
    %c0_i32 = arith.constant 0 : i32
    %c0_i32_0 = arith.constant 0 : i32
    %c0_i32_1 = arith.constant 0 : i32
    return %c0_i32, %c0_i32_0 : i32, i32
  }
  func.func @transform_17(%arg0: i32) -> (i32, i32) {
    %c0_i32 = arith.constant 0 : i32
    %c0_i32_0 = arith.constant 0 : i32
    %c0_i32_1 = arith.constant 0 : i32
    return %c0_i32, %c0_i32_0 : i32, i32
  }
  func.func @transform_18(%arg0: i32) -> (i32, i32) {
    %c0_i32 = arith.constant 0 : i32
    %c0_i32_0 = arith.constant 0 : i32
    %c0_i32_1 = arith.constant 0 : i32
    return %c0_i32, %c0_i32_0 : i32, i32
  }
  func.func @transform_19(%arg0: i32) -> (i32, i32) {
    %c0_i32 = arith.constant 0 : i32
    %c0_i32_0 = arith.constant 0 : i32
    %c0_i32_1 = arith.constant 0 : i32
    return %c0_i32, %c0_i32_0 : i32, i32
  }
  func.func @transform_20(%arg0: i32) -> (i32, i32) {
    %c0_i32 = arith.constant 0 : i32
    %c0_i32_0 = arith.constant 0 : i32
    %c0_i32_1 = arith.constant 0 : i32
    return %c0_i32, %c0_i32_0 : i32, i32
  }
  func.func @transform_21(%arg0: i32) -> (i32, i32) {
    %c0_i32 = arith.constant 0 : i32
    %c0_i32_0 = arith.constant 0 : i32
    %c0_i32_1 = arith.constant 0 : i32
    return %c0_i32, %c0_i32_0 : i32, i32
  }
  func.func @transform_22(%arg0: i32) -> (i32, i32) {
    %c0_i32 = arith.constant 0 : i32
    %c0_i32_0 = arith.constant 0 : i32
    %c0_i32_1 = arith.constant 0 : i32
    return %c0_i32, %c0_i32_0 : i32, i32
  }
  func.func @transform_23(%arg0: i32) -> (i32, i32) {
    %c0_i32 = arith.constant 0 : i32
    %c0_i32_0 = arith.constant 0 : i32
    %c0_i32_1 = arith.constant 0 : i32
    return %c0_i32, %c0_i32_0 : i32, i32
  }
  func.func @transform_24(%arg0: i32) -> (i32, i32) {
    %c0_i32 = arith.constant 0 : i32
    %c0_i32_0 = arith.constant 0 : i32
    %c0_i32_1 = arith.constant 0 : i32
    return %c0_i32, %c0_i32_0 : i32, i32
  }
  func.func @transform_25(%arg0: i32) -> (i32, i32) {
    %c0_i32 = arith.constant 0 : i32
    %c0_i32_0 = arith.constant 0 : i32
    %c0_i32_1 = arith.constant 0 : i32
    return %c0_i32, %c0_i32_0 : i32, i32
  }
  func.func @transform_26(%arg0: i32) -> (i32, i32) {
    %c0_i32 = arith.constant 0 : i32
    %c0_i32_0 = arith.constant 0 : i32
    %c0_i32_1 = arith.constant 0 : i32
    return %c0_i32, %c0_i32_0 : i32, i32
  }
  func.func @transform_27(%arg0: i32) -> (i32, i32) {
    %c0_i32 = arith.constant 0 : i32
    %c0_i32_0 = arith.constant 0 : i32
    %c0_i32_1 = arith.constant 0 : i32
    return %c0_i32, %c0_i32_0 : i32, i32
  }
  func.func @transform_28(%arg0: i32) -> (i32, i32) {
    %c0_i32 = arith.constant 0 : i32
    %c0_i32_0 = arith.constant 0 : i32
    %c0_i32_1 = arith.constant 0 : i32
    return %c0_i32, %c0_i32_0 : i32, i32
  }
  func.func @transform_29(%arg0: i32) -> (i32, i32) {
    %c0_i32 = arith.constant 0 : i32
    %c0_i32_0 = arith.constant 0 : i32
    %c0_i32_1 = arith.constant 0 : i32
    return %c0_i32, %c0_i32_0 : i32, i32
  }
  func.func @transform_30(%arg0: i32) -> (i32, i32) {
    %c0_i32 = arith.constant 0 : i32
    %c0_i32_0 = arith.constant 0 : i32
    %c0_i32_1 = arith.constant 0 : i32
    return %c0_i32, %c0_i32_0 : i32, i32
  }
  func.func @transform_31(%arg0: i32) -> (i32, i32) {
    %c0_i32 = arith.constant 0 : i32
    %c0_i32_0 = arith.constant 0 : i32
    %c0_i32_1 = arith.constant 0 : i32
    return %c0_i32, %c0_i32_0 : i32, i32
  }
  func.func @transform_32(%arg0: i32) -> (i32, i32) {
    %c0_i32 = arith.constant 0 : i32
    %c0_i32_0 = arith.constant 0 : i32
    %c0_i32_1 = arith.constant 0 : i32
    return %c0_i32, %c0_i32_0 : i32, i32
  }
}

module attributes {stable_mosaic.version = 11 : i64} {
  func.func @kernel(%arg0: i32, %arg1: memref<64x3xf32, #tpu.memory_space<vmem>>, %arg2: memref<64x64xf32, #tpu.memory_space<vmem>>, %arg3: memref<64x32xf32, #tpu.memory_space<vmem>>, %arg4: memref<64x256xf32, #tpu.memory_space<vmem>>, %arg5: memref<256x16xf32, #tpu.memory_space<vmem>>, %arg6: memref<16x32xf32, #tpu.memory_space<vmem>>, %arg7: memref<1x32xf32, #tpu.memory_space<vmem>>, %arg8: memref<32x32xf32, #tpu.memory_space<vmem>>, %arg9: memref<32x32xf32, #tpu.memory_space<vmem>>, %arg10: memref<3x32xf32, #tpu.memory_space<vmem>>, %arg11: memref<1x32xf32, #tpu.memory_space<vmem>>, %arg12: memref<32x32xf32, #tpu.memory_space<vmem>>, %arg13: memref<32x32xf32, #tpu.memory_space<vmem>>, %arg14: memref<3x32xf32, #tpu.memory_space<vmem>>, %arg15: memref<1x32xf32, #tpu.memory_space<vmem>>, %arg16: memref<32x32xf32, #tpu.memory_space<vmem>>, %arg17: memref<1x32xf32, #tpu.memory_space<vmem>>, %arg18: memref<32x32xf32, #tpu.memory_space<vmem>>, %arg19: memref<1x32xf32, #tpu.memory_space<vmem>>, %arg20: memref<32x32xf32, #tpu.memory_space<vmem>>, %arg21: memref<32x32xf32, #tpu.memory_space<vmem>>, %arg22: memref<3x32xf32, #tpu.memory_space<vmem>>, %arg23: memref<1x32xf32, #tpu.memory_space<vmem>>, %arg24: memref<32x32xf32, #tpu.memory_space<vmem>>, %arg25: memref<1x32xf32, #tpu.memory_space<vmem>>, %arg26: memref<32x32xf32, #tpu.memory_space<vmem>>, %arg27: memref<1x32xf32, #tpu.memory_space<vmem>>, %arg28: memref<32x32xf32, #tpu.memory_space<vmem>>, %arg29: memref<1x32xf32, #tpu.memory_space<vmem>>, %arg30: memref<32x32xf32, #tpu.memory_space<vmem>>, %arg31: memref<1x32xf32, #tpu.memory_space<vmem>>, %arg32: memref<32x3xf32, #tpu.memory_space<vmem>>, %arg33: memref<1x3xf32, #tpu.memory_space<vmem>>, %arg34: memref<32x3xf32, #tpu.memory_space<vmem>>, %arg35: memref<1x3xf32, #tpu.memory_space<vmem>>, %arg36: memref<64x3xf32, #tpu.memory_space<vmem>>, %arg37: memref<64x32xf32, #tpu.memory_space<vmem>>) attributes {dimension_semantics = [#tpu.dimension_semantics<arbitrary>], iteration_bounds = array<i64: 1>, scalar_prefetch = 0 : i64, scratch_operands = 0 : i64, tpu.core_type = #tpu.core_type<tc>, window_params = [{pipeline_mode = #tpu.pipeline_mode<synchronous>, transform_indices = @transform_0, window_bounds = array<i64: 64, 3>}, {pipeline_mode = #tpu.pipeline_mode<synchronous>, transform_indices = @transform_1, window_bounds = array<i64: 64, 64>}, {pipeline_mode = #tpu.pipeline_mode<synchronous>, transform_indices = @transform_2, window_bounds = array<i64: 64, 32>}, {pipeline_mode = #tpu.pipeline_mode<synchronous>, transform_indices = @transform_3, window_bounds = array<i64: 64, 256>}, {pipeline_mode = #tpu.pipeline_mode<synchronous>, transform_indices = @transform_4, window_bounds = array<i64: 256, 16>}, {pipeline_mode = #tpu.pipeline_mode<synchronous>, transform_indices = @transform_5, window_bounds = array<i64: 16, 32>}, {pipeline_mode = #tpu.pipeline_mode<synchronous>, transform_indices = @transform_6, window_bounds = array<i64: 1, 32>}, {pipeline_mode = #tpu.pipeline_mode<synchronous>, transform_indices = @transform_7, window_bounds = array<i64: 32, 32>}, {pipeline_mode = #tpu.pipeline_mode<synchronous>, transform_indices = @transform_8, window_bounds = array<i64: 32, 32>}, {pipeline_mode = #tpu.pipeline_mode<synchronous>, transform_indices = @transform_9, window_bounds = array<i64: 3, 32>}, {pipeline_mode = #tpu.pipeline_mode<synchronous>, transform_indices = @transform_10, window_bounds = array<i64: 1, 32>}, {pipeline_mode = #tpu.pipeline_mode<synchronous>, transform_indices = @transform_11, window_bounds = array<i64: 32, 32>}, {pipeline_mode = #tpu.pipeline_mode<synchronous>, transform_indices = @transform_12, window_bounds = array<i64: 32, 32>}, {pipeline_mode = #tpu.pipeline_mode<synchronous>, transform_indices = @transform_13, window_bounds = array<i64: 3, 32>}, {pipeline_mode = #tpu.pipeline_mode<synchronous>, transform_indices = @transform_14, window_bounds = array<i64: 1, 32>}, {pipeline_mode = #tpu.pipeline_mode<synchronous>, transform_indices = @transform_15, window_bounds = array<i64: 32, 32>}, {pipeline_mode = #tpu.pipeline_mode<synchronous>, transform_indices = @transform_16, window_bounds = array<i64: 1, 32>}, {pipeline_mode = #tpu.pipeline_mode<synchronous>, transform_indices = @transform_17, window_bounds = array<i64: 32, 32>}, {pipeline_mode = #tpu.pipeline_mode<synchronous>, transform_indices = @transform_18, window_bounds = array<i64: 1, 32>}, {pipeline_mode = #tpu.pipeline_mode<synchronous>, transform_indices = @transform_19, window_bounds = array<i64: 32, 32>}, {pipeline_mode = #tpu.pipeline_mode<synchronous>, transform_indices = @transform_20, window_bounds = array<i64: 32, 32>}, {pipeline_mode = #tpu.pipeline_mode<synchronous>, transform_indices = @transform_21, window_bounds = array<i64: 3, 32>}, {pipeline_mode = #tpu.pipeline_mode<synchronous>, transform_indices = @transform_22, window_bounds = array<i64: 1, 32>}, {pipeline_mode = #tpu.pipeline_mode<synchronous>, transform_indices = @transform_23, window_bounds = array<i64: 32, 32>}, {pipeline_mode = #tpu.pipeline_mode<synchronous>, transform_indices = @transform_24, window_bounds = array<i64: 1, 32>}, {pipeline_mode = #tpu.pipeline_mode<synchronous>, transform_indices = @transform_25, window_bounds = array<i64: 32, 32>}, {pipeline_mode = #tpu.pipeline_mode<synchronous>, transform_indices = @transform_26, window_bounds = array<i64: 1, 32>}, {pipeline_mode = #tpu.pipeline_mode<synchronous>, transform_indices = @transform_27, window_bounds = array<i64: 32, 32>}, {pipeline_mode = #tpu.pipeline_mode<synchronous>, transform_indices = @transform_28, window_bounds = array<i64: 1, 32>}, {pipeline_mode = #tpu.pipeline_mode<synchronous>, transform_indices = @transform_29, window_bounds = array<i64: 32, 32>}, {pipeline_mode = #tpu.pipeline_mode<synchronous>, transform_indices = @transform_30, window_bounds = array<i64: 1, 32>}, {pipeline_mode = #tpu.pipeline_mode<synchronous>, transform_indices = @transform_31, window_bounds = array<i64: 32, 3>}, {pipeline_mode = #tpu.pipeline_mode<synchronous>, transform_indices = @transform_32, window_bounds = array<i64: 1, 3>}, {pipeline_mode = #tpu.pipeline_mode<synchronous>, transform_indices = @transform_33, window_bounds = array<i64: 32, 3>}, {pipeline_mode = #tpu.pipeline_mode<synchronous>, transform_indices = @transform_34, window_bounds = array<i64: 1, 3>}, {pipeline_mode = #tpu.pipeline_mode<synchronous>, transform_indices = @transform_35, window_bounds = array<i64: 64, 3>}, {pipeline_mode = #tpu.pipeline_mode<synchronous>, transform_indices = @transform_36, window_bounds = array<i64: 64, 32>}]} {
    %c0 = arith.constant 0 : index
    %c0_0 = arith.constant 0 : index
    %0 = vector.load %arg1[%c0, %c0_0] : memref<64x3xf32, #tpu.memory_space<vmem>>, vector<64x3xf32>
    %c0_1 = arith.constant 0 : index
    %c0_2 = arith.constant 0 : index
    %1 = vector.load %arg2[%c0_1, %c0_2] : memref<64x64xf32, #tpu.memory_space<vmem>>, vector<64x64xf32>
    %c0_3 = arith.constant 0 : index
    %c0_4 = arith.constant 0 : index
    %2 = vector.load %arg3[%c0_3, %c0_4] : memref<64x32xf32, #tpu.memory_space<vmem>>, vector<64x32xf32>
    %c0_5 = arith.constant 0 : index
    %c0_6 = arith.constant 0 : index
    %3 = vector.load %arg4[%c0_5, %c0_6] : memref<64x256xf32, #tpu.memory_space<vmem>>, vector<64x256xf32>
    %c0_7 = arith.constant 0 : index
    %c0_8 = arith.constant 0 : index
    %4 = vector.load %arg5[%c0_7, %c0_8] : memref<256x16xf32, #tpu.memory_space<vmem>>, vector<256x16xf32>
    %c0_9 = arith.constant 0 : index
    %c0_10 = arith.constant 0 : index
    %5 = vector.load %arg6[%c0_9, %c0_10] : memref<16x32xf32, #tpu.memory_space<vmem>>, vector<16x32xf32>
    %cst = arith.constant dense<0.000000e+00> : vector<64x16xf32>
    %6 = tpu.matmul %3, %4, %cst {dimension_numbers = #tpu.dot_dimension_numbers<[1], [0], [0], [1], [0, 0, 1, 1], [], []>} : vector<64x256xf32>, vector<256x16xf32>, vector<64x16xf32> -> vector<64x16xf32>
    %cst_11 = arith.constant dense<0.000000e+00> : vector<64x32xf32>
    %7 = tpu.matmul %6, %5, %cst_11 {dimension_numbers = #tpu.dot_dimension_numbers<[1], [0], [0], [1], [0, 0, 1, 1], [], []>} : vector<64x16xf32>, vector<16x32xf32>, vector<64x32xf32> -> vector<64x32xf32>
    %c0_12 = arith.constant 0 : index
    %c0_13 = arith.constant 0 : index
    %8 = vector.load %arg7[%c0_12, %c0_13] : memref<1x32xf32, #tpu.memory_space<vmem>>, vector<1x32xf32>
    %9 = vector.broadcast %8 : vector<1x32xf32> to vector<64x32xf32>
    %10 = arith.addf %7, %9 : vector<64x32xf32>
    %cst_14 = arith.constant 0.000000e+00 : f32
    %11 = vector.broadcast %cst_14 : f32 to vector<64x32xf32>
    %12 = arith.maximumf %10, %11 : vector<64x32xf32>
    %cst_15 = arith.constant 0.000000e+00 : f32
    %13 = vector.broadcast %cst_15 : f32 to vector<64x32xf32>
    %14 = arith.maximumf %2, %13 : vector<64x32xf32>
    %cst_16 = arith.constant 0.000000e+00 : f32
    %15 = vector.broadcast %cst_16 : f32 to vector<64x32xf32>
    %16 = arith.maximumf %12, %15 : vector<64x32xf32>
    %cst_17 = arith.constant 0.000000e+00 : f32
    %17 = vector.broadcast %cst_17 : f32 to vector<64x3xf32>
    %18 = arith.maximumf %0, %17 : vector<64x3xf32>
    %c0_18 = arith.constant 0 : index
    %c0_19 = arith.constant 0 : index
    %19 = vector.load %arg8[%c0_18, %c0_19] : memref<32x32xf32, #tpu.memory_space<vmem>>, vector<32x32xf32>
    %c0_20 = arith.constant 0 : index
    %c0_21 = arith.constant 0 : index
    %20 = vector.load %arg9[%c0_20, %c0_21] : memref<32x32xf32, #tpu.memory_space<vmem>>, vector<32x32xf32>
    %c0_22 = arith.constant 0 : index
    %c0_23 = arith.constant 0 : index
    %21 = vector.load %arg10[%c0_22, %c0_23] : memref<3x32xf32, #tpu.memory_space<vmem>>, vector<3x32xf32>
    %c0_24 = arith.constant 0 : index
    %c0_25 = arith.constant 0 : index
    %22 = vector.load %arg11[%c0_24, %c0_25] : memref<1x32xf32, #tpu.memory_space<vmem>>, vector<1x32xf32>
    %c0_26 = arith.constant 0 : index
    %c0_27 = arith.constant 0 : index
    %23 = vector.load %arg12[%c0_26, %c0_27] : memref<32x32xf32, #tpu.memory_space<vmem>>, vector<32x32xf32>
    %c0_28 = arith.constant 0 : index
    %c0_29 = arith.constant 0 : index
    %24 = vector.load %arg13[%c0_28, %c0_29] : memref<32x32xf32, #tpu.memory_space<vmem>>, vector<32x32xf32>
    %c0_30 = arith.constant 0 : index
    %c0_31 = arith.constant 0 : index
    %25 = vector.load %arg14[%c0_30, %c0_31] : memref<3x32xf32, #tpu.memory_space<vmem>>, vector<3x32xf32>
    %c0_32 = arith.constant 0 : index
    %c0_33 = arith.constant 0 : index
    %26 = vector.load %arg15[%c0_32, %c0_33] : memref<1x32xf32, #tpu.memory_space<vmem>>, vector<1x32xf32>
    %cst_34 = arith.constant dense<0.000000e+00> : vector<64x32xf32>
    %27 = tpu.matmul %14, %19, %cst_34 {dimension_numbers = #tpu.dot_dimension_numbers<[1], [0], [0], [1], [0, 0, 1, 1], [], []>} : vector<64x32xf32>, vector<32x32xf32>, vector<64x32xf32> -> vector<64x32xf32>
    %28 = vector.broadcast %22 : vector<1x32xf32> to vector<64x32xf32>
    %29 = arith.addf %28, %27 : vector<64x32xf32>
    %cst_35 = arith.constant dense<0.000000e+00> : vector<64x32xf32>
    %30 = tpu.matmul %14, %23, %cst_35 {dimension_numbers = #tpu.dot_dimension_numbers<[1], [0], [0], [1], [0, 0, 1, 1], [], []>} : vector<64x32xf32>, vector<32x32xf32>, vector<64x32xf32> -> vector<64x32xf32>
    %31 = vector.broadcast %26 : vector<1x32xf32> to vector<64x32xf32>
    %32 = arith.addf %31, %30 : vector<64x32xf32>
    %cst_36 = arith.constant dense<0.000000e+00> : vector<64x32xf32>
    %33 = tpu.matmul %16, %20, %cst_36 {dimension_numbers = #tpu.dot_dimension_numbers<[1], [0], [0], [1], [0, 0, 1, 1], [], []>} : vector<64x32xf32>, vector<32x32xf32>, vector<64x32xf32> -> vector<64x32xf32>
    %34 = arith.addf %29, %33 : vector<64x32xf32>
    %cst_37 = arith.constant dense<0.000000e+00> : vector<64x32xf32>
    %35 = tpu.matmul %16, %24, %cst_37 {dimension_numbers = #tpu.dot_dimension_numbers<[1], [0], [0], [1], [0, 0, 1, 1], [], []>} : vector<64x32xf32>, vector<32x32xf32>, vector<64x32xf32> -> vector<64x32xf32>
    %36 = arith.addf %32, %35 : vector<64x32xf32>
    %cst_38 = arith.constant dense<0.000000e+00> : vector<64x32xf32>
    %37 = tpu.matmul %18, %21, %cst_38 {dimension_numbers = #tpu.dot_dimension_numbers<[1], [0], [0], [1], [0, 0, 1, 1], [], []>} : vector<64x3xf32>, vector<3x32xf32>, vector<64x32xf32> -> vector<64x32xf32>
    %38 = arith.addf %34, %37 : vector<64x32xf32>
    %cst_39 = arith.constant dense<0.000000e+00> : vector<64x32xf32>
    %39 = tpu.matmul %18, %25, %cst_39 {dimension_numbers = #tpu.dot_dimension_numbers<[1], [0], [0], [1], [0, 0, 1, 1], [], []>} : vector<64x3xf32>, vector<3x32xf32>, vector<64x32xf32> -> vector<64x32xf32>
    %40 = arith.addf %36, %39 : vector<64x32xf32>
    %cst_40 = arith.constant dense<0.000000e+00> : vector<64x32xf32>
    %41 = tpu.matmul %1, %40, %cst_40 {dimension_numbers = #tpu.dot_dimension_numbers<[1], [0], [0], [1], [0, 0, 1, 1], [], []>} : vector<64x64xf32>, vector<64x32xf32>, vector<64x32xf32> -> vector<64x32xf32>
    %42 = arith.addf %38, %41 : vector<64x32xf32>
    %c0_41 = arith.constant 0 : index
    %c0_42 = arith.constant 0 : index
    %43 = vector.load %arg16[%c0_41, %c0_42] : memref<32x32xf32, #tpu.memory_space<vmem>>, vector<32x32xf32>
    %c0_43 = arith.constant 0 : index
    %c0_44 = arith.constant 0 : index
    %44 = vector.load %arg17[%c0_43, %c0_44] : memref<1x32xf32, #tpu.memory_space<vmem>>, vector<1x32xf32>
    %c0_45 = arith.constant 0 : index
    %c0_46 = arith.constant 0 : index
    %45 = vector.load %arg18[%c0_45, %c0_46] : memref<32x32xf32, #tpu.memory_space<vmem>>, vector<32x32xf32>
    %c0_47 = arith.constant 0 : index
    %c0_48 = arith.constant 0 : index
    %46 = vector.load %arg19[%c0_47, %c0_48] : memref<1x32xf32, #tpu.memory_space<vmem>>, vector<1x32xf32>
    %cst_49 = arith.constant 0.000000e+00 : f32
    %47 = vector.broadcast %cst_49 : f32 to vector<64x32xf32>
    %48 = arith.maximumf %42, %47 : vector<64x32xf32>
    %cst_50 = arith.constant dense<0.000000e+00> : vector<64x32xf32>
    %49 = tpu.matmul %48, %43, %cst_50 {dimension_numbers = #tpu.dot_dimension_numbers<[1], [0], [0], [1], [0, 0, 1, 1], [], []>} : vector<64x32xf32>, vector<32x32xf32>, vector<64x32xf32> -> vector<64x32xf32>
    %50 = vector.broadcast %44 : vector<1x32xf32> to vector<64x32xf32>
    %51 = arith.addf %50, %49 : vector<64x32xf32>
    %cst_51 = arith.constant dense<0.000000e+00> : vector<64x32xf32>
    %52 = tpu.matmul %48, %45, %cst_51 {dimension_numbers = #tpu.dot_dimension_numbers<[1], [0], [0], [1], [0, 0, 1, 1], [], []>} : vector<64x32xf32>, vector<32x32xf32>, vector<64x32xf32> -> vector<64x32xf32>
    %53 = vector.broadcast %46 : vector<1x32xf32> to vector<64x32xf32>
    %54 = arith.addf %53, %52 : vector<64x32xf32>
    %cst_52 = arith.constant dense<0.000000e+00> : vector<64x32xf32>
    %55 = tpu.matmul %1, %54, %cst_52 {dimension_numbers = #tpu.dot_dimension_numbers<[1], [0], [0], [1], [0, 0, 1, 1], [], []>} : vector<64x64xf32>, vector<64x32xf32>, vector<64x32xf32> -> vector<64x32xf32>
    %56 = arith.addf %51, %55 : vector<64x32xf32>
    %c0_53 = arith.constant 0 : index
    %c0_54 = arith.constant 0 : index
    %57 = vector.load %arg20[%c0_53, %c0_54] : memref<32x32xf32, #tpu.memory_space<vmem>>, vector<32x32xf32>
    %c0_55 = arith.constant 0 : index
    %c0_56 = arith.constant 0 : index
    %58 = vector.load %arg21[%c0_55, %c0_56] : memref<32x32xf32, #tpu.memory_space<vmem>>, vector<32x32xf32>
    %c0_57 = arith.constant 0 : index
    %c0_58 = arith.constant 0 : index
    %59 = vector.load %arg22[%c0_57, %c0_58] : memref<3x32xf32, #tpu.memory_space<vmem>>, vector<3x32xf32>
    %c0_59 = arith.constant 0 : index
    %c0_60 = arith.constant 0 : index
    %60 = vector.load %arg23[%c0_59, %c0_60] : memref<1x32xf32, #tpu.memory_space<vmem>>, vector<1x32xf32>
    %cst_61 = arith.constant dense<0.000000e+00> : vector<64x32xf32>
    %61 = tpu.matmul %14, %57, %cst_61 {dimension_numbers = #tpu.dot_dimension_numbers<[1], [0], [0], [1], [0, 0, 1, 1], [], []>} : vector<64x32xf32>, vector<32x32xf32>, vector<64x32xf32> -> vector<64x32xf32>
    %62 = vector.broadcast %60 : vector<1x32xf32> to vector<64x32xf32>
    %63 = arith.addf %62, %61 : vector<64x32xf32>
    %cst_62 = arith.constant dense<0.000000e+00> : vector<64x32xf32>
    %64 = tpu.matmul %16, %58, %cst_62 {dimension_numbers = #tpu.dot_dimension_numbers<[1], [0], [0], [1], [0, 0, 1, 1], [], []>} : vector<64x32xf32>, vector<32x32xf32>, vector<64x32xf32> -> vector<64x32xf32>
    %65 = arith.addf %63, %64 : vector<64x32xf32>
    %cst_63 = arith.constant dense<0.000000e+00> : vector<64x32xf32>
    %66 = tpu.matmul %18, %59, %cst_63 {dimension_numbers = #tpu.dot_dimension_numbers<[1], [0], [0], [1], [0, 0, 1, 1], [], []>} : vector<64x3xf32>, vector<3x32xf32>, vector<64x32xf32> -> vector<64x32xf32>
    %67 = arith.addf %65, %66 : vector<64x32xf32>
    %68 = arith.addf %56, %67 : vector<64x32xf32>
    %cst_64 = arith.constant 0.000000e+00 : f32
    %69 = vector.broadcast %cst_64 : f32 to vector<64x32xf32>
    %70 = arith.maximumf %68, %69 : vector<64x32xf32>
    %c0_65 = arith.constant 0 : index
    %c0_66 = arith.constant 0 : index
    %71 = vector.load %arg24[%c0_65, %c0_66] : memref<32x32xf32, #tpu.memory_space<vmem>>, vector<32x32xf32>
    %c0_67 = arith.constant 0 : index
    %c0_68 = arith.constant 0 : index
    %72 = vector.load %arg25[%c0_67, %c0_68] : memref<1x32xf32, #tpu.memory_space<vmem>>, vector<1x32xf32>
    %c0_69 = arith.constant 0 : index
    %c0_70 = arith.constant 0 : index
    %73 = vector.load %arg26[%c0_69, %c0_70] : memref<32x32xf32, #tpu.memory_space<vmem>>, vector<32x32xf32>
    %c0_71 = arith.constant 0 : index
    %c0_72 = arith.constant 0 : index
    %74 = vector.load %arg27[%c0_71, %c0_72] : memref<1x32xf32, #tpu.memory_space<vmem>>, vector<1x32xf32>
    %cst_73 = arith.constant dense<0.000000e+00> : vector<64x32xf32>
    %75 = tpu.matmul %70, %71, %cst_73 {dimension_numbers = #tpu.dot_dimension_numbers<[1], [0], [0], [1], [0, 0, 1, 1], [], []>} : vector<64x32xf32>, vector<32x32xf32>, vector<64x32xf32> -> vector<64x32xf32>
    %76 = vector.broadcast %72 : vector<1x32xf32> to vector<64x32xf32>
    %77 = arith.addf %76, %75 : vector<64x32xf32>
    %cst_74 = arith.constant dense<0.000000e+00> : vector<64x32xf32>
    %78 = tpu.matmul %70, %73, %cst_74 {dimension_numbers = #tpu.dot_dimension_numbers<[1], [0], [0], [1], [0, 0, 1, 1], [], []>} : vector<64x32xf32>, vector<32x32xf32>, vector<64x32xf32> -> vector<64x32xf32>
    %79 = vector.broadcast %74 : vector<1x32xf32> to vector<64x32xf32>
    %80 = arith.addf %79, %78 : vector<64x32xf32>
    %cst_75 = arith.constant dense<0.000000e+00> : vector<64x32xf32>
    %81 = tpu.matmul %1, %80, %cst_75 {dimension_numbers = #tpu.dot_dimension_numbers<[1], [0], [0], [1], [0, 0, 1, 1], [], []>} : vector<64x64xf32>, vector<64x32xf32>, vector<64x32xf32> -> vector<64x32xf32>
    %82 = arith.addf %77, %81 : vector<64x32xf32>
    %c0_76 = arith.constant 0 : index
    %c0_77 = arith.constant 0 : index
    %83 = vector.load %arg28[%c0_76, %c0_77] : memref<32x32xf32, #tpu.memory_space<vmem>>, vector<32x32xf32>
    %c0_78 = arith.constant 0 : index
    %c0_79 = arith.constant 0 : index
    %84 = vector.load %arg29[%c0_78, %c0_79] : memref<1x32xf32, #tpu.memory_space<vmem>>, vector<1x32xf32>
    %c0_80 = arith.constant 0 : index
    %c0_81 = arith.constant 0 : index
    %85 = vector.load %arg30[%c0_80, %c0_81] : memref<32x32xf32, #tpu.memory_space<vmem>>, vector<32x32xf32>
    %c0_82 = arith.constant 0 : index
    %c0_83 = arith.constant 0 : index
    %86 = vector.load %arg31[%c0_82, %c0_83] : memref<1x32xf32, #tpu.memory_space<vmem>>, vector<1x32xf32>
    %cst_84 = arith.constant 0.000000e+00 : f32
    %87 = vector.broadcast %cst_84 : f32 to vector<64x32xf32>
    %88 = arith.maximumf %82, %87 : vector<64x32xf32>
    %cst_85 = arith.constant dense<0.000000e+00> : vector<64x32xf32>
    %89 = tpu.matmul %88, %83, %cst_85 {dimension_numbers = #tpu.dot_dimension_numbers<[1], [0], [0], [1], [0, 0, 1, 1], [], []>} : vector<64x32xf32>, vector<32x32xf32>, vector<64x32xf32> -> vector<64x32xf32>
    %90 = vector.broadcast %84 : vector<1x32xf32> to vector<64x32xf32>
    %91 = arith.addf %90, %89 : vector<64x32xf32>
    %cst_86 = arith.constant dense<0.000000e+00> : vector<64x32xf32>
    %92 = tpu.matmul %88, %85, %cst_86 {dimension_numbers = #tpu.dot_dimension_numbers<[1], [0], [0], [1], [0, 0, 1, 1], [], []>} : vector<64x32xf32>, vector<32x32xf32>, vector<64x32xf32> -> vector<64x32xf32>
    %93 = vector.broadcast %86 : vector<1x32xf32> to vector<64x32xf32>
    %94 = arith.addf %93, %92 : vector<64x32xf32>
    %cst_87 = arith.constant dense<0.000000e+00> : vector<64x32xf32>
    %95 = tpu.matmul %1, %94, %cst_87 {dimension_numbers = #tpu.dot_dimension_numbers<[1], [0], [0], [1], [0, 0, 1, 1], [], []>} : vector<64x64xf32>, vector<64x32xf32>, vector<64x32xf32> -> vector<64x32xf32>
    %96 = arith.addf %91, %95 : vector<64x32xf32>
    %97 = arith.addf %96, %70 : vector<64x32xf32>
    %c0_88 = arith.constant 0 : index
    %c0_89 = arith.constant 0 : index
    %98 = vector.load %arg32[%c0_88, %c0_89] : memref<32x3xf32, #tpu.memory_space<vmem>>, vector<32x3xf32>
    %c0_90 = arith.constant 0 : index
    %c0_91 = arith.constant 0 : index
    %99 = vector.load %arg33[%c0_90, %c0_91] : memref<1x3xf32, #tpu.memory_space<vmem>>, vector<1x3xf32>
    %c0_92 = arith.constant 0 : index
    %c0_93 = arith.constant 0 : index
    %100 = vector.load %arg34[%c0_92, %c0_93] : memref<32x3xf32, #tpu.memory_space<vmem>>, vector<32x3xf32>
    %c0_94 = arith.constant 0 : index
    %c0_95 = arith.constant 0 : index
    %101 = vector.load %arg35[%c0_94, %c0_95] : memref<1x3xf32, #tpu.memory_space<vmem>>, vector<1x3xf32>
    %cst_96 = arith.constant dense<0.000000e+00> : vector<64x3xf32>
    %102 = tpu.matmul %97, %98, %cst_96 {dimension_numbers = #tpu.dot_dimension_numbers<[1], [0], [0], [1], [0, 0, 1, 1], [], []>} : vector<64x32xf32>, vector<32x3xf32>, vector<64x3xf32> -> vector<64x3xf32>
    %103 = vector.broadcast %99 : vector<1x3xf32> to vector<64x3xf32>
    %104 = arith.addf %103, %102 : vector<64x3xf32>
    %cst_97 = arith.constant dense<0.000000e+00> : vector<64x3xf32>
    %105 = tpu.matmul %97, %100, %cst_97 {dimension_numbers = #tpu.dot_dimension_numbers<[1], [0], [0], [1], [0, 0, 1, 1], [], []>} : vector<64x32xf32>, vector<32x3xf32>, vector<64x3xf32> -> vector<64x3xf32>
    %106 = vector.broadcast %101 : vector<1x3xf32> to vector<64x3xf32>
    %107 = arith.addf %106, %105 : vector<64x3xf32>
    %cst_98 = arith.constant dense<0.000000e+00> : vector<64x3xf32>
    %108 = tpu.matmul %1, %107, %cst_98 {dimension_numbers = #tpu.dot_dimension_numbers<[1], [0], [0], [1], [0, 0, 1, 1], [], []>} : vector<64x64xf32>, vector<64x3xf32>, vector<64x3xf32> -> vector<64x3xf32>
    %109 = arith.addf %104, %108 : vector<64x3xf32>
    %110 = math.tanh %109 : vector<64x3xf32>
    %111 = arith.addf %0, %110 : vector<64x3xf32>
    %c0_99 = arith.constant 0 : index
    %c0_100 = arith.constant 0 : index
    %112 = vector.load %arg36[%c0_99, %c0_100] : memref<64x3xf32, #tpu.memory_space<vmem>>, vector<64x3xf32>
    tpu.vector_store %arg36[%c0_99, %c0_100], %111 {strides = array<i32>} : memref<64x3xf32, #tpu.memory_space<vmem>>, vector<64x3xf32>,
    %c0_101 = arith.constant 0 : index
    %c0_102 = arith.constant 0 : index
    %113 = vector.load %arg37[%c0_101, %c0_102] : memref<64x32xf32, #tpu.memory_space<vmem>>, vector<64x32xf32>
    tpu.vector_store %arg37[%c0_101, %c0_102], %97 {strides = array<i32>} : memref<64x32xf32, #tpu.memory_space<vmem>>, vector<64x32xf32>,
    return
  }
  func.func @transform_0(%arg0: i32) -> (i32, i32) {
    %c0_i32 = arith.constant 0 : i32
    %c0_i32_0 = arith.constant 0 : i32
    %c0_i32_1 = arith.constant 0 : i32
    return %c0_i32, %c0_i32_0 : i32, i32
  }
  func.func @transform_1(%arg0: i32) -> (i32, i32) {
    %c0_i32 = arith.constant 0 : i32
    %c0_i32_0 = arith.constant 0 : i32
    %c0_i32_1 = arith.constant 0 : i32
    return %c0_i32, %c0_i32_0 : i32, i32
  }
  func.func @transform_2(%arg0: i32) -> (i32, i32) {
    %c0_i32 = arith.constant 0 : i32
    %c0_i32_0 = arith.constant 0 : i32
    %c0_i32_1 = arith.constant 0 : i32
    return %c0_i32, %c0_i32_0 : i32, i32
  }
  func.func @transform_3(%arg0: i32) -> (i32, i32) {
    %c0_i32 = arith.constant 0 : i32
    %c0_i32_0 = arith.constant 0 : i32
    %c0_i32_1 = arith.constant 0 : i32
    return %c0_i32, %c0_i32_0 : i32, i32
  }
  func.func @transform_4(%arg0: i32) -> (i32, i32) {
    %c0_i32 = arith.constant 0 : i32
    %c0_i32_0 = arith.constant 0 : i32
    %c0_i32_1 = arith.constant 0 : i32
    return %c0_i32, %c0_i32_0 : i32, i32
  }
  func.func @transform_5(%arg0: i32) -> (i32, i32) {
    %c0_i32 = arith.constant 0 : i32
    %c0_i32_0 = arith.constant 0 : i32
    %c0_i32_1 = arith.constant 0 : i32
    return %c0_i32, %c0_i32_0 : i32, i32
  }
  func.func @transform_6(%arg0: i32) -> (i32, i32) {
    %c0_i32 = arith.constant 0 : i32
    %c0_i32_0 = arith.constant 0 : i32
    %c0_i32_1 = arith.constant 0 : i32
    return %c0_i32, %c0_i32_0 : i32, i32
  }
  func.func @transform_7(%arg0: i32) -> (i32, i32) {
    %c0_i32 = arith.constant 0 : i32
    %c0_i32_0 = arith.constant 0 : i32
    %c0_i32_1 = arith.constant 0 : i32
    return %c0_i32, %c0_i32_0 : i32, i32
  }
  func.func @transform_8(%arg0: i32) -> (i32, i32) {
    %c0_i32 = arith.constant 0 : i32
    %c0_i32_0 = arith.constant 0 : i32
    %c0_i32_1 = arith.constant 0 : i32
    return %c0_i32, %c0_i32_0 : i32, i32
  }
  func.func @transform_9(%arg0: i32) -> (i32, i32) {
    %c0_i32 = arith.constant 0 : i32
    %c0_i32_0 = arith.constant 0 : i32
    %c0_i32_1 = arith.constant 0 : i32
    return %c0_i32, %c0_i32_0 : i32, i32
  }
  func.func @transform_10(%arg0: i32) -> (i32, i32) {
    %c0_i32 = arith.constant 0 : i32
    %c0_i32_0 = arith.constant 0 : i32
    %c0_i32_1 = arith.constant 0 : i32
    return %c0_i32, %c0_i32_0 : i32, i32
  }
  func.func @transform_11(%arg0: i32) -> (i32, i32) {
    %c0_i32 = arith.constant 0 : i32
    %c0_i32_0 = arith.constant 0 : i32
    %c0_i32_1 = arith.constant 0 : i32
    return %c0_i32, %c0_i32_0 : i32, i32
  }
  func.func @transform_12(%arg0: i32) -> (i32, i32) {
    %c0_i32 = arith.constant 0 : i32
    %c0_i32_0 = arith.constant 0 : i32
    %c0_i32_1 = arith.constant 0 : i32
    return %c0_i32, %c0_i32_0 : i32, i32
  }
  func.func @transform_13(%arg0: i32) -> (i32, i32) {
    %c0_i32 = arith.constant 0 : i32
    %c0_i32_0 = arith.constant 0 : i32
    %c0_i32_1 = arith.constant 0 : i32
    return %c0_i32, %c0_i32_0 : i32, i32
  }
  func.func @transform_14(%arg0: i32) -> (i32, i32) {
    %c0_i32 = arith.constant 0 : i32
    %c0_i32_0 = arith.constant 0 : i32
    %c0_i32_1 = arith.constant 0 : i32
    return %c0_i32, %c0_i32_0 : i32, i32
  }
  func.func @transform_15(%arg0: i32) -> (i32, i32) {
    %c0_i32 = arith.constant 0 : i32
    %c0_i32_0 = arith.constant 0 : i32
    %c0_i32_1 = arith.constant 0 : i32
    return %c0_i32, %c0_i32_0 : i32, i32
  }
  func.func @transform_16(%arg0: i32) -> (i32, i32) {
    %c0_i32 = arith.constant 0 : i32
    %c0_i32_0 = arith.constant 0 : i32
    %c0_i32_1 = arith.constant 0 : i32
    return %c0_i32, %c0_i32_0 : i32, i32
  }
  func.func @transform_17(%arg0: i32) -> (i32, i32) {
    %c0_i32 = arith.constant 0 : i32
    %c0_i32_0 = arith.constant 0 : i32
    %c0_i32_1 = arith.constant 0 : i32
    return %c0_i32, %c0_i32_0 : i32, i32
  }
  func.func @transform_18(%arg0: i32) -> (i32, i32) {
    %c0_i32 = arith.constant 0 : i32
    %c0_i32_0 = arith.constant 0 : i32
    %c0_i32_1 = arith.constant 0 : i32
    return %c0_i32, %c0_i32_0 : i32, i32
  }
  func.func @transform_19(%arg0: i32) -> (i32, i32) {
    %c0_i32 = arith.constant 0 : i32
    %c0_i32_0 = arith.constant 0 : i32
    %c0_i32_1 = arith.constant 0 : i32
    return %c0_i32, %c0_i32_0 : i32, i32
  }
  func.func @transform_20(%arg0: i32) -> (i32, i32) {
    %c0_i32 = arith.constant 0 : i32
    %c0_i32_0 = arith.constant 0 : i32
    %c0_i32_1 = arith.constant 0 : i32
    return %c0_i32, %c0_i32_0 : i32, i32
  }
  func.func @transform_21(%arg0: i32) -> (i32, i32) {
    %c0_i32 = arith.constant 0 : i32
    %c0_i32_0 = arith.constant 0 : i32
    %c0_i32_1 = arith.constant 0 : i32
    return %c0_i32, %c0_i32_0 : i32, i32
  }
  func.func @transform_22(%arg0: i32) -> (i32, i32) {
    %c0_i32 = arith.constant 0 : i32
    %c0_i32_0 = arith.constant 0 : i32
    %c0_i32_1 = arith.constant 0 : i32
    return %c0_i32, %c0_i32_0 : i32, i32
  }
  func.func @transform_23(%arg0: i32) -> (i32, i32) {
    %c0_i32 = arith.constant 0 : i32
    %c0_i32_0 = arith.constant 0 : i32
    %c0_i32_1 = arith.constant 0 : i32
    return %c0_i32, %c0_i32_0 : i32, i32
  }
  func.func @transform_24(%arg0: i32) -> (i32, i32) {
    %c0_i32 = arith.constant 0 : i32
    %c0_i32_0 = arith.constant 0 : i32
    %c0_i32_1 = arith.constant 0 : i32
    return %c0_i32, %c0_i32_0 : i32, i32
  }
  func.func @transform_25(%arg0: i32) -> (i32, i32) {
    %c0_i32 = arith.constant 0 : i32
    %c0_i32_0 = arith.constant 0 : i32
    %c0_i32_1 = arith.constant 0 : i32
    return %c0_i32, %c0_i32_0 : i32, i32
  }
  func.func @transform_26(%arg0: i32) -> (i32, i32) {
    %c0_i32 = arith.constant 0 : i32
    %c0_i32_0 = arith.constant 0 : i32
    %c0_i32_1 = arith.constant 0 : i32
    return %c0_i32, %c0_i32_0 : i32, i32
  }
  func.func @transform_27(%arg0: i32) -> (i32, i32) {
    %c0_i32 = arith.constant 0 : i32
    %c0_i32_0 = arith.constant 0 : i32
    %c0_i32_1 = arith.constant 0 : i32
    return %c0_i32, %c0_i32_0 : i32, i32
  }
  func.func @transform_28(%arg0: i32) -> (i32, i32) {
    %c0_i32 = arith.constant 0 : i32
    %c0_i32_0 = arith.constant 0 : i32
    %c0_i32_1 = arith.constant 0 : i32
    return %c0_i32, %c0_i32_0 : i32, i32
  }
  func.func @transform_29(%arg0: i32) -> (i32, i32) {
    %c0_i32 = arith.constant 0 : i32
    %c0_i32_0 = arith.constant 0 : i32
    %c0_i32_1 = arith.constant 0 : i32
    return %c0_i32, %c0_i32_0 : i32, i32
  }
  func.func @transform_30(%arg0: i32) -> (i32, i32) {
    %c0_i32 = arith.constant 0 : i32
    %c0_i32_0 = arith.constant 0 : i32
    %c0_i32_1 = arith.constant 0 : i32
    return %c0_i32, %c0_i32_0 : i32, i32
  }
  func.func @transform_31(%arg0: i32) -> (i32, i32) {
    %c0_i32 = arith.constant 0 : i32
    %c0_i32_0 = arith.constant 0 : i32
    %c0_i32_1 = arith.constant 0 : i32
    return %c0_i32, %c0_i32_0 : i32, i32
  }
  func.func @transform_32(%arg0: i32) -> (i32, i32) {
    %c0_i32 = arith.constant 0 : i32
    %c0_i32_0 = arith.constant 0 : i32
    %c0_i32_1 = arith.constant 0 : i32
    return %c0_i32, %c0_i32_0 : i32, i32
  }
  func.func @transform_33(%arg0: i32) -> (i32, i32) {
    %c0_i32 = arith.constant 0 : i32
    %c0_i32_0 = arith.constant 0 : i32
    %c0_i32_1 = arith.constant 0 : i32
    return %c0_i32, %c0_i32_0 : i32, i32
  }
  func.func @transform_34(%arg0: i32) -> (i32, i32) {
    %c0_i32 = arith.constant 0 : i32
    %c0_i32_0 = arith.constant 0 : i32
    %c0_i32_1 = arith.constant 0 : i32
    return %c0_i32, %c0_i32_0 : i32, i32
  }
  func.func @transform_35(%arg0: i32) -> (i32, i32) {
    %c0_i32 = arith.constant 0 : i32
    %c0_i32_0 = arith.constant 0 : i32
    %c0_i32_1 = arith.constant 0 : i32
    return %c0_i32, %c0_i32_0 : i32, i32
  }
  func.func @transform_36(%arg0: i32) -> (i32, i32) {
    %c0_i32 = arith.constant 0 : i32
    %c0_i32_0 = arith.constant 0 : i32
    %c0_i32_1 = arith.constant 0 : i32
    return %c0_i32, %c0_i32_0 : i32, i32
  }
}

</mosaic_0001>

<llo_original>
// kernel: squeeze.16
$region0: #{squeeze.16}
  %s0 = inlined_call_operand.vmem [shape: f32[1,4,16,16], index: 0, kind: input, shape index: {}]
  %s1 = inlined_call_operand.vmem [shape: f32[4,256], index: 1, kind: output, shape index: {}]
  $region1: #{squeeze.16} parent=0
    #allocation0 [shape = 'u8[8192]{0}', space=vmem, size = 0x2000, scoped, tag = 'scoped mem for output reshape']
    %v2 = vld [vmem:[%s0] ss:$8 sm:$0xf]
    %v3 = vld [vmem:[%s0] ss:$8 sm:$0xf0]
    %vm4 = vcmask 1047556
    %v5 = vsel %vm4, %v3, %v2
    %vm6 = vcmask 130048
    %7 = vst.msk [vmem:[#allocation0] ss:$8 sm:$0x3] %vm6, %v5
    %s8 = scalar_lea.vmem [#allocation0], 4294967281
    %9 = vst.msk [vmem:[%s8] ss:$8 sm:$0xc] %vm6, %v5
    %s10 = scalar_lea.vmem [#allocation0], 4294967266
    %11 = vst.msk [vmem:[%s10] ss:$8 sm:$0x30] %vm6, %v5
    %s12 = scalar_lea.vmem [#allocation0], 4294967251
    %13 = vst.msk [vmem:[%s12] ss:$8 sm:$0xc0] %vm6, %v5
    %s14 = scalar_lea.vmem %s0, 7
    %s15 = smov 3
    %v16 = vld [vmem:[%s14] ss:$16 sm:%s15]
    %s17 = scalar_lea.vmem %s0, 7
    %s18 = smov 12
    %v19 = vld [vmem:[%s17] ss:$16 sm:%s18]
    %vm20 = vcmask 1043458
    %v21 = vsel %vm20, %v19, %v16
    %s22 = scalar_lea.vmem %s0, 4294967247
    %s23 = smov 48
    %v24 = vld [vmem:[%s22] ss:$16 sm:%s23]
    %vm25 = vcmask 1045508
    %v26 = vsel %vm25, %v24, %v21
    %s27 = scalar_lea.vmem %s0, 4294967247
    %s28 = smov 192
    %v29 = vld [vmem:[%s27] ss:$16 sm:%s28]
    %vm30 = vcmask 1047558
    %v31 = vsel %vm30, %v29, %v26
    %32 = vrot.lane.b32.xlu0 %v31, 112
    %v33 = vpop.permute.xlu0 %32
    %vm34 = vcmask 1048448
    %35 = vst.msk [vmem:[#allocation0] sm:$0xf] %vm34, %v33
    %s36 = scalar_lea.vmem [#allocation0], 4
    %37 = vst.msk [vmem:[%s36] sm:$0xf0] %vm34, %v33
    %s38 = scalar_lea.vmem %s0, 6
    %s39 = smov 3
    %v40 = vld [vmem:[%s38] ss:$16 sm:%s39]
    %s41 = scalar_lea.vmem %s0, 6
    %s42 = smov 12
    %v43 = vld [vmem:[%s41] ss:$16 sm:%s42]
    %vm44 = vcmask 1043458
    %v45 = vsel %vm44, %v43, %v40
    %s46 = scalar_lea.vmem %s0, 4294967246
    %s47 = smov 48
    %v48 = vld [vmem:[%s46] ss:$16 sm:%s47]
    %vm49 = vcmask 1045508
    %v50 = vsel %vm49, %v48, %v45
    %s51 = scalar_lea.vmem %s0, 4294967246
    %s52 = smov 192
    %v53 = vld [vmem:[%s51] ss:$16 sm:%s52]
    %vm54 = vcmask 1047558
    %v55 = vsel %vm54, %v53, %v50
    %56 = vrot.lane.b32.xlu0 %v55, 96
    %v57 = vpop.permute.xlu0 %56
    %vm58 = vcmask 917248
    %59 = vst.msk [vmem:[#allocation0] sm:$0xf] %vm58, %v57
    %s60 = scalar_lea.vmem [#allocation0], 4
    %61 = vst.msk [vmem:[%s60] sm:$0xf0] %vm58, %v57
    %s62 = scalar_lea.vmem %s0, 5
    %s63 = smov 3
    %v64 = vld [vmem:[%s62] ss:$16 sm:%s63]
    %s65 = scalar_lea.vmem %s0, 5
    %s66 = smov 12
    %v67 = vld [vmem:[%s65] ss:$16 sm:%s66]
    %vm68 = vcmask 1043458
    %v69 = vsel %vm68, %v67, %v64
    %s70 = scalar_lea.vmem %s0, 4294967245
    %s71 = smov 48
    %v72 = vld [vmem:[%s70] ss:$16 sm:%s71]
    %vm73 = vcmask 1045508
    %v74 = vsel %vm73, %v72, %v69
    %s75 = scalar_lea.vmem %s0, 4294967245
    %s76 = smov 192
    %v77 = vld [vmem:[%s75] ss:$16 sm:%s76]
    %vm78 = vcmask 1047558
    %v79 = vsel %vm78, %v77, %v74
    %80 = vrot.lane.b32.xlu0 %v79, 80
    %v81 = vpop.permute.xlu0 %80
    %vm82 = vcmask 786048
    %83 = vst.msk [vmem:[#allocation0] sm:$0xf] %vm82, %v81
    %s84 = scalar_lea.vmem [#allocation0], 4
    %85 = vst.msk [vmem:[%s84] sm:$0xf0] %vm82, %v81
    %s86 = scalar_lea.vmem %s0, 4
    %s87 = smov 3
    %v88 = vld [vmem:[%s86] ss:$16 sm:%s87]
    %s89 = scalar_lea.vmem %s0, 4
    %s90 = smov 12
    %v91 = vld [vmem:[%s89] ss:$16 sm:%s90]
    %vm92 = vcmask 1043458
    %v93 = vsel %vm92, %v91, %v88
    %s94 = scalar_lea.vmem %s0, 4294967244
    %s95 = smov 48
    %v96 = vld [vmem:[%s94] ss:$16 sm:%s95]
    %vm97 = vcmask 1045508
    %v98 = vsel %vm97, %v96, %v93
    %s99 = scalar_lea.vmem %s0, 4294967244
    %s100 = smov 192
    %v101 = vld [vmem:[%s99] ss:$16 sm:%s100]
    %vm102 = vcmask 1047558
    %v103 = vsel %vm102, %v101, %v98
    %104 = vrot.lane.b32.xlu0 %v103, 64
    %v105 = vpop.permute.xlu0 %104
    %vm106 = vcmask 654848
    %107 = vst.msk [vmem:[#allocation0] sm:$0xf] %vm106, %v105
    %s108 = scalar_lea.vmem [#allocation0], 4
    %109 = vst.msk [vmem:[%s108] sm:$0xf0] %vm106, %v105
    %s110 = scalar_lea.vmem %s0, 3
    %s111 = smov 3
    %v112 = vld [vmem:[%s110] ss:$16 sm:%s111]
    %s113 = scalar_lea.vmem %s0, 3
    %s114 = smov 12
    %v115 = vld [vmem:[%s113] ss:$16 sm:%s114]
    %vm116 = vcmask 1043458
    %v117 = vsel %vm116, %v115, %v112
    %s118 = scalar_lea.vmem %s0, 4294967243
    %s119 = smov 48
    %v120 = vld [vmem:[%s118] ss:$16 sm:%s119]
    %vm121 = vcmask 1045508
    %v122 = vsel %vm121, %v120, %v117
    %s123 = scalar_lea.vmem %s0, 4294967243
    %s124 = smov 192
    %v125 = vld [vmem:[%s123] ss:$16 sm:%s124]
    %vm126 = vcmask 1047558
    %v127 = vsel %vm126, %v125, %v122
    %128 = vrot.lane.b32.xlu0 %v127, 48
    %v129 = vpop.permute.xlu0 %128
    %vm130 = vcmask 523648
    %131 = vst.msk [vmem:[#allocation0] sm:$0xf] %vm130, %v129
    %s132 = scalar_lea.vmem [#allocation0], 4
    %133 = vst.msk [vmem:[%s132] sm:$0xf0] %vm130, %v129
    %s134 = scalar_lea.vmem %s0, 2
    %s135 = smov 3
    %v136 = vld [vmem:[%s134] ss:$16 sm:%s135]
    %s137 = scalar_lea.vmem %s0, 2
    %s138 = smov 12
    %v139 = vld [vmem:[%s137] ss:$16 sm:%s138]
    %vm140 = vcmask 1043458
    %v141 = vsel %vm140, %v139, %v136
    %s142 = scalar_lea.vmem %s0, 4294967242
    %s143 = smov 48
    %v144 = vld [vmem:[%s142] ss:$16 sm:%s143]
    %vm145 = vcmask 1045508
    %v146 = vsel %vm145, %v144, %v141
    %s147 = scalar_lea.vmem %s0, 4294967242
    %s148 = smov 192
    %v149 = vld [vmem:[%s147] ss:$16 sm:%s148]
    %vm150 = vcmask 1047558
    %v151 = vsel %vm150, %v149, %v146
    %152 = vrot.lane.b32.xlu0 %v151, 32
    %v153 = vpop.permute.xlu0 %152
    %vm154 = vcmask 392448
    %155 = vst.msk [vmem:[#allocation0] sm:$0xf] %vm154, %v153
    %s156 = scalar_lea.vmem [#allocation0], 4
    %157 = vst.msk [vmem:[%s156] sm:$0xf0] %vm154, %v153
    %s158 = scalar_lea.vmem %s0, 1
    %s159 = smov 3
    %v160 = vld [vmem:[%s158] ss:$16 sm:%s159]
    %s161 = scalar_lea.vmem %s0, 1
    %s162 = smov 12
    %v163 = vld [vmem:[%s161] ss:$16 sm:%s162]
    %vm164 = vcmask 1043458
    %v165 = vsel %vm164, %v163, %v160
    %s166 = scalar_lea.vmem %s0, 4294967241
    %s167 = smov 48
    %v168 = vld [vmem:[%s166] ss:$16 sm:%s167]
    %vm169 = vcmask 1045508
    %v170 = vsel %vm169, %v168, %v165
    %s171 = scalar_lea.vmem %s0, 4294967241
    %s172 = smov 192
    %v173 = vld [vmem:[%s171] ss:$16 sm:%s172]
    %vm174 = vcmask 1047558
    %v175 = vsel %vm174, %v173, %v170
    %176 = vrot.lane.b32.xlu0 %v175, 16
    %v177 = vpop.permute.xlu0 %176
    %vm178 = vcmask 261248
    %179 = vst.msk [vmem:[#allocation0] sm:$0xf] %vm178, %v177
    %s180 = scalar_lea.vmem [#allocation0], 4
    %181 = vst.msk [vmem:[%s180] sm:$0xf0] %vm178, %v177
    %s183 = sshllo.u32 0, 4
    %v185 = vld [vmem:[#allocation0] sm:%s183]
    %s186 = sshllo.u32 0, 4
    %187 = vst [vmem:[%s1] sm:%s186] %v185
    %s188 = scalar_lea.vmem [#allocation0], 8
    %v189 = vld [vmem:[%s188] sm:%s183]
    %s190 = sshllo.u32 0, 4
    %s191 = scalar_lea.vmem %s1, 4
    %192 = vst [vmem:[%s191] sm:%s190] %v189

// kernel: mesh_head_forward.2
$region0: #{mesh_head_forward.2}
  #allocation0 [shape = 'u32[]', space=smem, size = 0x4, offset = 0x4, fixed_abs, tag = 'smem constant byte address 0x4 - core index']
  #allocation1 [shape = 'u32[144,128]{1,0:T(1,128)}', space=vmem, size = 0x12000, scoped, tag = 'internal scratch']
  %s0 = inlined_call_operand.smem [shape: u32[33], index: -1, kind: input, shape index: {}]
  %s1 = sld [smem:[%s0]]
  %s2 = scalar_lea.smem %s0, 1
  %s3 = sld [smem:[%s2]]
  %s4 = scalar_lea.smem %s0, 2
  %s5 = sld [smem:[%s4]]
  %s6 = scalar_lea.smem %s0, 3
  %s7 = sld [smem:[%s6]]
  %s8 = scalar_lea.smem %s0, 4
  %s9 = sld [smem:[%s8]]
  %s10 = scalar_lea.smem %s0, 5
  %s11 = sld [smem:[%s10]]
  %s12 = scalar_lea.smem %s0, 6
  %s13 = sld [smem:[%s12]]
  %s14 = scalar_lea.smem %s0, 7
  %s15 = sld [smem:[%s14]]
  %s16 = scalar_lea.smem %s0, 8
  %s17 = sld [smem:[%s16]]
  %s18 = scalar_lea.smem %s0, 9
  %s19 = sld [smem:[%s18]]
  %s20 = scalar_lea.smem %s0, 10
  %s21 = sld [smem:[%s20]]
  %s22 = scalar_lea.smem %s0, 11
  %s23 = sld [smem:[%s22]]
  %s24 = scalar_lea.smem %s0, 12
  %s25 = sld [smem:[%s24]]
  %s26 = scalar_lea.smem %s0, 13
  %s27 = sld [smem:[%s26]]
  %s28 = scalar_lea.smem %s0, 14
  %s29 = sld [smem:[%s28]]
  %s30 = scalar_lea.smem %s0, 15
  %s31 = sld [smem:[%s30]]
  %s32 = scalar_lea.smem %s0, 16
  %s33 = sld [smem:[%s32]]
  %s34 = scalar_lea.smem %s0, 17
  %s35 = sld [smem:[%s34]]
  %s36 = scalar_lea.smem %s0, 18
  %s37 = sld [smem:[%s36]]
  %s38 = scalar_lea.smem %s0, 19
  %s39 = sld [smem:[%s38]]
  %s40 = scalar_lea.smem %s0, 20
  %s41 = sld [smem:[%s40]]
  %s42 = scalar_lea.smem %s0, 21
  %s43 = sld [smem:[%s42]]
  %s44 = scalar_lea.smem %s0, 22
  %s45 = sld [smem:[%s44]]
  %s46 = scalar_lea.smem %s0, 23
  %s47 = sld [smem:[%s46]]
  %s48 = scalar_lea.smem %s0, 24
  %s49 = sld [smem:[%s48]]
  %s50 = scalar_lea.smem %s0, 25
  %s51 = sld [smem:[%s50]]
  %s52 = scalar_lea.smem %s0, 26
  %s53 = sld [smem:[%s52]]
  %s54 = scalar_lea.smem %s0, 27
  %s55 = sld [smem:[%s54]]
  %s56 = scalar_lea.smem %s0, 28
  %s57 = sld [smem:[%s56]]
  %s58 = scalar_lea.smem %s0, 29
  %s59 = sld [smem:[%s58]]
  %s60 = scalar_lea.smem %s0, 30
  %s61 = sld [smem:[%s60]]
  %s62 = scalar_lea.smem %s0, 31
  %s63 = sld [smem:[%s62]]
  %s64 = scalar_lea.smem %s0, 32
  %s65 = sld [smem:[%s64]]
  %66 = xla_tuple %s63, %s65
  %s67 = sld [smem:[#allocation0]]
  $region150: #{mesh_head_forward.2} parent=0
    _
  %s69 = ssub.s32 1, %s67
  %s70 = scalar_select 0, %s69, %s67
  $region1: #{mesh_head_forward.2} parent=0
    #allocation2 [shape = 'u8[32768]{0}', space=vmem, size = 0x8000, scoped, tag = 'input window, operand 1, single buffered']
    #allocation3 [shape = 's32[1]{0}', space=sflag, size = 0x4, scoped, tag = 'scoped memory for mesh_head_forward.2']
    #allocation4 [shape = 'u8[65536]{0}', space=vmem, size = 0x10000, scoped, tag = 'input window, operand 2, single buffered']
    #allocation5 [shape = 's32[1]{0}', space=sflag, size = 0x4, scoped, tag = 'scoped memory for mesh_head_forward.2']
    %71 = vsyncpa [#allocation3], 0
    %72 = vsyncpa [#allocation5], 0
    // Predicated region
    $region2: #{mesh_head_forward.2} parent=1 // pred_check
      _
    $region3: #{mesh_head_forward.2} parent=1 // pred_check_branch
      %74 = sbr.rel (0) target = $region5
    $region4: #{mesh_head_forward.2} parent=1 // pred_region
      _
    $region5: #{mesh_head_forward.2} parent=1 // pred_fallthru
      _
    // Predicated region
    $region6: #{mesh_head_forward.2} parent=1 // pred_check
      _
    $region7: #{mesh_head_forward.2} parent=1 // pred_check_branch
      %76 = sbr.rel (0) target = $region9
    $region8: #{mesh_head_forward.2} parent=1 // pred_region
      %s78 = ssub.s32 1024, 1024
      %79 = vsyncadd [#allocation3], %s78
      %s80 = sshll.u32 [#allocation2], 4
      %s81 = int_to_ptr.vmem [resolvable:$true] %s80
      %86 = dma.hbm_to_vmem [thread:$0]  %s3, 1024, %s81, [#allocation3], 128, 128, 8
    $region9: #{mesh_head_forward.2} parent=1 // pred_fallthru
      _
    // Predicated region
    $region10: #{mesh_head_forward.2} parent=1 // pred_check
      _
    $region11: #{mesh_head_forward.2} parent=1 // pred_check_branch
      %88 = sbr.rel (0) target = $region13
    $region12: #{mesh_head_forward.2} parent=1 // pred_region
      %s90 = ssub.s32 2048, 2048
      %91 = vsyncadd [#allocation5], %s90
      %s92 = sshll.u32 [#allocation4], 4
      %s93 = int_to_ptr.vmem [resolvable:$true] %s92
      %98 = dma.hbm_to_vmem [thread:$0]  %s5, 2048, %s93, [#allocation5], 256, 256, 16
    $region13: #{mesh_head_forward.2} parent=1 // pred_fallthru
      _
    // Predicated region
    $region14: #{mesh_head_forward.2} parent=1 // pred_check
      _
    $region15: #{mesh_head_forward.2} parent=1 // pred_check_branch
      %100 = sbr.rel (0) target = $region17
    $region16: #{mesh_head_forward.2} parent=1 // pred_region
      _
    $region17: #{mesh_head_forward.2} parent=1 // pred_fallthru
      _
    // Predicated region
    $region18: #{mesh_head_forward.2} parent=1 // pred_check
      _
    $region19: #{mesh_head_forward.2} parent=1 // pred_check_branch
      %102 = sbr.rel (0) target = $region21
    $region20: #{mesh_head_forward.2} parent=1 // pred_region
      _
    $region21: #{mesh_head_forward.2} parent=1 // pred_fallthru
      _
    // Predicated region
    $region22: #{mesh_head_forward.2} parent=1 // pred_check
      _
    $region23: #{mesh_head_forward.2} parent=1 // pred_check_branch
      %104 = sbr.rel (0) target = $region25
    $region24: #{mesh_head_forward.2} parent=1 // pred_region
      _
    $region25: #{mesh_head_forward.2} parent=1 // pred_fallthru
      _
    // Predicated region
    $region26: #{mesh_head_forward.2} parent=1 // pred_check
      _
    $region27: #{mesh_head_forward.2} parent=1 // pred_check_branch
      %106 = sbr.rel (0) target = $region29
    $region28: #{mesh_head_forward.2} parent=1 // pred_region
      _
    $region29: #{mesh_head_forward.2} parent=1 // pred_fallthru
      _
    // Predicated region
    $region30: #{mesh_head_forward.2} parent=1 // pred_check
      _
    $region31: #{mesh_head_forward.2} parent=1 // pred_check_branch
      %108 = sbr.rel (0) target = $region33
    $region32: #{mesh_head_forward.2} parent=1 // pred_region
      _
    $region33: #{mesh_head_forward.2} parent=1 // pred_fallthru
      _
    // Predicated region
    $region34: #{mesh_head_forward.2} parent=1 // pred_check
      _
    $region35: #{mesh_head_forward.2} parent=1 // pred_check_branch
      %110 = sbr.rel (0) target = $region37
    $region36: #{mesh_head_forward.2} parent=1 // pred_region
      _
    $region37: #{mesh_head_forward.2} parent=1 // pred_fallthru
      _
    // Predicated region
    $region38: #{mesh_head_forward.2} parent=1 // pred_check
      _
    $region39: #{mesh_head_forward.2} parent=1 // pred_check_branch
      %112 = sbr.rel (0) target = $region41
    $region40: #{mesh_head_forward.2} parent=1 // pred_region
      _
    $region41: #{mesh_head_forward.2} parent=1 // pred_fallthru
      _
    // Predicated region
    $region42: #{mesh_head_forward.2} parent=1 // pred_check
      _
    $region43: #{mesh_head_forward.2} parent=1 // pred_check_branch
      %114 = sbr.rel (0) target = $region45
    $region44: #{mesh_head_forward.2} parent=1 // pred_region
      _
    $region45: #{mesh_head_forward.2} parent=1 // pred_fallthru
      _
    // Predicated region
    $region46: #{mesh_head_forward.2} parent=1 // pred_check
      _
    $region47: #{mesh_head_forward.2} parent=1 // pred_check_branch
      %116 = sbr.rel (0) target = $region49
    $region48: #{mesh_head_forward.2} parent=1 // pred_region
      _
    $region49: #{mesh_head_forward.2} parent=1 // pred_fallthru
      _
    // Predicated region
    $region50: #{mesh_head_forward.2} parent=1 // pred_check
      _
    $region51: #{mesh_head_forward.2} parent=1 // pred_check_branch
      %118 = sbr.rel (0) target = $region53
    $region52: #{mesh_head_forward.2} parent=1 // pred_region
      _
    $region53: #{mesh_head_forward.2} parent=1 // pred_fallthru
      _
    // Predicated region
    $region54: #{mesh_head_forward.2} parent=1 // pred_check
      _
    $region55: #{mesh_head_forward.2} parent=1 // pred_check_branch
      %120 = sbr.rel (0) target = $region57
    $region56: #{mesh_head_forward.2} parent=1 // pred_region
      _
    $region57: #{mesh_head_forward.2} parent=1 // pred_fallthru
      _
    // Predicated region
    $region58: #{mesh_head_forward.2} parent=1 // pred_check
      _
    $region59: #{mesh_head_forward.2} parent=1 // pred_check_branch
      %122 = sbr.rel (0) target = $region61
    $region60: #{mesh_head_forward.2} parent=1 // pred_region
      _
    $region61: #{mesh_head_forward.2} parent=1 // pred_fallthru
      _
    // Predicated region
    $region62: #{mesh_head_forward.2} parent=1 // pred_check
      _
    $region63: #{mesh_head_forward.2} parent=1 // pred_check_branch
      %124 = sbr.rel (0) target = $region65
    $region64: #{mesh_head_forward.2} parent=1 // pred_region
      _
    $region65: #{mesh_head_forward.2} parent=1 // pred_fallthru
      _
    // Predicated region
    $region66: #{mesh_head_forward.2} parent=1 // pred_check
      _
    $region67: #{mesh_head_forward.2} parent=1 // pred_check_branch
      %126 = sbr.rel (0) target = $region69
    $region68: #{mesh_head_forward.2} parent=1 // pred_region
      _
    $region69: #{mesh_head_forward.2} parent=1 // pred_fallthru
      _
    // Predicated region
    $region70: #{mesh_head_forward.2} parent=1 // pred_check
      _
    $region71: #{mesh_head_forward.2} parent=1 // pred_check_branch
      %128 = sbr.rel (0) target = $region73
    $region72: #{mesh_head_forward.2} parent=1 // pred_region
      _
    $region73: #{mesh_head_forward.2} parent=1 // pred_fallthru
      _
    // Predicated region
    $region74: #{mesh_head_forward.2} parent=1 // pred_check
      _
    $region75: #{mesh_head_forward.2} parent=1 // pred_check_branch
      %130 = sbr.rel (0) target = $region77
    $region76: #{mesh_head_forward.2} parent=1 // pred_region
      _
    $region77: #{mesh_head_forward.2} parent=1 // pred_fallthru
      _
    // Predicated region
    $region78: #{mesh_head_forward.2} parent=1 // pred_check
      _
    $region79: #{mesh_head_forward.2} parent=1 // pred_check_branch
      %132 = sbr.rel (0) target = $region81
    $region80: #{mesh_head_forward.2} parent=1 // pred_region
      _
    $region81: #{mesh_head_forward.2} parent=1 // pred_fallthru
      _
    // Predicated region
    $region82: #{mesh_head_forward.2} parent=1 // pred_check
      _
    $region83: #{mesh_head_forward.2} parent=1 // pred_check_branch
      %134 = sbr.rel (0) target = $region85
    $region84: #{mesh_head_forward.2} parent=1 // pred_region
      _
    $region85: #{mesh_head_forward.2} parent=1 // pred_fallthru
      _
    // Predicated region
    $region86: #{mesh_head_forward.2} parent=1 // pred_check
      _
    $region87: #{mesh_head_forward.2} parent=1 // pred_check_branch
      %136 = sbr.rel (0) target = $region89
    $region88: #{mesh_head_forward.2} parent=1 // pred_region
      _
    $region89: #{mesh_head_forward.2} parent=1 // pred_fallthru
      _
    // Predicated region
    $region90: #{mesh_head_forward.2} parent=1 // pred_check
      _
    $region91: #{mesh_head_forward.2} parent=1 // pred_check_branch
      %138 = sbr.rel (0) target = $region93
    $region92: #{mesh_head_forward.2} parent=1 // pred_region
      _
    $region93: #{mesh_head_forward.2} parent=1 // pred_fallthru
      _
    // Predicated region
    $region94: #{mesh_head_forward.2} parent=1 // pred_check
      _
    $region95: #{mesh_head_forward.2} parent=1 // pred_check_branch
      %140 = sbr.rel (0) target = $region97
    $region96: #{mesh_head_forward.2} parent=1 // pred_region
      _
    $region97: #{mesh_head_forward.2} parent=1 // pred_fallthru
      _
    // Predicated region
    $region98: #{mesh_head_forward.2} parent=1 // pred_check
      _
    $region99: #{mesh_head_forward.2} parent=1 // pred_check_branch
      %142 = sbr.rel (0) target = $region101
    $region100: #{mesh_head_forward.2} parent=1 // pred_region
      _
    $region101: #{mesh_head_forward.2} parent=1 // pred_fallthru
      _
    // Predicated region
    $region102: #{mesh_head_forward.2} parent=1 // pred_check
      _
    $region103: #{mesh_head_forward.2} parent=1 // pred_check_branch
      %144 = sbr.rel (0) target = $region105
    $region104: #{mesh_head_forward.2} parent=1 // pred_region
      _
    $region105: #{mesh_head_forward.2} parent=1 // pred_fallthru
      _
    // Predicated region
    $region106: #{mesh_head_forward.2} parent=1 // pred_check
      _
    $region107: #{mesh_head_forward.2} parent=1 // pred_check_branch
      %146 = sbr.rel (0) target = $region109
    $region108: #{mesh_head_forward.2} parent=1 // pred_region
      _
    $region109: #{mesh_head_forward.2} parent=1 // pred_fallthru
      _
    // Predicated region
    $region110: #{mesh_head_forward.2} parent=1 // pred_check
      _
    $region111: #{mesh_head_forward.2} parent=1 // pred_check_branch
      %148 = sbr.rel (0) target = $region113
    $region112: #{mesh_head_forward.2} parent=1 // pred_region
      _
    $region113: #{mesh_head_forward.2} parent=1 // pred_fallthru
      _
    // Predicated region
    $region114: #{mesh_head_forward.2} parent=1 // pred_check
      _
    $region115: #{mesh_head_forward.2} parent=1 // pred_check_branch
      %150 = sbr.rel (0) target = $region117
    $region116: #{mesh_head_forward.2} parent=1 // pred_region
      _
    $region117: #{mesh_head_forward.2} parent=1 // pred_fallthru
      _
    // Predicated region
    $region118: #{mesh_head_forward.2} parent=1 // pred_check
      _
    $region119: #{mesh_head_forward.2} parent=1 // pred_check_branch
      %152 = sbr.rel (0) target = $region121
    $region120: #{mesh_head_forward.2} parent=1 // pred_region
      _
    $region121: #{mesh_head_forward.2} parent=1 // pred_fallthru
      _
    // Predicated region
    $region122: #{mesh_head_forward.2} parent=1 // pred_check
      _
    $region123: #{mesh_head_forward.2} parent=1 // pred_check_branch
      %154 = sbr.rel (0) target = $region125
    $region124: #{mesh_head_forward.2} parent=1 // pred_region
      _
    $region125: #{mesh_head_forward.2} parent=1 // pred_fallthru
      _
    // Predicated region
    $region126: #{mesh_head_forward.2} parent=1 // pred_check
      _
    $region127: #{mesh_head_forward.2} parent=1 // pred_check_branch
      %156 = sbr.rel (0) target = $region129
    $region128: #{mesh_head_forward.2} parent=1 // pred_region
      %157 = dma.done [#allocation3], 1024
    $region129: #{mesh_head_forward.2} parent=1 // pred_fallthru
      _
    // Predicated region
    $region130: #{mesh_head_forward.2} parent=1 // pred_check
      _
    $region131: #{mesh_head_forward.2} parent=1 // pred_check_branch
      %159 = sbr.rel (0) target = $region133
    $region132: #{mesh_head_forward.2} parent=1 // pred_region
      %160 = dma.done [#allocation5], 2048
    $region133: #{mesh_head_forward.2} parent=1 // pred_fallthru
      _
    %v161 = vld [vmem:[%s1] sm:$0xff]
    %v162 = vld [vmem:[%s1 + $0x8] sm:$0xff]
    %v163 = vld [vmem:[%s1 + $0x10] sm:$0xff]
    %v164 = vld [vmem:[%s1 + $0x18] sm:$0xff]
    %v165 = vld [vmem:[%s1 + $0x20] sm:$0xff]
    %v166 = vld [vmem:[%s1 + $0x28] sm:$0xff]
    %v167 = vld [vmem:[%s1 + $0x30] sm:$0xff]
    %v168 = vld [vmem:[%s1 + $0x38] sm:$0xff]
    %v169 = vld [vmem:[#allocation2] sm:$0xff]
    %v170 = vld [vmem:[#allocation2 + $0x8] sm:$0xff]
    %v171 = vld [vmem:[#allocation2 + $0x10] sm:$0xff]
    %v172 = vld [vmem:[#allocation2 + $0x18] sm:$0xff]
    %v173 = vld [vmem:[#allocation2 + $0x20] sm:$0xff]
    %v174 = vld [vmem:[#allocation2 + $0x28] sm:$0xff]
    %v175 = vld [vmem:[#allocation2 + $0x30] sm:$0xff]
    %v176 = vld [vmem:[#allocation2 + $0x38] sm:$0xff]
    %v177 = vld [vmem:[#allocation4] sm:$0xff]
    %v178 = vld [vmem:[#allocation4 + $0x8] sm:$0xff]
    %v179 = vld [vmem:[#allocation4 + $0x10] sm:$0xff]
    %v180 = vld [vmem:[#allocation4 + $0x18] sm:$0xff]
    %v181 = vld [vmem:[#allocation4 + $0x20] sm:$0xff]
    %v182 = vld [vmem:[#allocation4 + $0x28] sm:$0xff]
    %v183 = vld [vmem:[#allocation4 + $0x30] sm:$0xff]
    %v184 = vld [vmem:[#allocation4 + $0x38] sm:$0xff]
    %v185 = vld [vmem:[#allocation4 + $0x40] sm:$0xff]
    %v186 = vld [vmem:[#allocation4 + $0x48] sm:$0xff]
    %v187 = vld [vmem:[#allocation4 + $0x50] sm:$0xff]
    %v188 = vld [vmem:[#allocation4 + $0x58] sm:$0xff]
    %v189 = vld [vmem:[#allocation4 + $0x60] sm:$0xff]
    %v190 = vld [vmem:[#allocation4 + $0x68] sm:$0xff]
    %v191 = vld [vmem:[#allocation4 + $0x70] sm:$0xff]
    %v192 = vld [vmem:[#allocation4 + $0x78] sm:$0xff]
    %v193 = vld [vmem:[%s7] sm:$0xff]
    %v194 = vld [vmem:[%s7 + $0x8] sm:$0xff]
    %v195 = vld [vmem:[%s7 + $0x10] sm:$0xff]
    %v196 = vld [vmem:[%s7 + $0x18] sm:$0xff]
    %v197 = vld [vmem:[%s7 + $0x20] sm:$0xff]
    %v198 = vld [vmem:[%s7 + $0x28] sm:$0xff]
    %v199 = vld [vmem:[%s7 + $0x30] sm:$0xff]
    %v200 = vld [vmem:[%s7 + $0x38] sm:$0xff]
    %v201 = vld [vmem:[%s7 + $0x40] sm:$0xff]
    %v202 = vld [vmem:[%s7 + $0x48] sm:$0xff]
    %v203 = vld [vmem:[%s7 + $0x50] sm:$0xff]
    %v204 = vld [vmem:[%s7 + $0x58] sm:$0xff]
    %v205 = vld [vmem:[%s7 + $0x60] sm:$0xff]
    %v206 = vld [vmem:[%s7 + $0x68] sm:$0xff]
    %v207 = vld [vmem:[%s7 + $0x70] sm:$0xff]
    %v208 = vld [vmem:[%s7 + $0x78] sm:$0xff]
    %v209 = vld [vmem:[%s7 + $0x80] sm:$0xff]
    %v210 = vld [vmem:[%s7 + $0x88] sm:$0xff]
    %v211 = vld [vmem:[%s7 + $0x90] sm:$0xff]
    %v212 = vld [vmem:[%s7 + $0x98] sm:$0xff]
    %v213 = vld [vmem:[%s7 + $0xa0] sm:$0xff]
    %v214 = vld [vmem:[%s7 + $0xa8] sm:$0xff]
    %v215 = vld [vmem:[%s7 + $0xb0] sm:$0xff]
    %v216 = vld [vmem:[%s7 + $0xb8] sm:$0xff]
    %v217 = vld [vmem:[%s7 + $0xc0] sm:$0xff]
    %v218 = vld [vmem:[%s7 + $0xc8] sm:$0xff]
    %v219 = vld [vmem:[%s7 + $0xd0] sm:$0xff]
    %v220 = vld [vmem:[%s7 + $0xd8] sm:$0xff]
    %v221 = vld [vmem:[%s7 + $0xe0] sm:$0xff]
    %v222 = vld [vmem:[%s7 + $0xe8] sm:$0xff]
    %v223 = vld [vmem:[%s7 + $0xf0] sm:$0xff]
    %v224 = vld [vmem:[%s7 + $0xf8] sm:$0xff]
    %v225 = vld [vmem:[%s9] sm:$0xff]
    %v226 = vld [vmem:[%s9 + $0x8] sm:$0xff]
    %227 = vmatprep.subr.mxu0 0.0
    %228 = vmatpush1.msra.mxu0 %v193
    %229 = vmatprep.subr.mxu0 0.0
    %230 = vmatpush1.msra.mxu0 %v194
    %231 = vmatprep.subr.mxu0 0.0
    %232 = vmatpush1.msra.mxu0 %v195
    %233 = vmatprep.subr.mxu0 0.0
    %234 = vmatpush1.msra.mxu0 %v196
    %235 = vmatprep.subr.mxu0 0.0
    %236 = vmatpush1.msra.mxu0 %v197
    %237 = vmatprep.subr.mxu0 0.0
    %238 = vmatpush1.msra.mxu0 %v198
    %239 = vmatprep.subr.mxu0 0.0
    %240 = vmatpush1.msra.mxu0 %v199
    %241 = vmatprep.subr.mxu0 0.0
    %242 = vmatpush1.msra.mxu0 %v200
    %243 = vmatprep.subr.mxu0 0.0
    %244 = vmatpush1.msra.mxu0 %v201
    %245 = vmatprep.subr.mxu0 0.0
    %246 = vmatpush1.msra.mxu0 %v202
    %247 = vmatprep.subr.mxu0 0.0
    %248 = vmatpush1.msra.mxu0 %v203
    %249 = vmatprep.subr.mxu0 0.0
    %250 = vmatpush1.msra.mxu0 %v204
    %251 = vmatprep.subr.mxu0 0.0
    %252 = vmatpush1.msra.mxu0 %v205
    %253 = vmatprep.subr.mxu0 0.0
    %254 = vmatpush1.msra.mxu0 %v206
    %255 = vmatprep.subr.mxu0 0.0
    %256 = vmatpush1.msra.mxu0 %v207
    %257 = vmatprep.subr.mxu0 0.0
    %258 = vmatpush1.msra.mxu0 %v208
    %259 = vmatprep.subr.mxu0 0.0
    %260 = vmatpush1.msra.mxu0 %v209
    %261 = vmatprep.subr.mxu0 0.0
    %262 = vmatpush1.msra.mxu0 %v210
    %263 = vmatprep.subr.mxu0 0.0
    %264 = vmatpush1.msra.mxu0 %v211
    %265 = vmatprep.subr.mxu0 0.0
    %266 = vmatpush1.msra.mxu0 %v212
    %267 = vmatprep.subr.mxu0 0.0
    %268 = vmatpush1.msra.mxu0 %v213
    %269 = vmatprep.subr.mxu0 0.0
    %270 = vmatpush1.msra.mxu0 %v214
    %271 = vmatprep.subr.mxu0 0.0
    %272 = vmatpush1.msra.mxu0 %v215
    %273 = vmatprep.subr.mxu0 0.0
    %274 = vmatpush1.msra.mxu0 %v216
    %275 = vmatprep.subr.mxu0 0.0
    %276 = vmatpush1.msra.mxu0 %v217
    %277 = vmatprep.subr.mxu0 0.0
    %278 = vmatpush1.msra.mxu0 %v218
    %279 = vmatprep.subr.mxu0 0.0
    %280 = vmatpush1.msra.mxu0 %v219
    %281 = vmatprep.subr.mxu0 0.0
    %282 = vmatpush1.msra.mxu0 %v220
    %283 = vmatprep.subr.mxu0 0.0
    %284 = vmatpush1.msra.mxu0 %v221
    %285 = vmatprep.subr.mxu0 0.0
    %286 = vmatpush1.msra.mxu0 %v222
    %287 = vmatprep.subr.mxu0 0.0
    %288 = vmatpush1.msra.mxu0 %v223
    %289 = vmatprep.subr.mxu0 0.0
    %290 = vmatpush1.msra.mxu0 %v224
    %291 = vmatprep.mubr.f32.mxu0 %v178
    %292 = vmatmul.mubr.f32.gmra.mrb[0].mxu0 %v177
    %v293 = vpop.f32.mrb[0].mxu0
    %v294 = vadd.f32 0.0, %v293
    %v295 = vpop.f32.mrb[0].mxu0
    %296 = vmatprep.mubr.f32.mxu0 %v180
    %297 = vmatmul.mubr.f32.gmra.mrb[0].mxu0 %v179
    %v298 = vpop.f32.mrb[0].mxu0
    %v299 = vadd.f32 0.0, %v298
    %v300 = vpop.f32.mrb[0].mxu0
    %301 = vmatprep.mubr.f32.mxu0 %v182
    %302 = vmatmul.mubr.f32.gmra.mrb[0].mxu0 %v181
    %v303 = vpop.f32.mrb[0].mxu0
    %v304 = vadd.f32 0.0, %v303
    %v305 = vpop.f32.mrb[0].mxu0
    %306 = vmatprep.mubr.f32.mxu0 %v184
    %307 = vmatmul.mubr.f32.gmra.mrb[0].mxu0 %v183
    %v308 = vpop.f32.mrb[0].mxu0
    %v309 = vadd.f32 0.0, %v308
    %v310 = vpop.f32.mrb[0].mxu0
    %311 = vmatprep.mubr.f32.mxu0 %v186
    %312 = vmatmul.mubr.f32.gmra.mrb[0].mxu0 %v185
    %v313 = vpop.f32.mrb[0].mxu0
    %v314 = vadd.f32 0.0, %v313
    %v315 = vpop.f32.mrb[0].mxu0
    %316 = vmatprep.mubr.f32.mxu0 %v188
    %317 = vmatmul.mubr.f32.gmra.mrb[0].mxu0 %v187
    %v318 = vpop.f32.mrb[0].mxu0
    %v319 = vadd.f32 0.0, %v318
    %v320 = vpop.f32.mrb[0].mxu0
    %321 = vmatprep.mubr.f32.mxu0 %v190
    %322 = vmatmul.mubr.f32.gmra.mrb[0].mxu0 %v189
    %v323 = vpop.f32.mrb[0].mxu0
    %v324 = vadd.f32 0.0, %v323
    %v325 = vpop.f32.mrb[0].mxu0
    %326 = vmatprep.mubr.f32.mxu0 %v192
    %327 = vmatmul.mubr.f32.gmra.mrb[0].mxu0 %v191
    %v328 = vpop.f32.mrb[0].mxu0
    %v329 = vadd.f32 0.0, %v328
    %v330 = vpop.f32.mrb[0].mxu0
    %331 = vdwg.mxu0
    %v332 = vld [vmem:[%s11] sm:$0x1]
    %v334 = vlaneseq
    %v335 = vshrl.u32 %v334, 7
    %v336 = vsub.s32 0, %v335
    %v337 = vrot.slane %v332, %v336
    %vm339 = vcmask 130048
    %v341 = vsel %vm339, %v294, 0
    %v344 = vsel %vm339, %v299, 0
    %v347 = vsel %vm339, %v304, 0
    %v350 = vsel %vm339, %v309, 0
    %v353 = vsel %vm339, %v314, 0
    %v356 = vsel %vm339, %v319, 0
    %v359 = vsel %vm339, %v324, 0
    %v362 = vsel %vm339, %v329, 0
    %364 = vmatprep.subr.mxu0 0.0
    %365 = vmatpush1.msra.mxu0 %v225
    %366 = vmatprep.subr.mxu0 0.0
    %367 = vmatpush1.msra.mxu0 %v226
    %368 = vmatprep.subr.mxu0 0.0
    %369 = vmatpush1.msra.mxu0 0.0
    %370 = vmatprep.subr.mxu0 0.0
    %371 = vmatpush1.msra.mxu0 0.0
    %372 = vmatprep.subr.mxu0 0.0
    %373 = vmatpush1.msra.mxu0 0.0
    %374 = vmatprep.subr.mxu0 0.0
    %375 = vmatpush1.msra.mxu0 0.0
    %376 = vmatprep.subr.mxu0 0.0
    %377 = vmatpush1.msra.mxu0 0.0
    %378 = vmatprep.subr.mxu0 0.0
    %379 = vmatpush1.msra.mxu0 0.0
    %380 = vmatprep.subr.mxu0 0.0
    %381 = vmatpush1.msra.mxu0 0.0
    %382 = vmatprep.subr.mxu0 0.0
    %383 = vmatpush1.msra.mxu0 0.0
    %384 = vmatprep.subr.mxu0 0.0
    %385 = vmatpush1.msra.mxu0 0.0
    %386 = vmatprep.subr.mxu0 0.0
    %387 = vmatpush1.msra.mxu0 0.0
    %388 = vmatprep.subr.mxu0 0.0
    %389 = vmatpush1.msra.mxu0 0.0
    %390 = vmatprep.subr.mxu0 0.0
    %391 = vmatpush1.msra.mxu0 0.0
    %392 = vmatprep.subr.mxu0 0.0
    %393 = vmatpush1.msra.mxu0 0.0
    %394 = vmatprep.subr.mxu0 0.0
    %395 = vmatpush1.msra.mxu0 0.0
    %396 = vmatprep.subr.mxu0 0.0
    %397 = vmatpush1.msra.mxu0 0.0
    %398 = vmatprep.subr.mxu0 0.0
    %399 = vmatpush1.msra.mxu0 0.0
    %400 = vmatprep.subr.mxu0 0.0
    %401 = vmatpush1.msra.mxu0 0.0
    %402 = vmatprep.subr.mxu0 0.0
    %403 = vmatpush1.msra.mxu0 0.0
    %404 = vmatprep.subr.mxu0 0.0
    %405 = vmatpush1.msra.mxu0 0.0
    %406 = vmatprep.subr.mxu0 0.0
    %407 = vmatpush1.msra.mxu0 0.0
    %408 = vmatprep.subr.mxu0 0.0
    %409 = vmatpush1.msra.mxu0 0.0
    %410 = vmatprep.subr.mxu0 0.0
    %411 = vmatpush1.msra.mxu0 0.0
    %412 = vmatprep.subr.mxu0 0.0
    %413 = vmatpush1.msra.mxu0 0.0
    %414 = vmatprep.subr.mxu0 0.0
    %415 = vmatpush1.msra.mxu0 0.0
    %416 = vmatprep.subr.mxu0 0.0
    %417 = vmatpush1.msra.mxu0 0.0
    %418 = vmatprep.subr.mxu0 0.0
    %419 = vmatpush1.msra.mxu0 0.0
    %420 = vmatprep.subr.mxu0 0.0
    %421 = vmatpush1.msra.mxu0 0.0
    %422 = vmatprep.subr.mxu0 0.0
    %423 = vmatpush1.msra.mxu0 0.0
    %424 = vmatprep.subr.mxu0 0.0
    %425 = vmatpush1.msra.mxu0 0.0
    %426 = vmatprep.subr.mxu0 0.0
    %427 = vmatpush1.msra.mxu0 0.0
    %428 = vmatprep.mubr.f32.mxu0 0.0
    %429 = vmatmul.mubr.f32.gmra.mrb[0].mxu0 %v341
    %v430 = vpop.f32.mrb[0].mxu0
    %v431 = vadd.f32 %v337, %v430
    %v432 = vpop.f32.mrb[0].mxu0
    %433 = vmatprep.mubr.f32.mxu0 0.0
    %434 = vmatmul.mubr.f32.gmra.mrb[0].mxu0 %v344
    %v435 = vpop.f32.mrb[0].mxu0
    %v436 = vadd.f32 %v337, %v435
    %v437 = vpop.f32.mrb[0].mxu0
    %438 = vmatprep.mubr.f32.mxu0 0.0
    %439 = vmatmul.mubr.f32.gmra.mrb[0].mxu0 %v347
    %v440 = vpop.f32.mrb[0].mxu0
    %v441 = vadd.f32 %v337, %v440
    %v442 = vpop.f32.mrb[0].mxu0
    %443 = vmatprep.mubr.f32.mxu0 0.0
    %444 = vmatmul.mubr.f32.gmra.mrb[0].mxu0 %v350
    %v445 = vpop.f32.mrb[0].mxu0
    %v446 = vadd.f32 %v337, %v445
    %v447 = vpop.f32.mrb[0].mxu0
    %448 = vmatprep.mubr.f32.mxu0 0.0
    %449 = vmatmul.mubr.f32.gmra.mrb[0].mxu0 %v353
    %v450 = vpop.f32.mrb[0].mxu0
    %v451 = vadd.f32 %v337, %v450
    %v452 = vpop.f32.mrb[0].mxu0
    %453 = vmatprep.mubr.f32.mxu0 0.0
    %454 = vmatmul.mubr.f32.gmra.mrb[0].mxu0 %v356
    %v455 = vpop.f32.mrb[0].mxu0
    %v456 = vadd.f32 %v337, %v455
    %v457 = vpop.f32.mrb[0].mxu0
    %458 = vmatprep.mubr.f32.mxu0 0.0
    %459 = vmatmul.mubr.f32.gmra.mrb[0].mxu0 %v359
    %v460 = vpop.f32.mrb[0].mxu0
    %v461 = vadd.f32 %v337, %v460
    %v462 = vpop.f32.mrb[0].mxu0
    %463 = vmatprep.mubr.f32.mxu0 0.0
    %464 = vmatmul.mubr.f32.gmra.mrb[0].mxu0 %v362
    %v465 = vpop.f32.mrb[0].mxu0
    %v466 = vadd.f32 %v337, %v465
    %v467 = vpop.f32.mrb[0].mxu0
    %468 = vdwg.mxu0
    %v469 = vmax.f32 %v431, 0.0
    %v470 = vmax.f32 %v436, 0.0
    %v471 = vmax.f32 %v441, 0.0
    %v472 = vmax.f32 %v446, 0.0
    %v473 = vmax.f32 %v451, 0.0
    %v474 = vmax.f32 %v456, 0.0
    %v475 = vmax.f32 %v461, 0.0
    %v476 = vmax.f32 %v466, 0.0
    %v477 = vmax.f32 %v469, 0.0
    %v478 = vmax.f32 %v470, 0.0
    %v479 = vmax.f32 %v471, 0.0
    %v480 = vmax.f32 %v472, 0.0
    %v481 = vmax.f32 %v473, 0.0
    %v482 = vmax.f32 %v474, 0.0
    %v483 = vmax.f32 %v475, 0.0
    %v484 = vmax.f32 %v476, 0.0
    %v485 = vmax.f32 %v161, 0.0
    %v486 = vmax.f32 %v162, 0.0
    %v487 = vmax.f32 %v163, 0.0
    %v488 = vmax.f32 %v164, 0.0
    %v489 = vmax.f32 %v165, 0.0
    %v490 = vmax.f32 %v166, 0.0
    %v491 = vmax.f32 %v167, 0.0
    %v492 = vmax.f32 %v168, 0.0
    %v493 = vld [vmem:[%s13] sm:$0xff]
    %v494 = vld [vmem:[%s13 + $0x8] sm:$0xff]
    %v495 = vld [vmem:[%s13 + $0x10] sm:$0xff]
    %v496 = vld [vmem:[%s13 + $0x18] sm:$0xff]
    %v497 = vld [vmem:[%s15] sm:$0x7]
    %v498 = vld [vmem:[%s17] sm:$0x1]
    %v499 = vld [vmem:[%s19] sm:$0xff]
    %v500 = vld [vmem:[%s19 + $0x8] sm:$0xff]
    %v501 = vld [vmem:[%s19 + $0x10] sm:$0xff]
    %v502 = vld [vmem:[%s19 + $0x18] sm:$0xff]
    %v503 = vld [vmem:[%s21] sm:$0x7]
    %v504 = vld [vmem:[%s23] sm:$0x1]
    %vm505 = vcmask 261120
    %v507 = vsel %vm505, %v477, 0
    %v510 = vsel %vm505, %v478, 0
    %v513 = vsel %vm505, %v479, 0
    %v516 = vsel %vm505, %v480, 0
    %v519 = vsel %vm505, %v481, 0
    %v522 = vsel %vm505, %v482, 0
    %v525 = vsel %vm505, %v483, 0
    %v528 = vsel %vm505, %v484, 0
    %530 = vmatprep.subr.mxu0 0.0
    %531 = vmatpush1.msra.mxu0 %v493
    %532 = vmatprep.subr.mxu0 0.0
    %533 = vmatpush1.msra.mxu0 %v494
    %534 = vmatprep.subr.mxu0 0.0
    %535 = vmatpush1.msra.mxu0 %v495
    %536 = vmatprep.subr.mxu0 0.0
    %537 = vmatpush1.msra.mxu0 %v496
    %538 = vmatprep.subr.mxu0 0.0
    %539 = vmatpush1.msra.mxu0 0.0
    %540 = vmatprep.subr.mxu0 0.0
    %541 = vmatpush1.msra.mxu0 0.0
    %542 = vmatprep.subr.mxu0 0.0
    %543 = vmatpush1.msra.mxu0 0.0
    %544 = vmatprep.subr.mxu0 0.0
    %545 = vmatpush1.msra.mxu0 0.0
    %546 = vmatprep.subr.mxu0 0.0
    %547 = vmatpush1.msra.mxu0 0.0
    %548 = vmatprep.subr.mxu0 0.0
    %549 = vmatpush1.msra.mxu0 0.0
    %550 = vmatprep.subr.mxu0 0.0
    %551 = vmatpush1.msra.mxu0 0.0
    %552 = vmatprep.subr.mxu0 0.0
    %553 = vmatpush1.msra.mxu0 0.0
    %554 = vmatprep.subr.mxu0 0.0
    %555 = vmatpush1.msra.mxu0 0.0
    %556 = vmatprep.subr.mxu0 0.0
    %557 = vmatpush1.msra.mxu0 0.0
    %558 = vmatprep.subr.mxu0 0.0
    %559 = vmatpush1.msra.mxu0 0.0
    %560 = vmatprep.subr.mxu0 0.0
    %561 = vmatpush1.msra.mxu0 0.0
    %562 = vmatprep.subr.mxu0 0.0
    %563 = vmatpush1.msra.mxu0 0.0
    %564 = vmatprep.subr.mxu0 0.0
    %565 = vmatpush1.msra.mxu0 0.0
    %566 = vmatprep.subr.mxu0 0.0
    %567 = vmatpush1.msra.mxu0 0.0
    %568 = vmatprep.subr.mxu0 0.0
    %569 = vmatpush1.msra.mxu0 0.0
    %570 = vmatprep.subr.mxu0 0.0
    %571 = vmatpush1.msra.mxu0 0.0
    %572 = vmatprep.subr.mxu0 0.0
    %573 = vmatpush1.msra.mxu0 0.0
    %574 = vmatprep.subr.mxu0 0.0
    %575 = vmatpush1.msra.mxu0 0.0
    %576 = vmatprep.subr.mxu0 0.0
    %577 = vmatpush1.msra.mxu0 0.0
    %578 = vmatprep.subr.mxu0 0.0
    %579 = vmatpush1.msra.mxu0 0.0
    %580 = vmatprep.subr.mxu0 0.0
    %581 = vmatpush1.msra.mxu0 0.0
    %582 = vmatprep.subr.mxu0 0.0
    %583 = vmatpush1.msra.mxu0 0.0
    %584 = vmatprep.subr.mxu0 0.0
    %585 = vmatpush1.msra.mxu0 0.0
    %586 = vmatprep.subr.mxu0 0.0
    %587 = vmatpush1.msra.mxu0 0.0
    %588 = vmatprep.subr.mxu0 0.0
    %589 = vmatpush1.msra.mxu0 0.0
    %590 = vmatprep.subr.mxu0 0.0
    %591 = vmatpush1.msra.mxu0 0.0
    %592 = vmatprep.subr.mxu0 0.0
    %593 = vmatpush1.msra.mxu0 0.0
    %594 = vmatprep.mubr.f32.mxu0 0.0
    %595 = vmatmul.mubr.f32.gmra.mrb[0].mxu0 %v507
    %v596 = vpop.f32.mrb[0].mxu0
    %v597 = vadd.f32 0.0, %v596
    %v598 = vpop.f32.mrb[0].mxu0
    %599 = vmatprep.mubr.f32.mxu0 0.0
    %600 = vmatmul.mubr.f32.gmra.mrb[0].mxu0 %v510
    %v601 = vpop.f32.mrb[0].mxu0
    %v602 = vadd.f32 0.0, %v601
    %v603 = vpop.f32.mrb[0].mxu0
    %604 = vmatprep.mubr.f32.mxu0 0.0
    %605 = vmatmul.mubr.f32.gmra.mrb[0].mxu0 %v513
    %v606 = vpop.f32.mrb[0].mxu0
    %v607 = vadd.f32 0.0, %v606
    %v608 = vpop.f32.mrb[0].mxu0
    %609 = vmatprep.mubr.f32.mxu0 0.0
    %610 = vmatmul.mubr.f32.gmra.mrb[0].mxu0 %v516
    %v611 = vpop.f32.mrb[0].mxu0
    %v612 = vadd.f32 0.0, %v611
    %v613 = vpop.f32.mrb[0].mxu0
    %614 = vmatprep.mubr.f32.mxu0 0.0
    %615 = vmatmul.mubr.f32.gmra.mrb[0].mxu0 %v519
    %v616 = vpop.f32.mrb[0].mxu0
    %v617 = vadd.f32 0.0, %v616
    %v618 = vpop.f32.mrb[0].mxu0
    %619 = vmatprep.mubr.f32.mxu0 0.0
    %620 = vmatmul.mubr.f32.gmra.mrb[0].mxu0 %v522
    %v621 = vpop.f32.mrb[0].mxu0
    %v622 = vadd.f32 0.0, %v621
    %v623 = vpop.f32.mrb[0].mxu0
    %624 = vmatprep.mubr.f32.mxu0 0.0
    %625 = vmatmul.mubr.f32.gmra.mrb[0].mxu0 %v525
    %v626 = vpop.f32.mrb[0].mxu0
    %v627 = vadd.f32 0.0, %v626
    %v628 = vpop.f32.mrb[0].mxu0
    %629 = vmatprep.mubr.f32.mxu0 0.0
    %630 = vmatmul.mubr.f32.gmra.mrb[0].mxu0 %v528
    %v631 = vpop.f32.mrb[0].mxu0
    %v632 = vadd.f32 0.0, %v631
    %v633 = vpop.f32.mrb[0].mxu0
    %634 = vdwg.mxu0
    %v636 = vlaneseq
    %v637 = vshrl.u32 %v636, 7
    %v638 = vsub.s32 0, %v637
    %v639 = vrot.slane %v498, %v638
    %v641 = vadd.f32 %v639, %v597
    %v642 = vadd.f32 %v639, %v602
    %v643 = vadd.f32 %v639, %v607
    %v644 = vadd.f32 %v639, %v612
    %v645 = vadd.f32 %v639, %v617
    %v646 = vadd.f32 %v639, %v622
    %v647 = vadd.f32 %v639, %v627
    %v648 = vadd.f32 %v639, %v632
    %649 = vmatprep.subr.mxu0 0.0
    %650 = vmatpush1.msra.mxu0 %v499
    %651 = vmatprep.subr.mxu0 0.0
    %652 = vmatpush1.msra.mxu0 %v500
    %653 = vmatprep.subr.mxu0 0.0
    %654 = vmatpush1.msra.mxu0 %v501
    %655 = vmatprep.subr.mxu0 0.0
    %656 = vmatpush1.msra.mxu0 %v502
    %657 = vmatprep.subr.mxu0 0.0
    %658 = vmatpush1.msra.mxu0 0.0
    %659 = vmatprep.subr.mxu0 0.0
    %660 = vmatpush1.msra.mxu0 0.0
    %661 = vmatprep.subr.mxu0 0.0
    %662 = vmatpush1.msra.mxu0 0.0
    %663 = vmatprep.subr.mxu0 0.0
    %664 = vmatpush1.msra.mxu0 0.0
    %665 = vmatprep.subr.mxu0 0.0
    %666 = vmatpush1.msra.mxu0 0.0
    %667 = vmatprep.subr.mxu0 0.0
    %668 = vmatpush1.msra.mxu0 0.0
    %669 = vmatprep.subr.mxu0 0.0
    %670 = vmatpush1.msra.mxu0 0.0
    %671 = vmatprep.subr.mxu0 0.0
    %672 = vmatpush1.msra.mxu0 0.0
    %673 = vmatprep.subr.mxu0 0.0
    %674 = vmatpush1.msra.mxu0 0.0
    %675 = vmatprep.subr.mxu0 0.0
    %676 = vmatpush1.msra.mxu0 0.0
    %677 = vmatprep.subr.mxu0 0.0
    %678 = vmatpush1.msra.mxu0 0.0
    %679 = vmatprep.subr.mxu0 0.0
    %680 = vmatpush1.msra.mxu0 0.0
    %681 = vmatprep.subr.mxu0 0.0
    %682 = vmatpush1.msra.mxu0 0.0
    %683 = vmatprep.subr.mxu0 0.0
    %684 = vmatpush1.msra.mxu0 0.0
    %685 = vmatprep.subr.mxu0 0.0
    %686 = vmatpush1.msra.mxu0 0.0
    %687 = vmatprep.subr.mxu0 0.0
    %688 = vmatpush1.msra.mxu0 0.0
    %689 = vmatprep.subr.mxu0 0.0
    %690 = vmatpush1.msra.mxu0 0.0
    %691 = vmatprep.subr.mxu0 0.0
    %692 = vmatpush1.msra.mxu0 0.0
    %693 = vmatprep.subr.mxu0 0.0
    %694 = vmatpush1.msra.mxu0 0.0
    %695 = vmatprep.subr.mxu0 0.0
    %696 = vmatpush1.msra.mxu0 0.0
    %697 = vmatprep.subr.mxu0 0.0
    %698 = vmatpush1.msra.mxu0 0.0
    %699 = vmatprep.subr.mxu0 0.0
    %700 = vmatpush1.msra.mxu0 0.0
    %701 = vmatprep.subr.mxu0 0.0
    %702 = vmatpush1.msra.mxu0 0.0
    %703 = vmatprep.subr.mxu0 0.0
    %704 = vmatpush1.msra.mxu0 0.0
    %705 = vmatprep.subr.mxu0 0.0
    %706 = vmatpush1.msra.mxu0 0.0
    %707 = vmatprep.subr.mxu0 0.0
    %708 = vmatpush1.msra.mxu0 0.0
    %709 = vmatprep.subr.mxu0 0.0
    %710 = vmatpush1.msra.mxu0 0.0
    %711 = vmatprep.subr.mxu0 0.0
    %712 = vmatpush1.msra.mxu0 0.0
    %713 = vmatprep.mubr.f32.mxu0 0.0
    %714 = vmatmul.mubr.f32.gmra.mrb[0].mxu0 %v507
    %v715 = vpop.f32.mrb[0].mxu0
    %v716 = vadd.f32 0.0, %v715
    %v717 = vpop.f32.mrb[0].mxu0
    %718 = vmatprep.mubr.f32.mxu0 0.0
    %719 = vmatmul.mubr.f32.gmra.mrb[0].mxu0 %v510
    %v720 = vpop.f32.mrb[0].mxu0
    %v721 = vadd.f32 0.0, %v720
    %v722 = vpop.f32.mrb[0].mxu0
    %723 = vmatprep.mubr.f32.mxu0 0.0
    %724 = vmatmul.mubr.f32.gmra.mrb[0].mxu0 %v513
    %v725 = vpop.f32.mrb[0].mxu0
    %v726 = vadd.f32 0.0, %v725
    %v727 = vpop.f32.mrb[0].mxu0
    %728 = vmatprep.mubr.f32.mxu0 0.0
    %729 = vmatmul.mubr.f32.gmra.mrb[0].mxu0 %v516
    %v730 = vpop.f32.mrb[0].mxu0
    %v731 = vadd.f32 0.0, %v730
    %v732 = vpop.f32.mrb[0].mxu0
    %733 = vmatprep.mubr.f32.mxu0 0.0
    %734 = vmatmul.mubr.f32.gmra.mrb[0].mxu0 %v519
    %v735 = vpop.f32.mrb[0].mxu0
    %v736 = vadd.f32 0.0, %v735
    %v737 = vpop.f32.mrb[0].mxu0
    %738 = vmatprep.mubr.f32.mxu0 0.0
    %739 = vmatmul.mubr.f32.gmra.mrb[0].mxu0 %v522
    %v740 = vpop.f32.mrb[0].mxu0
    %v741 = vadd.f32 0.0, %v740
    %v742 = vpop.f32.mrb[0].mxu0
    %743 = vmatprep.mubr.f32.mxu0 0.0
    %744 = vmatmul.mubr.f32.gmra.mrb[0].mxu0 %v525
    %v745 = vpop.f32.mrb[0].mxu0
    %v746 = vadd.f32 0.0, %v745
    %v747 = vpop.f32.mrb[0].mxu0
    %748 = vmatprep.mubr.f32.mxu0 0.0
    %749 = vmatmul.mubr.f32.gmra.mrb[0].mxu0 %v528
    %v750 = vpop.f32.mrb[0].mxu0
    %v751 = vadd.f32 0.0, %v750
    %v752 = vpop.f32.mrb[0].mxu0
    %753 = vdwg.mxu0
    %v755 = vlaneseq
    %v756 = vshrl.u32 %v755, 7
    %v757 = vsub.s32 0, %v756
    %v758 = vrot.slane %v504, %v757
    %v760 = vadd.f32 %v758, %v716
    %v761 = vadd.f32 %v758, %v721
    %v762 = vadd.f32 %v758, %v726
    %v763 = vadd.f32 %v758, %v731
    %v764 = vadd.f32 %v758, %v736
    %v765 = vadd.f32 %v758, %v741
    %v766 = vadd.f32 %v758, %v746
    %v767 = vadd.f32 %v758, %v751
    %vm768 = vcmask 23552
    %v770 = vsel %vm768, %v485, 0
    %v773 = vsel %vm768, %v486, 0
    %v776 = vsel %vm768, %v487, 0
    %v779 = vsel %vm768, %v488, 0
    %v782 = vsel %vm768, %v489, 0
    %v785 = vsel %vm768, %v490, 0
    %v788 = vsel %vm768, %v491, 0
    %v791 = vsel %vm768, %v492, 0
    %vm793 = vcmask 1042432
    %v795 = vsel %vm793, %v497, 0
    %797 = vmatprep.subr.mxu0 0.0
    %798 = vmatpush1.msra.mxu0 %v795
    %799 = vmatprep.subr.mxu0 0.0
    %800 = vmatpush1.msra.mxu0 0.0
    %801 = vmatprep.subr.mxu0 0.0
    %802 = vmatpush1.msra.mxu0 0.0
    %803 = vmatprep.subr.mxu0 0.0
    %804 = vmatpush1.msra.mxu0 0.0
    %805 = vmatprep.subr.mxu0 0.0
    %806 = vmatpush1.msra.mxu0 0.0
    %807 = vmatprep.subr.mxu0 0.0
    %808 = vmatpush1.msra.mxu0 0.0
    %809 = vmatprep.subr.mxu0 0.0
    %810 = vmatpush1.msra.mxu0 0.0
    %811 = vmatprep.subr.mxu0 0.0
    %812 = vmatpush1.msra.mxu0 0.0
    %813 = vmatprep.subr.mxu0 0.0
    %814 = vmatpush1.msra.mxu0 0.0
    %815 = vmatprep.subr.mxu0 0.0
    %816 = vmatpush1.msra.mxu0 0.0
    %817 = vmatprep.subr.mxu0 0.0
    %818 = vmatpush1.msra.mxu0 0.0
    %819 = vmatprep.subr.mxu0 0.0
    %820 = vmatpush1.msra.mxu0 0.0
    %821 = vmatprep.subr.mxu0 0.0
    %822 = vmatpush1.msra.mxu0 0.0
    %823 = vmatprep.subr.mxu0 0.0
    %824 = vmatpush1.msra.mxu0 0.0
    %825 = vmatprep.subr.mxu0 0.0
    %826 = vmatpush1.msra.mxu0 0.0
    %827 = vmatprep.subr.mxu0 0.0
    %828 = vmatpush1.msra.mxu0 0.0
    %829 = vmatprep.subr.mxu0 0.0
    %830 = vmatpush1.msra.mxu0 0.0
    %831 = vmatprep.subr.mxu0 0.0
    %832 = vmatpush1.msra.mxu0 0.0
    %833 = vmatprep.subr.mxu0 0.0
    %834 = vmatpush1.msra.mxu0 0.0
    %835 = vmatprep.subr.mxu0 0.0
    %836 = vmatpush1.msra.mxu0 0.0
    %837 = vmatprep.subr.mxu0 0.0
    %838 = vmatpush1.msra.mxu0 0.0
    %839 = vmatprep.subr.mxu0 0.0
    %840 = vmatpush1.msra.mxu0 0.0
    %841 = vmatprep.subr.mxu0 0.0
    %842 = vmatpush1.msra.mxu0 0.0
    %843 = vmatprep.subr.mxu0 0.0
    %844 = vmatpush1.msra.mxu0 0.0
    %845 = vmatprep.subr.mxu0 0.0
    %846 = vmatpush1.msra.mxu0 0.0
    %847 = vmatprep.subr.mxu0 0.0
    %848 = vmatpush1.msra.mxu0 0.0
    %849 = vmatprep.subr.mxu0 0.0
    %850 = vmatpush1.msra.mxu0 0.0
    %851 = vmatprep.subr.mxu0 0.0
    %852 = vmatpush1.msra.mxu0 0.0
    %853 = vmatprep.subr.mxu0 0.0
    %854 = vmatpush1.msra.mxu0 0.0
    %855 = vmatprep.subr.mxu0 0.0
    %856 = vmatpush1.msra.mxu0 0.0
    %857 = vmatprep.subr.mxu0 0.0
    %858 = vmatpush1.msra.mxu0 0.0
    %859 = vmatprep.subr.mxu0 0.0
    %860 = vmatpush1.msra.mxu0 0.0
    %861 = vmatprep.mubr.f32.mxu0 0.0
    %862 = vmatmul.mubr.f32.gmra.mrb[0].mxu0 %v770
    %v863 = vpop.f32.mrb[0].mxu0
    %v864 = vadd.f32 0.0, %v863
    %v865 = vpop.f32.mrb[0].mxu0
    %866 = vmatprep.mubr.f32.mxu0 0.0
    %867 = vmatmul.mubr.f32.gmra.mrb[0].mxu0 %v773
    %v868 = vpop.f32.mrb[0].mxu0
    %v869 = vadd.f32 0.0, %v868
    %v870 = vpop.f32.mrb[0].mxu0
    %871 = vmatprep.mubr.f32.mxu0 0.0
    %872 = vmatmul.mubr.f32.gmra.mrb[0].mxu0 %v776
    %v873 = vpop.f32.mrb[0].mxu0
    %v874 = vadd.f32 0.0, %v873
    %v875 = vpop.f32.mrb[0].mxu0
    %876 = vmatprep.mubr.f32.mxu0 0.0
    %877 = vmatmul.mubr.f32.gmra.mrb[0].mxu0 %v779
    %v878 = vpop.f32.mrb[0].mxu0
    %v879 = vadd.f32 0.0, %v878
    %v880 = vpop.f32.mrb[0].mxu0
    %881 = vmatprep.mubr.f32.mxu0 0.0
    %882 = vmatmul.mubr.f32.gmra.mrb[0].mxu0 %v782
    %v883 = vpop.f32.mrb[0].mxu0
    %v884 = vadd.f32 0.0, %v883
    %v885 = vpop.f32.mrb[0].mxu0
    %886 = vmatprep.mubr.f32.mxu0 0.0
    %887 = vmatmul.mubr.f32.gmra.mrb[0].mxu0 %v785
    %v888 = vpop.f32.mrb[0].mxu0
    %v889 = vadd.f32 0.0, %v888
    %v890 = vpop.f32.mrb[0].mxu0
    %891 = vmatprep.mubr.f32.mxu0 0.0
    %892 = vmatmul.mubr.f32.gmra.mrb[0].mxu0 %v788
    %v893 = vpop.f32.mrb[0].mxu0
    %v894 = vadd.f32 0.0, %v893
    %v895 = vpop.f32.mrb[0].mxu0
    %896 = vmatprep.mubr.f32.mxu0 0.0
    %897 = vmatmul.mubr.f32.gmra.mrb[0].mxu0 %v791
    %v898 = vpop.f32.mrb[0].mxu0
    %v899 = vadd.f32 0.0, %v898
    %v900 = vpop.f32.mrb[0].mxu0
    %901 = vdwg.mxu0
    %v902 = vadd.f32 %v641, %v864
    %v903 = vadd.f32 %v642, %v869
    %v904 = vadd.f32 %v643, %v874
    %v905 = vadd.f32 %v644, %v879
    %v906 = vadd.f32 %v645, %v884
    %v907 = vadd.f32 %v646, %v889
    %v908 = vadd.f32 %v647, %v894
    %v909 = vadd.f32 %v648, %v899
    %v911 = vsel %vm793, %v503, 0
    %913 = vmatprep.subr.mxu0 0.0
    %914 = vmatpush1.msra.mxu0 %v911
    %915 = vmatprep.subr.mxu0 0.0
    %916 = vmatpush1.msra.mxu0 0.0
    %917 = vmatprep.subr.mxu0 0.0
    %918 = vmatpush1.msra.mxu0 0.0
    %919 = vmatprep.subr.mxu0 0.0
    %920 = vmatpush1.msra.mxu0 0.0
    %921 = vmatprep.subr.mxu0 0.0
    %922 = vmatpush1.msra.mxu0 0.0
    %923 = vmatprep.subr.mxu0 0.0
    %924 = vmatpush1.msra.mxu0 0.0
    %925 = vmatprep.subr.mxu0 0.0
    %926 = vmatpush1.msra.mxu0 0.0
    %927 = vmatprep.subr.mxu0 0.0
    %928 = vmatpush1.msra.mxu0 0.0
    %929 = vmatprep.subr.mxu0 0.0
    %930 = vmatpush1.msra.mxu0 0.0
    %931 = vmatprep.subr.mxu0 0.0
    %932 = vmatpush1.msra.mxu0 0.0
    %933 = vmatprep.subr.mxu0 0.0
    %934 = vmatpush1.msra.mxu0 0.0
    %935 = vmatprep.subr.mxu0 0.0
    %936 = vmatpush1.msra.mxu0 0.0
    %937 = vmatprep.subr.mxu0 0.0
    %938 = vmatpush1.msra.mxu0 0.0
    %939 = vmatprep.subr.mxu0 0.0
    %940 = vmatpush1.msra.mxu0 0.0
    %941 = vmatprep.subr.mxu0 0.0
    %942 = vmatpush1.msra.mxu0 0.0
    %943 = vmatprep.subr.mxu0 0.0
    %944 = vmatpush1.msra.mxu0 0.0
    %945 = vmatprep.subr.mxu0 0.0
    %946 = vmatpush1.msra.mxu0 0.0
    %947 = vmatprep.subr.mxu0 0.0
    %948 = vmatpush1.msra.mxu0 0.0
    %949 = vmatprep.subr.mxu0 0.0
    %950 = vmatpush1.msra.mxu0 0.0
    %951 = vmatprep.subr.mxu0 0.0
    %952 = vmatpush1.msra.mxu0 0.0
    %953 = vmatprep.subr.mxu0 0.0
    %954 = vmatpush1.msra.mxu0 0.0
    %955 = vmatprep.subr.mxu0 0.0
    %956 = vmatpush1.msra.mxu0 0.0
    %957 = vmatprep.subr.mxu0 0.0
    %958 = vmatpush1.msra.mxu0 0.0
    %959 = vmatprep.subr.mxu0 0.0
    %960 = vmatpush1.msra.mxu0 0.0
    %961 = vmatprep.subr.mxu0 0.0
    %962 = vmatpush1.msra.mxu0 0.0
    %963 = vmatprep.subr.mxu0 0.0
    %964 = vmatpush1.msra.mxu0 0.0
    %965 = vmatprep.subr.mxu0 0.0
    %966 = vmatpush1.msra.mxu0 0.0
    %967 = vmatprep.subr.mxu0 0.0
    %968 = vmatpush1.msra.mxu0 0.0
    %969 = vmatprep.subr.mxu0 0.0
    %970 = vmatpush1.msra.mxu0 0.0
    %971 = vmatprep.subr.mxu0 0.0
    %972 = vmatpush1.msra.mxu0 0.0
    %973 = vmatprep.subr.mxu0 0.0
    %974 = vmatpush1.msra.mxu0 0.0
    %975 = vmatprep.subr.mxu0 0.0
    %976 = vmatpush1.msra.mxu0 0.0
    %977 = vmatprep.mubr.f32.mxu0 0.0
    %978 = vmatmul.mubr.f32.gmra.mrb[0].mxu0 %v770
    %v979 = vpop.f32.mrb[0].mxu0
    %v980 = vadd.f32 0.0, %v979
    %v981 = vpop.f32.mrb[0].mxu0
    %982 = vmatprep.mubr.f32.mxu0 0.0
    %983 = vmatmul.mubr.f32.gmra.mrb[0].mxu0 %v773
    %v984 = vpop.f32.mrb[0].mxu0
    %v985 = vadd.f32 0.0, %v984
    %v986 = vpop.f32.mrb[0].mxu0
    %987 = vmatprep.mubr.f32.mxu0 0.0
    %988 = vmatmul.mubr.f32.gmra.mrb[0].mxu0 %v776
    %v989 = vpop.f32.mrb[0].mxu0
    %v990 = vadd.f32 0.0, %v989
    %v991 = vpop.f32.mrb[0].mxu0
    %992 = vmatprep.mubr.f32.mxu0 0.0
    %993 = vmatmul.mubr.f32.gmra.mrb[0].mxu0 %v779
    %v994 = vpop.f32.mrb[0].mxu0
    %v995 = vadd.f32 0.0, %v994
    %v996 = vpop.f32.mrb[0].mxu0
    %997 = vmatprep.mubr.f32.mxu0 0.0
    %998 = vmatmul.mubr.f32.gmra.mrb[0].mxu0 %v782
    %v999 = vpop.f32.mrb[0].mxu0
    %v1000 = vadd.f32 0.0, %v999
    %v1001 = vpop.f32.mrb[0].mxu0
    %1002 = vmatprep.mubr.f32.mxu0 0.0
    %1003 = vmatmul.mubr.f32.gmra.mrb[0].mxu0 %v785
    %v1004 = vpop.f32.mrb[0].mxu0
    %v1005 = vadd.f32 0.0, %v1004
    %v1006 = vpop.f32.mrb[0].mxu0
    %1007 = vmatprep.mubr.f32.mxu0 0.0
    %1008 = vmatmul.mubr.f32.gmra.mrb[0].mxu0 %v788
    %v1009 = vpop.f32.mrb[0].mxu0
    %v1010 = vadd.f32 0.0, %v1009
    %v1011 = vpop.f32.mrb[0].mxu0
    %1012 = vmatprep.mubr.f32.mxu0 0.0
    %1013 = vmatmul.mubr.f32.gmra.mrb[0].mxu0 %v791
    %v1014 = vpop.f32.mrb[0].mxu0
    %v1015 = vadd.f32 0.0, %v1014
    %v1016 = vpop.f32.mrb[0].mxu0
    %1017 = vdwg.mxu0
    %v1018 = vadd.f32 %v760, %v980
    %v1019 = vadd.f32 %v761, %v985
    %v1020 = vadd.f32 %v762, %v990
    %v1021 = vadd.f32 %v763, %v995
    %v1022 = vadd.f32 %v764, %v1000
    %v1023 = vadd.f32 %v765, %v1005
    %v1024 = vadd.f32 %v766, %v1010
    %v1025 = vadd.f32 %v767, %v1015
    %vm1026 = vcmask 523264
    %v1028 = vsel %vm1026, %v169, 0
    %v1031 = vsel %vm1026, %v170, 0
    %v1034 = vsel %vm1026, %v171, 0
    %v1037 = vsel %vm1026, %v172, 0
    %v1040 = vsel %vm1026, %v173, 0
    %v1043 = vsel %vm1026, %v174, 0
    %v1046 = vsel %vm1026, %v175, 0
    %v1049 = vsel %vm1026, %v176, 0
    %1051 = vmatprep.subr.mxu0 0.0
    %1052 = vmatpush1.msra.mxu0 %v1018
    %1053 = vmatprep.subr.mxu0 0.0
    %1054 = vmatpush1.msra.mxu0 %v1019
    %1055 = vmatprep.subr.mxu0 0.0
    %1056 = vmatpush1.msra.mxu0 %v1020
    %1057 = vmatprep.subr.mxu0 0.0
    %1058 = vmatpush1.msra.mxu0 %v1021
    %1059 = vmatprep.subr.mxu0 0.0
    %1060 = vmatpush1.msra.mxu0 %v1022
    %1061 = vmatprep.subr.mxu0 0.0
    %1062 = vmatpush1.msra.mxu0 %v1023
    %1063 = vmatprep.subr.mxu0 0.0
    %1064 = vmatpush1.msra.mxu0 %v1024
    %1065 = vmatprep.subr.mxu0 0.0
    %1066 = vmatpush1.msra.mxu0 %v1025
    %1067 = vmatprep.subr.mxu0 0.0
    %1068 = vmatpush1.msra.mxu0 0.0
    %1069 = vmatprep.subr.mxu0 0.0
    %1070 = vmatpush1.msra.mxu0 0.0
    %1071 = vmatprep.subr.mxu0 0.0
    %1072 = vmatpush1.msra.mxu0 0.0
    %1073 = vmatprep.subr.mxu0 0.0
    %1074 = vmatpush1.msra.mxu0 0.0
    %1075 = vmatprep.subr.mxu0 0.0
    %1076 = vmatpush1.msra.mxu0 0.0
    %1077 = vmatprep.subr.mxu0 0.0
    %1078 = vmatpush1.msra.mxu0 0.0
    %1079 = vmatprep.subr.mxu0 0.0
    %1080 = vmatpush1.msra.mxu0 0.0
    %1081 = vmatprep.subr.mxu0 0.0
    %1082 = vmatpush1.msra.mxu0 0.0
    %1083 = vmatprep.subr.mxu0 0.0
    %1084 = vmatpush1.msra.mxu0 0.0
    %1085 = vmatprep.subr.mxu0 0.0
    %1086 = vmatpush1.msra.mxu0 0.0
    %1087 = vmatprep.subr.mxu0 0.0
    %1088 = vmatpush1.msra.mxu0 0.0
    %1089 = vmatprep.subr.mxu0 0.0
    %1090 = vmatpush1.msra.mxu0 0.0
    %1091 = vmatprep.subr.mxu0 0.0
    %1092 = vmatpush1.msra.mxu0 0.0
    %1093 = vmatprep.subr.mxu0 0.0
    %1094 = vmatpush1.msra.mxu0 0.0
    %1095 = vmatprep.subr.mxu0 0.0
    %1096 = vmatpush1.msra.mxu0 0.0
    %1097 = vmatprep.subr.mxu0 0.0
    %1098 = vmatpush1.msra.mxu0 0.0
    %1099 = vmatprep.subr.mxu0 0.0
    %1100 = vmatpush1.msra.mxu0 0.0
    %1101 = vmatprep.subr.mxu0 0.0
    %1102 = vmatpush1.msra.mxu0 0.0
    %1103 = vmatprep.subr.mxu0 0.0
    %1104 = vmatpush1.msra.mxu0 0.0
    %1105 = vmatprep.subr.mxu0 0.0
    %1106 = vmatpush1.msra.mxu0 0.0
    %1107 = vmatprep.subr.mxu0 0.0
    %1108 = vmatpush1.msra.mxu0 0.0
    %1109 = vmatprep.subr.mxu0 0.0
    %1110 = vmatpush1.msra.mxu0 0.0
    %1111 = vmatprep.subr.mxu0 0.0
    %1112 = vmatpush1.msra.mxu0 0.0
    %1113 = vmatprep.subr.mxu0 0.0
    %1114 = vmatpush1.msra.mxu0 0.0
    %1115 = vmatprep.mubr.f32.mxu0 0.0
    %1116 = vmatmul.mubr.f32.gmra.mrb[0].mxu0 %v1028
    %v1117 = vpop.f32.mrb[0].mxu0
    %v1118 = vadd.f32 0.0, %v1117
    %v1119 = vpop.f32.mrb[0].mxu0
    %1120 = vmatprep.mubr.f32.mxu0 0.0
    %1121 = vmatmul.mubr.f32.gmra.mrb[0].mxu0 %v1031
    %v1122 = vpop.f32.mrb[0].mxu0
    %v1123 = vadd.f32 0.0, %v1122
    %v1124 = vpop.f32.mrb[0].mxu0
    %1125 = vmatprep.mubr.f32.mxu0 0.0
    %1126 = vmatmul.mubr.f32.gmra.mrb[0].mxu0 %v1034
    %v1127 = vpop.f32.mrb[0].mxu0
    %v1128 = vadd.f32 0.0, %v1127
    %v1129 = vpop.f32.mrb[0].mxu0
    %1130 = vmatprep.mubr.f32.mxu0 0.0
    %1131 = vmatmul.mubr.f32.gmra.mrb[0].mxu0 %v1037
    %v1132 = vpop.f32.mrb[0].mxu0
    %v1133 = vadd.f32 0.0, %v1132
    %v1134 = vpop.f32.mrb[0].mxu0
    %1135 = vmatprep.mubr.f32.mxu0 0.0
    %1136 = vmatmul.mubr.f32.gmra.mrb[0].mxu0 %v1040
    %v1137 = vpop.f32.mrb[0].mxu0
    %v1138 = vadd.f32 0.0, %v1137
    %v1139 = vpop.f32.mrb[0].mxu0
    %1140 = vmatprep.mubr.f32.mxu0 0.0
    %1141 = vmatmul.mubr.f32.gmra.mrb[0].mxu0 %v1043
    %v1142 = vpop.f32.mrb[0].mxu0
    %v1143 = vadd.f32 0.0, %v1142
    %v1144 = vpop.f32.mrb[0].mxu0
    %1145 = vmatprep.mubr.f32.mxu0 0.0
    %1146 = vmatmul.mubr.f32.gmra.mrb[0].mxu0 %v1046
    %v1147 = vpop.f32.mrb[0].mxu0
    %v1148 = vadd.f32 0.0, %v1147
    %v1149 = vpop.f32.mrb[0].mxu0
    %1150 = vmatprep.mubr.f32.mxu0 0.0
    %1151 = vmatmul.mubr.f32.gmra.mrb[0].mxu0 %v1049
    %v1152 = vpop.f32.mrb[0].mxu0
    %v1153 = vadd.f32 0.0, %v1152
    %v1154 = vpop.f32.mrb[0].mxu0
    %1155 = vdwg.mxu0
    %v1156 = vadd.f32 %v902, %v1118
    %v1157 = vadd.f32 %v903, %v1123
    %v1158 = vadd.f32 %v904, %v1128
    %v1159 = vadd.f32 %v905, %v1133
    %v1160 = vadd.f32 %v906, %v1138
    %v1161 = vadd.f32 %v907, %v1143
    %v1162 = vadd.f32 %v908, %v1148
    %v1163 = vadd.f32 %v909, %v1153
    %v1164 = vld [vmem:[%s25] sm:$0xff]
    %v1165 = vld [vmem:[%s25 + $0x8] sm:$0xff]
    %v1166 = vld [vmem:[%s25 + $0x10] sm:$0xff]
    %v1167 = vld [vmem:[%s25 + $0x18] sm:$0xff]
    %v1168 = vld [vmem:[%s27] sm:$0x1]
    %v1169 = vld [vmem:[%s29] sm:$0xff]
    %v1170 = vld [vmem:[%s29 + $0x8] sm:$0xff]
    %v1171 = vld [vmem:[%s29 + $0x10] sm:$0xff]
    %v1172 = vld [vmem:[%s29 + $0x18] sm:$0xff]
    %v1173 = vld [vmem:[%s31] sm:$0x1]
    %v1174 = vmax.f32 %v1156, 0.0
    %v1175 = vmax.f32 %v1157, 0.0
    %v1176 = vmax.f32 %v1158, 0.0
    %v1177 = vmax.f32 %v1159, 0.0
    %v1178 = vmax.f32 %v1160, 0.0
    %v1179 = vmax.f32 %v1161, 0.0
    %v1180 = vmax.f32 %v1162, 0.0
    %v1181 = vmax.f32 %v1163, 0.0
    %v1183 = vsel %vm505, %v1174, 0
    %v1186 = vsel %vm505, %v1175, 0
    %v1189 = vsel %vm505, %v1176, 0
    %v1192 = vsel %vm505, %v1177, 0
    %v1195 = vsel %vm505, %v1178, 0
    %v1198 = vsel %vm505, %v1179, 0
    %v1201 = vsel %vm505, %v1180, 0
    %v1204 = vsel %vm505, %v1181, 0
    %1206 = vmatprep.subr.mxu0 0.0
    %1207 = vmatpush1.msra.mxu0 %v1164
    %1208 = vmatprep.subr.mxu0 0.0
    %1209 = vmatpush1.msra.mxu0 %v1165
    %1210 = vmatprep.subr.mxu0 0.0
    %1211 = vmatpush1.msra.mxu0 %v1166
    %1212 = vmatprep.subr.mxu0 0.0
    %1213 = vmatpush1.msra.mxu0 %v1167
    %1214 = vmatprep.subr.mxu0 0.0
    %1215 = vmatpush1.msra.mxu0 0.0
    %1216 = vmatprep.subr.mxu0 0.0
    %1217 = vmatpush1.msra.mxu0 0.0
    %1218 = vmatprep.subr.mxu0 0.0
    %1219 = vmatpush1.msra.mxu0 0.0
    %1220 = vmatprep.subr.mxu0 0.0
    %1221 = vmatpush1.msra.mxu0 0.0
    %1222 = vmatprep.subr.mxu0 0.0
    %1223 = vmatpush1.msra.mxu0 0.0
    %1224 = vmatprep.subr.mxu0 0.0
    %1225 = vmatpush1.msra.mxu0 0.0
    %1226 = vmatprep.subr.mxu0 0.0
    %1227 = vmatpush1.msra.mxu0 0.0
    %1228 = vmatprep.subr.mxu0 0.0
    %1229 = vmatpush1.msra.mxu0 0.0
    %1230 = vmatprep.subr.mxu0 0.0
    %1231 = vmatpush1.msra.mxu0 0.0
    %1232 = vmatprep.subr.mxu0 0.0
    %1233 = vmatpush1.msra.mxu0 0.0
    %1234 = vmatprep.subr.mxu0 0.0
    %1235 = vmatpush1.msra.mxu0 0.0
    %1236 = vmatprep.subr.mxu0 0.0
    %1237 = vmatpush1.msra.mxu0 0.0
    %1238 = vmatprep.subr.mxu0 0.0
    %1239 = vmatpush1.msra.mxu0 0.0
    %1240 = vmatprep.subr.mxu0 0.0
    %1241 = vmatpush1.msra.mxu0 0.0
    %1242 = vmatprep.subr.mxu0 0.0
    %1243 = vmatpush1.msra.mxu0 0.0
    %1244 = vmatprep.subr.mxu0 0.0
    %1245 = vmatpush1.msra.mxu0 0.0
    %1246 = vmatprep.subr.mxu0 0.0
    %1247 = vmatpush1.msra.mxu0 0.0
    %1248 = vmatprep.subr.mxu0 0.0
    %1249 = vmatpush1.msra.mxu0 0.0
    %1250 = vmatprep.subr.mxu0 0.0
    %1251 = vmatpush1.msra.mxu0 0.0
    %1252 = vmatprep.subr.mxu0 0.0
    %1253 = vmatpush1.msra.mxu0 0.0
    %1254 = vmatprep.subr.mxu0 0.0
    %1255 = vmatpush1.msra.mxu0 0.0
    %1256 = vmatprep.subr.mxu0 0.0
    %1257 = vmatpush1.msra.mxu0 0.0
    %1258 = vmatprep.subr.mxu0 0.0
    %1259 = vmatpush1.msra.mxu0 0.0
    %1260 = vmatprep.subr.mxu0 0.0
    %1261 = vmatpush1.msra.mxu0 0.0
    %1262 = vmatprep.subr.mxu0 0.0
    %1263 = vmatpush1.msra.mxu0 0.0
    %1264 = vmatprep.subr.mxu0 0.0
    %1265 = vmatpush1.msra.mxu0 0.0
    %1266 = vmatprep.subr.mxu0 0.0
    %1267 = vmatpush1.msra.mxu0 0.0
    %1268 = vmatprep.subr.mxu0 0.0
    %1269 = vmatpush1.msra.mxu0 0.0
    %1270 = vmatprep.mubr.f32.mxu0 0.0
    %1271 = vmatmul.mubr.f32.gmra.mrb[0].mxu0 %v1183
    %v1272 = vpop.f32.mrb[0].mxu0
    %v1273 = vadd.f32 0.0, %v1272
    %v1274 = vpop.f32.mrb[0].mxu0
    %1275 = vmatprep.mubr.f32.mxu0 0.0
    %1276 = vmatmul.mubr.f32.gmra.mrb[0].mxu0 %v1186
    %v1277 = vpop.f32.mrb[0].mxu0
    %v1278 = vadd.f32 0.0, %v1277
    %v1279 = vpop.f32.mrb[0].mxu0
    %1280 = vmatprep.mubr.f32.mxu0 0.0
    %1281 = vmatmul.mubr.f32.gmra.mrb[0].mxu0 %v1189
    %v1282 = vpop.f32.mrb[0].mxu0
    %v1283 = vadd.f32 0.0, %v1282
    %v1284 = vpop.f32.mrb[0].mxu0
    %1285 = vmatprep.mubr.f32.mxu0 0.0
    %1286 = vmatmul.mubr.f32.gmra.mrb[0].mxu0 %v1192
    %v1287 = vpop.f32.mrb[0].mxu0
    %v1288 = vadd.f32 0.0, %v1287
    %v1289 = vpop.f32.mrb[0].mxu0
    %1290 = vmatprep.mubr.f32.mxu0 0.0
    %1291 = vmatmul.mubr.f32.gmra.mrb[0].mxu0 %v1195
    %v1292 = vpop.f32.mrb[0].mxu0
    %v1293 = vadd.f32 0.0, %v1292
    %v1294 = vpop.f32.mrb[0].mxu0
    %1295 = vmatprep.mubr.f32.mxu0 0.0
    %1296 = vmatmul.mubr.f32.gmra.mrb[0].mxu0 %v1198
    %v1297 = vpop.f32.mrb[0].mxu0
    %v1298 = vadd.f32 0.0, %v1297
    %v1299 = vpop.f32.mrb[0].mxu0
    %1300 = vmatprep.mubr.f32.mxu0 0.0
    %1301 = vmatmul.mubr.f32.gmra.mrb[0].mxu0 %v1201
    %v1302 = vpop.f32.mrb[0].mxu0
    %v1303 = vadd.f32 0.0, %v1302
    %v1304 = vpop.f32.mrb[0].mxu0
    %1305 = vmatprep.mubr.f32.mxu0 0.0
    %1306 = vmatmul.mubr.f32.gmra.mrb[0].mxu0 %v1204
    %v1307 = vpop.f32.mrb[0].mxu0
    %v1308 = vadd.f32 0.0, %v1307
    %v1309 = vpop.f32.mrb[0].mxu0
    %1310 = vdwg.mxu0
    %v1312 = vlaneseq
    %v1313 = vshrl.u32 %v1312, 7
    %v1314 = vsub.s32 0, %v1313
    %v1315 = vrot.slane %v1168, %v1314
    %v1317 = vadd.f32 %v1315, %v1273
    %v1318 = vadd.f32 %v1315, %v1278
    %v1319 = vadd.f32 %v1315, %v1283
    %v1320 = vadd.f32 %v1315, %v1288
    %v1321 = vadd.f32 %v1315, %v1293
    %v1322 = vadd.f32 %v1315, %v1298
    %v1323 = vadd.f32 %v1315, %v1303
    %v1324 = vadd.f32 %v1315, %v1308
    %1325 = vmatprep.subr.mxu0 0.0
    %1326 = vmatpush1.msra.mxu0 %v1169
    %1327 = vmatprep.subr.mxu0 0.0
    %1328 = vmatpush1.msra.mxu0 %v1170
    %1329 = vmatprep.subr.mxu0 0.0
    %1330 = vmatpush1.msra.mxu0 %v1171
    %1331 = vmatprep.subr.mxu0 0.0
    %1332 = vmatpush1.msra.mxu0 %v1172
    %1333 = vmatprep.subr.mxu0 0.0
    %1334 = vmatpush1.msra.mxu0 0.0
    %1335 = vmatprep.subr.mxu0 0.0
    %1336 = vmatpush1.msra.mxu0 0.0
    %1337 = vmatprep.subr.mxu0 0.0
    %1338 = vmatpush1.msra.mxu0 0.0
    %1339 = vmatprep.subr.mxu0 0.0
    %1340 = vmatpush1.msra.mxu0 0.0
    %1341 = vmatprep.subr.mxu0 0.0
    %1342 = vmatpush1.msra.mxu0 0.0
    %1343 = vmatprep.subr.mxu0 0.0
    %1344 = vmatpush1.msra.mxu0 0.0
    %1345 = vmatprep.subr.mxu0 0.0
    %1346 = vmatpush1.msra.mxu0 0.0
    %1347 = vmatprep.subr.mxu0 0.0
    %1348 = vmatpush1.msra.mxu0 0.0
    %1349 = vmatprep.subr.mxu0 0.0
    %1350 = vmatpush1.msra.mxu0 0.0
    %1351 = vmatprep.subr.mxu0 0.0
    %1352 = vmatpush1.msra.mxu0 0.0
    %1353 = vmatprep.subr.mxu0 0.0
    %1354 = vmatpush1.msra.mxu0 0.0
    %1355 = vmatprep.subr.mxu0 0.0
    %1356 = vmatpush1.msra.mxu0 0.0
    %1357 = vmatprep.subr.mxu0 0.0
    %1358 = vmatpush1.msra.mxu0 0.0
    %1359 = vmatprep.subr.mxu0 0.0
    %1360 = vmatpush1.msra.mxu0 0.0
    %1361 = vmatprep.subr.mxu0 0.0
    %1362 = vmatpush1.msra.mxu0 0.0
    %1363 = vmatprep.subr.mxu0 0.0
    %1364 = vmatpush1.msra.mxu0 0.0
    %1365 = vmatprep.subr.mxu0 0.0
    %1366 = vmatpush1.msra.mxu0 0.0
    %1367 = vmatprep.subr.mxu0 0.0
    %1368 = vmatpush1.msra.mxu0 0.0
    %1369 = vmatprep.subr.mxu0 0.0
    %1370 = vmatpush1.msra.mxu0 0.0
    %1371 = vmatprep.subr.mxu0 0.0
    %1372 = vmatpush1.msra.mxu0 0.0
    %1373 = vmatprep.subr.mxu0 0.0
    %1374 = vmatpush1.msra.mxu0 0.0
    %1375 = vmatprep.subr.mxu0 0.0
    %1376 = vmatpush1.msra.mxu0 0.0
    %1377 = vmatprep.subr.mxu0 0.0
    %1378 = vmatpush1.msra.mxu0 0.0
    %1379 = vmatprep.subr.mxu0 0.0
    %1380 = vmatpush1.msra.mxu0 0.0
    %1381 = vmatprep.subr.mxu0 0.0
    %1382 = vmatpush1.msra.mxu0 0.0
    %1383 = vmatprep.subr.mxu0 0.0
    %1384 = vmatpush1.msra.mxu0 0.0
    %1385 = vmatprep.subr.mxu0 0.0
    %1386 = vmatpush1.msra.mxu0 0.0
    %1387 = vmatprep.subr.mxu0 0.0
    %1388 = vmatpush1.msra.mxu0 0.0
    %1389 = vmatprep.mubr.f32.mxu0 0.0
    %1390 = vmatmul.mubr.f32.gmra.mrb[0].mxu0 %v1183
    %v1391 = vpop.f32.mrb[0].mxu0
    %v1392 = vadd.f32 0.0, %v1391
    %v1393 = vpop.f32.mrb[0].mxu0
    %1394 = vmatprep.mubr.f32.mxu0 0.0
    %1395 = vmatmul.mubr.f32.gmra.mrb[0].mxu0 %v1186
    %v1396 = vpop.f32.mrb[0].mxu0
    %v1397 = vadd.f32 0.0, %v1396
    %v1398 = vpop.f32.mrb[0].mxu0
    %1399 = vmatprep.mubr.f32.mxu0 0.0
    %1400 = vmatmul.mubr.f32.gmra.mrb[0].mxu0 %v1189
    %v1401 = vpop.f32.mrb[0].mxu0
    %v1402 = vadd.f32 0.0, %v1401
    %v1403 = vpop.f32.mrb[0].mxu0
    %1404 = vmatprep.mubr.f32.mxu0 0.0
    %1405 = vmatmul.mubr.f32.gmra.mrb[0].mxu0 %v1192
    %v1406 = vpop.f32.mrb[0].mxu0
    %v1407 = vadd.f32 0.0, %v1406
    %v1408 = vpop.f32.mrb[0].mxu0
    %1409 = vmatprep.mubr.f32.mxu0 0.0
    %1410 = vmatmul.mubr.f32.gmra.mrb[0].mxu0 %v1195
    %v1411 = vpop.f32.mrb[0].mxu0
    %v1412 = vadd.f32 0.0, %v1411
    %v1413 = vpop.f32.mrb[0].mxu0
    %1414 = vmatprep.mubr.f32.mxu0 0.0
    %1415 = vmatmul.mubr.f32.gmra.mrb[0].mxu0 %v1198
    %v1416 = vpop.f32.mrb[0].mxu0
    %v1417 = vadd.f32 0.0, %v1416
    %v1418 = vpop.f32.mrb[0].mxu0
    %1419 = vmatprep.mubr.f32.mxu0 0.0
    %1420 = vmatmul.mubr.f32.gmra.mrb[0].mxu0 %v1201
    %v1421 = vpop.f32.mrb[0].mxu0
    %v1422 = vadd.f32 0.0, %v1421
    %v1423 = vpop.f32.mrb[0].mxu0
    %1424 = vmatprep.mubr.f32.mxu0 0.0
    %1425 = vmatmul.mubr.f32.gmra.mrb[0].mxu0 %v1204
    %v1426 = vpop.f32.mrb[0].mxu0
    %v1427 = vadd.f32 0.0, %v1426
    %v1428 = vpop.f32.mrb[0].mxu0
    %1429 = vdwg.mxu0
    %v1431 = vlaneseq
    %v1432 = vshrl.u32 %v1431, 7
    %v1433 = vsub.s32 0, %v1432
    %v1434 = vrot.slane %v1173, %v1433
    %v1436 = vadd.f32 %v1434, %v1392
    %v1437 = vadd.f32 %v1434, %v1397
    %v1438 = vadd.f32 %v1434, %v1402
    %v1439 = vadd.f32 %v1434, %v1407
    %v1440 = vadd.f32 %v1434, %v1412
    %v1441 = vadd.f32 %v1434, %v1417
    %v1442 = vadd.f32 %v1434, %v1422
    %v1443 = vadd.f32 %v1434, %v1427
    %1444 = vmatprep.subr.mxu0 0.0
    %1445 = vmatpush1.msra.mxu0 %v1436
    %1446 = vmatprep.subr.mxu0 0.0
    %1447 = vmatpush1.msra.mxu0 %v1437
    %1448 = vmatprep.subr.mxu0 0.0
    %1449 = vmatpush1.msra.mxu0 %v1438
    %1450 = vmatprep.subr.mxu0 0.0
    %1451 = vmatpush1.msra.mxu0 %v1439
    %1452 = vmatprep.subr.mxu0 0.0
    %1453 = vmatpush1.msra.mxu0 %v1440
    %1454 = vmatprep.subr.mxu0 0.0
    %1455 = vmatpush1.msra.mxu0 %v1441
    %1456 = vmatprep.subr.mxu0 0.0
    %1457 = vmatpush1.msra.mxu0 %v1442
    %1458 = vmatprep.subr.mxu0 0.0
    %1459 = vmatpush1.msra.mxu0 %v1443
    %1460 = vmatprep.subr.mxu0 0.0
    %1461 = vmatpush1.msra.mxu0 0.0
    %1462 = vmatprep.subr.mxu0 0.0
    %1463 = vmatpush1.msra.mxu0 0.0
    %1464 = vmatprep.subr.mxu0 0.0
    %1465 = vmatpush1.msra.mxu0 0.0
    %1466 = vmatprep.subr.mxu0 0.0
    %1467 = vmatpush1.msra.mxu0 0.0
    %1468 = vmatprep.subr.mxu0 0.0
    %1469 = vmatpush1.msra.mxu0 0.0
    %1470 = vmatprep.subr.mxu0 0.0
    %1471 = vmatpush1.msra.mxu0 0.0
    %1472 = vmatprep.subr.mxu0 0.0
    %1473 = vmatpush1.msra.mxu0 0.0
    %1474 = vmatprep.subr.mxu0 0.0
    %1475 = vmatpush1.msra.mxu0 0.0
    %1476 = vmatprep.subr.mxu0 0.0
    %1477 = vmatpush1.msra.mxu0 0.0
    %1478 = vmatprep.subr.mxu0 0.0
    %1479 = vmatpush1.msra.mxu0 0.0
    %1480 = vmatprep.subr.mxu0 0.0
    %1481 = vmatpush1.msra.mxu0 0.0
    %1482 = vmatprep.subr.mxu0 0.0
    %1483 = vmatpush1.msra.mxu0 0.0
    %1484 = vmatprep.subr.mxu0 0.0
    %1485 = vmatpush1.msra.mxu0 0.0
    %1486 = vmatprep.subr.mxu0 0.0
    %1487 = vmatpush1.msra.mxu0 0.0
    %1488 = vmatprep.subr.mxu0 0.0
    %1489 = vmatpush1.msra.mxu0 0.0
    %1490 = vmatprep.subr.mxu0 0.0
    %1491 = vmatpush1.msra.mxu0 0.0
    %1492 = vmatprep.subr.mxu0 0.0
    %1493 = vmatpush1.msra.mxu0 0.0
    %1494 = vmatprep.subr.mxu0 0.0
    %1495 = vmatpush1.msra.mxu0 0.0
    %1496 = vmatprep.subr.mxu0 0.0
    %1497 = vmatpush1.msra.mxu0 0.0
    %1498 = vmatprep.subr.mxu0 0.0
    %1499 = vmatpush1.msra.mxu0 0.0
    %1500 = vmatprep.subr.mxu0 0.0
    %1501 = vmatpush1.msra.mxu0 0.0
    %1502 = vmatprep.subr.mxu0 0.0
    %1503 = vmatpush1.msra.mxu0 0.0
    %1504 = vmatprep.subr.mxu0 0.0
    %1505 = vmatpush1.msra.mxu0 0.0
    %1506 = vmatprep.subr.mxu0 0.0
    %1507 = vmatpush1.msra.mxu0 0.0
    %1508 = vmatprep.mubr.f32.mxu0 0.0
    %1509 = vmatmul.mubr.f32.gmra.mrb[0].mxu0 %v1028
    %v1510 = vpop.f32.mrb[0].mxu0
    %v1511 = vadd.f32 0.0, %v1510
    %v1512 = vpop.f32.mrb[0].mxu0
    %1513 = vmatprep.mubr.f32.mxu0 0.0
    %1514 = vmatmul.mubr.f32.gmra.mrb[0].mxu0 %v1031
    %v1515 = vpop.f32.mrb[0].mxu0
    %v1516 = vadd.f32 0.0, %v1515
    %v1517 = vpop.f32.mrb[0].mxu0
    %1518 = vmatprep.mubr.f32.mxu0 0.0
    %1519 = vmatmul.mubr.f32.gmra.mrb[0].mxu0 %v1034
    %v1520 = vpop.f32.mrb[0].mxu0
    %v1521 = vadd.f32 0.0, %v1520
    %v1522 = vpop.f32.mrb[0].mxu0
    %1523 = vmatprep.mubr.f32.mxu0 0.0
    %1524 = vmatmul.mubr.f32.gmra.mrb[0].mxu0 %v1037
    %v1525 = vpop.f32.mrb[0].mxu0
    %v1526 = vadd.f32 0.0, %v1525
    %v1527 = vpop.f32.mrb[0].mxu0
    %1528 = vmatprep.mubr.f32.mxu0 0.0
    %1529 = vmatmul.mubr.f32.gmra.mrb[0].mxu0 %v1040
    %v1530 = vpop.f32.mrb[0].mxu0
    %v1531 = vadd.f32 0.0, %v1530
    %v1532 = vpop.f32.mrb[0].mxu0
    %1533 = vmatprep.mubr.f32.mxu0 0.0
    %1534 = vmatmul.mubr.f32.gmra.mrb[0].mxu0 %v1043
    %v1535 = vpop.f32.mrb[0].mxu0
    %v1536 = vadd.f32 0.0, %v1535
    %v1537 = vpop.f32.mrb[0].mxu0
    %1538 = vmatprep.mubr.f32.mxu0 0.0
    %1539 = vmatmul.mubr.f32.gmra.mrb[0].mxu0 %v1046
    %v1540 = vpop.f32.mrb[0].mxu0
    %v1541 = vadd.f32 0.0, %v1540
    %v1542 = vpop.f32.mrb[0].mxu0
    %1543 = vmatprep.mubr.f32.mxu0 0.0
    %1544 = vmatmul.mubr.f32.gmra.mrb[0].mxu0 %v1049
    %v1545 = vpop.f32.mrb[0].mxu0
    %v1546 = vadd.f32 0.0, %v1545
    %v1547 = vpop.f32.mrb[0].mxu0
    %1548 = vdwg.mxu0
    %v1549 = vadd.f32 %v1317, %v1511
    %v1550 = vadd.f32 %v1318, %v1516
    %v1551 = vadd.f32 %v1319, %v1521
    %v1552 = vadd.f32 %v1320, %v1526
    %v1553 = vadd.f32 %v1321, %v1531
    %v1554 = vadd.f32 %v1322, %v1536
    %v1555 = vadd.f32 %v1323, %v1541
    %v1556 = vadd.f32 %v1324, %v1546
    %v1557 = vld [vmem:[%s33] sm:$0xff]
    %v1558 = vld [vmem:[%s33 + $0x8] sm:$0xff]
    %v1559 = vld [vmem:[%s33 + $0x10] sm:$0xff]
    %v1560 = vld [vmem:[%s33 + $0x18] sm:$0xff]
    %v1561 = vld [vmem:[%s35] sm:$0x7]
    %v1562 = vld [vmem:[%s37] sm:$0x1]
    %1563 = vmatprep.subr.mxu0 0.0
    %1564 = vmatpush1.msra.mxu0 %v1557
    %1565 = vmatprep.subr.mxu0 0.0
    %1566 = vmatpush1.msra.mxu0 %v1558
    %1567 = vmatprep.subr.mxu0 0.0
    %1568 = vmatpush1.msra.mxu0 %v1559
    %1569 = vmatprep.subr.mxu0 0.0
    %1570 = vmatpush1.msra.mxu0 %v1560
    %1571 = vmatprep.subr.mxu0 0.0
    %1572 = vmatpush1.msra.mxu0 0.0
    %1573 = vmatprep.subr.mxu0 0.0
    %1574 = vmatpush1.msra.mxu0 0.0
    %1575 = vmatprep.subr.mxu0 0.0
    %1576 = vmatpush1.msra.mxu0 0.0
    %1577 = vmatprep.subr.mxu0 0.0
    %1578 = vmatpush1.msra.mxu0 0.0
    %1579 = vmatprep.subr.mxu0 0.0
    %1580 = vmatpush1.msra.mxu0 0.0
    %1581 = vmatprep.subr.mxu0 0.0
    %1582 = vmatpush1.msra.mxu0 0.0
    %1583 = vmatprep.subr.mxu0 0.0
    %1584 = vmatpush1.msra.mxu0 0.0
    %1585 = vmatprep.subr.mxu0 0.0
    %1586 = vmatpush1.msra.mxu0 0.0
    %1587 = vmatprep.subr.mxu0 0.0
    %1588 = vmatpush1.msra.mxu0 0.0
    %1589 = vmatprep.subr.mxu0 0.0
    %1590 = vmatpush1.msra.mxu0 0.0
    %1591 = vmatprep.subr.mxu0 0.0
    %1592 = vmatpush1.msra.mxu0 0.0
    %1593 = vmatprep.subr.mxu0 0.0
    %1594 = vmatpush1.msra.mxu0 0.0
    %1595 = vmatprep.subr.mxu0 0.0
    %1596 = vmatpush1.msra.mxu0 0.0
    %1597 = vmatprep.subr.mxu0 0.0
    %1598 = vmatpush1.msra.mxu0 0.0
    %1599 = vmatprep.subr.mxu0 0.0
    %1600 = vmatpush1.msra.mxu0 0.0
    %1601 = vmatprep.subr.mxu0 0.0
    %1602 = vmatpush1.msra.mxu0 0.0
    %1603 = vmatprep.subr.mxu0 0.0
    %1604 = vmatpush1.msra.mxu0 0.0
    %1605 = vmatprep.subr.mxu0 0.0
    %1606 = vmatpush1.msra.mxu0 0.0
    %1607 = vmatprep.subr.mxu0 0.0
    %1608 = vmatpush1.msra.mxu0 0.0
    %1609 = vmatprep.subr.mxu0 0.0
    %1610 = vmatpush1.msra.mxu0 0.0
    %1611 = vmatprep.subr.mxu0 0.0
    %1612 = vmatpush1.msra.mxu0 0.0
    %1613 = vmatprep.subr.mxu0 0.0
    %1614 = vmatpush1.msra.mxu0 0.0
    %1615 = vmatprep.subr.mxu0 0.0
    %1616 = vmatpush1.msra.mxu0 0.0
    %1617 = vmatprep.subr.mxu0 0.0
    %1618 = vmatpush1.msra.mxu0 0.0
    %1619 = vmatprep.subr.mxu0 0.0
    %1620 = vmatpush1.msra.mxu0 0.0
    %1621 = vmatprep.subr.mxu0 0.0
    %1622 = vmatpush1.msra.mxu0 0.0
    %1623 = vmatprep.subr.mxu0 0.0
    %1624 = vmatpush1.msra.mxu0 0.0
    %1625 = vmatprep.subr.mxu0 0.0
    %1626 = vmatpush1.msra.mxu0 0.0
    %1627 = vmatprep.mubr.f32.mxu0 0.0
    %1628 = vmatmul.mubr.f32.gmra.mrb[0].mxu0 %v507
    %v1629 = vpop.f32.mrb[0].mxu0
    %v1630 = vadd.f32 0.0, %v1629
    %v1631 = vpop.f32.mrb[0].mxu0
    %1632 = vmatprep.mubr.f32.mxu0 0.0
    %1633 = vmatmul.mubr.f32.gmra.mrb[0].mxu0 %v510
    %v1634 = vpop.f32.mrb[0].mxu0
    %v1635 = vadd.f32 0.0, %v1634
    %v1636 = vpop.f32.mrb[0].mxu0
    %1637 = vmatprep.mubr.f32.mxu0 0.0
    %1638 = vmatmul.mubr.f32.gmra.mrb[0].mxu0 %v513
    %v1639 = vpop.f32.mrb[0].mxu0
    %v1640 = vadd.f32 0.0, %v1639
    %v1641 = vpop.f32.mrb[0].mxu0
    %1642 = vmatprep.mubr.f32.mxu0 0.0
    %1643 = vmatmul.mubr.f32.gmra.mrb[0].mxu0 %v516
    %v1644 = vpop.f32.mrb[0].mxu0
    %v1645 = vadd.f32 0.0, %v1644
    %v1646 = vpop.f32.mrb[0].mxu0
    %1647 = vmatprep.mubr.f32.mxu0 0.0
    %1648 = vmatmul.mubr.f32.gmra.mrb[0].mxu0 %v519
    %v1649 = vpop.f32.mrb[0].mxu0
    %v1650 = vadd.f32 0.0, %v1649
    %v1651 = vpop.f32.mrb[0].mxu0
    %1652 = vmatprep.mubr.f32.mxu0 0.0
    %1653 = vmatmul.mubr.f32.gmra.mrb[0].mxu0 %v522
    %v1654 = vpop.f32.mrb[0].mxu0
    %v1655 = vadd.f32 0.0, %v1654
    %v1656 = vpop.f32.mrb[0].mxu0
    %1657 = vmatprep.mubr.f32.mxu0 0.0
    %1658 = vmatmul.mubr.f32.gmra.mrb[0].mxu0 %v525
    %v1659 = vpop.f32.mrb[0].mxu0
    %v1660 = vadd.f32 0.0, %v1659
    %v1661 = vpop.f32.mrb[0].mxu0
    %1662 = vmatprep.mubr.f32.mxu0 0.0
    %1663 = vmatmul.mubr.f32.gmra.mrb[0].mxu0 %v528
    %v1664 = vpop.f32.mrb[0].mxu0
    %v1665 = vadd.f32 0.0, %v1664
    %v1666 = vpop.f32.mrb[0].mxu0
    %1667 = vdwg.mxu0
    %v1669 = vlaneseq
    %v1670 = vshrl.u32 %v1669, 7
    %v1671 = vsub.s32 0, %v1670
    %v1672 = vrot.slane %v1562, %v1671
    %v1674 = vadd.f32 %v1672, %v1630
    %v1675 = vadd.f32 %v1672, %v1635
    %v1676 = vadd.f32 %v1672, %v1640
    %v1677 = vadd.f32 %v1672, %v1645
    %v1678 = vadd.f32 %v1672, %v1650
    %v1679 = vadd.f32 %v1672, %v1655
    %v1680 = vadd.f32 %v1672, %v1660
    %v1681 = vadd.f32 %v1672, %v1665
    %v1683 = vsel %vm793, %v1561, 0
    %1685 = vmatprep.subr.mxu0 0.0
    %1686 = vmatpush1.msra.mxu0 %v1683
    %1687 = vmatprep.subr.mxu0 0.0
    %1688 = vmatpush1.msra.mxu0 0.0
    %1689 = vmatprep.subr.mxu0 0.0
    %1690 = vmatpush1.msra.mxu0 0.0
    %1691 = vmatprep.subr.mxu0 0.0
    %1692 = vmatpush1.msra.mxu0 0.0
    %1693 = vmatprep.subr.mxu0 0.0
    %1694 = vmatpush1.msra.mxu0 0.0
    %1695 = vmatprep.subr.mxu0 0.0
    %1696 = vmatpush1.msra.mxu0 0.0
    %1697 = vmatprep.subr.mxu0 0.0
    %1698 = vmatpush1.msra.mxu0 0.0
    %1699 = vmatprep.subr.mxu0 0.0
    %1700 = vmatpush1.msra.mxu0 0.0
    %1701 = vmatprep.subr.mxu0 0.0
    %1702 = vmatpush1.msra.mxu0 0.0
    %1703 = vmatprep.subr.mxu0 0.0
    %1704 = vmatpush1.msra.mxu0 0.0
    %1705 = vmatprep.subr.mxu0 0.0
    %1706 = vmatpush1.msra.mxu0 0.0
    %1707 = vmatprep.subr.mxu0 0.0
    %1708 = vmatpush1.msra.mxu0 0.0
    %1709 = vmatprep.subr.mxu0 0.0
    %1710 = vmatpush1.msra.mxu0 0.0
    %1711 = vmatprep.subr.mxu0 0.0
    %1712 = vmatpush1.msra.mxu0 0.0
    %1713 = vmatprep.subr.mxu0 0.0
    %1714 = vmatpush1.msra.mxu0 0.0
    %1715 = vmatprep.subr.mxu0 0.0
    %1716 = vmatpush1.msra.mxu0 0.0
    %1717 = vmatprep.subr.mxu0 0.0
    %1718 = vmatpush1.msra.mxu0 0.0
    %1719 = vmatprep.subr.mxu0 0.0
    %1720 = vmatpush1.msra.mxu0 0.0
    %1721 = vmatprep.subr.mxu0 0.0
    %1722 = vmatpush1.msra.mxu0 0.0
    %1723 = vmatprep.subr.mxu0 0.0
    %1724 = vmatpush1.msra.mxu0 0.0
    %1725 = vmatprep.subr.mxu0 0.0
    %1726 = vmatpush1.msra.mxu0 0.0
    %1727 = vmatprep.subr.mxu0 0.0
    %1728 = vmatpush1.msra.mxu0 0.0
    %1729 = vmatprep.subr.mxu0 0.0
    %1730 = vmatpush1.msra.mxu0 0.0
    %1731 = vmatprep.subr.mxu0 0.0
    %1732 = vmatpush1.msra.mxu0 0.0
    %1733 = vmatprep.subr.mxu0 0.0
    %1734 = vmatpush1.msra.mxu0 0.0
    %1735 = vmatprep.subr.mxu0 0.0
    %1736 = vmatpush1.msra.mxu0 0.0
    %1737 = vmatprep.subr.mxu0 0.0
    %1738 = vmatpush1.msra.mxu0 0.0
    %1739 = vmatprep.subr.mxu0 0.0
    %1740 = vmatpush1.msra.mxu0 0.0
    %1741 = vmatprep.subr.mxu0 0.0
    %1742 = vmatpush1.msra.mxu0 0.0
    %1743 = vmatprep.subr.mxu0 0.0
    %1744 = vmatpush1.msra.mxu0 0.0
    %1745 = vmatprep.subr.mxu0 0.0
    %1746 = vmatpush1.msra.mxu0 0.0
    %1747 = vmatprep.subr.mxu0 0.0
    %1748 = vmatpush1.msra.mxu0 0.0
    %1749 = vmatprep.mubr.f32.mxu0 0.0
    %1750 = vmatmul.mubr.f32.gmra.mrb[0].mxu0 %v770
    %v1751 = vpop.f32.mrb[0].mxu0
    %v1752 = vadd.f32 0.0, %v1751
    %v1753 = vpop.f32.mrb[0].mxu0
    %1754 = vmatprep.mubr.f32.mxu0 0.0
    %1755 = vmatmul.mubr.f32.gmra.mrb[0].mxu0 %v773
    %v1756 = vpop.f32.mrb[0].mxu0
    %v1757 = vadd.f32 0.0, %v1756
    %v1758 = vpop.f32.mrb[0].mxu0
    %1759 = vmatprep.mubr.f32.mxu0 0.0
    %1760 = vmatmul.mubr.f32.gmra.mrb[0].mxu0 %v776
    %v1761 = vpop.f32.mrb[0].mxu0
    %v1762 = vadd.f32 0.0, %v1761
    %v1763 = vpop.f32.mrb[0].mxu0
    %1764 = vmatprep.mubr.f32.mxu0 0.0
    %1765 = vmatmul.mubr.f32.gmra.mrb[0].mxu0 %v779
    %v1766 = vpop.f32.mrb[0].mxu0
    %v1767 = vadd.f32 0.0, %v1766
    %v1768 = vpop.f32.mrb[0].mxu0
    %1769 = vmatprep.mubr.f32.mxu0 0.0
    %1770 = vmatmul.mubr.f32.gmra.mrb[0].mxu0 %v782
    %v1771 = vpop.f32.mrb[0].mxu0
    %v1772 = vadd.f32 0.0, %v1771
    %v1773 = vpop.f32.mrb[0].mxu0
    %1774 = vmatprep.mubr.f32.mxu0 0.0
    %1775 = vmatmul.mubr.f32.gmra.mrb[0].mxu0 %v785
    %v1776 = vpop.f32.mrb[0].mxu0
    %v1777 = vadd.f32 0.0, %v1776
    %v1778 = vpop.f32.mrb[0].mxu0
    %1779 = vmatprep.mubr.f32.mxu0 0.0
    %1780 = vmatmul.mubr.f32.gmra.mrb[0].mxu0 %v788
    %v1781 = vpop.f32.mrb[0].mxu0
    %v1782 = vadd.f32 0.0, %v1781
    %v1783 = vpop.f32.mrb[0].mxu0
    %1784 = vmatprep.mubr.f32.mxu0 0.0
    %1785 = vmatmul.mubr.f32.gmra.mrb[0].mxu0 %v791
    %v1786 = vpop.f32.mrb[0].mxu0
    %v1787 = vadd.f32 0.0, %v1786
    %v1788 = vpop.f32.mrb[0].mxu0
    %1789 = vdwg.mxu0
    %v1790 = vadd.f32 %v1674, %v1752
    %v1791 = vadd.f32 %v1675, %v1757
    %v1792 = vadd.f32 %v1676, %v1762
    %v1793 = vadd.f32 %v1677, %v1767
    %v1794 = vadd.f32 %v1678, %v1772
    %v1795 = vadd.f32 %v1679, %v1777
    %v1796 = vadd.f32 %v1680, %v1782
    %v1797 = vadd.f32 %v1681, %v1787
    %v1798 = vadd.f32 %v1549, %v1790
    %v1799 = vadd.f32 %v1550, %v1791
    %v1800 = vadd.f32 %v1551, %v1792
    %v1801 = vadd.f32 %v1552, %v1793
    %v1802 = vadd.f32 %v1553, %v1794
    %v1803 = vadd.f32 %v1554, %v1795
    %v1804 = vadd.f32 %v1555, %v1796
    %v1805 = vadd.f32 %v1556, %v1797
    %v1806 = vmax.f32 %v1798, 0.0
    %v1807 = vmax.f32 %v1799, 0.0
    %v1808 = vmax.f32 %v1800, 0.0
    %v1809 = vmax.f32 %v1801, 0.0
    %v1810 = vmax.f32 %v1802, 0.0
    %v1811 = vmax.f32 %v1803, 0.0
    %v1812 = vmax.f32 %v1804, 0.0
    %v1813 = vmax.f32 %v1805, 0.0
    %v1814 = vld [vmem:[%s39] sm:$0xff]
    %v1815 = vld [vmem:[%s39 + $0x8] sm:$0xff]
    %v1816 = vld [vmem:[%s39 + $0x10] sm:$0xff]
    %v1817 = vld [vmem:[%s39 + $0x18] sm:$0xff]
    %v1818 = vld [vmem:[%s41] sm:$0x1]
    %v1819 = vld [vmem:[%s43] sm:$0xff]
    %v1820 = vld [vmem:[%s43 + $0x8] sm:$0xff]
    %v1821 = vld [vmem:[%s43 + $0x10] sm:$0xff]
    %v1822 = vld [vmem:[%s43 + $0x18] sm:$0xff]
    %v1823 = vld [vmem:[%s45] sm:$0x1]
    %v1825 = vsel %vm505, %v1806, 0
    %v1828 = vsel %vm505, %v1807, 0
    %v1831 = vsel %vm505, %v1808, 0
    %v1834 = vsel %vm505, %v1809, 0
    %v1837 = vsel %vm505, %v1810, 0
    %v1840 = vsel %vm505, %v1811, 0
    %v1843 = vsel %vm505, %v1812, 0
    %v1846 = vsel %vm505, %v1813, 0
    %1848 = vmatprep.subr.mxu0 0.0
    %1849 = vmatpush1.msra.mxu0 %v1814
    %1850 = vmatprep.subr.mxu0 0.0
    %1851 = vmatpush1.msra.mxu0 %v1815
    %1852 = vmatprep.subr.mxu0 0.0
    %1853 = vmatpush1.msra.mxu0 %v1816
    %1854 = vmatprep.subr.mxu0 0.0
    %1855 = vmatpush1.msra.mxu0 %v1817
    %1856 = vmatprep.subr.mxu0 0.0
    %1857 = vmatpush1.msra.mxu0 0.0
    %1858 = vmatprep.subr.mxu0 0.0
    %1859 = vmatpush1.msra.mxu0 0.0
    %1860 = vmatprep.subr.mxu0 0.0
    %1861 = vmatpush1.msra.mxu0 0.0
    %1862 = vmatprep.subr.mxu0 0.0
    %1863 = vmatpush1.msra.mxu0 0.0
    %1864 = vmatprep.subr.mxu0 0.0
    %1865 = vmatpush1.msra.mxu0 0.0
    %1866 = vmatprep.subr.mxu0 0.0
    %1867 = vmatpush1.msra.mxu0 0.0
    %1868 = vmatprep.subr.mxu0 0.0
    %1869 = vmatpush1.msra.mxu0 0.0
    %1870 = vmatprep.subr.mxu0 0.0
    %1871 = vmatpush1.msra.mxu0 0.0
    %1872 = vmatprep.subr.mxu0 0.0
    %1873 = vmatpush1.msra.mxu0 0.0
    %1874 = vmatprep.subr.mxu0 0.0
    %1875 = vmatpush1.msra.mxu0 0.0
    %1876 = vmatprep.subr.mxu0 0.0
    %1877 = vmatpush1.msra.mxu0 0.0
    %1878 = vmatprep.subr.mxu0 0.0
    %1879 = vmatpush1.msra.mxu0 0.0
    %1880 = vmatprep.subr.mxu0 0.0
    %1881 = vmatpush1.msra.mxu0 0.0
    %1882 = vmatprep.subr.mxu0 0.0
    %1883 = vmatpush1.msra.mxu0 0.0
    %1884 = vmatprep.subr.mxu0 0.0
    %1885 = vmatpush1.msra.mxu0 0.0
    %1886 = vmatprep.subr.mxu0 0.0
    %1887 = vmatpush1.msra.mxu0 0.0
    %1888 = vmatprep.subr.mxu0 0.0
    %1889 = vmatpush1.msra.mxu0 0.0
    %1890 = vmatprep.subr.mxu0 0.0
    %1891 = vmatpush1.msra.mxu0 0.0
    %1892 = vmatprep.subr.mxu0 0.0
    %1893 = vmatpush1.msra.mxu0 0.0
    %1894 = vmatprep.subr.mxu0 0.0
    %1895 = vmatpush1.msra.mxu0 0.0
    %1896 = vmatprep.subr.mxu0 0.0
    %1897 = vmatpush1.msra.mxu0 0.0
    %1898 = vmatprep.subr.mxu0 0.0
    %1899 = vmatpush1.msra.mxu0 0.0
    %1900 = vmatprep.subr.mxu0 0.0
    %1901 = vmatpush1.msra.mxu0 0.0
    %1902 = vmatprep.subr.mxu0 0.0
    %1903 = vmatpush1.msra.mxu0 0.0
    %1904 = vmatprep.subr.mxu0 0.0
    %1905 = vmatpush1.msra.mxu0 0.0
    %1906 = vmatprep.subr.mxu0 0.0
    %1907 = vmatpush1.msra.mxu0 0.0
    %1908 = vmatprep.subr.mxu0 0.0
    %1909 = vmatpush1.msra.mxu0 0.0
    %1910 = vmatprep.subr.mxu0 0.0
    %1911 = vmatpush1.msra.mxu0 0.0
    %1912 = vmatprep.mubr.f32.mxu0 0.0
    %1913 = vmatmul.mubr.f32.gmra.mrb[0].mxu0 %v1825
    %v1914 = vpop.f32.mrb[0].mxu0
    %v1915 = vadd.f32 0.0, %v1914
    %v1916 = vpop.f32.mrb[0].mxu0
    %1917 = vmatprep.mubr.f32.mxu0 0.0
    %1918 = vmatmul.mubr.f32.gmra.mrb[0].mxu0 %v1828
    %v1919 = vpop.f32.mrb[0].mxu0
    %v1920 = vadd.f32 0.0, %v1919
    %v1921 = vpop.f32.mrb[0].mxu0
    %1922 = vmatprep.mubr.f32.mxu0 0.0
    %1923 = vmatmul.mubr.f32.gmra.mrb[0].mxu0 %v1831
    %v1924 = vpop.f32.mrb[0].mxu0
    %v1925 = vadd.f32 0.0, %v1924
    %v1926 = vpop.f32.mrb[0].mxu0
    %1927 = vmatprep.mubr.f32.mxu0 0.0
    %1928 = vmatmul.mubr.f32.gmra.mrb[0].mxu0 %v1834
    %v1929 = vpop.f32.mrb[0].mxu0
    %v1930 = vadd.f32 0.0, %v1929
    %v1931 = vpop.f32.mrb[0].mxu0
    %1932 = vmatprep.mubr.f32.mxu0 0.0
    %1933 = vmatmul.mubr.f32.gmra.mrb[0].mxu0 %v1837
    %v1934 = vpop.f32.mrb[0].mxu0
    %v1935 = vadd.f32 0.0, %v1934
    %v1936 = vpop.f32.mrb[0].mxu0
    %1937 = vmatprep.mubr.f32.mxu0 0.0
    %1938 = vmatmul.mubr.f32.gmra.mrb[0].mxu0 %v1840
    %v1939 = vpop.f32.mrb[0].mxu0
    %v1940 = vadd.f32 0.0, %v1939
    %v1941 = vpop.f32.mrb[0].mxu0
    %1942 = vmatprep.mubr.f32.mxu0 0.0
    %1943 = vmatmul.mubr.f32.gmra.mrb[0].mxu0 %v1843
    %v1944 = vpop.f32.mrb[0].mxu0
    %v1945 = vadd.f32 0.0, %v1944
    %v1946 = vpop.f32.mrb[0].mxu0
    %1947 = vmatprep.mubr.f32.mxu0 0.0
    %1948 = vmatmul.mubr.f32.gmra.mrb[0].mxu0 %v1846
    %v1949 = vpop.f32.mrb[0].mxu0
    %v1950 = vadd.f32 0.0, %v1949
    %v1951 = vpop.f32.mrb[0].mxu0
    %1952 = vdwg.mxu0
    %v1954 = vlaneseq
    %v1955 = vshrl.u32 %v1954, 7
    %v1956 = vsub.s32 0, %v1955
    %v1957 = vrot.slane %v1818, %v1956
    %v1959 = vadd.f32 %v1957, %v1915
    %v1960 = vadd.f32 %v1957, %v1920
    %v1961 = vadd.f32 %v1957, %v1925
    %v1962 = vadd.f32 %v1957, %v1930
    %v1963 = vadd.f32 %v1957, %v1935
    %v1964 = vadd.f32 %v1957, %v1940
    %v1965 = vadd.f32 %v1957, %v1945
    %v1966 = vadd.f32 %v1957, %v1950
    %1967 = vmatprep.subr.mxu0 0.0
    %1968 = vmatpush1.msra.mxu0 %v1819
    %1969 = vmatprep.subr.mxu0 0.0
    %1970 = vmatpush1.msra.mxu0 %v1820
    %1971 = vmatprep.subr.mxu0 0.0
    %1972 = vmatpush1.msra.mxu0 %v1821
    %1973 = vmatprep.subr.mxu0 0.0
    %1974 = vmatpush1.msra.mxu0 %v1822
    %1975 = vmatprep.subr.mxu0 0.0
    %1976 = vmatpush1.msra.mxu0 0.0
    %1977 = vmatprep.subr.mxu0 0.0
    %1978 = vmatpush1.msra.mxu0 0.0
    %1979 = vmatprep.subr.mxu0 0.0
    %1980 = vmatpush1.msra.mxu0 0.0
    %1981 = vmatprep.subr.mxu0 0.0
    %1982 = vmatpush1.msra.mxu0 0.0
    %1983 = vmatprep.subr.mxu0 0.0
    %1984 = vmatpush1.msra.mxu0 0.0
    %1985 = vmatprep.subr.mxu0 0.0
    %1986 = vmatpush1.msra.mxu0 0.0
    %1987 = vmatprep.subr.mxu0 0.0
    %1988 = vmatpush1.msra.mxu0 0.0
    %1989 = vmatprep.subr.mxu0 0.0
    %1990 = vmatpush1.msra.mxu0 0.0
    %1991 = vmatprep.subr.mxu0 0.0
    %1992 = vmatpush1.msra.mxu0 0.0
    %1993 = vmatprep.subr.mxu0 0.0
    %1994 = vmatpush1.msra.mxu0 0.0
    %1995 = vmatprep.subr.mxu0 0.0
    %1996 = vmatpush1.msra.mxu0 0.0
    %1997 = vmatprep.subr.mxu0 0.0
    %1998 = vmatpush1.msra.mxu0 0.0
    %1999 = vmatprep.subr.mxu0 0.0
    %2000 = vmatpush1.msra.mxu0 0.0
    %2001 = vmatprep.subr.mxu0 0.0
    %2002 = vmatpush1.msra.mxu0 0.0
    %2003 = vmatprep.subr.mxu0 0.0
    %2004 = vmatpush1.msra.mxu0 0.0
    %2005 = vmatprep.subr.mxu0 0.0
    %2006 = vmatpush1.msra.mxu0 0.0
    %2007 = vmatprep.subr.mxu0 0.0
    %2008 = vmatpush1.msra.mxu0 0.0
    %2009 = vmatprep.subr.mxu0 0.0
    %2010 = vmatpush1.msra.mxu0 0.0
    %2011 = vmatprep.subr.mxu0 0.0
    %2012 = vmatpush1.msra.mxu0 0.0
    %2013 = vmatprep.subr.mxu0 0.0
    %2014 = vmatpush1.msra.mxu0 0.0
    %2015 = vmatprep.subr.mxu0 0.0
    %2016 = vmatpush1.msra.mxu0 0.0
    %2017 = vmatprep.subr.mxu0 0.0
    %2018 = vmatpush1.msra.mxu0 0.0
    %2019 = vmatprep.subr.mxu0 0.0
    %2020 = vmatpush1.msra.mxu0 0.0
    %2021 = vmatprep.subr.mxu0 0.0
    %2022 = vmatpush1.msra.mxu0 0.0
    %2023 = vmatprep.subr.mxu0 0.0
    %2024 = vmatpush1.msra.mxu0 0.0
    %2025 = vmatprep.subr.mxu0 0.0
    %2026 = vmatpush1.msra.mxu0 0.0
    %2027 = vmatprep.subr.mxu0 0.0
    %2028 = vmatpush1.msra.mxu0 0.0
    %2029 = vmatprep.subr.mxu0 0.0
    %2030 = vmatpush1.msra.mxu0 0.0
    %2031 = vmatprep.mubr.f32.mxu0 0.0
    %2032 = vmatmul.mubr.f32.gmra.mrb[0].mxu0 %v1825
    %v2033 = vpop.f32.mrb[0].mxu0
    %v2034 = vadd.f32 0.0, %v2033
    %v2035 = vpop.f32.mrb[0].mxu0
    %2036 = vmatprep.mubr.f32.mxu0 0.0
    %2037 = vmatmul.mubr.f32.gmra.mrb[0].mxu0 %v1828
    %v2038 = vpop.f32.mrb[0].mxu0
    %v2039 = vadd.f32 0.0, %v2038
    %v2040 = vpop.f32.mrb[0].mxu0
    %2041 = vmatprep.mubr.f32.mxu0 0.0
    %2042 = vmatmul.mubr.f32.gmra.mrb[0].mxu0 %v1831
    %v2043 = vpop.f32.mrb[0].mxu0
    %v2044 = vadd.f32 0.0, %v2043
    %v2045 = vpop.f32.mrb[0].mxu0
    %2046 = vmatprep.mubr.f32.mxu0 0.0
    %2047 = vmatmul.mubr.f32.gmra.mrb[0].mxu0 %v1834
    %v2048 = vpop.f32.mrb[0].mxu0
    %v2049 = vadd.f32 0.0, %v2048
    %v2050 = vpop.f32.mrb[0].mxu0
    %2051 = vmatprep.mubr.f32.mxu0 0.0
    %2052 = vmatmul.mubr.f32.gmra.mrb[0].mxu0 %v1837
    %v2053 = vpop.f32.mrb[0].mxu0
    %v2054 = vadd.f32 0.0, %v2053
    %v2055 = vpop.f32.mrb[0].mxu0
    %2056 = vmatprep.mubr.f32.mxu0 0.0
    %2057 = vmatmul.mubr.f32.gmra.mrb[0].mxu0 %v1840
    %v2058 = vpop.f32.mrb[0].mxu0
    %v2059 = vadd.f32 0.0, %v2058
    %v2060 = vpop.f32.mrb[0].mxu0
    %2061 = vmatprep.mubr.f32.mxu0 0.0
    %2062 = vmatmul.mubr.f32.gmra.mrb[0].mxu0 %v1843
    %v2063 = vpop.f32.mrb[0].mxu0
    %v2064 = vadd.f32 0.0, %v2063
    %v2065 = vpop.f32.mrb[0].mxu0
    %2066 = vmatprep.mubr.f32.mxu0 0.0
    %2067 = vmatmul.mubr.f32.gmra.mrb[0].mxu0 %v1846
    %v2068 = vpop.f32.mrb[0].mxu0
    %v2069 = vadd.f32 0.0, %v2068
    %v2070 = vpop.f32.mrb[0].mxu0
    %2071 = vdwg.mxu0
    %v2073 = vlaneseq
    %v2074 = vshrl.u32 %v2073, 7
    %v2075 = vsub.s32 0, %v2074
    %v2076 = vrot.slane %v1823, %v2075
    %v2078 = vadd.f32 %v2076, %v2034
    %v2079 = vadd.f32 %v2076, %v2039
    %v2080 = vadd.f32 %v2076, %v2044
    %v2081 = vadd.f32 %v2076, %v2049
    %v2082 = vadd.f32 %v2076, %v2054
    %v2083 = vadd.f32 %v2076, %v2059
    %v2084 = vadd.f32 %v2076, %v2064
    %v2085 = vadd.f32 %v2076, %v2069
    %2086 = vmatprep.subr.mxu0 0.0
    %2087 = vmatpush1.msra.mxu0 %v2078
    %2088 = vmatprep.subr.mxu0 0.0
    %2089 = vmatpush1.msra.mxu0 %v2079
    %2090 = vmatprep.subr.mxu0 0.0
    %2091 = vmatpush1.msra.mxu0 %v2080
    %2092 = vmatprep.subr.mxu0 0.0
    %2093 = vmatpush1.msra.mxu0 %v2081
    %2094 = vmatprep.subr.mxu0 0.0
    %2095 = vmatpush1.msra.mxu0 %v2082
    %2096 = vmatprep.subr.mxu0 0.0
    %2097 = vmatpush1.msra.mxu0 %v2083
    %2098 = vmatprep.subr.mxu0 0.0
    %2099 = vmatpush1.msra.mxu0 %v2084
    %2100 = vmatprep.subr.mxu0 0.0
    %2101 = vmatpush1.msra.mxu0 %v2085
    %2102 = vmatprep.subr.mxu0 0.0
    %2103 = vmatpush1.msra.mxu0 0.0
    %2104 = vmatprep.subr.mxu0 0.0
    %2105 = vmatpush1.msra.mxu0 0.0
    %2106 = vmatprep.subr.mxu0 0.0
    %2107 = vmatpush1.msra.mxu0 0.0
    %2108 = vmatprep.subr.mxu0 0.0
    %2109 = vmatpush1.msra.mxu0 0.0
    %2110 = vmatprep.subr.mxu0 0.0
    %2111 = vmatpush1.msra.mxu0 0.0
    %2112 = vmatprep.subr.mxu0 0.0
    %2113 = vmatpush1.msra.mxu0 0.0
    %2114 = vmatprep.subr.mxu0 0.0
    %2115 = vmatpush1.msra.mxu0 0.0
    %2116 = vmatprep.subr.mxu0 0.0
    %2117 = vmatpush1.msra.mxu0 0.0
    %2118 = vmatprep.subr.mxu0 0.0
    %2119 = vmatpush1.msra.mxu0 0.0
    %2120 = vmatprep.subr.mxu0 0.0
    %2121 = vmatpush1.msra.mxu0 0.0
    %2122 = vmatprep.subr.mxu0 0.0
    %2123 = vmatpush1.msra.mxu0 0.0
    %2124 = vmatprep.subr.mxu0 0.0
    %2125 = vmatpush1.msra.mxu0 0.0
    %2126 = vmatprep.subr.mxu0 0.0
    %2127 = vmatpush1.msra.mxu0 0.0
    %2128 = vmatprep.subr.mxu0 0.0
    %2129 = vmatpush1.msra.mxu0 0.0
    %2130 = vmatprep.subr.mxu0 0.0
    %2131 = vmatpush1.msra.mxu0 0.0
    %2132 = vmatprep.subr.mxu0 0.0
    %2133 = vmatpush1.msra.mxu0 0.0
    %2134 = vmatprep.subr.mxu0 0.0
    %2135 = vmatpush1.msra.mxu0 0.0
    %2136 = vmatprep.subr.mxu0 0.0
    %2137 = vmatpush1.msra.mxu0 0.0
    %2138 = vmatprep.subr.mxu0 0.0
    %2139 = vmatpush1.msra.mxu0 0.0
    %2140 = vmatprep.subr.mxu0 0.0
    %2141 = vmatpush1.msra.mxu0 0.0
    %2142 = vmatprep.subr.mxu0 0.0
    %2143 = vmatpush1.msra.mxu0 0.0
    %2144 = vmatprep.subr.mxu0 0.0
    %2145 = vmatpush1.msra.mxu0 0.0
    %2146 = vmatprep.subr.mxu0 0.0
    %2147 = vmatpush1.msra.mxu0 0.0
    %2148 = vmatprep.subr.mxu0 0.0
    %2149 = vmatpush1.msra.mxu0 0.0
    %2150 = vmatprep.mubr.f32.mxu0 0.0
    %2151 = vmatmul.mubr.f32.gmra.mrb[0].mxu0 %v1028
    %v2152 = vpop.f32.mrb[0].mxu0
    %v2153 = vadd.f32 0.0, %v2152
    %v2154 = vpop.f32.mrb[0].mxu0
    %2155 = vmatprep.mubr.f32.mxu0 0.0
    %2156 = vmatmul.mubr.f32.gmra.mrb[0].mxu0 %v1031
    %v2157 = vpop.f32.mrb[0].mxu0
    %v2158 = vadd.f32 0.0, %v2157
    %v2159 = vpop.f32.mrb[0].mxu0
    %2160 = vmatprep.mubr.f32.mxu0 0.0
    %2161 = vmatmul.mubr.f32.gmra.mrb[0].mxu0 %v1034
    %v2162 = vpop.f32.mrb[0].mxu0
    %v2163 = vadd.f32 0.0, %v2162
    %v2164 = vpop.f32.mrb[0].mxu0
    %2165 = vmatprep.mubr.f32.mxu0 0.0
    %2166 = vmatmul.mubr.f32.gmra.mrb[0].mxu0 %v1037
    %v2167 = vpop.f32.mrb[0].mxu0
    %v2168 = vadd.f32 0.0, %v2167
    %v2169 = vpop.f32.mrb[0].mxu0
    %2170 = vmatprep.mubr.f32.mxu0 0.0
    %2171 = vmatmul.mubr.f32.gmra.mrb[0].mxu0 %v1040
    %v2172 = vpop.f32.mrb[0].mxu0
    %v2173 = vadd.f32 0.0, %v2172
    %v2174 = vpop.f32.mrb[0].mxu0
    %2175 = vmatprep.mubr.f32.mxu0 0.0
    %2176 = vmatmul.mubr.f32.gmra.mrb[0].mxu0 %v1043
    %v2177 = vpop.f32.mrb[0].mxu0
    %v2178 = vadd.f32 0.0, %v2177
    %v2179 = vpop.f32.mrb[0].mxu0
    %2180 = vmatprep.mubr.f32.mxu0 0.0
    %2181 = vmatmul.mubr.f32.gmra.mrb[0].mxu0 %v1046
    %v2182 = vpop.f32.mrb[0].mxu0
    %v2183 = vadd.f32 0.0, %v2182
    %v2184 = vpop.f32.mrb[0].mxu0
    %2185 = vmatprep.mubr.f32.mxu0 0.0
    %2186 = vmatmul.mubr.f32.gmra.mrb[0].mxu0 %v1049
    %v2187 = vpop.f32.mrb[0].mxu0
    %v2188 = vadd.f32 0.0, %v2187
    %v2189 = vpop.f32.mrb[0].mxu0
    %2190 = vdwg.mxu0
    %v2191 = vadd.f32 %v1959, %v2153
    %v2192 = vadd.f32 %v1960, %v2158
    %v2193 = vadd.f32 %v1961, %v2163
    %v2194 = vadd.f32 %v1962, %v2168
    %v2195 = vadd.f32 %v1963, %v2173
    %v2196 = vadd.f32 %v1964, %v2178
    %v2197 = vadd.f32 %v1965, %v2183
    %v2198 = vadd.f32 %v1966, %v2188
    %v2199 = vld [vmem:[%s47] sm:$0xff]
    %v2200 = vld [vmem:[%s47 + $0x8] sm:$0xff]
    %v2201 = vld [vmem:[%s47 + $0x10] sm:$0xff]
    %v2202 = vld [vmem:[%s47 + $0x18] sm:$0xff]
    %v2203 = vld [vmem:[%s49] sm:$0x1]
    %v2204 = vld [vmem:[%s51] sm:$0xff]
    %v2205 = vld [vmem:[%s51 + $0x8] sm:$0xff]
    %v2206 = vld [vmem:[%s51 + $0x10] sm:$0xff]
    %v2207 = vld [vmem:[%s51 + $0x18] sm:$0xff]
    %v2208 = vld [vmem:[%s53] sm:$0x1]
    %v2209 = vmax.f32 %v2191, 0.0
    %v2210 = vmax.f32 %v2192, 0.0
    %v2211 = vmax.f32 %v2193, 0.0
    %v2212 = vmax.f32 %v2194, 0.0
    %v2213 = vmax.f32 %v2195, 0.0
    %v2214 = vmax.f32 %v2196, 0.0
    %v2215 = vmax.f32 %v2197, 0.0
    %v2216 = vmax.f32 %v2198, 0.0
    %v2218 = vsel %vm505, %v2209, 0
    %v2221 = vsel %vm505, %v2210, 0
    %v2224 = vsel %vm505, %v2211, 0
    %v2227 = vsel %vm505, %v2212, 0
    %v2230 = vsel %vm505, %v2213, 0
    %v2233 = vsel %vm505, %v2214, 0
    %v2236 = vsel %vm505, %v2215, 0
    %v2239 = vsel %vm505, %v2216, 0
    %2241 = vmatprep.subr.mxu0 0.0
    %2242 = vmatpush1.msra.mxu0 %v2199
    %2243 = vmatprep.subr.mxu0 0.0
    %2244 = vmatpush1.msra.mxu0 %v2200
    %2245 = vmatprep.subr.mxu0 0.0
    %2246 = vmatpush1.msra.mxu0 %v2201
    %2247 = vmatprep.subr.mxu0 0.0
    %2248 = vmatpush1.msra.mxu0 %v2202
    %2249 = vmatprep.subr.mxu0 0.0
    %2250 = vmatpush1.msra.mxu0 0.0
    %2251 = vmatprep.subr.mxu0 0.0
    %2252 = vmatpush1.msra.mxu0 0.0
    %2253 = vmatprep.subr.mxu0 0.0
    %2254 = vmatpush1.msra.mxu0 0.0
    %2255 = vmatprep.subr.mxu0 0.0
    %2256 = vmatpush1.msra.mxu0 0.0
    %2257 = vmatprep.subr.mxu0 0.0
    %2258 = vmatpush1.msra.mxu0 0.0
    %2259 = vmatprep.subr.mxu0 0.0
    %2260 = vmatpush1.msra.mxu0 0.0
    %2261 = vmatprep.subr.mxu0 0.0
    %2262 = vmatpush1.msra.mxu0 0.0
    %2263 = vmatprep.subr.mxu0 0.0
    %2264 = vmatpush1.msra.mxu0 0.0
    %2265 = vmatprep.subr.mxu0 0.0
    %2266 = vmatpush1.msra.mxu0 0.0
    %2267 = vmatprep.subr.mxu0 0.0
    %2268 = vmatpush1.msra.mxu0 0.0
    %2269 = vmatprep.subr.mxu0 0.0
    %2270 = vmatpush1.msra.mxu0 0.0
    %2271 = vmatprep.subr.mxu0 0.0
    %2272 = vmatpush1.msra.mxu0 0.0
    %2273 = vmatprep.subr.mxu0 0.0
    %2274 = vmatpush1.msra.mxu0 0.0
    %2275 = vmatprep.subr.mxu0 0.0
    %2276 = vmatpush1.msra.mxu0 0.0
    %2277 = vmatprep.subr.mxu0 0.0
    %2278 = vmatpush1.msra.mxu0 0.0
    %2279 = vmatprep.subr.mxu0 0.0
    %2280 = vmatpush1.msra.mxu0 0.0
    %2281 = vmatprep.subr.mxu0 0.0
    %2282 = vmatpush1.msra.mxu0 0.0
    %2283 = vmatprep.subr.mxu0 0.0
    %2284 = vmatpush1.msra.mxu0 0.0
    %2285 = vmatprep.subr.mxu0 0.0
    %2286 = vmatpush1.msra.mxu0 0.0
    %2287 = vmatprep.subr.mxu0 0.0
    %2288 = vmatpush1.msra.mxu0 0.0
    %2289 = vmatprep.subr.mxu0 0.0
    %2290 = vmatpush1.msra.mxu0 0.0
    %2291 = vmatprep.subr.mxu0 0.0
    %2292 = vmatpush1.msra.mxu0 0.0
    %2293 = vmatprep.subr.mxu0 0.0
    %2294 = vmatpush1.msra.mxu0 0.0
    %2295 = vmatprep.subr.mxu0 0.0
    %2296 = vmatpush1.msra.mxu0 0.0
    %2297 = vmatprep.subr.mxu0 0.0
    %2298 = vmatpush1.msra.mxu0 0.0
    %2299 = vmatprep.subr.mxu0 0.0
    %2300 = vmatpush1.msra.mxu0 0.0
    %2301 = vmatprep.subr.mxu0 0.0
    %2302 = vmatpush1.msra.mxu0 0.0
    %2303 = vmatprep.subr.mxu0 0.0
    %2304 = vmatpush1.msra.mxu0 0.0
    %2305 = vmatprep.mubr.f32.mxu0 0.0
    %2306 = vmatmul.mubr.f32.gmra.mrb[0].mxu0 %v2218
    %v2307 = vpop.f32.mrb[0].mxu0
    %v2308 = vadd.f32 0.0, %v2307
    %v2309 = vpop.f32.mrb[0].mxu0
    %2310 = vmatprep.mubr.f32.mxu0 0.0
    %2311 = vmatmul.mubr.f32.gmra.mrb[0].mxu0 %v2221
    %v2312 = vpop.f32.mrb[0].mxu0
    %v2313 = vadd.f32 0.0, %v2312
    %v2314 = vpop.f32.mrb[0].mxu0
    %2315 = vmatprep.mubr.f32.mxu0 0.0
    %2316 = vmatmul.mubr.f32.gmra.mrb[0].mxu0 %v2224
    %v2317 = vpop.f32.mrb[0].mxu0
    %v2318 = vadd.f32 0.0, %v2317
    %v2319 = vpop.f32.mrb[0].mxu0
    %2320 = vmatprep.mubr.f32.mxu0 0.0
    %2321 = vmatmul.mubr.f32.gmra.mrb[0].mxu0 %v2227
    %v2322 = vpop.f32.mrb[0].mxu0
    %v2323 = vadd.f32 0.0, %v2322
    %v2324 = vpop.f32.mrb[0].mxu0
    %2325 = vmatprep.mubr.f32.mxu0 0.0
    %2326 = vmatmul.mubr.f32.gmra.mrb[0].mxu0 %v2230
    %v2327 = vpop.f32.mrb[0].mxu0
    %v2328 = vadd.f32 0.0, %v2327
    %v2329 = vpop.f32.mrb[0].mxu0
    %2330 = vmatprep.mubr.f32.mxu0 0.0
    %2331 = vmatmul.mubr.f32.gmra.mrb[0].mxu0 %v2233
    %v2332 = vpop.f32.mrb[0].mxu0
    %v2333 = vadd.f32 0.0, %v2332
    %v2334 = vpop.f32.mrb[0].mxu0
    %2335 = vmatprep.mubr.f32.mxu0 0.0
    %2336 = vmatmul.mubr.f32.gmra.mrb[0].mxu0 %v2236
    %v2337 = vpop.f32.mrb[0].mxu0
    %v2338 = vadd.f32 0.0, %v2337
    %v2339 = vpop.f32.mrb[0].mxu0
    %2340 = vmatprep.mubr.f32.mxu0 0.0
    %2341 = vmatmul.mubr.f32.gmra.mrb[0].mxu0 %v2239
    %v2342 = vpop.f32.mrb[0].mxu0
    %v2343 = vadd.f32 0.0, %v2342
    %v2344 = vpop.f32.mrb[0].mxu0
    %2345 = vdwg.mxu0
    %v2347 = vlaneseq
    %v2348 = vshrl.u32 %v2347, 7
    %v2349 = vsub.s32 0, %v2348
    %v2350 = vrot.slane %v2203, %v2349
    %v2352 = vadd.f32 %v2350, %v2308
    %v2353 = vadd.f32 %v2350, %v2313
    %v2354 = vadd.f32 %v2350, %v2318
    %v2355 = vadd.f32 %v2350, %v2323
    %v2356 = vadd.f32 %v2350, %v2328
    %v2357 = vadd.f32 %v2350, %v2333
    %v2358 = vadd.f32 %v2350, %v2338
    %v2359 = vadd.f32 %v2350, %v2343
    %2360 = vmatprep.subr.mxu0 0.0
    %2361 = vmatpush1.msra.mxu0 %v2204
    %2362 = vmatprep.subr.mxu0 0.0
    %2363 = vmatpush1.msra.mxu0 %v2205
    %2364 = vmatprep.subr.mxu0 0.0
    %2365 = vmatpush1.msra.mxu0 %v2206
    %2366 = vmatprep.subr.mxu0 0.0
    %2367 = vmatpush1.msra.mxu0 %v2207
    %2368 = vmatprep.subr.mxu0 0.0
    %2369 = vmatpush1.msra.mxu0 0.0
    %2370 = vmatprep.subr.mxu0 0.0
    %2371 = vmatpush1.msra.mxu0 0.0
    %2372 = vmatprep.subr.mxu0 0.0
    %2373 = vmatpush1.msra.mxu0 0.0
    %2374 = vmatprep.subr.mxu0 0.0
    %2375 = vmatpush1.msra.mxu0 0.0
    %2376 = vmatprep.subr.mxu0 0.0
    %2377 = vmatpush1.msra.mxu0 0.0
    %2378 = vmatprep.subr.mxu0 0.0
    %2379 = vmatpush1.msra.mxu0 0.0
    %2380 = vmatprep.subr.mxu0 0.0
    %2381 = vmatpush1.msra.mxu0 0.0
    %2382 = vmatprep.subr.mxu0 0.0
    %2383 = vmatpush1.msra.mxu0 0.0
    %2384 = vmatprep.subr.mxu0 0.0
    %2385 = vmatpush1.msra.mxu0 0.0
    %2386 = vmatprep.subr.mxu0 0.0
    %2387 = vmatpush1.msra.mxu0 0.0
    %2388 = vmatprep.subr.mxu0 0.0
    %2389 = vmatpush1.msra.mxu0 0.0
    %2390 = vmatprep.subr.mxu0 0.0
    %2391 = vmatpush1.msra.mxu0 0.0
    %2392 = vmatprep.subr.mxu0 0.0
    %2393 = vmatpush1.msra.mxu0 0.0
    %2394 = vmatprep.subr.mxu0 0.0
    %2395 = vmatpush1.msra.mxu0 0.0
    %2396 = vmatprep.subr.mxu0 0.0
    %2397 = vmatpush1.msra.mxu0 0.0
    %2398 = vmatprep.subr.mxu0 0.0
    %2399 = vmatpush1.msra.mxu0 0.0
    %2400 = vmatprep.subr.mxu0 0.0
    %2401 = vmatpush1.msra.mxu0 0.0
    %2402 = vmatprep.subr.mxu0 0.0
    %2403 = vmatpush1.msra.mxu0 0.0
    %2404 = vmatprep.subr.mxu0 0.0
    %2405 = vmatpush1.msra.mxu0 0.0
    %2406 = vmatprep.subr.mxu0 0.0
    %2407 = vmatpush1.msra.mxu0 0.0
    %2408 = vmatprep.subr.mxu0 0.0
    %2409 = vmatpush1.msra.mxu0 0.0
    %2410 = vmatprep.subr.mxu0 0.0
    %2411 = vmatpush1.msra.mxu0 0.0
    %2412 = vmatprep.subr.mxu0 0.0
    %2413 = vmatpush1.msra.mxu0 0.0
    %2414 = vmatprep.subr.mxu0 0.0
    %2415 = vmatpush1.msra.mxu0 0.0
    %2416 = vmatprep.subr.mxu0 0.0
    %2417 = vmatpush1.msra.mxu0 0.0
    %2418 = vmatprep.subr.mxu0 0.0
    %2419 = vmatpush1.msra.mxu0 0.0
    %2420 = vmatprep.subr.mxu0 0.0
    %2421 = vmatpush1.msra.mxu0 0.0
    %2422 = vmatprep.subr.mxu0 0.0
    %2423 = vmatpush1.msra.mxu0 0.0
    %2424 = vmatprep.mubr.f32.mxu0 0.0
    %2425 = vmatmul.mubr.f32.gmra.mrb[0].mxu0 %v2218
    %v2426 = vpop.f32.mrb[0].mxu0
    %v2427 = vadd.f32 0.0, %v2426
    %v2428 = vpop.f32.mrb[0].mxu0
    %2429 = vmatprep.mubr.f32.mxu0 0.0
    %2430 = vmatmul.mubr.f32.gmra.mrb[0].mxu0 %v2221
    %v2431 = vpop.f32.mrb[0].mxu0
    %v2432 = vadd.f32 0.0, %v2431
    %v2433 = vpop.f32.mrb[0].mxu0
    %2434 = vmatprep.mubr.f32.mxu0 0.0
    %2435 = vmatmul.mubr.f32.gmra.mrb[0].mxu0 %v2224
    %v2436 = vpop.f32.mrb[0].mxu0
    %v2437 = vadd.f32 0.0, %v2436
    %v2438 = vpop.f32.mrb[0].mxu0
    %2439 = vmatprep.mubr.f32.mxu0 0.0
    %2440 = vmatmul.mubr.f32.gmra.mrb[0].mxu0 %v2227
    %v2441 = vpop.f32.mrb[0].mxu0
    %v2442 = vadd.f32 0.0, %v2441
    %v2443 = vpop.f32.mrb[0].mxu0
    %2444 = vmatprep.mubr.f32.mxu0 0.0
    %2445 = vmatmul.mubr.f32.gmra.mrb[0].mxu0 %v2230
    %v2446 = vpop.f32.mrb[0].mxu0
    %v2447 = vadd.f32 0.0, %v2446
    %v2448 = vpop.f32.mrb[0].mxu0
    %2449 = vmatprep.mubr.f32.mxu0 0.0
    %2450 = vmatmul.mubr.f32.gmra.mrb[0].mxu0 %v2233
    %v2451 = vpop.f32.mrb[0].mxu0
    %v2452 = vadd.f32 0.0, %v2451
    %v2453 = vpop.f32.mrb[0].mxu0
    %2454 = vmatprep.mubr.f32.mxu0 0.0
    %2455 = vmatmul.mubr.f32.gmra.mrb[0].mxu0 %v2236
    %v2456 = vpop.f32.mrb[0].mxu0
    %v2457 = vadd.f32 0.0, %v2456
    %v2458 = vpop.f32.mrb[0].mxu0
    %2459 = vmatprep.mubr.f32.mxu0 0.0
    %2460 = vmatmul.mubr.f32.gmra.mrb[0].mxu0 %v2239
    %v2461 = vpop.f32.mrb[0].mxu0
    %v2462 = vadd.f32 0.0, %v2461
    %v2463 = vpop.f32.mrb[0].mxu0
    %2464 = vdwg.mxu0
    %v2466 = vlaneseq
    %v2467 = vshrl.u32 %v2466, 7
    %v2468 = vsub.s32 0, %v2467
    %v2469 = vrot.slane %v2208, %v2468
    %v2471 = vadd.f32 %v2469, %v2427
    %v2472 = vadd.f32 %v2469, %v2432
    %v2473 = vadd.f32 %v2469, %v2437
    %v2474 = vadd.f32 %v2469, %v2442
    %v2475 = vadd.f32 %v2469, %v2447
    %v2476 = vadd.f32 %v2469, %v2452
    %v2477 = vadd.f32 %v2469, %v2457
    %v2478 = vadd.f32 %v2469, %v2462
    %2479 = vmatprep.subr.mxu0 0.0
    %2480 = vmatpush1.msra.mxu0 %v2471
    %2481 = vmatprep.subr.mxu0 0.0
    %2482 = vmatpush1.msra.mxu0 %v2472
    %2483 = vmatprep.subr.mxu0 0.0
    %2484 = vmatpush1.msra.mxu0 %v2473
    %2485 = vmatprep.subr.mxu0 0.0
    %2486 = vmatpush1.msra.mxu0 %v2474
    %2487 = vmatprep.subr.mxu0 0.0
    %2488 = vmatpush1.msra.mxu0 %v2475
    %2489 = vmatprep.subr.mxu0 0.0
    %2490 = vmatpush1.msra.mxu0 %v2476
    %2491 = vmatprep.subr.mxu0 0.0
    %2492 = vmatpush1.msra.mxu0 %v2477
    %2493 = vmatprep.subr.mxu0 0.0
    %2494 = vmatpush1.msra.mxu0 %v2478
    %2495 = vmatprep.subr.mxu0 0.0
    %2496 = vmatpush1.msra.mxu0 0.0
    %2497 = vmatprep.subr.mxu0 0.0
    %2498 = vmatpush1.msra.mxu0 0.0
    %2499 = vmatprep.subr.mxu0 0.0
    %2500 = vmatpush1.msra.mxu0 0.0
    %2501 = vmatprep.subr.mxu0 0.0
    %2502 = vmatpush1.msra.mxu0 0.0
    %2503 = vmatprep.subr.mxu0 0.0
    %2504 = vmatpush1.msra.mxu0 0.0
    %2505 = vmatprep.subr.mxu0 0.0
    %2506 = vmatpush1.msra.mxu0 0.0
    %2507 = vmatprep.subr.mxu0 0.0
    %2508 = vmatpush1.msra.mxu0 0.0
    %2509 = vmatprep.subr.mxu0 0.0
    %2510 = vmatpush1.msra.mxu0 0.0
    %2511 = vmatprep.subr.mxu0 0.0
    %2512 = vmatpush1.msra.mxu0 0.0
    %2513 = vmatprep.subr.mxu0 0.0
    %2514 = vmatpush1.msra.mxu0 0.0
    %2515 = vmatprep.subr.mxu0 0.0
    %2516 = vmatpush1.msra.mxu0 0.0
    %2517 = vmatprep.subr.mxu0 0.0
    %2518 = vmatpush1.msra.mxu0 0.0
    %2519 = vmatprep.subr.mxu0 0.0
    %2520 = vmatpush1.msra.mxu0 0.0
    %2521 = vmatprep.subr.mxu0 0.0
    %2522 = vmatpush1.msra.mxu0 0.0
    %2523 = vmatprep.subr.mxu0 0.0
    %2524 = vmatpush1.msra.mxu0 0.0
    %2525 = vmatprep.subr.mxu0 0.0
    %2526 = vmatpush1.msra.mxu0 0.0
    %2527 = vmatprep.subr.mxu0 0.0
    %2528 = vmatpush1.msra.mxu0 0.0
    %2529 = vmatprep.subr.mxu0 0.0
    %2530 = vmatpush1.msra.mxu0 0.0
    %2531 = vmatprep.subr.mxu0 0.0
    %2532 = vmatpush1.msra.mxu0 0.0
    %2533 = vmatprep.subr.mxu0 0.0
    %2534 = vmatpush1.msra.mxu0 0.0
    %2535 = vmatprep.subr.mxu0 0.0
    %2536 = vmatpush1.msra.mxu0 0.0
    %2537 = vmatprep.subr.mxu0 0.0
    %2538 = vmatpush1.msra.mxu0 0.0
    %2539 = vmatprep.subr.mxu0 0.0
    %2540 = vmatpush1.msra.mxu0 0.0
    %2541 = vmatprep.subr.mxu0 0.0
    %2542 = vmatpush1.msra.mxu0 0.0
    %2543 = vmatprep.mubr.f32.mxu0 0.0
    %2544 = vmatmul.mubr.f32.gmra.mrb[0].mxu0 %v1028
    %v2545 = vpop.f32.mrb[0].mxu0
    %v2546 = vadd.f32 0.0, %v2545
    %v2547 = vpop.f32.mrb[0].mxu0
    %2548 = vmatprep.mubr.f32.mxu0 0.0
    %2549 = vmatmul.mubr.f32.gmra.mrb[0].mxu0 %v1031
    %v2550 = vpop.f32.mrb[0].mxu0
    %v2551 = vadd.f32 0.0, %v2550
    %v2552 = vpop.f32.mrb[0].mxu0
    %2553 = vmatprep.mubr.f32.mxu0 0.0
    %2554 = vmatmul.mubr.f32.gmra.mrb[0].mxu0 %v1034
    %v2555 = vpop.f32.mrb[0].mxu0
    %v2556 = vadd.f32 0.0, %v2555
    %v2557 = vpop.f32.mrb[0].mxu0
    %2558 = vmatprep.mubr.f32.mxu0 0.0
    %2559 = vmatmul.mubr.f32.gmra.mrb[0].mxu0 %v1037
    %v2560 = vpop.f32.mrb[0].mxu0
    %v2561 = vadd.f32 0.0, %v2560
    %v2562 = vpop.f32.mrb[0].mxu0
    %2563 = vmatprep.mubr.f32.mxu0 0.0
    %2564 = vmatmul.mubr.f32.gmra.mrb[0].mxu0 %v1040
    %v2565 = vpop.f32.mrb[0].mxu0
    %v2566 = vadd.f32 0.0, %v2565
    %v2567 = vpop.f32.mrb[0].mxu0
    %2568 = vmatprep.mubr.f32.mxu0 0.0
    %2569 = vmatmul.mubr.f32.gmra.mrb[0].mxu0 %v1043
    %v2570 = vpop.f32.mrb[0].mxu0
    %v2571 = vadd.f32 0.0, %v2570
    %v2572 = vpop.f32.mrb[0].mxu0
    %2573 = vmatprep.mubr.f32.mxu0 0.0
    %2574 = vmatmul.mubr.f32.gmra.mrb[0].mxu0 %v1046
    %v2575 = vpop.f32.mrb[0].mxu0
    %v2576 = vadd.f32 0.0, %v2575
    %v2577 = vpop.f32.mrb[0].mxu0
    %2578 = vmatprep.mubr.f32.mxu0 0.0
    %2579 = vmatmul.mubr.f32.gmra.mrb[0].mxu0 %v1049
    %v2580 = vpop.f32.mrb[0].mxu0
    %v2581 = vadd.f32 0.0, %v2580
    %v2582 = vpop.f32.mrb[0].mxu0
    %2583 = vdwg.mxu0
    %v2584 = vadd.f32 %v2352, %v2546
    %v2585 = vadd.f32 %v2353, %v2551
    %v2586 = vadd.f32 %v2354, %v2556
    %v2587 = vadd.f32 %v2355, %v2561
    %v2588 = vadd.f32 %v2356, %v2566
    %v2589 = vadd.f32 %v2357, %v2571
    %v2590 = vadd.f32 %v2358, %v2576
    %v2591 = vadd.f32 %v2359, %v2581
    %v2592 = vadd.f32 %v2584, %v1806
    %v2593 = vadd.f32 %v2585, %v1807
    %v2594 = vadd.f32 %v2586, %v1808
    %v2595 = vadd.f32 %v2587, %v1809
    %v2596 = vadd.f32 %v2588, %v1810
    %v2597 = vadd.f32 %v2589, %v1811
    %v2598 = vadd.f32 %v2590, %v1812
    %v2599 = vadd.f32 %v2591, %v1813
    %v2600 = vld [vmem:[%s55] sm:$0xff]
    %v2601 = vld [vmem:[%s55 + $0x8] sm:$0xff]
    %v2602 = vld [vmem:[%s55 + $0x10] sm:$0xff]
    %v2603 = vld [vmem:[%s55 + $0x18] sm:$0xff]
    %v2604 = vld [vmem:[%s57] sm:$0x1]
    %v2605 = vld [vmem:[%s59] sm:$0xff]
    %v2606 = vld [vmem:[%s59 + $0x8] sm:$0xff]
    %v2607 = vld [vmem:[%s59 + $0x10] sm:$0xff]
    %v2608 = vld [vmem:[%s59 + $0x18] sm:$0xff]
    %v2609 = vld [vmem:[%s61] sm:$0x1]
    %v2611 = vsel %vm505, %v2592, 0
    %v2614 = vsel %vm505, %v2593, 0
    %v2617 = vsel %vm505, %v2594, 0
    %v2620 = vsel %vm505, %v2595, 0
    %v2623 = vsel %vm505, %v2596, 0
    %v2626 = vsel %vm505, %v2597, 0
    %v2629 = vsel %vm505, %v2598, 0
    %v2632 = vsel %vm505, %v2599, 0
    %2634 = vmatprep.subr.mxu0 0.0
    %2635 = vmatpush1.msra.mxu0 %v2600
    %2636 = vmatprep.subr.mxu0 0.0
    %2637 = vmatpush1.msra.mxu0 %v2601
    %2638 = vmatprep.subr.mxu0 0.0
    %2639 = vmatpush1.msra.mxu0 %v2602
    %2640 = vmatprep.subr.mxu0 0.0
    %2641 = vmatpush1.msra.mxu0 %v2603
    %2642 = vmatprep.subr.mxu0 0.0
    %2643 = vmatpush1.msra.mxu0 0.0
    %2644 = vmatprep.subr.mxu0 0.0
    %2645 = vmatpush1.msra.mxu0 0.0
    %2646 = vmatprep.subr.mxu0 0.0
    %2647 = vmatpush1.msra.mxu0 0.0
    %2648 = vmatprep.subr.mxu0 0.0
    %2649 = vmatpush1.msra.mxu0 0.0
    %2650 = vmatprep.subr.mxu0 0.0
    %2651 = vmatpush1.msra.mxu0 0.0
    %2652 = vmatprep.subr.mxu0 0.0
    %2653 = vmatpush1.msra.mxu0 0.0
    %2654 = vmatprep.subr.mxu0 0.0
    %2655 = vmatpush1.msra.mxu0 0.0
    %2656 = vmatprep.subr.mxu0 0.0
    %2657 = vmatpush1.msra.mxu0 0.0
    %2658 = vmatprep.subr.mxu0 0.0
    %2659 = vmatpush1.msra.mxu0 0.0
    %2660 = vmatprep.subr.mxu0 0.0
    %2661 = vmatpush1.msra.mxu0 0.0
    %2662 = vmatprep.subr.mxu0 0.0
    %2663 = vmatpush1.msra.mxu0 0.0
    %2664 = vmatprep.subr.mxu0 0.0
    %2665 = vmatpush1.msra.mxu0 0.0
    %2666 = vmatprep.subr.mxu0 0.0
    %2667 = vmatpush1.msra.mxu0 0.0
    %2668 = vmatprep.subr.mxu0 0.0
    %2669 = vmatpush1.msra.mxu0 0.0
    %2670 = vmatprep.subr.mxu0 0.0
    %2671 = vmatpush1.msra.mxu0 0.0
    %2672 = vmatprep.subr.mxu0 0.0
    %2673 = vmatpush1.msra.mxu0 0.0
    %2674 = vmatprep.subr.mxu0 0.0
    %2675 = vmatpush1.msra.mxu0 0.0
    %2676 = vmatprep.subr.mxu0 0.0
    %2677 = vmatpush1.msra.mxu0 0.0
    %2678 = vmatprep.subr.mxu0 0.0
    %2679 = vmatpush1.msra.mxu0 0.0
    %2680 = vmatprep.subr.mxu0 0.0
    %2681 = vmatpush1.msra.mxu0 0.0
    %2682 = vmatprep.subr.mxu0 0.0
    %2683 = vmatpush1.msra.mxu0 0.0
    %2684 = vmatprep.subr.mxu0 0.0
    %2685 = vmatpush1.msra.mxu0 0.0
    %2686 = vmatprep.subr.mxu0 0.0
    %2687 = vmatpush1.msra.mxu0 0.0
    %2688 = vmatprep.subr.mxu0 0.0
    %2689 = vmatpush1.msra.mxu0 0.0
    %2690 = vmatprep.subr.mxu0 0.0
    %2691 = vmatpush1.msra.mxu0 0.0
    %2692 = vmatprep.subr.mxu0 0.0
    %2693 = vmatpush1.msra.mxu0 0.0
    %2694 = vmatprep.subr.mxu0 0.0
    %2695 = vmatpush1.msra.mxu0 0.0
    %2696 = vmatprep.subr.mxu0 0.0
    %2697 = vmatpush1.msra.mxu0 0.0
    %2698 = vmatprep.mubr.f32.mxu0 0.0
    %2699 = vmatmul.mubr.f32.gmra.mrb[0].mxu0 %v2611
    %v2700 = vpop.f32.mrb[0].mxu0
    %v2701 = vadd.f32 0.0, %v2700
    %v2702 = vpop.f32.mrb[0].mxu0
    %2703 = vmatprep.mubr.f32.mxu0 0.0
    %2704 = vmatmul.mubr.f32.gmra.mrb[0].mxu0 %v2614
    %v2705 = vpop.f32.mrb[0].mxu0
    %v2706 = vadd.f32 0.0, %v2705
    %v2707 = vpop.f32.mrb[0].mxu0
    %2708 = vmatprep.mubr.f32.mxu0 0.0
    %2709 = vmatmul.mubr.f32.gmra.mrb[0].mxu0 %v2617
    %v2710 = vpop.f32.mrb[0].mxu0
    %v2711 = vadd.f32 0.0, %v2710
    %v2712 = vpop.f32.mrb[0].mxu0
    %2713 = vmatprep.mubr.f32.mxu0 0.0
    %2714 = vmatmul.mubr.f32.gmra.mrb[0].mxu0 %v2620
    %v2715 = vpop.f32.mrb[0].mxu0
    %v2716 = vadd.f32 0.0, %v2715
    %v2717 = vpop.f32.mrb[0].mxu0
    %2718 = vmatprep.mubr.f32.mxu0 0.0
    %2719 = vmatmul.mubr.f32.gmra.mrb[0].mxu0 %v2623
    %v2720 = vpop.f32.mrb[0].mxu0
    %v2721 = vadd.f32 0.0, %v2720
    %v2722 = vpop.f32.mrb[0].mxu0
    %2723 = vmatprep.mubr.f32.mxu0 0.0
    %2724 = vmatmul.mubr.f32.gmra.mrb[0].mxu0 %v2626
    %v2725 = vpop.f32.mrb[0].mxu0
    %v2726 = vadd.f32 0.0, %v2725
    %v2727 = vpop.f32.mrb[0].mxu0
    %2728 = vmatprep.mubr.f32.mxu0 0.0
    %2729 = vmatmul.mubr.f32.gmra.mrb[0].mxu0 %v2629
    %v2730 = vpop.f32.mrb[0].mxu0
    %v2731 = vadd.f32 0.0, %v2730
    %v2732 = vpop.f32.mrb[0].mxu0
    %2733 = vmatprep.mubr.f32.mxu0 0.0
    %2734 = vmatmul.mubr.f32.gmra.mrb[0].mxu0 %v2632
    %v2735 = vpop.f32.mrb[0].mxu0
    %v2736 = vadd.f32 0.0, %v2735
    %v2737 = vpop.f32.mrb[0].mxu0
    %2738 = vdwg.mxu0
    %v2740 = vlaneseq
    %v2741 = vshrl.u32 %v2740, 7
    %v2742 = vsub.s32 0, %v2741
    %v2743 = vrot.slane %v2604, %v2742
    %v2745 = vadd.f32 %v2743, %v2701
    %v2746 = vadd.f32 %v2743, %v2706
    %v2747 = vadd.f32 %v2743, %v2711
    %v2748 = vadd.f32 %v2743, %v2716
    %v2749 = vadd.f32 %v2743, %v2721
    %v2750 = vadd.f32 %v2743, %v2726
    %v2751 = vadd.f32 %v2743, %v2731
    %v2752 = vadd.f32 %v2743, %v2736
    %2753 = vmatprep.subr.mxu0 0.0
    %2754 = vmatpush1.msra.mxu0 %v2605
    %2755 = vmatprep.subr.mxu0 0.0
    %2756 = vmatpush1.msra.mxu0 %v2606
    %2757 = vmatprep.subr.mxu0 0.0
    %2758 = vmatpush1.msra.mxu0 %v2607
    %2759 = vmatprep.subr.mxu0 0.0
    %2760 = vmatpush1.msra.mxu0 %v2608
    %2761 = vmatprep.subr.mxu0 0.0
    %2762 = vmatpush1.msra.mxu0 0.0
    %2763 = vmatprep.subr.mxu0 0.0
    %2764 = vmatpush1.msra.mxu0 0.0
    %2765 = vmatprep.subr.mxu0 0.0
    %2766 = vmatpush1.msra.mxu0 0.0
    %2767 = vmatprep.subr.mxu0 0.0
    %2768 = vmatpush1.msra.mxu0 0.0
    %2769 = vmatprep.subr.mxu0 0.0
    %2770 = vmatpush1.msra.mxu0 0.0
    %2771 = vmatprep.subr.mxu0 0.0
    %2772 = vmatpush1.msra.mxu0 0.0
    %2773 = vmatprep.subr.mxu0 0.0
    %2774 = vmatpush1.msra.mxu0 0.0
    %2775 = vmatprep.subr.mxu0 0.0
    %2776 = vmatpush1.msra.mxu0 0.0
    %2777 = vmatprep.subr.mxu0 0.0
    %2778 = vmatpush1.msra.mxu0 0.0
    %2779 = vmatprep.subr.mxu0 0.0
    %2780 = vmatpush1.msra.mxu0 0.0
    %2781 = vmatprep.subr.mxu0 0.0
    %2782 = vmatpush1.msra.mxu0 0.0
    %2783 = vmatprep.subr.mxu0 0.0
    %2784 = vmatpush1.msra.mxu0 0.0
    %2785 = vmatprep.subr.mxu0 0.0
    %2786 = vmatpush1.msra.mxu0 0.0
    %2787 = vmatprep.subr.mxu0 0.0
    %2788 = vmatpush1.msra.mxu0 0.0
    %2789 = vmatprep.subr.mxu0 0.0
    %2790 = vmatpush1.msra.mxu0 0.0
    %2791 = vmatprep.subr.mxu0 0.0
    %2792 = vmatpush1.msra.mxu0 0.0
    %2793 = vmatprep.subr.mxu0 0.0
    %2794 = vmatpush1.msra.mxu0 0.0
    %2795 = vmatprep.subr.mxu0 0.0
    %2796 = vmatpush1.msra.mxu0 0.0
    %2797 = vmatprep.subr.mxu0 0.0
    %2798 = vmatpush1.msra.mxu0 0.0
    %2799 = vmatprep.subr.mxu0 0.0
    %2800 = vmatpush1.msra.mxu0 0.0
    %2801 = vmatprep.subr.mxu0 0.0
    %2802 = vmatpush1.msra.mxu0 0.0
    %2803 = vmatprep.subr.mxu0 0.0
    %2804 = vmatpush1.msra.mxu0 0.0
    %2805 = vmatprep.subr.mxu0 0.0
    %2806 = vmatpush1.msra.mxu0 0.0
    %2807 = vmatprep.subr.mxu0 0.0
    %2808 = vmatpush1.msra.mxu0 0.0
    %2809 = vmatprep.subr.mxu0 0.0
    %2810 = vmatpush1.msra.mxu0 0.0
    %2811 = vmatprep.subr.mxu0 0.0
    %2812 = vmatpush1.msra.mxu0 0.0
    %2813 = vmatprep.subr.mxu0 0.0
    %2814 = vmatpush1.msra.mxu0 0.0
    %2815 = vmatprep.subr.mxu0 0.0
    %2816 = vmatpush1.msra.mxu0 0.0
    %2817 = vmatprep.mubr.f32.mxu0 0.0
    %2818 = vmatmul.mubr.f32.gmra.mrb[0].mxu0 %v2611
    %v2819 = vpop.f32.mrb[0].mxu0
    %v2820 = vadd.f32 0.0, %v2819
    %v2821 = vpop.f32.mrb[0].mxu0
    %2822 = vmatprep.mubr.f32.mxu0 0.0
    %2823 = vmatmul.mubr.f32.gmra.mrb[0].mxu0 %v2614
    %v2824 = vpop.f32.mrb[0].mxu0
    %v2825 = vadd.f32 0.0, %v2824
    %v2826 = vpop.f32.mrb[0].mxu0
    %2827 = vmatprep.mubr.f32.mxu0 0.0
    %2828 = vmatmul.mubr.f32.gmra.mrb[0].mxu0 %v2617
    %v2829 = vpop.f32.mrb[0].mxu0
    %v2830 = vadd.f32 0.0, %v2829
    %v2831 = vpop.f32.mrb[0].mxu0
    %2832 = vmatprep.mubr.f32.mxu0 0.0
    %2833 = vmatmul.mubr.f32.gmra.mrb[0].mxu0 %v2620
    %v2834 = vpop.f32.mrb[0].mxu0
    %v2835 = vadd.f32 0.0, %v2834
    %v2836 = vpop.f32.mrb[0].mxu0
    %2837 = vmatprep.mubr.f32.mxu0 0.0
    %2838 = vmatmul.mubr.f32.gmra.mrb[0].mxu0 %v2623
    %v2839 = vpop.f32.mrb[0].mxu0
    %v2840 = vadd.f32 0.0, %v2839
    %v2841 = vpop.f32.mrb[0].mxu0
    %2842 = vmatprep.mubr.f32.mxu0 0.0
    %2843 = vmatmul.mubr.f32.gmra.mrb[0].mxu0 %v2626
    %v2844 = vpop.f32.mrb[0].mxu0
    %v2845 = vadd.f32 0.0, %v2844
    %v2846 = vpop.f32.mrb[0].mxu0
    %2847 = vmatprep.mubr.f32.mxu0 0.0
    %2848 = vmatmul.mubr.f32.gmra.mrb[0].mxu0 %v2629
    %v2849 = vpop.f32.mrb[0].mxu0
    %v2850 = vadd.f32 0.0, %v2849
    %v2851 = vpop.f32.mrb[0].mxu0
    %2852 = vmatprep.mubr.f32.mxu0 0.0
    %2853 = vmatmul.mubr.f32.gmra.mrb[0].mxu0 %v2632
    %v2854 = vpop.f32.mrb[0].mxu0
    %v2855 = vadd.f32 0.0, %v2854
    %v2856 = vpop.f32.mrb[0].mxu0
    %2857 = vdwg.mxu0
    %v2859 = vlaneseq
    %v2860 = vshrl.u32 %v2859, 7
    %v2861 = vsub.s32 0, %v2860
    %v2862 = vrot.slane %v2609, %v2861
    %v2864 = vadd.f32 %v2862, %v2820
    %v2865 = vadd.f32 %v2862, %v2825
    %v2866 = vadd.f32 %v2862, %v2830
    %v2867 = vadd.f32 %v2862, %v2835
    %v2868 = vadd.f32 %v2862, %v2840
    %v2869 = vadd.f32 %v2862, %v2845
    %v2870 = vadd.f32 %v2862, %v2850
    %v2871 = vadd.f32 %v2862, %v2855
    %2872 = vmatprep.subr.mxu0 0.0
    %2873 = vmatpush1.msra.mxu0 %v2864
    %2874 = vmatprep.subr.mxu0 0.0
    %2875 = vmatpush1.msra.mxu0 %v2865
    %2876 = vmatprep.subr.mxu0 0.0
    %2877 = vmatpush1.msra.mxu0 %v2866
    %2878 = vmatprep.subr.mxu0 0.0
    %2879 = vmatpush1.msra.mxu0 %v2867
    %2880 = vmatprep.subr.mxu0 0.0
    %2881 = vmatpush1.msra.mxu0 %v2868
    %2882 = vmatprep.subr.mxu0 0.0
    %2883 = vmatpush1.msra.mxu0 %v2869
    %2884 = vmatprep.subr.mxu0 0.0
    %2885 = vmatpush1.msra.mxu0 %v2870
    %2886 = vmatprep.subr.mxu0 0.0
    %2887 = vmatpush1.msra.mxu0 %v2871
    %2888 = vmatprep.subr.mxu0 0.0
    %2889 = vmatpush1.msra.mxu0 0.0
    %2890 = vmatprep.subr.mxu0 0.0
    %2891 = vmatpush1.msra.mxu0 0.0
    %2892 = vmatprep.subr.mxu0 0.0
    %2893 = vmatpush1.msra.mxu0 0.0
    %2894 = vmatprep.subr.mxu0 0.0
    %2895 = vmatpush1.msra.mxu0 0.0
    %2896 = vmatprep.subr.mxu0 0.0
    %2897 = vmatpush1.msra.mxu0 0.0
    %2898 = vmatprep.subr.mxu0 0.0
    %2899 = vmatpush1.msra.mxu0 0.0
    %2900 = vmatprep.subr.mxu0 0.0
    %2901 = vmatpush1.msra.mxu0 0.0
    %2902 = vmatprep.subr.mxu0 0.0
    %2903 = vmatpush1.msra.mxu0 0.0
    %2904 = vmatprep.subr.mxu0 0.0
    %2905 = vmatpush1.msra.mxu0 0.0
    %2906 = vmatprep.subr.mxu0 0.0
    %2907 = vmatpush1.msra.mxu0 0.0
    %2908 = vmatprep.subr.mxu0 0.0
    %2909 = vmatpush1.msra.mxu0 0.0
    %2910 = vmatprep.subr.mxu0 0.0
    %2911 = vmatpush1.msra.mxu0 0.0
    %2912 = vmatprep.subr.mxu0 0.0
    %2913 = vmatpush1.msra.mxu0 0.0
    %2914 = vmatprep.subr.mxu0 0.0
    %2915 = vmatpush1.msra.mxu0 0.0
    %2916 = vmatprep.subr.mxu0 0.0
    %2917 = vmatpush1.msra.mxu0 0.0
    %2918 = vmatprep.subr.mxu0 0.0
    %2919 = vmatpush1.msra.mxu0 0.0
    %2920 = vmatprep.subr.mxu0 0.0
    %2921 = vmatpush1.msra.mxu0 0.0
    %2922 = vmatprep.subr.mxu0 0.0
    %2923 = vmatpush1.msra.mxu0 0.0
    %2924 = vmatprep.subr.mxu0 0.0
    %2925 = vmatpush1.msra.mxu0 0.0
    %2926 = vmatprep.subr.mxu0 0.0
    %2927 = vmatpush1.msra.mxu0 0.0
    %2928 = vmatprep.subr.mxu0 0.0
    %2929 = vmatpush1.msra.mxu0 0.0
    %2930 = vmatprep.subr.mxu0 0.0
    %2931 = vmatpush1.msra.mxu0 0.0
    %2932 = vmatprep.subr.mxu0 0.0
    %2933 = vmatpush1.msra.mxu0 0.0
    %2934 = vmatprep.subr.mxu0 0.0
    %2935 = vmatpush1.msra.mxu0 0.0
    %2936 = vmatprep.mubr.f32.mxu0 0.0
    %2937 = vmatmul.mubr.f32.gmra.mrb[0].mxu0 %v1028
    %v2938 = vpop.f32.mrb[0].mxu0
    %v2939 = vadd.f32 0.0, %v2938
    %v2940 = vpop.f32.mrb[0].mxu0
    %2941 = vmatprep.mubr.f32.mxu0 0.0
    %2942 = vmatmul.mubr.f32.gmra.mrb[0].mxu0 %v1031
    %v2943 = vpop.f32.mrb[0].mxu0
    %v2944 = vadd.f32 0.0, %v2943
    %v2945 = vpop.f32.mrb[0].mxu0
    %2946 = vmatprep.mubr.f32.mxu0 0.0
    %2947 = vmatmul.mubr.f32.gmra.mrb[0].mxu0 %v1034
    %v2948 = vpop.f32.mrb[0].mxu0
    %v2949 = vadd.f32 0.0, %v2948
    %v2950 = vpop.f32.mrb[0].mxu0
    %2951 = vmatprep.mubr.f32.mxu0 0.0
    %2952 = vmatmul.mubr.f32.gmra.mrb[0].mxu0 %v1037
    %v2953 = vpop.f32.mrb[0].mxu0
    %v2954 = vadd.f32 0.0, %v2953
    %v2955 = vpop.f32.mrb[0].mxu0
    %2956 = vmatprep.mubr.f32.mxu0 0.0
    %2957 = vmatmul.mubr.f32.gmra.mrb[0].mxu0 %v1040
    %v2958 = vpop.f32.mrb[0].mxu0
    %v2959 = vadd.f32 0.0, %v2958
    %v2960 = vpop.f32.mrb[0].mxu0
    %2961 = vmatprep.mubr.f32.mxu0 0.0
    %2962 = vmatmul.mubr.f32.gmra.mrb[0].mxu0 %v1043
    %v2963 = vpop.f32.mrb[0].mxu0
    %v2964 = vadd.f32 0.0, %v2963
    %v2965 = vpop.f32.mrb[0].mxu0
    %2966 = vmatprep.mubr.f32.mxu0 0.0
    %2967 = vmatmul.mubr.f32.gmra.mrb[0].mxu0 %v1046
    %v2968 = vpop.f32.mrb[0].mxu0
    %v2969 = vadd.f32 0.0, %v2968
    %v2970 = vpop.f32.mrb[0].mxu0
    %2971 = vmatprep.mubr.f32.mxu0 0.0
    %2972 = vmatmul.mubr.f32.gmra.mrb[0].mxu0 %v1049
    %v2973 = vpop.f32.mrb[0].mxu0
    %v2974 = vadd.f32 0.0, %v2973
    %v2975 = vpop.f32.mrb[0].mxu0
    %2976 = vdwg.mxu0
    %v2977 = vadd.f32 %v2745, %v2939
    %v2978 = vadd.f32 %v2746, %v2944
    %v2979 = vadd.f32 %v2747, %v2949
    %v2980 = vadd.f32 %v2748, %v2954
    %v2981 = vadd.f32 %v2749, %v2959
    %v2982 = vadd.f32 %v2750, %v2964
    %v2983 = vadd.f32 %v2751, %v2969
    %v2984 = vadd.f32 %v2752, %v2974
    %v2985 = vtanh.pop %v2977
    %v2986 = vtanh.pop %v2978
    %v2987 = vtanh.pop %v2979
    %v2988 = vtanh.pop %v2980
    %v2989 = vtanh.pop %v2981
    %v2990 = vtanh.pop %v2982
    %v2991 = vtanh.pop %v2983
    %v2992 = vtanh.pop %v2984
    %v2993 = vadd.f32 %v161, %v2985
    %v2994 = vadd.f32 %v162, %v2986
    %v2995 = vadd.f32 %v163, %v2987
    %v2996 = vadd.f32 %v164, %v2988
    %v2997 = vadd.f32 %v165, %v2989
    %v2998 = vadd.f32 %v166, %v2990
    %v2999 = vadd.f32 %v167, %v2991
    %v3000 = vadd.f32 %v168, %v2992
    %3001 = vst.msk [vmem:[%s63] sm:$0xff] %vm768, %v2993
    %3002 = vst.msk [vmem:[%s63 + $0x8] sm:$0xff] %vm768, %v2994
    %3003 = vst.msk [vmem:[%s63 + $0x10] sm:$0xff] %vm768, %v2995
    %3004 = vst.msk [vmem:[%s63 + $0x18] sm:$0xff] %vm768, %v2996
    %3005 = vst.msk [vmem:[%s63 + $0x20] sm:$0xff] %vm768, %v2997
    %3006 = vst.msk [vmem:[%s63 + $0x28] sm:$0xff] %vm768, %v2998
    %3007 = vst.msk [vmem:[%s63 + $0x30] sm:$0xff] %vm768, %v2999
    %3008 = vst.msk [vmem:[%s63 + $0x38] sm:$0xff] %vm768, %v3000
    %3009 = vst.msk [vmem:[%s65] sm:$0xff] %vm505, %v2592
    %3010 = vst.msk [vmem:[%s65 + $0x8] sm:$0xff] %vm505, %v2593
    %3011 = vst.msk [vmem:[%s65 + $0x10] sm:$0xff] %vm505, %v2594
    %3012 = vst.msk [vmem:[%s65 + $0x18] sm:$0xff] %vm505, %v2595
    %3013 = vst.msk [vmem:[%s65 + $0x20] sm:$0xff] %vm505, %v2596
    %3014 = vst.msk [vmem:[%s65 + $0x28] sm:$0xff] %vm505, %v2597
    %3015 = vst.msk [vmem:[%s65 + $0x30] sm:$0xff] %vm505, %v2598
    %3016 = vst.msk [vmem:[%s65 + $0x38] sm:$0xff] %vm505, %v2599
    // Predicated region
    $region134: #{mesh_head_forward.2} parent=1 // pred_check
      _
    $region135: #{mesh_head_forward.2} parent=1 // pred_check_branch
      %3018 = sbr.rel (0) target = $region137
    $region136: #{mesh_head_forward.2} parent=1 // pred_region
      _
    $region137: #{mesh_head_forward.2} parent=1 // pred_fallthru
      _
    // Predicated region
    $region138: #{mesh_head_forward.2} parent=1 // pred_check
      _
    $region139: #{mesh_head_forward.2} parent=1 // pred_check_branch
      %3020 = sbr.rel (0) target = $region141
    $region140: #{mesh_head_forward.2} parent=1 // pred_region
      _
    $region141: #{mesh_head_forward.2} parent=1 // pred_fallthru
      _
    // Predicated region
    $region142: #{mesh_head_forward.2} parent=1 // pred_check
      _
    $region143: #{mesh_head_forward.2} parent=1 // pred_check_branch
      %3022 = sbr.rel (0) target = $region145
    $region144: #{mesh_head_forward.2} parent=1 // pred_region
      _
    $region145: #{mesh_head_forward.2} parent=1 // pred_fallthru
      _
    // Predicated region
    $region146: #{mesh_head_forward.2} parent=1 // pred_check
      _
    $region147: #{mesh_head_forward.2} parent=1 // pred_check_branch
      %3024 = sbr.rel (0) target = $region149
    $region148: #{mesh_head_forward.2} parent=1 // pred_region
      _
    $region149: #{mesh_head_forward.2} parent=1 // pred_fallthru
      _
    %3025 = vsyncpa [#allocation3], 1
    %3026 = vsyncpa [#allocation5], 1

// kernel: mesh_head_forward.3
$region0: #{mesh_head_forward.3}
  #allocation0 [shape = 'u32[]', space=smem, size = 0x4, offset = 0x4, fixed_abs, tag = 'smem constant byte address 0x4 - core index']
  #allocation1 [shape = 'u32[144,128]{1,0:T(1,128)}', space=vmem, size = 0x12000, scoped, tag = 'internal scratch']
  %s0 = inlined_call_operand.smem [shape: u32[37], index: -1, kind: input, shape index: {}]
  %s1 = sld [smem:[%s0]]
  %s2 = scalar_lea.smem %s0, 1
  %s3 = sld [smem:[%s2]]
  %s4 = scalar_lea.smem %s0, 2
  %s5 = sld [smem:[%s4]]
  %s6 = scalar_lea.smem %s0, 3
  %s7 = sld [smem:[%s6]]
  %s8 = scalar_lea.smem %s0, 4
  %s9 = sld [smem:[%s8]]
  %s10 = scalar_lea.smem %s0, 5
  %s11 = sld [smem:[%s10]]
  %s12 = scalar_lea.smem %s0, 6
  %s13 = sld [smem:[%s12]]
  %s14 = scalar_lea.smem %s0, 7
  %s15 = sld [smem:[%s14]]
  %s16 = scalar_lea.smem %s0, 8
  %s17 = sld [smem:[%s16]]
  %s18 = scalar_lea.smem %s0, 9
  %s19 = sld [smem:[%s18]]
  %s20 = scalar_lea.smem %s0, 10
  %s21 = sld [smem:[%s20]]
  %s22 = scalar_lea.smem %s0, 11
  %s23 = sld [smem:[%s22]]
  %s24 = scalar_lea.smem %s0, 12
  %s25 = sld [smem:[%s24]]
  %s26 = scalar_lea.smem %s0, 13
  %s27 = sld [smem:[%s26]]
  %s28 = scalar_lea.smem %s0, 14
  %s29 = sld [smem:[%s28]]
  %s30 = scalar_lea.smem %s0, 15
  %s31 = sld [smem:[%s30]]
  %s32 = scalar_lea.smem %s0, 16
  %s33 = sld [smem:[%s32]]
  %s34 = scalar_lea.smem %s0, 17
  %s35 = sld [smem:[%s34]]
  %s36 = scalar_lea.smem %s0, 18
  %s37 = sld [smem:[%s36]]
  %s38 = scalar_lea.smem %s0, 19
  %s39 = sld [smem:[%s38]]
  %s40 = scalar_lea.smem %s0, 20
  %s41 = sld [smem:[%s40]]
  %s42 = scalar_lea.smem %s0, 21
  %s43 = sld [smem:[%s42]]
  %s44 = scalar_lea.smem %s0, 22
  %s45 = sld [smem:[%s44]]
  %s46 = scalar_lea.smem %s0, 23
  %s47 = sld [smem:[%s46]]
  %s48 = scalar_lea.smem %s0, 24
  %s49 = sld [smem:[%s48]]
  %s50 = scalar_lea.smem %s0, 25
  %s51 = sld [smem:[%s50]]
  %s52 = scalar_lea.smem %s0, 26
  %s53 = sld [smem:[%s52]]
  %s54 = scalar_lea.smem %s0, 27
  %s55 = sld [smem:[%s54]]
  %s56 = scalar_lea.smem %s0, 28
  %s57 = sld [smem:[%s56]]
  %s58 = scalar_lea.smem %s0, 29
  %s59 = sld [smem:[%s58]]
  %s60 = scalar_lea.smem %s0, 30
  %s61 = sld [smem:[%s60]]
  %s62 = scalar_lea.smem %s0, 31
  %s63 = sld [smem:[%s62]]
  %s64 = scalar_lea.smem %s0, 32
  %s65 = sld [smem:[%s64]]
  %s66 = scalar_lea.smem %s0, 33
  %s67 = sld [smem:[%s66]]
  %s68 = scalar_lea.smem %s0, 34
  %s69 = sld [smem:[%s68]]
  %s70 = scalar_lea.smem %s0, 35
  %s71 = sld [smem:[%s70]]
  %s72 = scalar_lea.smem %s0, 36
  %s73 = sld [smem:[%s72]]
  %74 = xla_tuple %s71, %s73
  %s75 = sld [smem:[#allocation0]]
  $region162: #{mesh_head_forward.3} parent=0
    _
  %s77 = ssub.s32 1, %s75
  %s78 = scalar_select 0, %s77, %s75
  $region1: #{mesh_head_forward.3} parent=0
    #allocation2 [shape = 'u8[65536]{0}', space=vmem, size = 0x10000, scoped, tag = 'input window, operand 3, single buffered']
    #allocation3 [shape = 's32[1]{0}', space=sflag, size = 0x4, scoped, tag = 'scoped memory for mesh_head_forward.3']
    #allocation4 [shape = 's32[1]{0}', space=sflag, size = 0x4, scoped, tag = 'scoped memory for mesh_head_forward.3']
    #allocation5 [shape = 'u8[32768]{0}', space=vmem, size = 0x8000, scoped, tag = 'output window, operand 1, single buffered']
    %79 = vsyncpa [#allocation3], 0
    %80 = vsyncpa [#allocation4], 0
    // Predicated region
    $region2: #{mesh_head_forward.3} parent=1 // pred_check
      _
    $region3: #{mesh_head_forward.3} parent=1 // pred_check_branch
      %82 = sbr.rel (0) target = $region5
    $region4: #{mesh_head_forward.3} parent=1 // pred_region
      _
    $region5: #{mesh_head_forward.3} parent=1 // pred_fallthru
      _
    // Predicated region
    $region6: #{mesh_head_forward.3} parent=1 // pred_check
      _
    $region7: #{mesh_head_forward.3} parent=1 // pred_check_branch
      %84 = sbr.rel (0) target = $region9
    $region8: #{mesh_head_forward.3} parent=1 // pred_region
      _
    $region9: #{mesh_head_forward.3} parent=1 // pred_fallthru
      _
    // Predicated region
    $region10: #{mesh_head_forward.3} parent=1 // pred_check
      _
    $region11: #{mesh_head_forward.3} parent=1 // pred_check_branch
      %86 = sbr.rel (0) target = $region13
    $region12: #{mesh_head_forward.3} parent=1 // pred_region
      _
    $region13: #{mesh_head_forward.3} parent=1 // pred_fallthru
      _
    // Predicated region
    $region14: #{mesh_head_forward.3} parent=1 // pred_check
      _
    $region15: #{mesh_head_forward.3} parent=1 // pred_check_branch
      %88 = sbr.rel (0) target = $region17
    $region16: #{mesh_head_forward.3} parent=1 // pred_region
      %s90 = ssub.s32 2048, 2048
      %91 = vsyncadd [#allocation3], %s90
      %s92 = sshll.u32 [#allocation2], 4
      %s93 = int_to_ptr.vmem [resolvable:$true] %s92
      %98 = dma.hbm_to_vmem [thread:$0]  %s7, 2048, %s93, [#allocation3], 256, 256, 16
    $region17: #{mesh_head_forward.3} parent=1 // pred_fallthru
      _
    // Predicated region
    $region18: #{mesh_head_forward.3} parent=1 // pred_check
      _
    $region19: #{mesh_head_forward.3} parent=1 // pred_check_branch
      %100 = sbr.rel (0) target = $region21
    $region20: #{mesh_head_forward.3} parent=1 // pred_region
      _
    $region21: #{mesh_head_forward.3} parent=1 // pred_fallthru
      _
    // Predicated region
    $region22: #{mesh_head_forward.3} parent=1 // pred_check
      _
    $region23: #{mesh_head_forward.3} parent=1 // pred_check_branch
      %102 = sbr.rel (0) target = $region25
    $region24: #{mesh_head_forward.3} parent=1 // pred_region
      _
    $region25: #{mesh_head_forward.3} parent=1 // pred_fallthru
      _
    // Predicated region
    $region26: #{mesh_head_forward.3} parent=1 // pred_check
      _
    $region27: #{mesh_head_forward.3} parent=1 // pred_check_branch
      %104 = sbr.rel (0) target = $region29
    $region28: #{mesh_head_forward.3} parent=1 // pred_region
      _
    $region29: #{mesh_head_forward.3} parent=1 // pred_fallthru
      _
    // Predicated region
    $region30: #{mesh_head_forward.3} parent=1 // pred_check
      _
    $region31: #{mesh_head_forward.3} parent=1 // pred_check_branch
      %106 = sbr.rel (0) target = $region33
    $region32: #{mesh_head_forward.3} parent=1 // pred_region
      _
    $region33: #{mesh_head_forward.3} parent=1 // pred_fallthru
      _
    // Predicated region
    $region34: #{mesh_head_forward.3} parent=1 // pred_check
      _
    $region35: #{mesh_head_forward.3} parent=1 // pred_check_branch
      %108 = sbr.rel (0) target = $region37
    $region36: #{mesh_head_forward.3} parent=1 // pred_region
      _
    $region37: #{mesh_head_forward.3} parent=1 // pred_fallthru
      _
    // Predicated region
    $region38: #{mesh_head_forward.3} parent=1 // pred_check
      _
    $region39: #{mesh_head_forward.3} parent=1 // pred_check_branch
      %110 = sbr.rel (0) target = $region41
    $region40: #{mesh_head_forward.3} parent=1 // pred_region
      _
    $region41: #{mesh_head_forward.3} parent=1 // pred_fallthru
      _
    // Predicated region
    $region42: #{mesh_head_forward.3} parent=1 // pred_check
      _
    $region43: #{mesh_head_forward.3} parent=1 // pred_check_branch
      %112 = sbr.rel (0) target = $region45
    $region44: #{mesh_head_forward.3} parent=1 // pred_region
      _
    $region45: #{mesh_head_forward.3} parent=1 // pred_fallthru
      _
    // Predicated region
    $region46: #{mesh_head_forward.3} parent=1 // pred_check
      _
    $region47: #{mesh_head_forward.3} parent=1 // pred_check_branch
      %114 = sbr.rel (0) target = $region49
    $region48: #{mesh_head_forward.3} parent=1 // pred_region
      _
    $region49: #{mesh_head_forward.3} parent=1 // pred_fallthru
      _
    // Predicated region
    $region50: #{mesh_head_forward.3} parent=1 // pred_check
      _
    $region51: #{mesh_head_forward.3} parent=1 // pred_check_branch
      %116 = sbr.rel (0) target = $region53
    $region52: #{mesh_head_forward.3} parent=1 // pred_region
      _
    $region53: #{mesh_head_forward.3} parent=1 // pred_fallthru
      _
    // Predicated region
    $region54: #{mesh_head_forward.3} parent=1 // pred_check
      _
    $region55: #{mesh_head_forward.3} parent=1 // pred_check_branch
      %118 = sbr.rel (0) target = $region57
    $region56: #{mesh_head_forward.3} parent=1 // pred_region
      _
    $region57: #{mesh_head_forward.3} parent=1 // pred_fallthru
      _
    // Predicated region
    $region58: #{mesh_head_forward.3} parent=1 // pred_check
      _
    $region59: #{mesh_head_forward.3} parent=1 // pred_check_branch
      %120 = sbr.rel (0) target = $region61
    $region60: #{mesh_head_forward.3} parent=1 // pred_region
      _
    $region61: #{mesh_head_forward.3} parent=1 // pred_fallthru
      _
    // Predicated region
    $region62: #{mesh_head_forward.3} parent=1 // pred_check
      _
    $region63: #{mesh_head_forward.3} parent=1 // pred_check_branch
      %122 = sbr.rel (0) target = $region65
    $region64: #{mesh_head_forward.3} parent=1 // pred_region
      _
    $region65: #{mesh_head_forward.3} parent=1 // pred_fallthru
      _
    // Predicated region
    $region66: #{mesh_head_forward.3} parent=1 // pred_check
      _
    $region67: #{mesh_head_forward.3} parent=1 // pred_check_branch
      %124 = sbr.rel (0) target = $region69
    $region68: #{mesh_head_forward.3} parent=1 // pred_region
      _
    $region69: #{mesh_head_forward.3} parent=1 // pred_fallthru
      _
    // Predicated region
    $region70: #{mesh_head_forward.3} parent=1 // pred_check
      _
    $region71: #{mesh_head_forward.3} parent=1 // pred_check_branch
      %126 = sbr.rel (0) target = $region73
    $region72: #{mesh_head_forward.3} parent=1 // pred_region
      _
    $region73: #{mesh_head_forward.3} parent=1 // pred_fallthru
      _
    // Predicated region
    $region74: #{mesh_head_forward.3} parent=1 // pred_check
      _
    $region75: #{mesh_head_forward.3} parent=1 // pred_check_branch
      %128 = sbr.rel (0) target = $region77
    $region76: #{mesh_head_forward.3} parent=1 // pred_region
      _
    $region77: #{mesh_head_forward.3} parent=1 // pred_fallthru
      _
    // Predicated region
    $region78: #{mesh_head_forward.3} parent=1 // pred_check
      _
    $region79: #{mesh_head_forward.3} parent=1 // pred_check_branch
      %130 = sbr.rel (0) target = $region81
    $region80: #{mesh_head_forward.3} parent=1 // pred_region
      _
    $region81: #{mesh_head_forward.3} parent=1 // pred_fallthru
      _
    // Predicated region
    $region82: #{mesh_head_forward.3} parent=1 // pred_check
      _
    $region83: #{mesh_head_forward.3} parent=1 // pred_check_branch
      %132 = sbr.rel (0) target = $region85
    $region84: #{mesh_head_forward.3} parent=1 // pred_region
      _
    $region85: #{mesh_head_forward.3} parent=1 // pred_fallthru
      _
    // Predicated region
    $region86: #{mesh_head_forward.3} parent=1 // pred_check
      _
    $region87: #{mesh_head_forward.3} parent=1 // pred_check_branch
      %134 = sbr.rel (0) target = $region89
    $region88: #{mesh_head_forward.3} parent=1 // pred_region
      _
    $region89: #{mesh_head_forward.3} parent=1 // pred_fallthru
      _
    // Predicated region
    $region90: #{mesh_head_forward.3} parent=1 // pred_check
      _
    $region91: #{mesh_head_forward.3} parent=1 // pred_check_branch
      %136 = sbr.rel (0) target = $region93
    $region92: #{mesh_head_forward.3} parent=1 // pred_region
      _
    $region93: #{mesh_head_forward.3} parent=1 // pred_fallthru
      _
    // Predicated region
    $region94: #{mesh_head_forward.3} parent=1 // pred_check
      _
    $region95: #{mesh_head_forward.3} parent=1 // pred_check_branch
      %138 = sbr.rel (0) target = $region97
    $region96: #{mesh_head_forward.3} parent=1 // pred_region
      _
    $region97: #{mesh_head_forward.3} parent=1 // pred_fallthru
      _
    // Predicated region
    $region98: #{mesh_head_forward.3} parent=1 // pred_check
      _
    $region99: #{mesh_head_forward.3} parent=1 // pred_check_branch
      %140 = sbr.rel (0) target = $region101
    $region100: #{mesh_head_forward.3} parent=1 // pred_region
      _
    $region101: #{mesh_head_forward.3} parent=1 // pred_fallthru
      _
    // Predicated region
    $region102: #{mesh_head_forward.3} parent=1 // pred_check
      _
    $region103: #{mesh_head_forward.3} parent=1 // pred_check_branch
      %142 = sbr.rel (0) target = $region105
    $region104: #{mesh_head_forward.3} parent=1 // pred_region
      _
    $region105: #{mesh_head_forward.3} parent=1 // pred_fallthru
      _
    // Predicated region
    $region106: #{mesh_head_forward.3} parent=1 // pred_check
      _
    $region107: #{mesh_head_forward.3} parent=1 // pred_check_branch
      %144 = sbr.rel (0) target = $region109
    $region108: #{mesh_head_forward.3} parent=1 // pred_region
      _
    $region109: #{mesh_head_forward.3} parent=1 // pred_fallthru
      _
    // Predicated region
    $region110: #{mesh_head_forward.3} parent=1 // pred_check
      _
    $region111: #{mesh_head_forward.3} parent=1 // pred_check_branch
      %146 = sbr.rel (0) target = $region113
    $region112: #{mesh_head_forward.3} parent=1 // pred_region
      _
    $region113: #{mesh_head_forward.3} parent=1 // pred_fallthru
      _
    // Predicated region
    $region114: #{mesh_head_forward.3} parent=1 // pred_check
      _
    $region115: #{mesh_head_forward.3} parent=1 // pred_check_branch
      %148 = sbr.rel (0) target = $region117
    $region116: #{mesh_head_forward.3} parent=1 // pred_region
      _
    $region117: #{mesh_head_forward.3} parent=1 // pred_fallthru
      _
    // Predicated region
    $region118: #{mesh_head_forward.3} parent=1 // pred_check
      _
    $region119: #{mesh_head_forward.3} parent=1 // pred_check_branch
      %150 = sbr.rel (0) target = $region121
    $region120: #{mesh_head_forward.3} parent=1 // pred_region
      _
    $region121: #{mesh_head_forward.3} parent=1 // pred_fallthru
      _
    // Predicated region
    $region122: #{mesh_head_forward.3} parent=1 // pred_check
      _
    $region123: #{mesh_head_forward.3} parent=1 // pred_check_branch
      %152 = sbr.rel (0) target = $region125
    $region124: #{mesh_head_forward.3} parent=1 // pred_region
      _
    $region125: #{mesh_head_forward.3} parent=1 // pred_fallthru
      _
    // Predicated region
    $region126: #{mesh_head_forward.3} parent=1 // pred_check
      _
    $region127: #{mesh_head_forward.3} parent=1 // pred_check_branch
      %154 = sbr.rel (0) target = $region129
    $region128: #{mesh_head_forward.3} parent=1 // pred_region
      _
    $region129: #{mesh_head_forward.3} parent=1 // pred_fallthru
      _
    // Predicated region
    $region130: #{mesh_head_forward.3} parent=1 // pred_check
      _
    $region131: #{mesh_head_forward.3} parent=1 // pred_check_branch
      %156 = sbr.rel (0) target = $region133
    $region132: #{mesh_head_forward.3} parent=1 // pred_region
      _
    $region133: #{mesh_head_forward.3} parent=1 // pred_fallthru
      _
    // Predicated region
    $region134: #{mesh_head_forward.3} parent=1 // pred_check
      _
    $region135: #{mesh_head_forward.3} parent=1 // pred_check_branch
      %158 = sbr.rel (0) target = $region137
    $region136: #{mesh_head_forward.3} parent=1 // pred_region
      _
    $region137: #{mesh_head_forward.3} parent=1 // pred_fallthru
      _
    // Predicated region
    $region138: #{mesh_head_forward.3} parent=1 // pred_check
      _
    $region139: #{mesh_head_forward.3} parent=1 // pred_check_branch
      %160 = sbr.rel (0) target = $region141
    $region140: #{mesh_head_forward.3} parent=1 // pred_region
      _
    $region141: #{mesh_head_forward.3} parent=1 // pred_fallthru
      _
    // Predicated region
    $region142: #{mesh_head_forward.3} parent=1 // pred_check
      _
    $region143: #{mesh_head_forward.3} parent=1 // pred_check_branch
      %162 = sbr.rel (0) target = $region145
    $region144: #{mesh_head_forward.3} parent=1 // pred_region
      %163 = dma.done [#allocation3], 2048
    $region145: #{mesh_head_forward.3} parent=1 // pred_fallthru
      _
    %v164 = vld [vmem:[%s1] sm:$0xff]
    %v165 = vld [vmem:[%s1 + $0x8] sm:$0xff]
    %v166 = vld [vmem:[%s1 + $0x10] sm:$0xff]
    %v167 = vld [vmem:[%s1 + $0x18] sm:$0xff]
    %v168 = vld [vmem:[%s1 + $0x20] sm:$0xff]
    %v169 = vld [vmem:[%s1 + $0x28] sm:$0xff]
    %v170 = vld [vmem:[%s1 + $0x30] sm:$0xff]
    %v171 = vld [vmem:[%s1 + $0x38] sm:$0xff]
    %v172 = vld [vmem:[%s3] sm:$0xff]
    %v173 = vld [vmem:[%s3 + $0x8] sm:$0xff]
    %v174 = vld [vmem:[%s3 + $0x10] sm:$0xff]
    %v175 = vld [vmem:[%s3 + $0x18] sm:$0xff]
    %v176 = vld [vmem:[%s3 + $0x20] sm:$0xff]
    %v177 = vld [vmem:[%s3 + $0x28] sm:$0xff]
    %v178 = vld [vmem:[%s3 + $0x30] sm:$0xff]
    %v179 = vld [vmem:[%s3 + $0x38] sm:$0xff]
    %v180 = vld [vmem:[%s5] sm:$0xff]
    %v181 = vld [vmem:[%s5 + $0x8] sm:$0xff]
    %v182 = vld [vmem:[%s5 + $0x10] sm:$0xff]
    %v183 = vld [vmem:[%s5 + $0x18] sm:$0xff]
    %v184 = vld [vmem:[%s5 + $0x20] sm:$0xff]
    %v185 = vld [vmem:[%s5 + $0x28] sm:$0xff]
    %v186 = vld [vmem:[%s5 + $0x30] sm:$0xff]
    %v187 = vld [vmem:[%s5 + $0x38] sm:$0xff]
    %v188 = vld [vmem:[#allocation2] sm:$0xff]
    %v189 = vld [vmem:[#allocation2 + $0x8] sm:$0xff]
    %v190 = vld [vmem:[#allocation2 + $0x10] sm:$0xff]
    %v191 = vld [vmem:[#allocation2 + $0x18] sm:$0xff]
    %v192 = vld [vmem:[#allocation2 + $0x20] sm:$0xff]
    %v193 = vld [vmem:[#allocation2 + $0x28] sm:$0xff]
    %v194 = vld [vmem:[#allocation2 + $0x30] sm:$0xff]
    %v195 = vld [vmem:[#allocation2 + $0x38] sm:$0xff]
    %v196 = vld [vmem:[#allocation2 + $0x40] sm:$0xff]
    %v197 = vld [vmem:[#allocation2 + $0x48] sm:$0xff]
    %v198 = vld [vmem:[#allocation2 + $0x50] sm:$0xff]
    %v199 = vld [vmem:[#allocation2 + $0x58] sm:$0xff]
    %v200 = vld [vmem:[#allocation2 + $0x60] sm:$0xff]
    %v201 = vld [vmem:[#allocation2 + $0x68] sm:$0xff]
    %v202 = vld [vmem:[#allocation2 + $0x70] sm:$0xff]
    %v203 = vld [vmem:[#allocation2 + $0x78] sm:$0xff]
    %v204 = vld [vmem:[%s9] sm:$0xff]
    %v205 = vld [vmem:[%s9 + $0x8] sm:$0xff]
    %v206 = vld [vmem:[%s9 + $0x10] sm:$0xff]
    %v207 = vld [vmem:[%s9 + $0x18] sm:$0xff]
    %v208 = vld [vmem:[%s9 + $0x20] sm:$0xff]
    %v209 = vld [vmem:[%s9 + $0x28] sm:$0xff]
    %v210 = vld [vmem:[%s9 + $0x30] sm:$0xff]
    %v211 = vld [vmem:[%s9 + $0x38] sm:$0xff]
    %v212 = vld [vmem:[%s9 + $0x40] sm:$0xff]
    %v213 = vld [vmem:[%s9 + $0x48] sm:$0xff]
    %v214 = vld [vmem:[%s9 + $0x50] sm:$0xff]
    %v215 = vld [vmem:[%s9 + $0x58] sm:$0xff]
    %v216 = vld [vmem:[%s9 + $0x60] sm:$0xff]
    %v217 = vld [vmem:[%s9 + $0x68] sm:$0xff]
    %v218 = vld [vmem:[%s9 + $0x70] sm:$0xff]
    %v219 = vld [vmem:[%s9 + $0x78] sm:$0xff]
    %v220 = vld [vmem:[%s9 + $0x80] sm:$0xff]
    %v221 = vld [vmem:[%s9 + $0x88] sm:$0xff]
    %v222 = vld [vmem:[%s9 + $0x90] sm:$0xff]
    %v223 = vld [vmem:[%s9 + $0x98] sm:$0xff]
    %v224 = vld [vmem:[%s9 + $0xa0] sm:$0xff]
    %v225 = vld [vmem:[%s9 + $0xa8] sm:$0xff]
    %v226 = vld [vmem:[%s9 + $0xb0] sm:$0xff]
    %v227 = vld [vmem:[%s9 + $0xb8] sm:$0xff]
    %v228 = vld [vmem:[%s9 + $0xc0] sm:$0xff]
    %v229 = vld [vmem:[%s9 + $0xc8] sm:$0xff]
    %v230 = vld [vmem:[%s9 + $0xd0] sm:$0xff]
    %v231 = vld [vmem:[%s9 + $0xd8] sm:$0xff]
    %v232 = vld [vmem:[%s9 + $0xe0] sm:$0xff]
    %v233 = vld [vmem:[%s9 + $0xe8] sm:$0xff]
    %v234 = vld [vmem:[%s9 + $0xf0] sm:$0xff]
    %v235 = vld [vmem:[%s9 + $0xf8] sm:$0xff]
    %v236 = vld [vmem:[%s11] sm:$0xff]
    %v237 = vld [vmem:[%s11 + $0x8] sm:$0xff]
    %238 = vmatprep.subr.mxu0 0.0
    %239 = vmatpush1.msra.mxu0 %v204
    %240 = vmatprep.subr.mxu0 0.0
    %241 = vmatpush1.msra.mxu0 %v205
    %242 = vmatprep.subr.mxu0 0.0
    %243 = vmatpush1.msra.mxu0 %v206
    %244 = vmatprep.subr.mxu0 0.0
    %245 = vmatpush1.msra.mxu0 %v207
    %246 = vmatprep.subr.mxu0 0.0
    %247 = vmatpush1.msra.mxu0 %v208
    %248 = vmatprep.subr.mxu0 0.0
    %249 = vmatpush1.msra.mxu0 %v209
    %250 = vmatprep.subr.mxu0 0.0
    %251 = vmatpush1.msra.mxu0 %v210
    %252 = vmatprep.subr.mxu0 0.0
    %253 = vmatpush1.msra.mxu0 %v211
    %254 = vmatprep.subr.mxu0 0.0
    %255 = vmatpush1.msra.mxu0 %v212
    %256 = vmatprep.subr.mxu0 0.0
    %257 = vmatpush1.msra.mxu0 %v213
    %258 = vmatprep.subr.mxu0 0.0
    %259 = vmatpush1.msra.mxu0 %v214
    %260 = vmatprep.subr.mxu0 0.0
    %261 = vmatpush1.msra.mxu0 %v215
    %262 = vmatprep.subr.mxu0 0.0
    %263 = vmatpush1.msra.mxu0 %v216
    %264 = vmatprep.subr.mxu0 0.0
    %265 = vmatpush1.msra.mxu0 %v217
    %266 = vmatprep.subr.mxu0 0.0
    %267 = vmatpush1.msra.mxu0 %v218
    %268 = vmatprep.subr.mxu0 0.0
    %269 = vmatpush1.msra.mxu0 %v219
    %270 = vmatprep.subr.mxu0 0.0
    %271 = vmatpush1.msra.mxu0 %v220
    %272 = vmatprep.subr.mxu0 0.0
    %273 = vmatpush1.msra.mxu0 %v221
    %274 = vmatprep.subr.mxu0 0.0
    %275 = vmatpush1.msra.mxu0 %v222
    %276 = vmatprep.subr.mxu0 0.0
    %277 = vmatpush1.msra.mxu0 %v223
    %278 = vmatprep.subr.mxu0 0.0
    %279 = vmatpush1.msra.mxu0 %v224
    %280 = vmatprep.subr.mxu0 0.0
    %281 = vmatpush1.msra.mxu0 %v225
    %282 = vmatprep.subr.mxu0 0.0
    %283 = vmatpush1.msra.mxu0 %v226
    %284 = vmatprep.subr.mxu0 0.0
    %285 = vmatpush1.msra.mxu0 %v227
    %286 = vmatprep.subr.mxu0 0.0
    %287 = vmatpush1.msra.mxu0 %v228
    %288 = vmatprep.subr.mxu0 0.0
    %289 = vmatpush1.msra.mxu0 %v229
    %290 = vmatprep.subr.mxu0 0.0
    %291 = vmatpush1.msra.mxu0 %v230
    %292 = vmatprep.subr.mxu0 0.0
    %293 = vmatpush1.msra.mxu0 %v231
    %294 = vmatprep.subr.mxu0 0.0
    %295 = vmatpush1.msra.mxu0 %v232
    %296 = vmatprep.subr.mxu0 0.0
    %297 = vmatpush1.msra.mxu0 %v233
    %298 = vmatprep.subr.mxu0 0.0
    %299 = vmatpush1.msra.mxu0 %v234
    %300 = vmatprep.subr.mxu0 0.0
    %301 = vmatpush1.msra.mxu0 %v235
    %302 = vmatprep.mubr.f32.mxu0 %v189
    %303 = vmatmul.mubr.f32.gmra.mrb[0].mxu0 %v188
    %v304 = vpop.f32.mrb[0].mxu0
    %v305 = vadd.f32 0.0, %v304
    %v306 = vpop.f32.mrb[0].mxu0
    %307 = vmatprep.mubr.f32.mxu0 %v191
    %308 = vmatmul.mubr.f32.gmra.mrb[0].mxu0 %v190
    %v309 = vpop.f32.mrb[0].mxu0
    %v310 = vadd.f32 0.0, %v309
    %v311 = vpop.f32.mrb[0].mxu0
    %312 = vmatprep.mubr.f32.mxu0 %v193
    %313 = vmatmul.mubr.f32.gmra.mrb[0].mxu0 %v192
    %v314 = vpop.f32.mrb[0].mxu0
    %v315 = vadd.f32 0.0, %v314
    %v316 = vpop.f32.mrb[0].mxu0
    %317 = vmatprep.mubr.f32.mxu0 %v195
    %318 = vmatmul.mubr.f32.gmra.mrb[0].mxu0 %v194
    %v319 = vpop.f32.mrb[0].mxu0
    %v320 = vadd.f32 0.0, %v319
    %v321 = vpop.f32.mrb[0].mxu0
    %322 = vmatprep.mubr.f32.mxu0 %v197
    %323 = vmatmul.mubr.f32.gmra.mrb[0].mxu0 %v196
    %v324 = vpop.f32.mrb[0].mxu0
    %v325 = vadd.f32 0.0, %v324
    %v326 = vpop.f32.mrb[0].mxu0
    %327 = vmatprep.mubr.f32.mxu0 %v199
    %328 = vmatmul.mubr.f32.gmra.mrb[0].mxu0 %v198
    %v329 = vpop.f32.mrb[0].mxu0
    %v330 = vadd.f32 0.0, %v329
    %v331 = vpop.f32.mrb[0].mxu0
    %332 = vmatprep.mubr.f32.mxu0 %v201
    %333 = vmatmul.mubr.f32.gmra.mrb[0].mxu0 %v200
    %v334 = vpop.f32.mrb[0].mxu0
    %v335 = vadd.f32 0.0, %v334
    %v336 = vpop.f32.mrb[0].mxu0
    %337 = vmatprep.mubr.f32.mxu0 %v203
    %338 = vmatmul.mubr.f32.gmra.mrb[0].mxu0 %v202
    %v339 = vpop.f32.mrb[0].mxu0
    %v340 = vadd.f32 0.0, %v339
    %v341 = vpop.f32.mrb[0].mxu0
    %342 = vdwg.mxu0
    %v343 = vld [vmem:[%s13] sm:$0x1]
    %v345 = vlaneseq
    %v346 = vshrl.u32 %v345, 7
    %v347 = vsub.s32 0, %v346
    %v348 = vrot.slane %v343, %v347
    %vm350 = vcmask 130048
    %v352 = vsel %vm350, %v305, 0
    %v355 = vsel %vm350, %v310, 0
    %v358 = vsel %vm350, %v315, 0
    %v361 = vsel %vm350, %v320, 0
    %v364 = vsel %vm350, %v325, 0
    %v367 = vsel %vm350, %v330, 0
    %v370 = vsel %vm350, %v335, 0
    %v373 = vsel %vm350, %v340, 0
    %375 = vmatprep.subr.mxu0 0.0
    %376 = vmatpush1.msra.mxu0 %v236
    %377 = vmatprep.subr.mxu0 0.0
    %378 = vmatpush1.msra.mxu0 %v237
    %379 = vmatprep.subr.mxu0 0.0
    %380 = vmatpush1.msra.mxu0 0.0
    %381 = vmatprep.subr.mxu0 0.0
    %382 = vmatpush1.msra.mxu0 0.0
    %383 = vmatprep.subr.mxu0 0.0
    %384 = vmatpush1.msra.mxu0 0.0
    %385 = vmatprep.subr.mxu0 0.0
    %386 = vmatpush1.msra.mxu0 0.0
    %387 = vmatprep.subr.mxu0 0.0
    %388 = vmatpush1.msra.mxu0 0.0
    %389 = vmatprep.subr.mxu0 0.0
    %390 = vmatpush1.msra.mxu0 0.0
    %391 = vmatprep.subr.mxu0 0.0
    %392 = vmatpush1.msra.mxu0 0.0
    %393 = vmatprep.subr.mxu0 0.0
    %394 = vmatpush1.msra.mxu0 0.0
    %395 = vmatprep.subr.mxu0 0.0
    %396 = vmatpush1.msra.mxu0 0.0
    %397 = vmatprep.subr.mxu0 0.0
    %398 = vmatpush1.msra.mxu0 0.0
    %399 = vmatprep.subr.mxu0 0.0
    %400 = vmatpush1.msra.mxu0 0.0
    %401 = vmatprep.subr.mxu0 0.0
    %402 = vmatpush1.msra.mxu0 0.0
    %403 = vmatprep.subr.mxu0 0.0
    %404 = vmatpush1.msra.mxu0 0.0
    %405 = vmatprep.subr.mxu0 0.0
    %406 = vmatpush1.msra.mxu0 0.0
    %407 = vmatprep.subr.mxu0 0.0
    %408 = vmatpush1.msra.mxu0 0.0
    %409 = vmatprep.subr.mxu0 0.0
    %410 = vmatpush1.msra.mxu0 0.0
    %411 = vmatprep.subr.mxu0 0.0
    %412 = vmatpush1.msra.mxu0 0.0
    %413 = vmatprep.subr.mxu0 0.0
    %414 = vmatpush1.msra.mxu0 0.0
    %415 = vmatprep.subr.mxu0 0.0
    %416 = vmatpush1.msra.mxu0 0.0
    %417 = vmatprep.subr.mxu0 0.0
    %418 = vmatpush1.msra.mxu0 0.0
    %419 = vmatprep.subr.mxu0 0.0
    %420 = vmatpush1.msra.mxu0 0.0
    %421 = vmatprep.subr.mxu0 0.0
    %422 = vmatpush1.msra.mxu0 0.0
    %423 = vmatprep.subr.mxu0 0.0
    %424 = vmatpush1.msra.mxu0 0.0
    %425 = vmatprep.subr.mxu0 0.0
    %426 = vmatpush1.msra.mxu0 0.0
    %427 = vmatprep.subr.mxu0 0.0
    %428 = vmatpush1.msra.mxu0 0.0
    %429 = vmatprep.subr.mxu0 0.0
    %430 = vmatpush1.msra.mxu0 0.0
    %431 = vmatprep.subr.mxu0 0.0
    %432 = vmatpush1.msra.mxu0 0.0
    %433 = vmatprep.subr.mxu0 0.0
    %434 = vmatpush1.msra.mxu0 0.0
    %435 = vmatprep.subr.mxu0 0.0
    %436 = vmatpush1.msra.mxu0 0.0
    %437 = vmatprep.subr.mxu0 0.0
    %438 = vmatpush1.msra.mxu0 0.0
    %439 = vmatprep.mubr.f32.mxu0 0.0
    %440 = vmatmul.mubr.f32.gmra.mrb[0].mxu0 %v352
    %v441 = vpop.f32.mrb[0].mxu0
    %v442 = vadd.f32 %v348, %v441
    %v443 = vpop.f32.mrb[0].mxu0
    %444 = vmatprep.mubr.f32.mxu0 0.0
    %445 = vmatmul.mubr.f32.gmra.mrb[0].mxu0 %v355
    %v446 = vpop.f32.mrb[0].mxu0
    %v447 = vadd.f32 %v348, %v446
    %v448 = vpop.f32.mrb[0].mxu0
    %449 = vmatprep.mubr.f32.mxu0 0.0
    %450 = vmatmul.mubr.f32.gmra.mrb[0].mxu0 %v358
    %v451 = vpop.f32.mrb[0].mxu0
    %v452 = vadd.f32 %v348, %v451
    %v453 = vpop.f32.mrb[0].mxu0
    %454 = vmatprep.mubr.f32.mxu0 0.0
    %455 = vmatmul.mubr.f32.gmra.mrb[0].mxu0 %v361
    %v456 = vpop.f32.mrb[0].mxu0
    %v457 = vadd.f32 %v348, %v456
    %v458 = vpop.f32.mrb[0].mxu0
    %459 = vmatprep.mubr.f32.mxu0 0.0
    %460 = vmatmul.mubr.f32.gmra.mrb[0].mxu0 %v364
    %v461 = vpop.f32.mrb[0].mxu0
    %v462 = vadd.f32 %v348, %v461
    %v463 = vpop.f32.mrb[0].mxu0
    %464 = vmatprep.mubr.f32.mxu0 0.0
    %465 = vmatmul.mubr.f32.gmra.mrb[0].mxu0 %v367
    %v466 = vpop.f32.mrb[0].mxu0
    %v467 = vadd.f32 %v348, %v466
    %v468 = vpop.f32.mrb[0].mxu0
    %469 = vmatprep.mubr.f32.mxu0 0.0
    %470 = vmatmul.mubr.f32.gmra.mrb[0].mxu0 %v370
    %v471 = vpop.f32.mrb[0].mxu0
    %v472 = vadd.f32 %v348, %v471
    %v473 = vpop.f32.mrb[0].mxu0
    %474 = vmatprep.mubr.f32.mxu0 0.0
    %475 = vmatmul.mubr.f32.gmra.mrb[0].mxu0 %v373
    %v476 = vpop.f32.mrb[0].mxu0
    %v477 = vadd.f32 %v348, %v476
    %v478 = vpop.f32.mrb[0].mxu0
    %479 = vdwg.mxu0
    %v480 = vmax.f32 %v442, 0.0
    %v481 = vmax.f32 %v447, 0.0
    %v482 = vmax.f32 %v452, 0.0
    %v483 = vmax.f32 %v457, 0.0
    %v484 = vmax.f32 %v462, 0.0
    %v485 = vmax.f32 %v467, 0.0
    %v486 = vmax.f32 %v472, 0.0
    %v487 = vmax.f32 %v477, 0.0
    %v488 = vmax.f32 %v180, 0.0
    %v489 = vmax.f32 %v181, 0.0
    %v490 = vmax.f32 %v182, 0.0
    %v491 = vmax.f32 %v183, 0.0
    %v492 = vmax.f32 %v184, 0.0
    %v493 = vmax.f32 %v185, 0.0
    %v494 = vmax.f32 %v186, 0.0
    %v495 = vmax.f32 %v187, 0.0
    %v496 = vmax.f32 %v480, 0.0
    %v497 = vmax.f32 %v481, 0.0
    %v498 = vmax.f32 %v482, 0.0
    %v499 = vmax.f32 %v483, 0.0
    %v500 = vmax.f32 %v484, 0.0
    %v501 = vmax.f32 %v485, 0.0
    %v502 = vmax.f32 %v486, 0.0
    %v503 = vmax.f32 %v487, 0.0
    %v504 = vmax.f32 %v164, 0.0
    %v505 = vmax.f32 %v165, 0.0
    %v506 = vmax.f32 %v166, 0.0
    %v507 = vmax.f32 %v167, 0.0
    %v508 = vmax.f32 %v168, 0.0
    %v509 = vmax.f32 %v169, 0.0
    %v510 = vmax.f32 %v170, 0.0
    %v511 = vmax.f32 %v171, 0.0
    %v512 = vld [vmem:[%s15] sm:$0xff]
    %v513 = vld [vmem:[%s15 + $0x8] sm:$0xff]
    %v514 = vld [vmem:[%s15 + $0x10] sm:$0xff]
    %v515 = vld [vmem:[%s15 + $0x18] sm:$0xff]
    %v516 = vld [vmem:[%s17] sm:$0xff]
    %v517 = vld [vmem:[%s17 + $0x8] sm:$0xff]
    %v518 = vld [vmem:[%s17 + $0x10] sm:$0xff]
    %v519 = vld [vmem:[%s17 + $0x18] sm:$0xff]
    %v520 = vld [vmem:[%s19] sm:$0x7]
    %v521 = vld [vmem:[%s21] sm:$0x1]
    %v522 = vld [vmem:[%s23] sm:$0xff]
    %v523 = vld [vmem:[%s23 + $0x8] sm:$0xff]
    %v524 = vld [vmem:[%s23 + $0x10] sm:$0xff]
    %v525 = vld [vmem:[%s23 + $0x18] sm:$0xff]
    %v526 = vld [vmem:[%s25] sm:$0xff]
    %v527 = vld [vmem:[%s25 + $0x8] sm:$0xff]
    %v528 = vld [vmem:[%s25 + $0x10] sm:$0xff]
    %v529 = vld [vmem:[%s25 + $0x18] sm:$0xff]
    %v530 = vld [vmem:[%s27] sm:$0x7]
    %v531 = vld [vmem:[%s29] sm:$0x1]
    %vm532 = vcmask 261120
    %v534 = vsel %vm532, %v488, 0
    %v537 = vsel %vm532, %v489, 0
    %v540 = vsel %vm532, %v490, 0
    %v543 = vsel %vm532, %v491, 0
    %v546 = vsel %vm532, %v492, 0
    %v549 = vsel %vm532, %v493, 0
    %v552 = vsel %vm532, %v494, 0
    %v555 = vsel %vm532, %v495, 0
    %557 = vmatprep.subr.mxu0 0.0
    %558 = vmatpush1.msra.mxu0 %v512
    %559 = vmatprep.subr.mxu0 0.0
    %560 = vmatpush1.msra.mxu0 %v513
    %561 = vmatprep.subr.mxu0 0.0
    %562 = vmatpush1.msra.mxu0 %v514
    %563 = vmatprep.subr.mxu0 0.0
    %564 = vmatpush1.msra.mxu0 %v515
    %565 = vmatprep.subr.mxu0 0.0
    %566 = vmatpush1.msra.mxu0 0.0
    %567 = vmatprep.subr.mxu0 0.0
    %568 = vmatpush1.msra.mxu0 0.0
    %569 = vmatprep.subr.mxu0 0.0
    %570 = vmatpush1.msra.mxu0 0.0
    %571 = vmatprep.subr.mxu0 0.0
    %572 = vmatpush1.msra.mxu0 0.0
    %573 = vmatprep.subr.mxu0 0.0
    %574 = vmatpush1.msra.mxu0 0.0
    %575 = vmatprep.subr.mxu0 0.0
    %576 = vmatpush1.msra.mxu0 0.0
    %577 = vmatprep.subr.mxu0 0.0
    %578 = vmatpush1.msra.mxu0 0.0
    %579 = vmatprep.subr.mxu0 0.0
    %580 = vmatpush1.msra.mxu0 0.0
    %581 = vmatprep.subr.mxu0 0.0
    %582 = vmatpush1.msra.mxu0 0.0
    %583 = vmatprep.subr.mxu0 0.0
    %584 = vmatpush1.msra.mxu0 0.0
    %585 = vmatprep.subr.mxu0 0.0
    %586 = vmatpush1.msra.mxu0 0.0
    %587 = vmatprep.subr.mxu0 0.0
    %588 = vmatpush1.msra.mxu0 0.0
    %589 = vmatprep.subr.mxu0 0.0
    %590 = vmatpush1.msra.mxu0 0.0
    %591 = vmatprep.subr.mxu0 0.0
    %592 = vmatpush1.msra.mxu0 0.0
    %593 = vmatprep.subr.mxu0 0.0
    %594 = vmatpush1.msra.mxu0 0.0
    %595 = vmatprep.subr.mxu0 0.0
    %596 = vmatpush1.msra.mxu0 0.0
    %597 = vmatprep.subr.mxu0 0.0
    %598 = vmatpush1.msra.mxu0 0.0
    %599 = vmatprep.subr.mxu0 0.0
    %600 = vmatpush1.msra.mxu0 0.0
    %601 = vmatprep.subr.mxu0 0.0
    %602 = vmatpush1.msra.mxu0 0.0
    %603 = vmatprep.subr.mxu0 0.0
    %604 = vmatpush1.msra.mxu0 0.0
    %605 = vmatprep.subr.mxu0 0.0
    %606 = vmatpush1.msra.mxu0 0.0
    %607 = vmatprep.subr.mxu0 0.0
    %608 = vmatpush1.msra.mxu0 0.0
    %609 = vmatprep.subr.mxu0 0.0
    %610 = vmatpush1.msra.mxu0 0.0
    %611 = vmatprep.subr.mxu0 0.0
    %612 = vmatpush1.msra.mxu0 0.0
    %613 = vmatprep.subr.mxu0 0.0
    %614 = vmatpush1.msra.mxu0 0.0
    %615 = vmatprep.subr.mxu0 0.0
    %616 = vmatpush1.msra.mxu0 0.0
    %617 = vmatprep.subr.mxu0 0.0
    %618 = vmatpush1.msra.mxu0 0.0
    %619 = vmatprep.subr.mxu0 0.0
    %620 = vmatpush1.msra.mxu0 0.0
    %621 = vmatprep.mubr.f32.mxu0 0.0
    %622 = vmatmul.mubr.f32.gmra.mrb[0].mxu0 %v534
    %v623 = vpop.f32.mrb[0].mxu0
    %v624 = vadd.f32 0.0, %v623
    %v625 = vpop.f32.mrb[0].mxu0
    %626 = vmatprep.mubr.f32.mxu0 0.0
    %627 = vmatmul.mubr.f32.gmra.mrb[0].mxu0 %v537
    %v628 = vpop.f32.mrb[0].mxu0
    %v629 = vadd.f32 0.0, %v628
    %v630 = vpop.f32.mrb[0].mxu0
    %631 = vmatprep.mubr.f32.mxu0 0.0
    %632 = vmatmul.mubr.f32.gmra.mrb[0].mxu0 %v540
    %v633 = vpop.f32.mrb[0].mxu0
    %v634 = vadd.f32 0.0, %v633
    %v635 = vpop.f32.mrb[0].mxu0
    %636 = vmatprep.mubr.f32.mxu0 0.0
    %637 = vmatmul.mubr.f32.gmra.mrb[0].mxu0 %v543
    %v638 = vpop.f32.mrb[0].mxu0
    %v639 = vadd.f32 0.0, %v638
    %v640 = vpop.f32.mrb[0].mxu0
    %641 = vmatprep.mubr.f32.mxu0 0.0
    %642 = vmatmul.mubr.f32.gmra.mrb[0].mxu0 %v546
    %v643 = vpop.f32.mrb[0].mxu0
    %v644 = vadd.f32 0.0, %v643
    %v645 = vpop.f32.mrb[0].mxu0
    %646 = vmatprep.mubr.f32.mxu0 0.0
    %647 = vmatmul.mubr.f32.gmra.mrb[0].mxu0 %v549
    %v648 = vpop.f32.mrb[0].mxu0
    %v649 = vadd.f32 0.0, %v648
    %v650 = vpop.f32.mrb[0].mxu0
    %651 = vmatprep.mubr.f32.mxu0 0.0
    %652 = vmatmul.mubr.f32.gmra.mrb[0].mxu0 %v552
    %v653 = vpop.f32.mrb[0].mxu0
    %v654 = vadd.f32 0.0, %v653
    %v655 = vpop.f32.mrb[0].mxu0
    %656 = vmatprep.mubr.f32.mxu0 0.0
    %657 = vmatmul.mubr.f32.gmra.mrb[0].mxu0 %v555
    %v658 = vpop.f32.mrb[0].mxu0
    %v659 = vadd.f32 0.0, %v658
    %v660 = vpop.f32.mrb[0].mxu0
    %661 = vdwg.mxu0
    %v663 = vlaneseq
    %v664 = vshrl.u32 %v663, 7
    %v665 = vsub.s32 0, %v664
    %v666 = vrot.slane %v521, %v665
    %v668 = vadd.f32 %v666, %v624
    %v669 = vadd.f32 %v666, %v629
    %v670 = vadd.f32 %v666, %v634
    %v671 = vadd.f32 %v666, %v639
    %v672 = vadd.f32 %v666, %v644
    %v673 = vadd.f32 %v666, %v649
    %v674 = vadd.f32 %v666, %v654
    %v675 = vadd.f32 %v666, %v659
    %676 = vmatprep.subr.mxu0 0.0
    %677 = vmatpush1.msra.mxu0 %v522
    %678 = vmatprep.subr.mxu0 0.0
    %679 = vmatpush1.msra.mxu0 %v523
    %680 = vmatprep.subr.mxu0 0.0
    %681 = vmatpush1.msra.mxu0 %v524
    %682 = vmatprep.subr.mxu0 0.0
    %683 = vmatpush1.msra.mxu0 %v525
    %684 = vmatprep.subr.mxu0 0.0
    %685 = vmatpush1.msra.mxu0 0.0
    %686 = vmatprep.subr.mxu0 0.0
    %687 = vmatpush1.msra.mxu0 0.0
    %688 = vmatprep.subr.mxu0 0.0
    %689 = vmatpush1.msra.mxu0 0.0
    %690 = vmatprep.subr.mxu0 0.0
    %691 = vmatpush1.msra.mxu0 0.0
    %692 = vmatprep.subr.mxu0 0.0
    %693 = vmatpush1.msra.mxu0 0.0
    %694 = vmatprep.subr.mxu0 0.0
    %695 = vmatpush1.msra.mxu0 0.0
    %696 = vmatprep.subr.mxu0 0.0
    %697 = vmatpush1.msra.mxu0 0.0
    %698 = vmatprep.subr.mxu0 0.0
    %699 = vmatpush1.msra.mxu0 0.0
    %700 = vmatprep.subr.mxu0 0.0
    %701 = vmatpush1.msra.mxu0 0.0
    %702 = vmatprep.subr.mxu0 0.0
    %703 = vmatpush1.msra.mxu0 0.0
    %704 = vmatprep.subr.mxu0 0.0
    %705 = vmatpush1.msra.mxu0 0.0
    %706 = vmatprep.subr.mxu0 0.0
    %707 = vmatpush1.msra.mxu0 0.0
    %708 = vmatprep.subr.mxu0 0.0
    %709 = vmatpush1.msra.mxu0 0.0
    %710 = vmatprep.subr.mxu0 0.0
    %711 = vmatpush1.msra.mxu0 0.0
    %712 = vmatprep.subr.mxu0 0.0
    %713 = vmatpush1.msra.mxu0 0.0
    %714 = vmatprep.subr.mxu0 0.0
    %715 = vmatpush1.msra.mxu0 0.0
    %716 = vmatprep.subr.mxu0 0.0
    %717 = vmatpush1.msra.mxu0 0.0
    %718 = vmatprep.subr.mxu0 0.0
    %719 = vmatpush1.msra.mxu0 0.0
    %720 = vmatprep.subr.mxu0 0.0
    %721 = vmatpush1.msra.mxu0 0.0
    %722 = vmatprep.subr.mxu0 0.0
    %723 = vmatpush1.msra.mxu0 0.0
    %724 = vmatprep.subr.mxu0 0.0
    %725 = vmatpush1.msra.mxu0 0.0
    %726 = vmatprep.subr.mxu0 0.0
    %727 = vmatpush1.msra.mxu0 0.0
    %728 = vmatprep.subr.mxu0 0.0
    %729 = vmatpush1.msra.mxu0 0.0
    %730 = vmatprep.subr.mxu0 0.0
    %731 = vmatpush1.msra.mxu0 0.0
    %732 = vmatprep.subr.mxu0 0.0
    %733 = vmatpush1.msra.mxu0 0.0
    %734 = vmatprep.subr.mxu0 0.0
    %735 = vmatpush1.msra.mxu0 0.0
    %736 = vmatprep.subr.mxu0 0.0
    %737 = vmatpush1.msra.mxu0 0.0
    %738 = vmatprep.subr.mxu0 0.0
    %739 = vmatpush1.msra.mxu0 0.0
    %740 = vmatprep.mubr.f32.mxu0 0.0
    %741 = vmatmul.mubr.f32.gmra.mrb[0].mxu0 %v534
    %v742 = vpop.f32.mrb[0].mxu0
    %v743 = vadd.f32 0.0, %v742
    %v744 = vpop.f32.mrb[0].mxu0
    %745 = vmatprep.mubr.f32.mxu0 0.0
    %746 = vmatmul.mubr.f32.gmra.mrb[0].mxu0 %v537
    %v747 = vpop.f32.mrb[0].mxu0
    %v748 = vadd.f32 0.0, %v747
    %v749 = vpop.f32.mrb[0].mxu0
    %750 = vmatprep.mubr.f32.mxu0 0.0
    %751 = vmatmul.mubr.f32.gmra.mrb[0].mxu0 %v540
    %v752 = vpop.f32.mrb[0].mxu0
    %v753 = vadd.f32 0.0, %v752
    %v754 = vpop.f32.mrb[0].mxu0
    %755 = vmatprep.mubr.f32.mxu0 0.0
    %756 = vmatmul.mubr.f32.gmra.mrb[0].mxu0 %v543
    %v757 = vpop.f32.mrb[0].mxu0
    %v758 = vadd.f32 0.0, %v757
    %v759 = vpop.f32.mrb[0].mxu0
    %760 = vmatprep.mubr.f32.mxu0 0.0
    %761 = vmatmul.mubr.f32.gmra.mrb[0].mxu0 %v546
    %v762 = vpop.f32.mrb[0].mxu0
    %v763 = vadd.f32 0.0, %v762
    %v764 = vpop.f32.mrb[0].mxu0
    %765 = vmatprep.mubr.f32.mxu0 0.0
    %766 = vmatmul.mubr.f32.gmra.mrb[0].mxu0 %v549
    %v767 = vpop.f32.mrb[0].mxu0
    %v768 = vadd.f32 0.0, %v767
    %v769 = vpop.f32.mrb[0].mxu0
    %770 = vmatprep.mubr.f32.mxu0 0.0
    %771 = vmatmul.mubr.f32.gmra.mrb[0].mxu0 %v552
    %v772 = vpop.f32.mrb[0].mxu0
    %v773 = vadd.f32 0.0, %v772
    %v774 = vpop.f32.mrb[0].mxu0
    %775 = vmatprep.mubr.f32.mxu0 0.0
    %776 = vmatmul.mubr.f32.gmra.mrb[0].mxu0 %v555
    %v777 = vpop.f32.mrb[0].mxu0
    %v778 = vadd.f32 0.0, %v777
    %v779 = vpop.f32.mrb[0].mxu0
    %780 = vdwg.mxu0
    %v782 = vlaneseq
    %v783 = vshrl.u32 %v782, 7
    %v784 = vsub.s32 0, %v783
    %v785 = vrot.slane %v531, %v784
    %v787 = vadd.f32 %v785, %v743
    %v788 = vadd.f32 %v785, %v748
    %v789 = vadd.f32 %v785, %v753
    %v790 = vadd.f32 %v785, %v758
    %v791 = vadd.f32 %v785, %v763
    %v792 = vadd.f32 %v785, %v768
    %v793 = vadd.f32 %v785, %v773
    %v794 = vadd.f32 %v785, %v778
    %v796 = vsel %vm532, %v496, 0
    %v799 = vsel %vm532, %v497, 0
    %v802 = vsel %vm532, %v498, 0
    %v805 = vsel %vm532, %v499, 0
    %v808 = vsel %vm532, %v500, 0
    %v811 = vsel %vm532, %v501, 0
    %v814 = vsel %vm532, %v502, 0
    %v817 = vsel %vm532, %v503, 0
    %819 = vmatprep.subr.mxu0 0.0
    %820 = vmatpush1.msra.mxu0 %v516
    %821 = vmatprep.subr.mxu0 0.0
    %822 = vmatpush1.msra.mxu0 %v517
    %823 = vmatprep.subr.mxu0 0.0
    %824 = vmatpush1.msra.mxu0 %v518
    %825 = vmatprep.subr.mxu0 0.0
    %826 = vmatpush1.msra.mxu0 %v519
    %827 = vmatprep.subr.mxu0 0.0
    %828 = vmatpush1.msra.mxu0 0.0
    %829 = vmatprep.subr.mxu0 0.0
    %830 = vmatpush1.msra.mxu0 0.0
    %831 = vmatprep.subr.mxu0 0.0
    %832 = vmatpush1.msra.mxu0 0.0
    %833 = vmatprep.subr.mxu0 0.0
    %834 = vmatpush1.msra.mxu0 0.0
    %835 = vmatprep.subr.mxu0 0.0
    %836 = vmatpush1.msra.mxu0 0.0
    %837 = vmatprep.subr.mxu0 0.0
    %838 = vmatpush1.msra.mxu0 0.0
    %839 = vmatprep.subr.mxu0 0.0
    %840 = vmatpush1.msra.mxu0 0.0
    %841 = vmatprep.subr.mxu0 0.0
    %842 = vmatpush1.msra.mxu0 0.0
    %843 = vmatprep.subr.mxu0 0.0
    %844 = vmatpush1.msra.mxu0 0.0
    %845 = vmatprep.subr.mxu0 0.0
    %846 = vmatpush1.msra.mxu0 0.0
    %847 = vmatprep.subr.mxu0 0.0
    %848 = vmatpush1.msra.mxu0 0.0
    %849 = vmatprep.subr.mxu0 0.0
    %850 = vmatpush1.msra.mxu0 0.0
    %851 = vmatprep.subr.mxu0 0.0
    %852 = vmatpush1.msra.mxu0 0.0
    %853 = vmatprep.subr.mxu0 0.0
    %854 = vmatpush1.msra.mxu0 0.0
    %855 = vmatprep.subr.mxu0 0.0
    %856 = vmatpush1.msra.mxu0 0.0
    %857 = vmatprep.subr.mxu0 0.0
    %858 = vmatpush1.msra.mxu0 0.0
    %859 = vmatprep.subr.mxu0 0.0
    %860 = vmatpush1.msra.mxu0 0.0
    %861 = vmatprep.subr.mxu0 0.0
    %862 = vmatpush1.msra.mxu0 0.0
    %863 = vmatprep.subr.mxu0 0.0
    %864 = vmatpush1.msra.mxu0 0.0
    %865 = vmatprep.subr.mxu0 0.0
    %866 = vmatpush1.msra.mxu0 0.0
    %867 = vmatprep.subr.mxu0 0.0
    %868 = vmatpush1.msra.mxu0 0.0
    %869 = vmatprep.subr.mxu0 0.0
    %870 = vmatpush1.msra.mxu0 0.0
    %871 = vmatprep.subr.mxu0 0.0
    %872 = vmatpush1.msra.mxu0 0.0
    %873 = vmatprep.subr.mxu0 0.0
    %874 = vmatpush1.msra.mxu0 0.0
    %875 = vmatprep.subr.mxu0 0.0
    %876 = vmatpush1.msra.mxu0 0.0
    %877 = vmatprep.subr.mxu0 0.0
    %878 = vmatpush1.msra.mxu0 0.0
    %879 = vmatprep.subr.mxu0 0.0
    %880 = vmatpush1.msra.mxu0 0.0
    %881 = vmatprep.subr.mxu0 0.0
    %882 = vmatpush1.msra.mxu0 0.0
    %883 = vmatprep.mubr.f32.mxu0 0.0
    %884 = vmatmul.mubr.f32.gmra.mrb[0].mxu0 %v796
    %v885 = vpop.f32.mrb[0].mxu0
    %v886 = vadd.f32 0.0, %v885
    %v887 = vpop.f32.mrb[0].mxu0
    %888 = vmatprep.mubr.f32.mxu0 0.0
    %889 = vmatmul.mubr.f32.gmra.mrb[0].mxu0 %v799
    %v890 = vpop.f32.mrb[0].mxu0
    %v891 = vadd.f32 0.0, %v890
    %v892 = vpop.f32.mrb[0].mxu0
    %893 = vmatprep.mubr.f32.mxu0 0.0
    %894 = vmatmul.mubr.f32.gmra.mrb[0].mxu0 %v802
    %v895 = vpop.f32.mrb[0].mxu0
    %v896 = vadd.f32 0.0, %v895
    %v897 = vpop.f32.mrb[0].mxu0
    %898 = vmatprep.mubr.f32.mxu0 0.0
    %899 = vmatmul.mubr.f32.gmra.mrb[0].mxu0 %v805
    %v900 = vpop.f32.mrb[0].mxu0
    %v901 = vadd.f32 0.0, %v900
    %v902 = vpop.f32.mrb[0].mxu0
    %903 = vmatprep.mubr.f32.mxu0 0.0
    %904 = vmatmul.mubr.f32.gmra.mrb[0].mxu0 %v808
    %v905 = vpop.f32.mrb[0].mxu0
    %v906 = vadd.f32 0.0, %v905
    %v907 = vpop.f32.mrb[0].mxu0
    %908 = vmatprep.mubr.f32.mxu0 0.0
    %909 = vmatmul.mubr.f32.gmra.mrb[0].mxu0 %v811
    %v910 = vpop.f32.mrb[0].mxu0
    %v911 = vadd.f32 0.0, %v910
    %v912 = vpop.f32.mrb[0].mxu0
    %913 = vmatprep.mubr.f32.mxu0 0.0
    %914 = vmatmul.mubr.f32.gmra.mrb[0].mxu0 %v814
    %v915 = vpop.f32.mrb[0].mxu0
    %v916 = vadd.f32 0.0, %v915
    %v917 = vpop.f32.mrb[0].mxu0
    %918 = vmatprep.mubr.f32.mxu0 0.0
    %919 = vmatmul.mubr.f32.gmra.mrb[0].mxu0 %v817
    %v920 = vpop.f32.mrb[0].mxu0
    %v921 = vadd.f32 0.0, %v920
    %v922 = vpop.f32.mrb[0].mxu0
    %923 = vdwg.mxu0
    %v924 = vadd.f32 %v668, %v886
    %v925 = vadd.f32 %v669, %v891
    %v926 = vadd.f32 %v670, %v896
    %v927 = vadd.f32 %v671, %v901
    %v928 = vadd.f32 %v672, %v906
    %v929 = vadd.f32 %v673, %v911
    %v930 = vadd.f32 %v674, %v916
    %v931 = vadd.f32 %v675, %v921
    %932 = vmatprep.subr.mxu0 0.0
    %933 = vmatpush1.msra.mxu0 %v526
    %934 = vmatprep.subr.mxu0 0.0
    %935 = vmatpush1.msra.mxu0 %v527
    %936 = vmatprep.subr.mxu0 0.0
    %937 = vmatpush1.msra.mxu0 %v528
    %938 = vmatprep.subr.mxu0 0.0
    %939 = vmatpush1.msra.mxu0 %v529
    %940 = vmatprep.subr.mxu0 0.0
    %941 = vmatpush1.msra.mxu0 0.0
    %942 = vmatprep.subr.mxu0 0.0
    %943 = vmatpush1.msra.mxu0 0.0
    %944 = vmatprep.subr.mxu0 0.0
    %945 = vmatpush1.msra.mxu0 0.0
    %946 = vmatprep.subr.mxu0 0.0
    %947 = vmatpush1.msra.mxu0 0.0
    %948 = vmatprep.subr.mxu0 0.0
    %949 = vmatpush1.msra.mxu0 0.0
    %950 = vmatprep.subr.mxu0 0.0
    %951 = vmatpush1.msra.mxu0 0.0
    %952 = vmatprep.subr.mxu0 0.0
    %953 = vmatpush1.msra.mxu0 0.0
    %954 = vmatprep.subr.mxu0 0.0
    %955 = vmatpush1.msra.mxu0 0.0
    %956 = vmatprep.subr.mxu0 0.0
    %957 = vmatpush1.msra.mxu0 0.0
    %958 = vmatprep.subr.mxu0 0.0
    %959 = vmatpush1.msra.mxu0 0.0
    %960 = vmatprep.subr.mxu0 0.0
    %961 = vmatpush1.msra.mxu0 0.0
    %962 = vmatprep.subr.mxu0 0.0
    %963 = vmatpush1.msra.mxu0 0.0
    %964 = vmatprep.subr.mxu0 0.0
    %965 = vmatpush1.msra.mxu0 0.0
    %966 = vmatprep.subr.mxu0 0.0
    %967 = vmatpush1.msra.mxu0 0.0
    %968 = vmatprep.subr.mxu0 0.0
    %969 = vmatpush1.msra.mxu0 0.0
    %970 = vmatprep.subr.mxu0 0.0
    %971 = vmatpush1.msra.mxu0 0.0
    %972 = vmatprep.subr.mxu0 0.0
    %973 = vmatpush1.msra.mxu0 0.0
    %974 = vmatprep.subr.mxu0 0.0
    %975 = vmatpush1.msra.mxu0 0.0
    %976 = vmatprep.subr.mxu0 0.0
    %977 = vmatpush1.msra.mxu0 0.0
    %978 = vmatprep.subr.mxu0 0.0
    %979 = vmatpush1.msra.mxu0 0.0
    %980 = vmatprep.subr.mxu0 0.0
    %981 = vmatpush1.msra.mxu0 0.0
    %982 = vmatprep.subr.mxu0 0.0
    %983 = vmatpush1.msra.mxu0 0.0
    %984 = vmatprep.subr.mxu0 0.0
    %985 = vmatpush1.msra.mxu0 0.0
    %986 = vmatprep.subr.mxu0 0.0
    %987 = vmatpush1.msra.mxu0 0.0
    %988 = vmatprep.subr.mxu0 0.0
    %989 = vmatpush1.msra.mxu0 0.0
    %990 = vmatprep.subr.mxu0 0.0
    %991 = vmatpush1.msra.mxu0 0.0
    %992 = vmatprep.subr.mxu0 0.0
    %993 = vmatpush1.msra.mxu0 0.0
    %994 = vmatprep.subr.mxu0 0.0
    %995 = vmatpush1.msra.mxu0 0.0
    %996 = vmatprep.mubr.f32.mxu0 0.0
    %997 = vmatmul.mubr.f32.gmra.mrb[0].mxu0 %v796
    %v998 = vpop.f32.mrb[0].mxu0
    %v999 = vadd.f32 0.0, %v998
    %v1000 = vpop.f32.mrb[0].mxu0
    %1001 = vmatprep.mubr.f32.mxu0 0.0
    %1002 = vmatmul.mubr.f32.gmra.mrb[0].mxu0 %v799
    %v1003 = vpop.f32.mrb[0].mxu0
    %v1004 = vadd.f32 0.0, %v1003
    %v1005 = vpop.f32.mrb[0].mxu0
    %1006 = vmatprep.mubr.f32.mxu0 0.0
    %1007 = vmatmul.mubr.f32.gmra.mrb[0].mxu0 %v802
    %v1008 = vpop.f32.mrb[0].mxu0
    %v1009 = vadd.f32 0.0, %v1008
    %v1010 = vpop.f32.mrb[0].mxu0
    %1011 = vmatprep.mubr.f32.mxu0 0.0
    %1012 = vmatmul.mubr.f32.gmra.mrb[0].mxu0 %v805
    %v1013 = vpop.f32.mrb[0].mxu0
    %v1014 = vadd.f32 0.0, %v1013
    %v1015 = vpop.f32.mrb[0].mxu0
    %1016 = vmatprep.mubr.f32.mxu0 0.0
    %1017 = vmatmul.mubr.f32.gmra.mrb[0].mxu0 %v808
    %v1018 = vpop.f32.mrb[0].mxu0
    %v1019 = vadd.f32 0.0, %v1018
    %v1020 = vpop.f32.mrb[0].mxu0
    %1021 = vmatprep.mubr.f32.mxu0 0.0
    %1022 = vmatmul.mubr.f32.gmra.mrb[0].mxu0 %v811
    %v1023 = vpop.f32.mrb[0].mxu0
    %v1024 = vadd.f32 0.0, %v1023
    %v1025 = vpop.f32.mrb[0].mxu0
    %1026 = vmatprep.mubr.f32.mxu0 0.0
    %1027 = vmatmul.mubr.f32.gmra.mrb[0].mxu0 %v814
    %v1028 = vpop.f32.mrb[0].mxu0
    %v1029 = vadd.f32 0.0, %v1028
    %v1030 = vpop.f32.mrb[0].mxu0
    %1031 = vmatprep.mubr.f32.mxu0 0.0
    %1032 = vmatmul.mubr.f32.gmra.mrb[0].mxu0 %v817
    %v1033 = vpop.f32.mrb[0].mxu0
    %v1034 = vadd.f32 0.0, %v1033
    %v1035 = vpop.f32.mrb[0].mxu0
    %1036 = vdwg.mxu0
    %v1037 = vadd.f32 %v787, %v999
    %v1038 = vadd.f32 %v788, %v1004
    %v1039 = vadd.f32 %v789, %v1009
    %v1040 = vadd.f32 %v790, %v1014
    %v1041 = vadd.f32 %v791, %v1019
    %v1042 = vadd.f32 %v792, %v1024
    %v1043 = vadd.f32 %v793, %v1029
    %v1044 = vadd.f32 %v794, %v1034
    %vm1045 = vcmask 23552
    %v1047 = vsel %vm1045, %v504, 0
    %v1050 = vsel %vm1045, %v505, 0
    %v1053 = vsel %vm1045, %v506, 0
    %v1056 = vsel %vm1045, %v507, 0
    %v1059 = vsel %vm1045, %v508, 0
    %v1062 = vsel %vm1045, %v509, 0
    %v1065 = vsel %vm1045, %v510, 0
    %v1068 = vsel %vm1045, %v511, 0
    %vm1070 = vcmask 1042432
    %v1072 = vsel %vm1070, %v520, 0
    %1074 = vmatprep.subr.mxu0 0.0
    %1075 = vmatpush1.msra.mxu0 %v1072
    %1076 = vmatprep.subr.mxu0 0.0
    %1077 = vmatpush1.msra.mxu0 0.0
    %1078 = vmatprep.subr.mxu0 0.0
    %1079 = vmatpush1.msra.mxu0 0.0
    %1080 = vmatprep.subr.mxu0 0.0
    %1081 = vmatpush1.msra.mxu0 0.0
    %1082 = vmatprep.subr.mxu0 0.0
    %1083 = vmatpush1.msra.mxu0 0.0
    %1084 = vmatprep.subr.mxu0 0.0
    %1085 = vmatpush1.msra.mxu0 0.0
    %1086 = vmatprep.subr.mxu0 0.0
    %1087 = vmatpush1.msra.mxu0 0.0
    %1088 = vmatprep.subr.mxu0 0.0
    %1089 = vmatpush1.msra.mxu0 0.0
    %1090 = vmatprep.subr.mxu0 0.0
    %1091 = vmatpush1.msra.mxu0 0.0
    %1092 = vmatprep.subr.mxu0 0.0
    %1093 = vmatpush1.msra.mxu0 0.0
    %1094 = vmatprep.subr.mxu0 0.0
    %1095 = vmatpush1.msra.mxu0 0.0
    %1096 = vmatprep.subr.mxu0 0.0
    %1097 = vmatpush1.msra.mxu0 0.0
    %1098 = vmatprep.subr.mxu0 0.0
    %1099 = vmatpush1.msra.mxu0 0.0
    %1100 = vmatprep.subr.mxu0 0.0
    %1101 = vmatpush1.msra.mxu0 0.0
    %1102 = vmatprep.subr.mxu0 0.0
    %1103 = vmatpush1.msra.mxu0 0.0
    %1104 = vmatprep.subr.mxu0 0.0
    %1105 = vmatpush1.msra.mxu0 0.0
    %1106 = vmatprep.subr.mxu0 0.0
    %1107 = vmatpush1.msra.mxu0 0.0
    %1108 = vmatprep.subr.mxu0 0.0
    %1109 = vmatpush1.msra.mxu0 0.0
    %1110 = vmatprep.subr.mxu0 0.0
    %1111 = vmatpush1.msra.mxu0 0.0
    %1112 = vmatprep.subr.mxu0 0.0
    %1113 = vmatpush1.msra.mxu0 0.0
    %1114 = vmatprep.subr.mxu0 0.0
    %1115 = vmatpush1.msra.mxu0 0.0
    %1116 = vmatprep.subr.mxu0 0.0
    %1117 = vmatpush1.msra.mxu0 0.0
    %1118 = vmatprep.subr.mxu0 0.0
    %1119 = vmatpush1.msra.mxu0 0.0
    %1120 = vmatprep.subr.mxu0 0.0
    %1121 = vmatpush1.msra.mxu0 0.0
    %1122 = vmatprep.subr.mxu0 0.0
    %1123 = vmatpush1.msra.mxu0 0.0
    %1124 = vmatprep.subr.mxu0 0.0
    %1125 = vmatpush1.msra.mxu0 0.0
    %1126 = vmatprep.subr.mxu0 0.0
    %1127 = vmatpush1.msra.mxu0 0.0
    %1128 = vmatprep.subr.mxu0 0.0
    %1129 = vmatpush1.msra.mxu0 0.0
    %1130 = vmatprep.subr.mxu0 0.0
    %1131 = vmatpush1.msra.mxu0 0.0
    %1132 = vmatprep.subr.mxu0 0.0
    %1133 = vmatpush1.msra.mxu0 0.0
    %1134 = vmatprep.subr.mxu0 0.0
    %1135 = vmatpush1.msra.mxu0 0.0
    %1136 = vmatprep.subr.mxu0 0.0
    %1137 = vmatpush1.msra.mxu0 0.0
    %1138 = vmatprep.mubr.f32.mxu0 0.0
    %1139 = vmatmul.mubr.f32.gmra.mrb[0].mxu0 %v1047
    %v1140 = vpop.f32.mrb[0].mxu0
    %v1141 = vadd.f32 0.0, %v1140
    %v1142 = vpop.f32.mrb[0].mxu0
    %1143 = vmatprep.mubr.f32.mxu0 0.0
    %1144 = vmatmul.mubr.f32.gmra.mrb[0].mxu0 %v1050
    %v1145 = vpop.f32.mrb[0].mxu0
    %v1146 = vadd.f32 0.0, %v1145
    %v1147 = vpop.f32.mrb[0].mxu0
    %1148 = vmatprep.mubr.f32.mxu0 0.0
    %1149 = vmatmul.mubr.f32.gmra.mrb[0].mxu0 %v1053
    %v1150 = vpop.f32.mrb[0].mxu0
    %v1151 = vadd.f32 0.0, %v1150
    %v1152 = vpop.f32.mrb[0].mxu0
    %1153 = vmatprep.mubr.f32.mxu0 0.0
    %1154 = vmatmul.mubr.f32.gmra.mrb[0].mxu0 %v1056
    %v1155 = vpop.f32.mrb[0].mxu0
    %v1156 = vadd.f32 0.0, %v1155
    %v1157 = vpop.f32.mrb[0].mxu0
    %1158 = vmatprep.mubr.f32.mxu0 0.0
    %1159 = vmatmul.mubr.f32.gmra.mrb[0].mxu0 %v1059
    %v1160 = vpop.f32.mrb[0].mxu0
    %v1161 = vadd.f32 0.0, %v1160
    %v1162 = vpop.f32.mrb[0].mxu0
    %1163 = vmatprep.mubr.f32.mxu0 0.0
    %1164 = vmatmul.mubr.f32.gmra.mrb[0].mxu0 %v1062
    %v1165 = vpop.f32.mrb[0].mxu0
    %v1166 = vadd.f32 0.0, %v1165
    %v1167 = vpop.f32.mrb[0].mxu0
    %1168 = vmatprep.mubr.f32.mxu0 0.0
    %1169 = vmatmul.mubr.f32.gmra.mrb[0].mxu0 %v1065
    %v1170 = vpop.f32.mrb[0].mxu0
    %v1171 = vadd.f32 0.0, %v1170
    %v1172 = vpop.f32.mrb[0].mxu0
    %1173 = vmatprep.mubr.f32.mxu0 0.0
    %1174 = vmatmul.mubr.f32.gmra.mrb[0].mxu0 %v1068
    %v1175 = vpop.f32.mrb[0].mxu0
    %v1176 = vadd.f32 0.0, %v1175
    %v1177 = vpop.f32.mrb[0].mxu0
    %1178 = vdwg.mxu0
    %v1179 = vadd.f32 %v924, %v1141
    %v1180 = vadd.f32 %v925, %v1146
    %v1181 = vadd.f32 %v926, %v1151
    %v1182 = vadd.f32 %v927, %v1156
    %v1183 = vadd.f32 %v928, %v1161
    %v1184 = vadd.f32 %v929, %v1166
    %v1185 = vadd.f32 %v930, %v1171
    %v1186 = vadd.f32 %v931, %v1176
    %v1188 = vsel %vm1070, %v530, 0
    %1190 = vmatprep.subr.mxu0 0.0
    %1191 = vmatpush1.msra.mxu0 %v1188
    %1192 = vmatprep.subr.mxu0 0.0
    %1193 = vmatpush1.msra.mxu0 0.0
    %1194 = vmatprep.subr.mxu0 0.0
    %1195 = vmatpush1.msra.mxu0 0.0
    %1196 = vmatprep.subr.mxu0 0.0
    %1197 = vmatpush1.msra.mxu0 0.0
    %1198 = vmatprep.subr.mxu0 0.0
    %1199 = vmatpush1.msra.mxu0 0.0
    %1200 = vmatprep.subr.mxu0 0.0
    %1201 = vmatpush1.msra.mxu0 0.0
    %1202 = vmatprep.subr.mxu0 0.0
    %1203 = vmatpush1.msra.mxu0 0.0
    %1204 = vmatprep.subr.mxu0 0.0
    %1205 = vmatpush1.msra.mxu0 0.0
    %1206 = vmatprep.subr.mxu0 0.0
    %1207 = vmatpush1.msra.mxu0 0.0
    %1208 = vmatprep.subr.mxu0 0.0
    %1209 = vmatpush1.msra.mxu0 0.0
    %1210 = vmatprep.subr.mxu0 0.0
    %1211 = vmatpush1.msra.mxu0 0.0
    %1212 = vmatprep.subr.mxu0 0.0
    %1213 = vmatpush1.msra.mxu0 0.0
    %1214 = vmatprep.subr.mxu0 0.0
    %1215 = vmatpush1.msra.mxu0 0.0
    %1216 = vmatprep.subr.mxu0 0.0
    %1217 = vmatpush1.msra.mxu0 0.0
    %1218 = vmatprep.subr.mxu0 0.0
    %1219 = vmatpush1.msra.mxu0 0.0
    %1220 = vmatprep.subr.mxu0 0.0
    %1221 = vmatpush1.msra.mxu0 0.0
    %1222 = vmatprep.subr.mxu0 0.0
    %1223 = vmatpush1.msra.mxu0 0.0
    %1224 = vmatprep.subr.mxu0 0.0
    %1225 = vmatpush1.msra.mxu0 0.0
    %1226 = vmatprep.subr.mxu0 0.0
    %1227 = vmatpush1.msra.mxu0 0.0
    %1228 = vmatprep.subr.mxu0 0.0
    %1229 = vmatpush1.msra.mxu0 0.0
    %1230 = vmatprep.subr.mxu0 0.0
    %1231 = vmatpush1.msra.mxu0 0.0
    %1232 = vmatprep.subr.mxu0 0.0
    %1233 = vmatpush1.msra.mxu0 0.0
    %1234 = vmatprep.subr.mxu0 0.0
    %1235 = vmatpush1.msra.mxu0 0.0
    %1236 = vmatprep.subr.mxu0 0.0
    %1237 = vmatpush1.msra.mxu0 0.0
    %1238 = vmatprep.subr.mxu0 0.0
    %1239 = vmatpush1.msra.mxu0 0.0
    %1240 = vmatprep.subr.mxu0 0.0
    %1241 = vmatpush1.msra.mxu0 0.0
    %1242 = vmatprep.subr.mxu0 0.0
    %1243 = vmatpush1.msra.mxu0 0.0
    %1244 = vmatprep.subr.mxu0 0.0
    %1245 = vmatpush1.msra.mxu0 0.0
    %1246 = vmatprep.subr.mxu0 0.0
    %1247 = vmatpush1.msra.mxu0 0.0
    %1248 = vmatprep.subr.mxu0 0.0
    %1249 = vmatpush1.msra.mxu0 0.0
    %1250 = vmatprep.subr.mxu0 0.0
    %1251 = vmatpush1.msra.mxu0 0.0
    %1252 = vmatprep.subr.mxu0 0.0
    %1253 = vmatpush1.msra.mxu0 0.0
    %1254 = vmatprep.mubr.f32.mxu0 0.0
    %1255 = vmatmul.mubr.f32.gmra.mrb[0].mxu0 %v1047
    %v1256 = vpop.f32.mrb[0].mxu0
    %v1257 = vadd.f32 0.0, %v1256
    %v1258 = vpop.f32.mrb[0].mxu0
    %1259 = vmatprep.mubr.f32.mxu0 0.0
    %1260 = vmatmul.mubr.f32.gmra.mrb[0].mxu0 %v1050
    %v1261 = vpop.f32.mrb[0].mxu0
    %v1262 = vadd.f32 0.0, %v1261
    %v1263 = vpop.f32.mrb[0].mxu0
    %1264 = vmatprep.mubr.f32.mxu0 0.0
    %1265 = vmatmul.mubr.f32.gmra.mrb[0].mxu0 %v1053
    %v1266 = vpop.f32.mrb[0].mxu0
    %v1267 = vadd.f32 0.0, %v1266
    %v1268 = vpop.f32.mrb[0].mxu0
    %1269 = vmatprep.mubr.f32.mxu0 0.0
    %1270 = vmatmul.mubr.f32.gmra.mrb[0].mxu0 %v1056
    %v1271 = vpop.f32.mrb[0].mxu0
    %v1272 = vadd.f32 0.0, %v1271
    %v1273 = vpop.f32.mrb[0].mxu0
    %1274 = vmatprep.mubr.f32.mxu0 0.0
    %1275 = vmatmul.mubr.f32.gmra.mrb[0].mxu0 %v1059
    %v1276 = vpop.f32.mrb[0].mxu0
    %v1277 = vadd.f32 0.0, %v1276
    %v1278 = vpop.f32.mrb[0].mxu0
    %1279 = vmatprep.mubr.f32.mxu0 0.0
    %1280 = vmatmul.mubr.f32.gmra.mrb[0].mxu0 %v1062
    %v1281 = vpop.f32.mrb[0].mxu0
    %v1282 = vadd.f32 0.0, %v1281
    %v1283 = vpop.f32.mrb[0].mxu0
    %1284 = vmatprep.mubr.f32.mxu0 0.0
    %1285 = vmatmul.mubr.f32.gmra.mrb[0].mxu0 %v1065
    %v1286 = vpop.f32.mrb[0].mxu0
    %v1287 = vadd.f32 0.0, %v1286
    %v1288 = vpop.f32.mrb[0].mxu0
    %1289 = vmatprep.mubr.f32.mxu0 0.0
    %1290 = vmatmul.mubr.f32.gmra.mrb[0].mxu0 %v1068
    %v1291 = vpop.f32.mrb[0].mxu0
    %v1292 = vadd.f32 0.0, %v1291
    %v1293 = vpop.f32.mrb[0].mxu0
    %1294 = vdwg.mxu0
    %v1295 = vadd.f32 %v1037, %v1257
    %v1296 = vadd.f32 %v1038, %v1262
    %v1297 = vadd.f32 %v1039, %v1267
    %v1298 = vadd.f32 %v1040, %v1272
    %v1299 = vadd.f32 %v1041, %v1277
    %v1300 = vadd.f32 %v1042, %v1282
    %v1301 = vadd.f32 %v1043, %v1287
    %v1302 = vadd.f32 %v1044, %v1292
    %vm1303 = vcmask 523264
    %v1305 = vsel %vm1303, %v172, 0
    %v1308 = vsel %vm1303, %v173, 0
    %v1311 = vsel %vm1303, %v174, 0
    %v1314 = vsel %vm1303, %v175, 0
    %v1317 = vsel %vm1303, %v176, 0
    %v1320 = vsel %vm1303, %v177, 0
    %v1323 = vsel %vm1303, %v178, 0
    %v1326 = vsel %vm1303, %v179, 0
    %1328 = vmatprep.subr.mxu0 0.0
    %1329 = vmatpush1.msra.mxu0 %v1295
    %1330 = vmatprep.subr.mxu0 0.0
    %1331 = vmatpush1.msra.mxu0 %v1296
    %1332 = vmatprep.subr.mxu0 0.0
    %1333 = vmatpush1.msra.mxu0 %v1297
    %1334 = vmatprep.subr.mxu0 0.0
    %1335 = vmatpush1.msra.mxu0 %v1298
    %1336 = vmatprep.subr.mxu0 0.0
    %1337 = vmatpush1.msra.mxu0 %v1299
    %1338 = vmatprep.subr.mxu0 0.0
    %1339 = vmatpush1.msra.mxu0 %v1300
    %1340 = vmatprep.subr.mxu0 0.0
    %1341 = vmatpush1.msra.mxu0 %v1301
    %1342 = vmatprep.subr.mxu0 0.0
    %1343 = vmatpush1.msra.mxu0 %v1302
    %1344 = vmatprep.subr.mxu0 0.0
    %1345 = vmatpush1.msra.mxu0 0.0
    %1346 = vmatprep.subr.mxu0 0.0
    %1347 = vmatpush1.msra.mxu0 0.0
    %1348 = vmatprep.subr.mxu0 0.0
    %1349 = vmatpush1.msra.mxu0 0.0
    %1350 = vmatprep.subr.mxu0 0.0
    %1351 = vmatpush1.msra.mxu0 0.0
    %1352 = vmatprep.subr.mxu0 0.0
    %1353 = vmatpush1.msra.mxu0 0.0
    %1354 = vmatprep.subr.mxu0 0.0
    %1355 = vmatpush1.msra.mxu0 0.0
    %1356 = vmatprep.subr.mxu0 0.0
    %1357 = vmatpush1.msra.mxu0 0.0
    %1358 = vmatprep.subr.mxu0 0.0
    %1359 = vmatpush1.msra.mxu0 0.0
    %1360 = vmatprep.subr.mxu0 0.0
    %1361 = vmatpush1.msra.mxu0 0.0
    %1362 = vmatprep.subr.mxu0 0.0
    %1363 = vmatpush1.msra.mxu0 0.0
    %1364 = vmatprep.subr.mxu0 0.0
    %1365 = vmatpush1.msra.mxu0 0.0
    %1366 = vmatprep.subr.mxu0 0.0
    %1367 = vmatpush1.msra.mxu0 0.0
    %1368 = vmatprep.subr.mxu0 0.0
    %1369 = vmatpush1.msra.mxu0 0.0
    %1370 = vmatprep.subr.mxu0 0.0
    %1371 = vmatpush1.msra.mxu0 0.0
    %1372 = vmatprep.subr.mxu0 0.0
    %1373 = vmatpush1.msra.mxu0 0.0
    %1374 = vmatprep.subr.mxu0 0.0
    %1375 = vmatpush1.msra.mxu0 0.0
    %1376 = vmatprep.subr.mxu0 0.0
    %1377 = vmatpush1.msra.mxu0 0.0
    %1378 = vmatprep.subr.mxu0 0.0
    %1379 = vmatpush1.msra.mxu0 0.0
    %1380 = vmatprep.subr.mxu0 0.0
    %1381 = vmatpush1.msra.mxu0 0.0
    %1382 = vmatprep.subr.mxu0 0.0
    %1383 = vmatpush1.msra.mxu0 0.0
    %1384 = vmatprep.subr.mxu0 0.0
    %1385 = vmatpush1.msra.mxu0 0.0
    %1386 = vmatprep.subr.mxu0 0.0
    %1387 = vmatpush1.msra.mxu0 0.0
    %1388 = vmatprep.subr.mxu0 0.0
    %1389 = vmatpush1.msra.mxu0 0.0
    %1390 = vmatprep.subr.mxu0 0.0
    %1391 = vmatpush1.msra.mxu0 0.0
    %1392 = vmatprep.mubr.f32.mxu0 0.0
    %1393 = vmatmul.mubr.f32.gmra.mrb[0].mxu0 %v1305
    %v1394 = vpop.f32.mrb[0].mxu0
    %v1395 = vadd.f32 0.0, %v1394
    %v1396 = vpop.f32.mrb[0].mxu0
    %1397 = vmatprep.mubr.f32.mxu0 0.0
    %1398 = vmatmul.mubr.f32.gmra.mrb[0].mxu0 %v1308
    %v1399 = vpop.f32.mrb[0].mxu0
    %v1400 = vadd.f32 0.0, %v1399
    %v1401 = vpop.f32.mrb[0].mxu0
    %1402 = vmatprep.mubr.f32.mxu0 0.0
    %1403 = vmatmul.mubr.f32.gmra.mrb[0].mxu0 %v1311
    %v1404 = vpop.f32.mrb[0].mxu0
    %v1405 = vadd.f32 0.0, %v1404
    %v1406 = vpop.f32.mrb[0].mxu0
    %1407 = vmatprep.mubr.f32.mxu0 0.0
    %1408 = vmatmul.mubr.f32.gmra.mrb[0].mxu0 %v1314
    %v1409 = vpop.f32.mrb[0].mxu0
    %v1410 = vadd.f32 0.0, %v1409
    %v1411 = vpop.f32.mrb[0].mxu0
    %1412 = vmatprep.mubr.f32.mxu0 0.0
    %1413 = vmatmul.mubr.f32.gmra.mrb[0].mxu0 %v1317
    %v1414 = vpop.f32.mrb[0].mxu0
    %v1415 = vadd.f32 0.0, %v1414
    %v1416 = vpop.f32.mrb[0].mxu0
    %1417 = vmatprep.mubr.f32.mxu0 0.0
    %1418 = vmatmul.mubr.f32.gmra.mrb[0].mxu0 %v1320
    %v1419 = vpop.f32.mrb[0].mxu0
    %v1420 = vadd.f32 0.0, %v1419
    %v1421 = vpop.f32.mrb[0].mxu0
    %1422 = vmatprep.mubr.f32.mxu0 0.0
    %1423 = vmatmul.mubr.f32.gmra.mrb[0].mxu0 %v1323
    %v1424 = vpop.f32.mrb[0].mxu0
    %v1425 = vadd.f32 0.0, %v1424
    %v1426 = vpop.f32.mrb[0].mxu0
    %1427 = vmatprep.mubr.f32.mxu0 0.0
    %1428 = vmatmul.mubr.f32.gmra.mrb[0].mxu0 %v1326
    %v1429 = vpop.f32.mrb[0].mxu0
    %v1430 = vadd.f32 0.0, %v1429
    %v1431 = vpop.f32.mrb[0].mxu0
    %1432 = vdwg.mxu0
    %v1433 = vadd.f32 %v1179, %v1395
    %v1434 = vadd.f32 %v1180, %v1400
    %v1435 = vadd.f32 %v1181, %v1405
    %v1436 = vadd.f32 %v1182, %v1410
    %v1437 = vadd.f32 %v1183, %v1415
    %v1438 = vadd.f32 %v1184, %v1420
    %v1439 = vadd.f32 %v1185, %v1425
    %v1440 = vadd.f32 %v1186, %v1430
    %v1441 = vld [vmem:[%s31] sm:$0xff]
    %v1442 = vld [vmem:[%s31 + $0x8] sm:$0xff]
    %v1443 = vld [vmem:[%s31 + $0x10] sm:$0xff]
    %v1444 = vld [vmem:[%s31 + $0x18] sm:$0xff]
    %v1445 = vld [vmem:[%s33] sm:$0x1]
    %v1446 = vld [vmem:[%s35] sm:$0xff]
    %v1447 = vld [vmem:[%s35 + $0x8] sm:$0xff]
    %v1448 = vld [vmem:[%s35 + $0x10] sm:$0xff]
    %v1449 = vld [vmem:[%s35 + $0x18] sm:$0xff]
    %v1450 = vld [vmem:[%s37] sm:$0x1]
    %v1451 = vmax.f32 %v1433, 0.0
    %v1452 = vmax.f32 %v1434, 0.0
    %v1453 = vmax.f32 %v1435, 0.0
    %v1454 = vmax.f32 %v1436, 0.0
    %v1455 = vmax.f32 %v1437, 0.0
    %v1456 = vmax.f32 %v1438, 0.0
    %v1457 = vmax.f32 %v1439, 0.0
    %v1458 = vmax.f32 %v1440, 0.0
    %v1460 = vsel %vm532, %v1451, 0
    %v1463 = vsel %vm532, %v1452, 0
    %v1466 = vsel %vm532, %v1453, 0
    %v1469 = vsel %vm532, %v1454, 0
    %v1472 = vsel %vm532, %v1455, 0
    %v1475 = vsel %vm532, %v1456, 0
    %v1478 = vsel %vm532, %v1457, 0
    %v1481 = vsel %vm532, %v1458, 0
    %1483 = vmatprep.subr.mxu0 0.0
    %1484 = vmatpush1.msra.mxu0 %v1441
    %1485 = vmatprep.subr.mxu0 0.0
    %1486 = vmatpush1.msra.mxu0 %v1442
    %1487 = vmatprep.subr.mxu0 0.0
    %1488 = vmatpush1.msra.mxu0 %v1443
    %1489 = vmatprep.subr.mxu0 0.0
    %1490 = vmatpush1.msra.mxu0 %v1444
    %1491 = vmatprep.subr.mxu0 0.0
    %1492 = vmatpush1.msra.mxu0 0.0
    %1493 = vmatprep.subr.mxu0 0.0
    %1494 = vmatpush1.msra.mxu0 0.0
    %1495 = vmatprep.subr.mxu0 0.0
    %1496 = vmatpush1.msra.mxu0 0.0
    %1497 = vmatprep.subr.mxu0 0.0
    %1498 = vmatpush1.msra.mxu0 0.0
    %1499 = vmatprep.subr.mxu0 0.0
    %1500 = vmatpush1.msra.mxu0 0.0
    %1501 = vmatprep.subr.mxu0 0.0
    %1502 = vmatpush1.msra.mxu0 0.0
    %1503 = vmatprep.subr.mxu0 0.0
    %1504 = vmatpush1.msra.mxu0 0.0
    %1505 = vmatprep.subr.mxu0 0.0
    %1506 = vmatpush1.msra.mxu0 0.0
    %1507 = vmatprep.subr.mxu0 0.0
    %1508 = vmatpush1.msra.mxu0 0.0
    %1509 = vmatprep.subr.mxu0 0.0
    %1510 = vmatpush1.msra.mxu0 0.0
    %1511 = vmatprep.subr.mxu0 0.0
    %1512 = vmatpush1.msra.mxu0 0.0
    %1513 = vmatprep.subr.mxu0 0.0
    %1514 = vmatpush1.msra.mxu0 0.0
    %1515 = vmatprep.subr.mxu0 0.0
    %1516 = vmatpush1.msra.mxu0 0.0
    %1517 = vmatprep.subr.mxu0 0.0
    %1518 = vmatpush1.msra.mxu0 0.0
    %1519 = vmatprep.subr.mxu0 0.0
    %1520 = vmatpush1.msra.mxu0 0.0
    %1521 = vmatprep.subr.mxu0 0.0
    %1522 = vmatpush1.msra.mxu0 0.0
    %1523 = vmatprep.subr.mxu0 0.0
    %1524 = vmatpush1.msra.mxu0 0.0
    %1525 = vmatprep.subr.mxu0 0.0
    %1526 = vmatpush1.msra.mxu0 0.0
    %1527 = vmatprep.subr.mxu0 0.0
    %1528 = vmatpush1.msra.mxu0 0.0
    %1529 = vmatprep.subr.mxu0 0.0
    %1530 = vmatpush1.msra.mxu0 0.0
    %1531 = vmatprep.subr.mxu0 0.0
    %1532 = vmatpush1.msra.mxu0 0.0
    %1533 = vmatprep.subr.mxu0 0.0
    %1534 = vmatpush1.msra.mxu0 0.0
    %1535 = vmatprep.subr.mxu0 0.0
    %1536 = vmatpush1.msra.mxu0 0.0
    %1537 = vmatprep.subr.mxu0 0.0
    %1538 = vmatpush1.msra.mxu0 0.0
    %1539 = vmatprep.subr.mxu0 0.0
    %1540 = vmatpush1.msra.mxu0 0.0
    %1541 = vmatprep.subr.mxu0 0.0
    %1542 = vmatpush1.msra.mxu0 0.0
    %1543 = vmatprep.subr.mxu0 0.0
    %1544 = vmatpush1.msra.mxu0 0.0
    %1545 = vmatprep.subr.mxu0 0.0
    %1546 = vmatpush1.msra.mxu0 0.0
    %1547 = vmatprep.mubr.f32.mxu0 0.0
    %1548 = vmatmul.mubr.f32.gmra.mrb[0].mxu0 %v1460
    %v1549 = vpop.f32.mrb[0].mxu0
    %v1550 = vadd.f32 0.0, %v1549
    %v1551 = vpop.f32.mrb[0].mxu0
    %1552 = vmatprep.mubr.f32.mxu0 0.0
    %1553 = vmatmul.mubr.f32.gmra.mrb[0].mxu0 %v1463
    %v1554 = vpop.f32.mrb[0].mxu0
    %v1555 = vadd.f32 0.0, %v1554
    %v1556 = vpop.f32.mrb[0].mxu0
    %1557 = vmatprep.mubr.f32.mxu0 0.0
    %1558 = vmatmul.mubr.f32.gmra.mrb[0].mxu0 %v1466
    %v1559 = vpop.f32.mrb[0].mxu0
    %v1560 = vadd.f32 0.0, %v1559
    %v1561 = vpop.f32.mrb[0].mxu0
    %1562 = vmatprep.mubr.f32.mxu0 0.0
    %1563 = vmatmul.mubr.f32.gmra.mrb[0].mxu0 %v1469
    %v1564 = vpop.f32.mrb[0].mxu0
    %v1565 = vadd.f32 0.0, %v1564
    %v1566 = vpop.f32.mrb[0].mxu0
    %1567 = vmatprep.mubr.f32.mxu0 0.0
    %1568 = vmatmul.mubr.f32.gmra.mrb[0].mxu0 %v1472
    %v1569 = vpop.f32.mrb[0].mxu0
    %v1570 = vadd.f32 0.0, %v1569
    %v1571 = vpop.f32.mrb[0].mxu0
    %1572 = vmatprep.mubr.f32.mxu0 0.0
    %1573 = vmatmul.mubr.f32.gmra.mrb[0].mxu0 %v1475
    %v1574 = vpop.f32.mrb[0].mxu0
    %v1575 = vadd.f32 0.0, %v1574
    %v1576 = vpop.f32.mrb[0].mxu0
    %1577 = vmatprep.mubr.f32.mxu0 0.0
    %1578 = vmatmul.mubr.f32.gmra.mrb[0].mxu0 %v1478
    %v1579 = vpop.f32.mrb[0].mxu0
    %v1580 = vadd.f32 0.0, %v1579
    %v1581 = vpop.f32.mrb[0].mxu0
    %1582 = vmatprep.mubr.f32.mxu0 0.0
    %1583 = vmatmul.mubr.f32.gmra.mrb[0].mxu0 %v1481
    %v1584 = vpop.f32.mrb[0].mxu0
    %v1585 = vadd.f32 0.0, %v1584
    %v1586 = vpop.f32.mrb[0].mxu0
    %1587 = vdwg.mxu0
    %v1589 = vlaneseq
    %v1590 = vshrl.u32 %v1589, 7
    %v1591 = vsub.s32 0, %v1590
    %v1592 = vrot.slane %v1445, %v1591
    %v1594 = vadd.f32 %v1592, %v1550
    %v1595 = vadd.f32 %v1592, %v1555
    %v1596 = vadd.f32 %v1592, %v1560
    %v1597 = vadd.f32 %v1592, %v1565
    %v1598 = vadd.f32 %v1592, %v1570
    %v1599 = vadd.f32 %v1592, %v1575
    %v1600 = vadd.f32 %v1592, %v1580
    %v1601 = vadd.f32 %v1592, %v1585
    %1602 = vmatprep.subr.mxu0 0.0
    %1603 = vmatpush1.msra.mxu0 %v1446
    %1604 = vmatprep.subr.mxu0 0.0
    %1605 = vmatpush1.msra.mxu0 %v1447
    %1606 = vmatprep.subr.mxu0 0.0
    %1607 = vmatpush1.msra.mxu0 %v1448
    %1608 = vmatprep.subr.mxu0 0.0
    %1609 = vmatpush1.msra.mxu0 %v1449
    %1610 = vmatprep.subr.mxu0 0.0
    %1611 = vmatpush1.msra.mxu0 0.0
    %1612 = vmatprep.subr.mxu0 0.0
    %1613 = vmatpush1.msra.mxu0 0.0
    %1614 = vmatprep.subr.mxu0 0.0
    %1615 = vmatpush1.msra.mxu0 0.0
    %1616 = vmatprep.subr.mxu0 0.0
    %1617 = vmatpush1.msra.mxu0 0.0
    %1618 = vmatprep.subr.mxu0 0.0
    %1619 = vmatpush1.msra.mxu0 0.0
    %1620 = vmatprep.subr.mxu0 0.0
    %1621 = vmatpush1.msra.mxu0 0.0
    %1622 = vmatprep.subr.mxu0 0.0
    %1623 = vmatpush1.msra.mxu0 0.0
    %1624 = vmatprep.subr.mxu0 0.0
    %1625 = vmatpush1.msra.mxu0 0.0
    %1626 = vmatprep.subr.mxu0 0.0
    %1627 = vmatpush1.msra.mxu0 0.0
    %1628 = vmatprep.subr.mxu0 0.0
    %1629 = vmatpush1.msra.mxu0 0.0
    %1630 = vmatprep.subr.mxu0 0.0
    %1631 = vmatpush1.msra.mxu0 0.0
    %1632 = vmatprep.subr.mxu0 0.0
    %1633 = vmatpush1.msra.mxu0 0.0
    %1634 = vmatprep.subr.mxu0 0.0
    %1635 = vmatpush1.msra.mxu0 0.0
    %1636 = vmatprep.subr.mxu0 0.0
    %1637 = vmatpush1.msra.mxu0 0.0
    %1638 = vmatprep.subr.mxu0 0.0
    %1639 = vmatpush1.msra.mxu0 0.0
    %1640 = vmatprep.subr.mxu0 0.0
    %1641 = vmatpush1.msra.mxu0 0.0
    %1642 = vmatprep.subr.mxu0 0.0
    %1643 = vmatpush1.msra.mxu0 0.0
    %1644 = vmatprep.subr.mxu0 0.0
    %1645 = vmatpush1.msra.mxu0 0.0
    %1646 = vmatprep.subr.mxu0 0.0
    %1647 = vmatpush1.msra.mxu0 0.0
    %1648 = vmatprep.subr.mxu0 0.0
    %1649 = vmatpush1.msra.mxu0 0.0
    %1650 = vmatprep.subr.mxu0 0.0
    %1651 = vmatpush1.msra.mxu0 0.0
    %1652 = vmatprep.subr.mxu0 0.0
    %1653 = vmatpush1.msra.mxu0 0.0
    %1654 = vmatprep.subr.mxu0 0.0
    %1655 = vmatpush1.msra.mxu0 0.0
    %1656 = vmatprep.subr.mxu0 0.0
    %1657 = vmatpush1.msra.mxu0 0.0
    %1658 = vmatprep.subr.mxu0 0.0
    %1659 = vmatpush1.msra.mxu0 0.0
    %1660 = vmatprep.subr.mxu0 0.0
    %1661 = vmatpush1.msra.mxu0 0.0
    %1662 = vmatprep.subr.mxu0 0.0
    %1663 = vmatpush1.msra.mxu0 0.0
    %1664 = vmatprep.subr.mxu0 0.0
    %1665 = vmatpush1.msra.mxu0 0.0
    %1666 = vmatprep.mubr.f32.mxu0 0.0
    %1667 = vmatmul.mubr.f32.gmra.mrb[0].mxu0 %v1460
    %v1668 = vpop.f32.mrb[0].mxu0
    %v1669 = vadd.f32 0.0, %v1668
    %v1670 = vpop.f32.mrb[0].mxu0
    %1671 = vmatprep.mubr.f32.mxu0 0.0
    %1672 = vmatmul.mubr.f32.gmra.mrb[0].mxu0 %v1463
    %v1673 = vpop.f32.mrb[0].mxu0
    %v1674 = vadd.f32 0.0, %v1673
    %v1675 = vpop.f32.mrb[0].mxu0
    %1676 = vmatprep.mubr.f32.mxu0 0.0
    %1677 = vmatmul.mubr.f32.gmra.mrb[0].mxu0 %v1466
    %v1678 = vpop.f32.mrb[0].mxu0
    %v1679 = vadd.f32 0.0, %v1678
    %v1680 = vpop.f32.mrb[0].mxu0
    %1681 = vmatprep.mubr.f32.mxu0 0.0
    %1682 = vmatmul.mubr.f32.gmra.mrb[0].mxu0 %v1469
    %v1683 = vpop.f32.mrb[0].mxu0
    %v1684 = vadd.f32 0.0, %v1683
    %v1685 = vpop.f32.mrb[0].mxu0
    %1686 = vmatprep.mubr.f32.mxu0 0.0
    %1687 = vmatmul.mubr.f32.gmra.mrb[0].mxu0 %v1472
    %v1688 = vpop.f32.mrb[0].mxu0
    %v1689 = vadd.f32 0.0, %v1688
    %v1690 = vpop.f32.mrb[0].mxu0
    %1691 = vmatprep.mubr.f32.mxu0 0.0
    %1692 = vmatmul.mubr.f32.gmra.mrb[0].mxu0 %v1475
    %v1693 = vpop.f32.mrb[0].mxu0
    %v1694 = vadd.f32 0.0, %v1693
    %v1695 = vpop.f32.mrb[0].mxu0
    %1696 = vmatprep.mubr.f32.mxu0 0.0
    %1697 = vmatmul.mubr.f32.gmra.mrb[0].mxu0 %v1478
    %v1698 = vpop.f32.mrb[0].mxu0
    %v1699 = vadd.f32 0.0, %v1698
    %v1700 = vpop.f32.mrb[0].mxu0
    %1701 = vmatprep.mubr.f32.mxu0 0.0
    %1702 = vmatmul.mubr.f32.gmra.mrb[0].mxu0 %v1481
    %v1703 = vpop.f32.mrb[0].mxu0
    %v1704 = vadd.f32 0.0, %v1703
    %v1705 = vpop.f32.mrb[0].mxu0
    %1706 = vdwg.mxu0
    %v1708 = vlaneseq
    %v1709 = vshrl.u32 %v1708, 7
    %v1710 = vsub.s32 0, %v1709
    %v1711 = vrot.slane %v1450, %v1710
    %v1713 = vadd.f32 %v1711, %v1669
    %v1714 = vadd.f32 %v1711, %v1674
    %v1715 = vadd.f32 %v1711, %v1679
    %v1716 = vadd.f32 %v1711, %v1684
    %v1717 = vadd.f32 %v1711, %v1689
    %v1718 = vadd.f32 %v1711, %v1694
    %v1719 = vadd.f32 %v1711, %v1699
    %v1720 = vadd.f32 %v1711, %v1704
    %1721 = vmatprep.subr.mxu0 0.0
    %1722 = vmatpush1.msra.mxu0 %v1713
    %1723 = vmatprep.subr.mxu0 0.0
    %1724 = vmatpush1.msra.mxu0 %v1714
    %1725 = vmatprep.subr.mxu0 0.0
    %1726 = vmatpush1.msra.mxu0 %v1715
    %1727 = vmatprep.subr.mxu0 0.0
    %1728 = vmatpush1.msra.mxu0 %v1716
    %1729 = vmatprep.subr.mxu0 0.0
    %1730 = vmatpush1.msra.mxu0 %v1717
    %1731 = vmatprep.subr.mxu0 0.0
    %1732 = vmatpush1.msra.mxu0 %v1718
    %1733 = vmatprep.subr.mxu0 0.0
    %1734 = vmatpush1.msra.mxu0 %v1719
    %1735 = vmatprep.subr.mxu0 0.0
    %1736 = vmatpush1.msra.mxu0 %v1720
    %1737 = vmatprep.subr.mxu0 0.0
    %1738 = vmatpush1.msra.mxu0 0.0
    %1739 = vmatprep.subr.mxu0 0.0
    %1740 = vmatpush1.msra.mxu0 0.0
    %1741 = vmatprep.subr.mxu0 0.0
    %1742 = vmatpush1.msra.mxu0 0.0
    %1743 = vmatprep.subr.mxu0 0.0
    %1744 = vmatpush1.msra.mxu0 0.0
    %1745 = vmatprep.subr.mxu0 0.0
    %1746 = vmatpush1.msra.mxu0 0.0
    %1747 = vmatprep.subr.mxu0 0.0
    %1748 = vmatpush1.msra.mxu0 0.0
    %1749 = vmatprep.subr.mxu0 0.0
    %1750 = vmatpush1.msra.mxu0 0.0
    %1751 = vmatprep.subr.mxu0 0.0
    %1752 = vmatpush1.msra.mxu0 0.0
    %1753 = vmatprep.subr.mxu0 0.0
    %1754 = vmatpush1.msra.mxu0 0.0
    %1755 = vmatprep.subr.mxu0 0.0
    %1756 = vmatpush1.msra.mxu0 0.0
    %1757 = vmatprep.subr.mxu0 0.0
    %1758 = vmatpush1.msra.mxu0 0.0
    %1759 = vmatprep.subr.mxu0 0.0
    %1760 = vmatpush1.msra.mxu0 0.0
    %1761 = vmatprep.subr.mxu0 0.0
    %1762 = vmatpush1.msra.mxu0 0.0
    %1763 = vmatprep.subr.mxu0 0.0
    %1764 = vmatpush1.msra.mxu0 0.0
    %1765 = vmatprep.subr.mxu0 0.0
    %1766 = vmatpush1.msra.mxu0 0.0
    %1767 = vmatprep.subr.mxu0 0.0
    %1768 = vmatpush1.msra.mxu0 0.0
    %1769 = vmatprep.subr.mxu0 0.0
    %1770 = vmatpush1.msra.mxu0 0.0
    %1771 = vmatprep.subr.mxu0 0.0
    %1772 = vmatpush1.msra.mxu0 0.0
    %1773 = vmatprep.subr.mxu0 0.0
    %1774 = vmatpush1.msra.mxu0 0.0
    %1775 = vmatprep.subr.mxu0 0.0
    %1776 = vmatpush1.msra.mxu0 0.0
    %1777 = vmatprep.subr.mxu0 0.0
    %1778 = vmatpush1.msra.mxu0 0.0
    %1779 = vmatprep.subr.mxu0 0.0
    %1780 = vmatpush1.msra.mxu0 0.0
    %1781 = vmatprep.subr.mxu0 0.0
    %1782 = vmatpush1.msra.mxu0 0.0
    %1783 = vmatprep.subr.mxu0 0.0
    %1784 = vmatpush1.msra.mxu0 0.0
    %1785 = vmatprep.mubr.f32.mxu0 0.0
    %1786 = vmatmul.mubr.f32.gmra.mrb[0].mxu0 %v1305
    %v1787 = vpop.f32.mrb[0].mxu0
    %v1788 = vadd.f32 0.0, %v1787
    %v1789 = vpop.f32.mrb[0].mxu0
    %1790 = vmatprep.mubr.f32.mxu0 0.0
    %1791 = vmatmul.mubr.f32.gmra.mrb[0].mxu0 %v1308
    %v1792 = vpop.f32.mrb[0].mxu0
    %v1793 = vadd.f32 0.0, %v1792
    %v1794 = vpop.f32.mrb[0].mxu0
    %1795 = vmatprep.mubr.f32.mxu0 0.0
    %1796 = vmatmul.mubr.f32.gmra.mrb[0].mxu0 %v1311
    %v1797 = vpop.f32.mrb[0].mxu0
    %v1798 = vadd.f32 0.0, %v1797
    %v1799 = vpop.f32.mrb[0].mxu0
    %1800 = vmatprep.mubr.f32.mxu0 0.0
    %1801 = vmatmul.mubr.f32.gmra.mrb[0].mxu0 %v1314
    %v1802 = vpop.f32.mrb[0].mxu0
    %v1803 = vadd.f32 0.0, %v1802
    %v1804 = vpop.f32.mrb[0].mxu0
    %1805 = vmatprep.mubr.f32.mxu0 0.0
    %1806 = vmatmul.mubr.f32.gmra.mrb[0].mxu0 %v1317
    %v1807 = vpop.f32.mrb[0].mxu0
    %v1808 = vadd.f32 0.0, %v1807
    %v1809 = vpop.f32.mrb[0].mxu0
    %1810 = vmatprep.mubr.f32.mxu0 0.0
    %1811 = vmatmul.mubr.f32.gmra.mrb[0].mxu0 %v1320
    %v1812 = vpop.f32.mrb[0].mxu0
    %v1813 = vadd.f32 0.0, %v1812
    %v1814 = vpop.f32.mrb[0].mxu0
    %1815 = vmatprep.mubr.f32.mxu0 0.0
    %1816 = vmatmul.mubr.f32.gmra.mrb[0].mxu0 %v1323
    %v1817 = vpop.f32.mrb[0].mxu0
    %v1818 = vadd.f32 0.0, %v1817
    %v1819 = vpop.f32.mrb[0].mxu0
    %1820 = vmatprep.mubr.f32.mxu0 0.0
    %1821 = vmatmul.mubr.f32.gmra.mrb[0].mxu0 %v1326
    %v1822 = vpop.f32.mrb[0].mxu0
    %v1823 = vadd.f32 0.0, %v1822
    %v1824 = vpop.f32.mrb[0].mxu0
    %1825 = vdwg.mxu0
    %v1826 = vadd.f32 %v1594, %v1788
    %v1827 = vadd.f32 %v1595, %v1793
    %v1828 = vadd.f32 %v1596, %v1798
    %v1829 = vadd.f32 %v1597, %v1803
    %v1830 = vadd.f32 %v1598, %v1808
    %v1831 = vadd.f32 %v1599, %v1813
    %v1832 = vadd.f32 %v1600, %v1818
    %v1833 = vadd.f32 %v1601, %v1823
    %v1834 = vld [vmem:[%s39] sm:$0xff]
    %v1835 = vld [vmem:[%s39 + $0x8] sm:$0xff]
    %v1836 = vld [vmem:[%s39 + $0x10] sm:$0xff]
    %v1837 = vld [vmem:[%s39 + $0x18] sm:$0xff]
    %v1838 = vld [vmem:[%s41] sm:$0xff]
    %v1839 = vld [vmem:[%s41 + $0x8] sm:$0xff]
    %v1840 = vld [vmem:[%s41 + $0x10] sm:$0xff]
    %v1841 = vld [vmem:[%s41 + $0x18] sm:$0xff]
    %v1842 = vld [vmem:[%s43] sm:$0x7]
    %v1843 = vld [vmem:[%s45] sm:$0x1]
    %1844 = vmatprep.subr.mxu0 0.0
    %1845 = vmatpush1.msra.mxu0 %v1834
    %1846 = vmatprep.subr.mxu0 0.0
    %1847 = vmatpush1.msra.mxu0 %v1835
    %1848 = vmatprep.subr.mxu0 0.0
    %1849 = vmatpush1.msra.mxu0 %v1836
    %1850 = vmatprep.subr.mxu0 0.0
    %1851 = vmatpush1.msra.mxu0 %v1837
    %1852 = vmatprep.subr.mxu0 0.0
    %1853 = vmatpush1.msra.mxu0 0.0
    %1854 = vmatprep.subr.mxu0 0.0
    %1855 = vmatpush1.msra.mxu0 0.0
    %1856 = vmatprep.subr.mxu0 0.0
    %1857 = vmatpush1.msra.mxu0 0.0
    %1858 = vmatprep.subr.mxu0 0.0
    %1859 = vmatpush1.msra.mxu0 0.0
    %1860 = vmatprep.subr.mxu0 0.0
    %1861 = vmatpush1.msra.mxu0 0.0
    %1862 = vmatprep.subr.mxu0 0.0
    %1863 = vmatpush1.msra.mxu0 0.0
    %1864 = vmatprep.subr.mxu0 0.0
    %1865 = vmatpush1.msra.mxu0 0.0
    %1866 = vmatprep.subr.mxu0 0.0
    %1867 = vmatpush1.msra.mxu0 0.0
    %1868 = vmatprep.subr.mxu0 0.0
    %1869 = vmatpush1.msra.mxu0 0.0
    %1870 = vmatprep.subr.mxu0 0.0
    %1871 = vmatpush1.msra.mxu0 0.0
    %1872 = vmatprep.subr.mxu0 0.0
    %1873 = vmatpush1.msra.mxu0 0.0
    %1874 = vmatprep.subr.mxu0 0.0
    %1875 = vmatpush1.msra.mxu0 0.0
    %1876 = vmatprep.subr.mxu0 0.0
    %1877 = vmatpush1.msra.mxu0 0.0
    %1878 = vmatprep.subr.mxu0 0.0
    %1879 = vmatpush1.msra.mxu0 0.0
    %1880 = vmatprep.subr.mxu0 0.0
    %1881 = vmatpush1.msra.mxu0 0.0
    %1882 = vmatprep.subr.mxu0 0.0
    %1883 = vmatpush1.msra.mxu0 0.0
    %1884 = vmatprep.subr.mxu0 0.0
    %1885 = vmatpush1.msra.mxu0 0.0
    %1886 = vmatprep.subr.mxu0 0.0
    %1887 = vmatpush1.msra.mxu0 0.0
    %1888 = vmatprep.subr.mxu0 0.0
    %1889 = vmatpush1.msra.mxu0 0.0
    %1890 = vmatprep.subr.mxu0 0.0
    %1891 = vmatpush1.msra.mxu0 0.0
    %1892 = vmatprep.subr.mxu0 0.0
    %1893 = vmatpush1.msra.mxu0 0.0
    %1894 = vmatprep.subr.mxu0 0.0
    %1895 = vmatpush1.msra.mxu0 0.0
    %1896 = vmatprep.subr.mxu0 0.0
    %1897 = vmatpush1.msra.mxu0 0.0
    %1898 = vmatprep.subr.mxu0 0.0
    %1899 = vmatpush1.msra.mxu0 0.0
    %1900 = vmatprep.subr.mxu0 0.0
    %1901 = vmatpush1.msra.mxu0 0.0
    %1902 = vmatprep.subr.mxu0 0.0
    %1903 = vmatpush1.msra.mxu0 0.0
    %1904 = vmatprep.subr.mxu0 0.0
    %1905 = vmatpush1.msra.mxu0 0.0
    %1906 = vmatprep.subr.mxu0 0.0
    %1907 = vmatpush1.msra.mxu0 0.0
    %1908 = vmatprep.mubr.f32.mxu0 0.0
    %1909 = vmatmul.mubr.f32.gmra.mrb[0].mxu0 %v534
    %v1910 = vpop.f32.mrb[0].mxu0
    %v1911 = vadd.f32 0.0, %v1910
    %v1912 = vpop.f32.mrb[0].mxu0
    %1913 = vmatprep.mubr.f32.mxu0 0.0
    %1914 = vmatmul.mubr.f32.gmra.mrb[0].mxu0 %v537
    %v1915 = vpop.f32.mrb[0].mxu0
    %v1916 = vadd.f32 0.0, %v1915
    %v1917 = vpop.f32.mrb[0].mxu0
    %1918 = vmatprep.mubr.f32.mxu0 0.0
    %1919 = vmatmul.mubr.f32.gmra.mrb[0].mxu0 %v540
    %v1920 = vpop.f32.mrb[0].mxu0
    %v1921 = vadd.f32 0.0, %v1920
    %v1922 = vpop.f32.mrb[0].mxu0
    %1923 = vmatprep.mubr.f32.mxu0 0.0
    %1924 = vmatmul.mubr.f32.gmra.mrb[0].mxu0 %v543
    %v1925 = vpop.f32.mrb[0].mxu0
    %v1926 = vadd.f32 0.0, %v1925
    %v1927 = vpop.f32.mrb[0].mxu0
    %1928 = vmatprep.mubr.f32.mxu0 0.0
    %1929 = vmatmul.mubr.f32.gmra.mrb[0].mxu0 %v546
    %v1930 = vpop.f32.mrb[0].mxu0
    %v1931 = vadd.f32 0.0, %v1930
    %v1932 = vpop.f32.mrb[0].mxu0
    %1933 = vmatprep.mubr.f32.mxu0 0.0
    %1934 = vmatmul.mubr.f32.gmra.mrb[0].mxu0 %v549
    %v1935 = vpop.f32.mrb[0].mxu0
    %v1936 = vadd.f32 0.0, %v1935
    %v1937 = vpop.f32.mrb[0].mxu0
    %1938 = vmatprep.mubr.f32.mxu0 0.0
    %1939 = vmatmul.mubr.f32.gmra.mrb[0].mxu0 %v552
    %v1940 = vpop.f32.mrb[0].mxu0
    %v1941 = vadd.f32 0.0, %v1940
    %v1942 = vpop.f32.mrb[0].mxu0
    %1943 = vmatprep.mubr.f32.mxu0 0.0
    %1944 = vmatmul.mubr.f32.gmra.mrb[0].mxu0 %v555
    %v1945 = vpop.f32.mrb[0].mxu0
    %v1946 = vadd.f32 0.0, %v1945
    %v1947 = vpop.f32.mrb[0].mxu0
    %1948 = vdwg.mxu0
    %v1950 = vlaneseq
    %v1951 = vshrl.u32 %v1950, 7
    %v1952 = vsub.s32 0, %v1951
    %v1953 = vrot.slane %v1843, %v1952
    %v1955 = vadd.f32 %v1953, %v1911
    %v1956 = vadd.f32 %v1953, %v1916
    %v1957 = vadd.f32 %v1953, %v1921
    %v1958 = vadd.f32 %v1953, %v1926
    %v1959 = vadd.f32 %v1953, %v1931
    %v1960 = vadd.f32 %v1953, %v1936
    %v1961 = vadd.f32 %v1953, %v1941
    %v1962 = vadd.f32 %v1953, %v1946
    %1963 = vmatprep.subr.mxu0 0.0
    %1964 = vmatpush1.msra.mxu0 %v1838
    %1965 = vmatprep.subr.mxu0 0.0
    %1966 = vmatpush1.msra.mxu0 %v1839
    %1967 = vmatprep.subr.mxu0 0.0
    %1968 = vmatpush1.msra.mxu0 %v1840
    %1969 = vmatprep.subr.mxu0 0.0
    %1970 = vmatpush1.msra.mxu0 %v1841
    %1971 = vmatprep.subr.mxu0 0.0
    %1972 = vmatpush1.msra.mxu0 0.0
    %1973 = vmatprep.subr.mxu0 0.0
    %1974 = vmatpush1.msra.mxu0 0.0
    %1975 = vmatprep.subr.mxu0 0.0
    %1976 = vmatpush1.msra.mxu0 0.0
    %1977 = vmatprep.subr.mxu0 0.0
    %1978 = vmatpush1.msra.mxu0 0.0
    %1979 = vmatprep.subr.mxu0 0.0
    %1980 = vmatpush1.msra.mxu0 0.0
    %1981 = vmatprep.subr.mxu0 0.0
    %1982 = vmatpush1.msra.mxu0 0.0
    %1983 = vmatprep.subr.mxu0 0.0
    %1984 = vmatpush1.msra.mxu0 0.0
    %1985 = vmatprep.subr.mxu0 0.0
    %1986 = vmatpush1.msra.mxu0 0.0
    %1987 = vmatprep.subr.mxu0 0.0
    %1988 = vmatpush1.msra.mxu0 0.0
    %1989 = vmatprep.subr.mxu0 0.0
    %1990 = vmatpush1.msra.mxu0 0.0
    %1991 = vmatprep.subr.mxu0 0.0
    %1992 = vmatpush1.msra.mxu0 0.0
    %1993 = vmatprep.subr.mxu0 0.0
    %1994 = vmatpush1.msra.mxu0 0.0
    %1995 = vmatprep.subr.mxu0 0.0
    %1996 = vmatpush1.msra.mxu0 0.0
    %1997 = vmatprep.subr.mxu0 0.0
    %1998 = vmatpush1.msra.mxu0 0.0
    %1999 = vmatprep.subr.mxu0 0.0
    %2000 = vmatpush1.msra.mxu0 0.0
    %2001 = vmatprep.subr.mxu0 0.0
    %2002 = vmatpush1.msra.mxu0 0.0
    %2003 = vmatprep.subr.mxu0 0.0
    %2004 = vmatpush1.msra.mxu0 0.0
    %2005 = vmatprep.subr.mxu0 0.0
    %2006 = vmatpush1.msra.mxu0 0.0
    %2007 = vmatprep.subr.mxu0 0.0
    %2008 = vmatpush1.msra.mxu0 0.0
    %2009 = vmatprep.subr.mxu0 0.0
    %2010 = vmatpush1.msra.mxu0 0.0
    %2011 = vmatprep.subr.mxu0 0.0
    %2012 = vmatpush1.msra.mxu0 0.0
    %2013 = vmatprep.subr.mxu0 0.0
    %2014 = vmatpush1.msra.mxu0 0.0
    %2015 = vmatprep.subr.mxu0 0.0
    %2016 = vmatpush1.msra.mxu0 0.0
    %2017 = vmatprep.subr.mxu0 0.0
    %2018 = vmatpush1.msra.mxu0 0.0
    %2019 = vmatprep.subr.mxu0 0.0
    %2020 = vmatpush1.msra.mxu0 0.0
    %2021 = vmatprep.subr.mxu0 0.0
    %2022 = vmatpush1.msra.mxu0 0.0
    %2023 = vmatprep.subr.mxu0 0.0
    %2024 = vmatpush1.msra.mxu0 0.0
    %2025 = vmatprep.subr.mxu0 0.0
    %2026 = vmatpush1.msra.mxu0 0.0
    %2027 = vmatprep.mubr.f32.mxu0 0.0
    %2028 = vmatmul.mubr.f32.gmra.mrb[0].mxu0 %v796
    %v2029 = vpop.f32.mrb[0].mxu0
    %v2030 = vadd.f32 0.0, %v2029
    %v2031 = vpop.f32.mrb[0].mxu0
    %2032 = vmatprep.mubr.f32.mxu0 0.0
    %2033 = vmatmul.mubr.f32.gmra.mrb[0].mxu0 %v799
    %v2034 = vpop.f32.mrb[0].mxu0
    %v2035 = vadd.f32 0.0, %v2034
    %v2036 = vpop.f32.mrb[0].mxu0
    %2037 = vmatprep.mubr.f32.mxu0 0.0
    %2038 = vmatmul.mubr.f32.gmra.mrb[0].mxu0 %v802
    %v2039 = vpop.f32.mrb[0].mxu0
    %v2040 = vadd.f32 0.0, %v2039
    %v2041 = vpop.f32.mrb[0].mxu0
    %2042 = vmatprep.mubr.f32.mxu0 0.0
    %2043 = vmatmul.mubr.f32.gmra.mrb[0].mxu0 %v805
    %v2044 = vpop.f32.mrb[0].mxu0
    %v2045 = vadd.f32 0.0, %v2044
    %v2046 = vpop.f32.mrb[0].mxu0
    %2047 = vmatprep.mubr.f32.mxu0 0.0
    %2048 = vmatmul.mubr.f32.gmra.mrb[0].mxu0 %v808
    %v2049 = vpop.f32.mrb[0].mxu0
    %v2050 = vadd.f32 0.0, %v2049
    %v2051 = vpop.f32.mrb[0].mxu0
    %2052 = vmatprep.mubr.f32.mxu0 0.0
    %2053 = vmatmul.mubr.f32.gmra.mrb[0].mxu0 %v811
    %v2054 = vpop.f32.mrb[0].mxu0
    %v2055 = vadd.f32 0.0, %v2054
    %v2056 = vpop.f32.mrb[0].mxu0
    %2057 = vmatprep.mubr.f32.mxu0 0.0
    %2058 = vmatmul.mubr.f32.gmra.mrb[0].mxu0 %v814
    %v2059 = vpop.f32.mrb[0].mxu0
    %v2060 = vadd.f32 0.0, %v2059
    %v2061 = vpop.f32.mrb[0].mxu0
    %2062 = vmatprep.mubr.f32.mxu0 0.0
    %2063 = vmatmul.mubr.f32.gmra.mrb[0].mxu0 %v817
    %v2064 = vpop.f32.mrb[0].mxu0
    %v2065 = vadd.f32 0.0, %v2064
    %v2066 = vpop.f32.mrb[0].mxu0
    %2067 = vdwg.mxu0
    %v2068 = vadd.f32 %v1955, %v2030
    %v2069 = vadd.f32 %v1956, %v2035
    %v2070 = vadd.f32 %v1957, %v2040
    %v2071 = vadd.f32 %v1958, %v2045
    %v2072 = vadd.f32 %v1959, %v2050
    %v2073 = vadd.f32 %v1960, %v2055
    %v2074 = vadd.f32 %v1961, %v2060
    %v2075 = vadd.f32 %v1962, %v2065
    %v2077 = vsel %vm1070, %v1842, 0
    %2079 = vmatprep.subr.mxu0 0.0
    %2080 = vmatpush1.msra.mxu0 %v2077
    %2081 = vmatprep.subr.mxu0 0.0
    %2082 = vmatpush1.msra.mxu0 0.0
    %2083 = vmatprep.subr.mxu0 0.0
    %2084 = vmatpush1.msra.mxu0 0.0
    %2085 = vmatprep.subr.mxu0 0.0
    %2086 = vmatpush1.msra.mxu0 0.0
    %2087 = vmatprep.subr.mxu0 0.0
    %2088 = vmatpush1.msra.mxu0 0.0
    %2089 = vmatprep.subr.mxu0 0.0
    %2090 = vmatpush1.msra.mxu0 0.0
    %2091 = vmatprep.subr.mxu0 0.0
    %2092 = vmatpush1.msra.mxu0 0.0
    %2093 = vmatprep.subr.mxu0 0.0
    %2094 = vmatpush1.msra.mxu0 0.0
    %2095 = vmatprep.subr.mxu0 0.0
    %2096 = vmatpush1.msra.mxu0 0.0
    %2097 = vmatprep.subr.mxu0 0.0
    %2098 = vmatpush1.msra.mxu0 0.0
    %2099 = vmatprep.subr.mxu0 0.0
    %2100 = vmatpush1.msra.mxu0 0.0
    %2101 = vmatprep.subr.mxu0 0.0
    %2102 = vmatpush1.msra.mxu0 0.0
    %2103 = vmatprep.subr.mxu0 0.0
    %2104 = vmatpush1.msra.mxu0 0.0
    %2105 = vmatprep.subr.mxu0 0.0
    %2106 = vmatpush1.msra.mxu0 0.0
    %2107 = vmatprep.subr.mxu0 0.0
    %2108 = vmatpush1.msra.mxu0 0.0
    %2109 = vmatprep.subr.mxu0 0.0
    %2110 = vmatpush1.msra.mxu0 0.0
    %2111 = vmatprep.subr.mxu0 0.0
    %2112 = vmatpush1.msra.mxu0 0.0
    %2113 = vmatprep.subr.mxu0 0.0
    %2114 = vmatpush1.msra.mxu0 0.0
    %2115 = vmatprep.subr.mxu0 0.0
    %2116 = vmatpush1.msra.mxu0 0.0
    %2117 = vmatprep.subr.mxu0 0.0
    %2118 = vmatpush1.msra.mxu0 0.0
    %2119 = vmatprep.subr.mxu0 0.0
    %2120 = vmatpush1.msra.mxu0 0.0
    %2121 = vmatprep.subr.mxu0 0.0
    %2122 = vmatpush1.msra.mxu0 0.0
    %2123 = vmatprep.subr.mxu0 0.0
    %2124 = vmatpush1.msra.mxu0 0.0
    %2125 = vmatprep.subr.mxu0 0.0
    %2126 = vmatpush1.msra.mxu0 0.0
    %2127 = vmatprep.subr.mxu0 0.0
    %2128 = vmatpush1.msra.mxu0 0.0
    %2129 = vmatprep.subr.mxu0 0.0
    %2130 = vmatpush1.msra.mxu0 0.0
    %2131 = vmatprep.subr.mxu0 0.0
    %2132 = vmatpush1.msra.mxu0 0.0
    %2133 = vmatprep.subr.mxu0 0.0
    %2134 = vmatpush1.msra.mxu0 0.0
    %2135 = vmatprep.subr.mxu0 0.0
    %2136 = vmatpush1.msra.mxu0 0.0
    %2137 = vmatprep.subr.mxu0 0.0
    %2138 = vmatpush1.msra.mxu0 0.0
    %2139 = vmatprep.subr.mxu0 0.0
    %2140 = vmatpush1.msra.mxu0 0.0
    %2141 = vmatprep.subr.mxu0 0.0
    %2142 = vmatpush1.msra.mxu0 0.0
    %2143 = vmatprep.mubr.f32.mxu0 0.0
    %2144 = vmatmul.mubr.f32.gmra.mrb[0].mxu0 %v1047
    %v2145 = vpop.f32.mrb[0].mxu0
    %v2146 = vadd.f32 0.0, %v2145
    %v2147 = vpop.f32.mrb[0].mxu0
    %2148 = vmatprep.mubr.f32.mxu0 0.0
    %2149 = vmatmul.mubr.f32.gmra.mrb[0].mxu0 %v1050
    %v2150 = vpop.f32.mrb[0].mxu0
    %v2151 = vadd.f32 0.0, %v2150
    %v2152 = vpop.f32.mrb[0].mxu0
    %2153 = vmatprep.mubr.f32.mxu0 0.0
    %2154 = vmatmul.mubr.f32.gmra.mrb[0].mxu0 %v1053
    %v2155 = vpop.f32.mrb[0].mxu0
    %v2156 = vadd.f32 0.0, %v2155
    %v2157 = vpop.f32.mrb[0].mxu0
    %2158 = vmatprep.mubr.f32.mxu0 0.0
    %2159 = vmatmul.mubr.f32.gmra.mrb[0].mxu0 %v1056
    %v2160 = vpop.f32.mrb[0].mxu0
    %v2161 = vadd.f32 0.0, %v2160
    %v2162 = vpop.f32.mrb[0].mxu0
    %2163 = vmatprep.mubr.f32.mxu0 0.0
    %2164 = vmatmul.mubr.f32.gmra.mrb[0].mxu0 %v1059
    %v2165 = vpop.f32.mrb[0].mxu0
    %v2166 = vadd.f32 0.0, %v2165
    %v2167 = vpop.f32.mrb[0].mxu0
    %2168 = vmatprep.mubr.f32.mxu0 0.0
    %2169 = vmatmul.mubr.f32.gmra.mrb[0].mxu0 %v1062
    %v2170 = vpop.f32.mrb[0].mxu0
    %v2171 = vadd.f32 0.0, %v2170
    %v2172 = vpop.f32.mrb[0].mxu0
    %2173 = vmatprep.mubr.f32.mxu0 0.0
    %2174 = vmatmul.mubr.f32.gmra.mrb[0].mxu0 %v1065
    %v2175 = vpop.f32.mrb[0].mxu0
    %v2176 = vadd.f32 0.0, %v2175
    %v2177 = vpop.f32.mrb[0].mxu0
    %2178 = vmatprep.mubr.f32.mxu0 0.0
    %2179 = vmatmul.mubr.f32.gmra.mrb[0].mxu0 %v1068
    %v2180 = vpop.f32.mrb[0].mxu0
    %v2181 = vadd.f32 0.0, %v2180
    %v2182 = vpop.f32.mrb[0].mxu0
    %2183 = vdwg.mxu0
    %v2184 = vadd.f32 %v2068, %v2146
    %v2185 = vadd.f32 %v2069, %v2151
    %v2186 = vadd.f32 %v2070, %v2156
    %v2187 = vadd.f32 %v2071, %v2161
    %v2188 = vadd.f32 %v2072, %v2166
    %v2189 = vadd.f32 %v2073, %v2171
    %v2190 = vadd.f32 %v2074, %v2176
    %v2191 = vadd.f32 %v2075, %v2181
    %v2192 = vadd.f32 %v1826, %v2184
    %v2193 = vadd.f32 %v1827, %v2185
    %v2194 = vadd.f32 %v1828, %v2186
    %v2195 = vadd.f32 %v1829, %v2187
    %v2196 = vadd.f32 %v1830, %v2188
    %v2197 = vadd.f32 %v1831, %v2189
    %v2198 = vadd.f32 %v1832, %v2190
    %v2199 = vadd.f32 %v1833, %v2191
    %v2200 = vmax.f32 %v2192, 0.0
    %v2201 = vmax.f32 %v2193, 0.0
    %v2202 = vmax.f32 %v2194, 0.0
    %v2203 = vmax.f32 %v2195, 0.0
    %v2204 = vmax.f32 %v2196, 0.0
    %v2205 = vmax.f32 %v2197, 0.0
    %v2206 = vmax.f32 %v2198, 0.0
    %v2207 = vmax.f32 %v2199, 0.0
    %v2208 = vld [vmem:[%s47] sm:$0xff]
    %v2209 = vld [vmem:[%s47 + $0x8] sm:$0xff]
    %v2210 = vld [vmem:[%s47 + $0x10] sm:$0xff]
    %v2211 = vld [vmem:[%s47 + $0x18] sm:$0xff]
    %v2212 = vld [vmem:[%s49] sm:$0x1]
    %v2213 = vld [vmem:[%s51] sm:$0xff]
    %v2214 = vld [vmem:[%s51 + $0x8] sm:$0xff]
    %v2215 = vld [vmem:[%s51 + $0x10] sm:$0xff]
    %v2216 = vld [vmem:[%s51 + $0x18] sm:$0xff]
    %v2217 = vld [vmem:[%s53] sm:$0x1]
    %v2219 = vsel %vm532, %v2200, 0
    %v2222 = vsel %vm532, %v2201, 0
    %v2225 = vsel %vm532, %v2202, 0
    %v2228 = vsel %vm532, %v2203, 0
    %v2231 = vsel %vm532, %v2204, 0
    %v2234 = vsel %vm532, %v2205, 0
    %v2237 = vsel %vm532, %v2206, 0
    %v2240 = vsel %vm532, %v2207, 0
    %2242 = vmatprep.subr.mxu0 0.0
    %2243 = vmatpush1.msra.mxu0 %v2208
    %2244 = vmatprep.subr.mxu0 0.0
    %2245 = vmatpush1.msra.mxu0 %v2209
    %2246 = vmatprep.subr.mxu0 0.0
    %2247 = vmatpush1.msra.mxu0 %v2210
    %2248 = vmatprep.subr.mxu0 0.0
    %2249 = vmatpush1.msra.mxu0 %v2211
    %2250 = vmatprep.subr.mxu0 0.0
    %2251 = vmatpush1.msra.mxu0 0.0
    %2252 = vmatprep.subr.mxu0 0.0
    %2253 = vmatpush1.msra.mxu0 0.0
    %2254 = vmatprep.subr.mxu0 0.0
    %2255 = vmatpush1.msra.mxu0 0.0
    %2256 = vmatprep.subr.mxu0 0.0
    %2257 = vmatpush1.msra.mxu0 0.0
    %2258 = vmatprep.subr.mxu0 0.0
    %2259 = vmatpush1.msra.mxu0 0.0
    %2260 = vmatprep.subr.mxu0 0.0
    %2261 = vmatpush1.msra.mxu0 0.0
    %2262 = vmatprep.subr.mxu0 0.0
    %2263 = vmatpush1.msra.mxu0 0.0
    %2264 = vmatprep.subr.mxu0 0.0
    %2265 = vmatpush1.msra.mxu0 0.0
    %2266 = vmatprep.subr.mxu0 0.0
    %2267 = vmatpush1.msra.mxu0 0.0
    %2268 = vmatprep.subr.mxu0 0.0
    %2269 = vmatpush1.msra.mxu0 0.0
    %2270 = vmatprep.subr.mxu0 0.0
    %2271 = vmatpush1.msra.mxu0 0.0
    %2272 = vmatprep.subr.mxu0 0.0
    %2273 = vmatpush1.msra.mxu0 0.0
    %2274 = vmatprep.subr.mxu0 0.0
    %2275 = vmatpush1.msra.mxu0 0.0
    %2276 = vmatprep.subr.mxu0 0.0
    %2277 = vmatpush1.msra.mxu0 0.0
    %2278 = vmatprep.subr.mxu0 0.0
    %2279 = vmatpush1.msra.mxu0 0.0
    %2280 = vmatprep.subr.mxu0 0.0
    %2281 = vmatpush1.msra.mxu0 0.0
    %2282 = vmatprep.subr.mxu0 0.0
    %2283 = vmatpush1.msra.mxu0 0.0
    %2284 = vmatprep.subr.mxu0 0.0
    %2285 = vmatpush1.msra.mxu0 0.0
    %2286 = vmatprep.subr.mxu0 0.0
    %2287 = vmatpush1.msra.mxu0 0.0
    %2288 = vmatprep.subr.mxu0 0.0
    %2289 = vmatpush1.msra.mxu0 0.0
    %2290 = vmatprep.subr.mxu0 0.0
    %2291 = vmatpush1.msra.mxu0 0.0
    %2292 = vmatprep.subr.mxu0 0.0
    %2293 = vmatpush1.msra.mxu0 0.0
    %2294 = vmatprep.subr.mxu0 0.0
    %2295 = vmatpush1.msra.mxu0 0.0
    %2296 = vmatprep.subr.mxu0 0.0
    %2297 = vmatpush1.msra.mxu0 0.0
    %2298 = vmatprep.subr.mxu0 0.0
    %2299 = vmatpush1.msra.mxu0 0.0
    %2300 = vmatprep.subr.mxu0 0.0
    %2301 = vmatpush1.msra.mxu0 0.0
    %2302 = vmatprep.subr.mxu0 0.0
    %2303 = vmatpush1.msra.mxu0 0.0
    %2304 = vmatprep.subr.mxu0 0.0
    %2305 = vmatpush1.msra.mxu0 0.0
    %2306 = vmatprep.mubr.f32.mxu0 0.0
    %2307 = vmatmul.mubr.f32.gmra.mrb[0].mxu0 %v2219
    %v2308 = vpop.f32.mrb[0].mxu0
    %v2309 = vadd.f32 0.0, %v2308
    %v2310 = vpop.f32.mrb[0].mxu0
    %2311 = vmatprep.mubr.f32.mxu0 0.0
    %2312 = vmatmul.mubr.f32.gmra.mrb[0].mxu0 %v2222
    %v2313 = vpop.f32.mrb[0].mxu0
    %v2314 = vadd.f32 0.0, %v2313
    %v2315 = vpop.f32.mrb[0].mxu0
    %2316 = vmatprep.mubr.f32.mxu0 0.0
    %2317 = vmatmul.mubr.f32.gmra.mrb[0].mxu0 %v2225
    %v2318 = vpop.f32.mrb[0].mxu0
    %v2319 = vadd.f32 0.0, %v2318
    %v2320 = vpop.f32.mrb[0].mxu0
    %2321 = vmatprep.mubr.f32.mxu0 0.0
    %2322 = vmatmul.mubr.f32.gmra.mrb[0].mxu0 %v2228
    %v2323 = vpop.f32.mrb[0].mxu0
    %v2324 = vadd.f32 0.0, %v2323
    %v2325 = vpop.f32.mrb[0].mxu0
    %2326 = vmatprep.mubr.f32.mxu0 0.0
    %2327 = vmatmul.mubr.f32.gmra.mrb[0].mxu0 %v2231
    %v2328 = vpop.f32.mrb[0].mxu0
    %v2329 = vadd.f32 0.0, %v2328
    %v2330 = vpop.f32.mrb[0].mxu0
    %2331 = vmatprep.mubr.f32.mxu0 0.0
    %2332 = vmatmul.mubr.f32.gmra.mrb[0].mxu0 %v2234
    %v2333 = vpop.f32.mrb[0].mxu0
    %v2334 = vadd.f32 0.0, %v2333
    %v2335 = vpop.f32.mrb[0].mxu0
    %2336 = vmatprep.mubr.f32.mxu0 0.0
    %2337 = vmatmul.mubr.f32.gmra.mrb[0].mxu0 %v2237
    %v2338 = vpop.f32.mrb[0].mxu0
    %v2339 = vadd.f32 0.0, %v2338
    %v2340 = vpop.f32.mrb[0].mxu0
    %2341 = vmatprep.mubr.f32.mxu0 0.0
    %2342 = vmatmul.mubr.f32.gmra.mrb[0].mxu0 %v2240
    %v2343 = vpop.f32.mrb[0].mxu0
    %v2344 = vadd.f32 0.0, %v2343
    %v2345 = vpop.f32.mrb[0].mxu0
    %2346 = vdwg.mxu0
    %v2348 = vlaneseq
    %v2349 = vshrl.u32 %v2348, 7
    %v2350 = vsub.s32 0, %v2349
    %v2351 = vrot.slane %v2212, %v2350
    %v2353 = vadd.f32 %v2351, %v2309
    %v2354 = vadd.f32 %v2351, %v2314
    %v2355 = vadd.f32 %v2351, %v2319
    %v2356 = vadd.f32 %v2351, %v2324
    %v2357 = vadd.f32 %v2351, %v2329
    %v2358 = vadd.f32 %v2351, %v2334
    %v2359 = vadd.f32 %v2351, %v2339
    %v2360 = vadd.f32 %v2351, %v2344
    %2361 = vmatprep.subr.mxu0 0.0
    %2362 = vmatpush1.msra.mxu0 %v2213
    %2363 = vmatprep.subr.mxu0 0.0
    %2364 = vmatpush1.msra.mxu0 %v2214
    %2365 = vmatprep.subr.mxu0 0.0
    %2366 = vmatpush1.msra.mxu0 %v2215
    %2367 = vmatprep.subr.mxu0 0.0
    %2368 = vmatpush1.msra.mxu0 %v2216
    %2369 = vmatprep.subr.mxu0 0.0
    %2370 = vmatpush1.msra.mxu0 0.0
    %2371 = vmatprep.subr.mxu0 0.0
    %2372 = vmatpush1.msra.mxu0 0.0
    %2373 = vmatprep.subr.mxu0 0.0
    %2374 = vmatpush1.msra.mxu0 0.0
    %2375 = vmatprep.subr.mxu0 0.0
    %2376 = vmatpush1.msra.mxu0 0.0
    %2377 = vmatprep.subr.mxu0 0.0
    %2378 = vmatpush1.msra.mxu0 0.0
    %2379 = vmatprep.subr.mxu0 0.0
    %2380 = vmatpush1.msra.mxu0 0.0
    %2381 = vmatprep.subr.mxu0 0.0
    %2382 = vmatpush1.msra.mxu0 0.0
    %2383 = vmatprep.subr.mxu0 0.0
    %2384 = vmatpush1.msra.mxu0 0.0
    %2385 = vmatprep.subr.mxu0 0.0
    %2386 = vmatpush1.msra.mxu0 0.0
    %2387 = vmatprep.subr.mxu0 0.0
    %2388 = vmatpush1.msra.mxu0 0.0
    %2389 = vmatprep.subr.mxu0 0.0
    %2390 = vmatpush1.msra.mxu0 0.0
    %2391 = vmatprep.subr.mxu0 0.0
    %2392 = vmatpush1.msra.mxu0 0.0
    %2393 = vmatprep.subr.mxu0 0.0
    %2394 = vmatpush1.msra.mxu0 0.0
    %2395 = vmatprep.subr.mxu0 0.0
    %2396 = vmatpush1.msra.mxu0 0.0
    %2397 = vmatprep.subr.mxu0 0.0
    %2398 = vmatpush1.msra.mxu0 0.0
    %2399 = vmatprep.subr.mxu0 0.0
    %2400 = vmatpush1.msra.mxu0 0.0
    %2401 = vmatprep.subr.mxu0 0.0
    %2402 = vmatpush1.msra.mxu0 0.0
    %2403 = vmatprep.subr.mxu0 0.0
    %2404 = vmatpush1.msra.mxu0 0.0
    %2405 = vmatprep.subr.mxu0 0.0
    %2406 = vmatpush1.msra.mxu0 0.0
    %2407 = vmatprep.subr.mxu0 0.0
    %2408 = vmatpush1.msra.mxu0 0.0
    %2409 = vmatprep.subr.mxu0 0.0
    %2410 = vmatpush1.msra.mxu0 0.0
    %2411 = vmatprep.subr.mxu0 0.0
    %2412 = vmatpush1.msra.mxu0 0.0
    %2413 = vmatprep.subr.mxu0 0.0
    %2414 = vmatpush1.msra.mxu0 0.0
    %2415 = vmatprep.subr.mxu0 0.0
    %2416 = vmatpush1.msra.mxu0 0.0
    %2417 = vmatprep.subr.mxu0 0.0
    %2418 = vmatpush1.msra.mxu0 0.0
    %2419 = vmatprep.subr.mxu0 0.0
    %2420 = vmatpush1.msra.mxu0 0.0
    %2421 = vmatprep.subr.mxu0 0.0
    %2422 = vmatpush1.msra.mxu0 0.0
    %2423 = vmatprep.subr.mxu0 0.0
    %2424 = vmatpush1.msra.mxu0 0.0
    %2425 = vmatprep.mubr.f32.mxu0 0.0
    %2426 = vmatmul.mubr.f32.gmra.mrb[0].mxu0 %v2219
    %v2427 = vpop.f32.mrb[0].mxu0
    %v2428 = vadd.f32 0.0, %v2427
    %v2429 = vpop.f32.mrb[0].mxu0
    %2430 = vmatprep.mubr.f32.mxu0 0.0
    %2431 = vmatmul.mubr.f32.gmra.mrb[0].mxu0 %v2222
    %v2432 = vpop.f32.mrb[0].mxu0
    %v2433 = vadd.f32 0.0, %v2432
    %v2434 = vpop.f32.mrb[0].mxu0
    %2435 = vmatprep.mubr.f32.mxu0 0.0
    %2436 = vmatmul.mubr.f32.gmra.mrb[0].mxu0 %v2225
    %v2437 = vpop.f32.mrb[0].mxu0
    %v2438 = vadd.f32 0.0, %v2437
    %v2439 = vpop.f32.mrb[0].mxu0
    %2440 = vmatprep.mubr.f32.mxu0 0.0
    %2441 = vmatmul.mubr.f32.gmra.mrb[0].mxu0 %v2228
    %v2442 = vpop.f32.mrb[0].mxu0
    %v2443 = vadd.f32 0.0, %v2442
    %v2444 = vpop.f32.mrb[0].mxu0
    %2445 = vmatprep.mubr.f32.mxu0 0.0
    %2446 = vmatmul.mubr.f32.gmra.mrb[0].mxu0 %v2231
    %v2447 = vpop.f32.mrb[0].mxu0
    %v2448 = vadd.f32 0.0, %v2447
    %v2449 = vpop.f32.mrb[0].mxu0
    %2450 = vmatprep.mubr.f32.mxu0 0.0
    %2451 = vmatmul.mubr.f32.gmra.mrb[0].mxu0 %v2234
    %v2452 = vpop.f32.mrb[0].mxu0
    %v2453 = vadd.f32 0.0, %v2452
    %v2454 = vpop.f32.mrb[0].mxu0
    %2455 = vmatprep.mubr.f32.mxu0 0.0
    %2456 = vmatmul.mubr.f32.gmra.mrb[0].mxu0 %v2237
    %v2457 = vpop.f32.mrb[0].mxu0
    %v2458 = vadd.f32 0.0, %v2457
    %v2459 = vpop.f32.mrb[0].mxu0
    %2460 = vmatprep.mubr.f32.mxu0 0.0
    %2461 = vmatmul.mubr.f32.gmra.mrb[0].mxu0 %v2240
    %v2462 = vpop.f32.mrb[0].mxu0
    %v2463 = vadd.f32 0.0, %v2462
    %v2464 = vpop.f32.mrb[0].mxu0
    %2465 = vdwg.mxu0
    %v2467 = vlaneseq
    %v2468 = vshrl.u32 %v2467, 7
    %v2469 = vsub.s32 0, %v2468
    %v2470 = vrot.slane %v2217, %v2469
    %v2472 = vadd.f32 %v2470, %v2428
    %v2473 = vadd.f32 %v2470, %v2433
    %v2474 = vadd.f32 %v2470, %v2438
    %v2475 = vadd.f32 %v2470, %v2443
    %v2476 = vadd.f32 %v2470, %v2448
    %v2477 = vadd.f32 %v2470, %v2453
    %v2478 = vadd.f32 %v2470, %v2458
    %v2479 = vadd.f32 %v2470, %v2463
    %2480 = vmatprep.subr.mxu0 0.0
    %2481 = vmatpush1.msra.mxu0 %v2472
    %2482 = vmatprep.subr.mxu0 0.0
    %2483 = vmatpush1.msra.mxu0 %v2473
    %2484 = vmatprep.subr.mxu0 0.0
    %2485 = vmatpush1.msra.mxu0 %v2474
    %2486 = vmatprep.subr.mxu0 0.0
    %2487 = vmatpush1.msra.mxu0 %v2475
    %2488 = vmatprep.subr.mxu0 0.0
    %2489 = vmatpush1.msra.mxu0 %v2476
    %2490 = vmatprep.subr.mxu0 0.0
    %2491 = vmatpush1.msra.mxu0 %v2477
    %2492 = vmatprep.subr.mxu0 0.0
    %2493 = vmatpush1.msra.mxu0 %v2478
    %2494 = vmatprep.subr.mxu0 0.0
    %2495 = vmatpush1.msra.mxu0 %v2479
    %2496 = vmatprep.subr.mxu0 0.0
    %2497 = vmatpush1.msra.mxu0 0.0
    %2498 = vmatprep.subr.mxu0 0.0
    %2499 = vmatpush1.msra.mxu0 0.0
    %2500 = vmatprep.subr.mxu0 0.0
    %2501 = vmatpush1.msra.mxu0 0.0
    %2502 = vmatprep.subr.mxu0 0.0
    %2503 = vmatpush1.msra.mxu0 0.0
    %2504 = vmatprep.subr.mxu0 0.0
    %2505 = vmatpush1.msra.mxu0 0.0
    %2506 = vmatprep.subr.mxu0 0.0
    %2507 = vmatpush1.msra.mxu0 0.0
    %2508 = vmatprep.subr.mxu0 0.0
    %2509 = vmatpush1.msra.mxu0 0.0
    %2510 = vmatprep.subr.mxu0 0.0
    %2511 = vmatpush1.msra.mxu0 0.0
    %2512 = vmatprep.subr.mxu0 0.0
    %2513 = vmatpush1.msra.mxu0 0.0
    %2514 = vmatprep.subr.mxu0 0.0
    %2515 = vmatpush1.msra.mxu0 0.0
    %2516 = vmatprep.subr.mxu0 0.0
    %2517 = vmatpush1.msra.mxu0 0.0
    %2518 = vmatprep.subr.mxu0 0.0
    %2519 = vmatpush1.msra.mxu0 0.0
    %2520 = vmatprep.subr.mxu0 0.0
    %2521 = vmatpush1.msra.mxu0 0.0
    %2522 = vmatprep.subr.mxu0 0.0
    %2523 = vmatpush1.msra.mxu0 0.0
    %2524 = vmatprep.subr.mxu0 0.0
    %2525 = vmatpush1.msra.mxu0 0.0
    %2526 = vmatprep.subr.mxu0 0.0
    %2527 = vmatpush1.msra.mxu0 0.0
    %2528 = vmatprep.subr.mxu0 0.0
    %2529 = vmatpush1.msra.mxu0 0.0
    %2530 = vmatprep.subr.mxu0 0.0
    %2531 = vmatpush1.msra.mxu0 0.0
    %2532 = vmatprep.subr.mxu0 0.0
    %2533 = vmatpush1.msra.mxu0 0.0
    %2534 = vmatprep.subr.mxu0 0.0
    %2535 = vmatpush1.msra.mxu0 0.0
    %2536 = vmatprep.subr.mxu0 0.0
    %2537 = vmatpush1.msra.mxu0 0.0
    %2538 = vmatprep.subr.mxu0 0.0
    %2539 = vmatpush1.msra.mxu0 0.0
    %2540 = vmatprep.subr.mxu0 0.0
    %2541 = vmatpush1.msra.mxu0 0.0
    %2542 = vmatprep.subr.mxu0 0.0
    %2543 = vmatpush1.msra.mxu0 0.0
    %2544 = vmatprep.mubr.f32.mxu0 0.0
    %2545 = vmatmul.mubr.f32.gmra.mrb[0].mxu0 %v1305
    %v2546 = vpop.f32.mrb[0].mxu0
    %v2547 = vadd.f32 0.0, %v2546
    %v2548 = vpop.f32.mrb[0].mxu0
    %2549 = vmatprep.mubr.f32.mxu0 0.0
    %2550 = vmatmul.mubr.f32.gmra.mrb[0].mxu0 %v1308
    %v2551 = vpop.f32.mrb[0].mxu0
    %v2552 = vadd.f32 0.0, %v2551
    %v2553 = vpop.f32.mrb[0].mxu0
    %2554 = vmatprep.mubr.f32.mxu0 0.0
    %2555 = vmatmul.mubr.f32.gmra.mrb[0].mxu0 %v1311
    %v2556 = vpop.f32.mrb[0].mxu0
    %v2557 = vadd.f32 0.0, %v2556
    %v2558 = vpop.f32.mrb[0].mxu0
    %2559 = vmatprep.mubr.f32.mxu0 0.0
    %2560 = vmatmul.mubr.f32.gmra.mrb[0].mxu0 %v1314
    %v2561 = vpop.f32.mrb[0].mxu0
    %v2562 = vadd.f32 0.0, %v2561
    %v2563 = vpop.f32.mrb[0].mxu0
    %2564 = vmatprep.mubr.f32.mxu0 0.0
    %2565 = vmatmul.mubr.f32.gmra.mrb[0].mxu0 %v1317
    %v2566 = vpop.f32.mrb[0].mxu0
    %v2567 = vadd.f32 0.0, %v2566
    %v2568 = vpop.f32.mrb[0].mxu0
    %2569 = vmatprep.mubr.f32.mxu0 0.0
    %2570 = vmatmul.mubr.f32.gmra.mrb[0].mxu0 %v1320
    %v2571 = vpop.f32.mrb[0].mxu0
    %v2572 = vadd.f32 0.0, %v2571
    %v2573 = vpop.f32.mrb[0].mxu0
    %2574 = vmatprep.mubr.f32.mxu0 0.0
    %2575 = vmatmul.mubr.f32.gmra.mrb[0].mxu0 %v1323
    %v2576 = vpop.f32.mrb[0].mxu0
    %v2577 = vadd.f32 0.0, %v2576
    %v2578 = vpop.f32.mrb[0].mxu0
    %2579 = vmatprep.mubr.f32.mxu0 0.0
    %2580 = vmatmul.mubr.f32.gmra.mrb[0].mxu0 %v1326
    %v2581 = vpop.f32.mrb[0].mxu0
    %v2582 = vadd.f32 0.0, %v2581
    %v2583 = vpop.f32.mrb[0].mxu0
    %2584 = vdwg.mxu0
    %v2585 = vadd.f32 %v2353, %v2547
    %v2586 = vadd.f32 %v2354, %v2552
    %v2587 = vadd.f32 %v2355, %v2557
    %v2588 = vadd.f32 %v2356, %v2562
    %v2589 = vadd.f32 %v2357, %v2567
    %v2590 = vadd.f32 %v2358, %v2572
    %v2591 = vadd.f32 %v2359, %v2577
    %v2592 = vadd.f32 %v2360, %v2582
    %v2593 = vld [vmem:[%s55] sm:$0xff]
    %v2594 = vld [vmem:[%s55 + $0x8] sm:$0xff]
    %v2595 = vld [vmem:[%s55 + $0x10] sm:$0xff]
    %v2596 = vld [vmem:[%s55 + $0x18] sm:$0xff]
    %v2597 = vld [vmem:[%s57] sm:$0x1]
    %v2598 = vld [vmem:[%s59] sm:$0xff]
    %v2599 = vld [vmem:[%s59 + $0x8] sm:$0xff]
    %v2600 = vld [vmem:[%s59 + $0x10] sm:$0xff]
    %v2601 = vld [vmem:[%s59 + $0x18] sm:$0xff]
    %v2602 = vld [vmem:[%s61] sm:$0x1]
    %v2603 = vmax.f32 %v2585, 0.0
    %v2604 = vmax.f32 %v2586, 0.0
    %v2605 = vmax.f32 %v2587, 0.0
    %v2606 = vmax.f32 %v2588, 0.0
    %v2607 = vmax.f32 %v2589, 0.0
    %v2608 = vmax.f32 %v2590, 0.0
    %v2609 = vmax.f32 %v2591, 0.0
    %v2610 = vmax.f32 %v2592, 0.0
    %v2612 = vsel %vm532, %v2603, 0
    %v2615 = vsel %vm532, %v2604, 0
    %v2618 = vsel %vm532, %v2605, 0
    %v2621 = vsel %vm532, %v2606, 0
    %v2624 = vsel %vm532, %v2607, 0
    %v2627 = vsel %vm532, %v2608, 0
    %v2630 = vsel %vm532, %v2609, 0
    %v2633 = vsel %vm532, %v2610, 0
    %2635 = vmatprep.subr.mxu0 0.0
    %2636 = vmatpush1.msra.mxu0 %v2593
    %2637 = vmatprep.subr.mxu0 0.0
    %2638 = vmatpush1.msra.mxu0 %v2594
    %2639 = vmatprep.subr.mxu0 0.0
    %2640 = vmatpush1.msra.mxu0 %v2595
    %2641 = vmatprep.subr.mxu0 0.0
    %2642 = vmatpush1.msra.mxu0 %v2596
    %2643 = vmatprep.subr.mxu0 0.0
    %2644 = vmatpush1.msra.mxu0 0.0
    %2645 = vmatprep.subr.mxu0 0.0
    %2646 = vmatpush1.msra.mxu0 0.0
    %2647 = vmatprep.subr.mxu0 0.0
    %2648 = vmatpush1.msra.mxu0 0.0
    %2649 = vmatprep.subr.mxu0 0.0
    %2650 = vmatpush1.msra.mxu0 0.0
    %2651 = vmatprep.subr.mxu0 0.0
    %2652 = vmatpush1.msra.mxu0 0.0
    %2653 = vmatprep.subr.mxu0 0.0
    %2654 = vmatpush1.msra.mxu0 0.0
    %2655 = vmatprep.subr.mxu0 0.0
    %2656 = vmatpush1.msra.mxu0 0.0
    %2657 = vmatprep.subr.mxu0 0.0
    %2658 = vmatpush1.msra.mxu0 0.0
    %2659 = vmatprep.subr.mxu0 0.0
    %2660 = vmatpush1.msra.mxu0 0.0
    %2661 = vmatprep.subr.mxu0 0.0
    %2662 = vmatpush1.msra.mxu0 0.0
    %2663 = vmatprep.subr.mxu0 0.0
    %2664 = vmatpush1.msra.mxu0 0.0
    %2665 = vmatprep.subr.mxu0 0.0
    %2666 = vmatpush1.msra.mxu0 0.0
    %2667 = vmatprep.subr.mxu0 0.0
    %2668 = vmatpush1.msra.mxu0 0.0
    %2669 = vmatprep.subr.mxu0 0.0
    %2670 = vmatpush1.msra.mxu0 0.0
    %2671 = vmatprep.subr.mxu0 0.0
    %2672 = vmatpush1.msra.mxu0 0.0
    %2673 = vmatprep.subr.mxu0 0.0
    %2674 = vmatpush1.msra.mxu0 0.0
    %2675 = vmatprep.subr.mxu0 0.0
    %2676 = vmatpush1.msra.mxu0 0.0
    %2677 = vmatprep.subr.mxu0 0.0
    %2678 = vmatpush1.msra.mxu0 0.0
    %2679 = vmatprep.subr.mxu0 0.0
    %2680 = vmatpush1.msra.mxu0 0.0
    %2681 = vmatprep.subr.mxu0 0.0
    %2682 = vmatpush1.msra.mxu0 0.0
    %2683 = vmatprep.subr.mxu0 0.0
    %2684 = vmatpush1.msra.mxu0 0.0
    %2685 = vmatprep.subr.mxu0 0.0
    %2686 = vmatpush1.msra.mxu0 0.0
    %2687 = vmatprep.subr.mxu0 0.0
    %2688 = vmatpush1.msra.mxu0 0.0
    %2689 = vmatprep.subr.mxu0 0.0
    %2690 = vmatpush1.msra.mxu0 0.0
    %2691 = vmatprep.subr.mxu0 0.0
    %2692 = vmatpush1.msra.mxu0 0.0
    %2693 = vmatprep.subr.mxu0 0.0
    %2694 = vmatpush1.msra.mxu0 0.0
    %2695 = vmatprep.subr.mxu0 0.0
    %2696 = vmatpush1.msra.mxu0 0.0
    %2697 = vmatprep.subr.mxu0 0.0
    %2698 = vmatpush1.msra.mxu0 0.0
    %2699 = vmatprep.mubr.f32.mxu0 0.0
    %2700 = vmatmul.mubr.f32.gmra.mrb[0].mxu0 %v2612
    %v2701 = vpop.f32.mrb[0].mxu0
    %v2702 = vadd.f32 0.0, %v2701
    %v2703 = vpop.f32.mrb[0].mxu0
    %2704 = vmatprep.mubr.f32.mxu0 0.0
    %2705 = vmatmul.mubr.f32.gmra.mrb[0].mxu0 %v2615
    %v2706 = vpop.f32.mrb[0].mxu0
    %v2707 = vadd.f32 0.0, %v2706
    %v2708 = vpop.f32.mrb[0].mxu0
    %2709 = vmatprep.mubr.f32.mxu0 0.0
    %2710 = vmatmul.mubr.f32.gmra.mrb[0].mxu0 %v2618
    %v2711 = vpop.f32.mrb[0].mxu0
    %v2712 = vadd.f32 0.0, %v2711
    %v2713 = vpop.f32.mrb[0].mxu0
    %2714 = vmatprep.mubr.f32.mxu0 0.0
    %2715 = vmatmul.mubr.f32.gmra.mrb[0].mxu0 %v2621
    %v2716 = vpop.f32.mrb[0].mxu0
    %v2717 = vadd.f32 0.0, %v2716
    %v2718 = vpop.f32.mrb[0].mxu0
    %2719 = vmatprep.mubr.f32.mxu0 0.0
    %2720 = vmatmul.mubr.f32.gmra.mrb[0].mxu0 %v2624
    %v2721 = vpop.f32.mrb[0].mxu0
    %v2722 = vadd.f32 0.0, %v2721
    %v2723 = vpop.f32.mrb[0].mxu0
    %2724 = vmatprep.mubr.f32.mxu0 0.0
    %2725 = vmatmul.mubr.f32.gmra.mrb[0].mxu0 %v2627
    %v2726 = vpop.f32.mrb[0].mxu0
    %v2727 = vadd.f32 0.0, %v2726
    %v2728 = vpop.f32.mrb[0].mxu0
    %2729 = vmatprep.mubr.f32.mxu0 0.0
    %2730 = vmatmul.mubr.f32.gmra.mrb[0].mxu0 %v2630
    %v2731 = vpop.f32.mrb[0].mxu0
    %v2732 = vadd.f32 0.0, %v2731
    %v2733 = vpop.f32.mrb[0].mxu0
    %2734 = vmatprep.mubr.f32.mxu0 0.0
    %2735 = vmatmul.mubr.f32.gmra.mrb[0].mxu0 %v2633
    %v2736 = vpop.f32.mrb[0].mxu0
    %v2737 = vadd.f32 0.0, %v2736
    %v2738 = vpop.f32.mrb[0].mxu0
    %2739 = vdwg.mxu0
    %v2741 = vlaneseq
    %v2742 = vshrl.u32 %v2741, 7
    %v2743 = vsub.s32 0, %v2742
    %v2744 = vrot.slane %v2597, %v2743
    %v2746 = vadd.f32 %v2744, %v2702
    %v2747 = vadd.f32 %v2744, %v2707
    %v2748 = vadd.f32 %v2744, %v2712
    %v2749 = vadd.f32 %v2744, %v2717
    %v2750 = vadd.f32 %v2744, %v2722
    %v2751 = vadd.f32 %v2744, %v2727
    %v2752 = vadd.f32 %v2744, %v2732
    %v2753 = vadd.f32 %v2744, %v2737
    %2754 = vmatprep.subr.mxu0 0.0
    %2755 = vmatpush1.msra.mxu0 %v2598
    %2756 = vmatprep.subr.mxu0 0.0
    %2757 = vmatpush1.msra.mxu0 %v2599
    %2758 = vmatprep.subr.mxu0 0.0
    %2759 = vmatpush1.msra.mxu0 %v2600
    %2760 = vmatprep.subr.mxu0 0.0
    %2761 = vmatpush1.msra.mxu0 %v2601
    %2762 = vmatprep.subr.mxu0 0.0
    %2763 = vmatpush1.msra.mxu0 0.0
    %2764 = vmatprep.subr.mxu0 0.0
    %2765 = vmatpush1.msra.mxu0 0.0
    %2766 = vmatprep.subr.mxu0 0.0
    %2767 = vmatpush1.msra.mxu0 0.0
    %2768 = vmatprep.subr.mxu0 0.0
    %2769 = vmatpush1.msra.mxu0 0.0
    %2770 = vmatprep.subr.mxu0 0.0
    %2771 = vmatpush1.msra.mxu0 0.0
    %2772 = vmatprep.subr.mxu0 0.0
    %2773 = vmatpush1.msra.mxu0 0.0
    %2774 = vmatprep.subr.mxu0 0.0
    %2775 = vmatpush1.msra.mxu0 0.0
    %2776 = vmatprep.subr.mxu0 0.0
    %2777 = vmatpush1.msra.mxu0 0.0
    %2778 = vmatprep.subr.mxu0 0.0
    %2779 = vmatpush1.msra.mxu0 0.0
    %2780 = vmatprep.subr.mxu0 0.0
    %2781 = vmatpush1.msra.mxu0 0.0
    %2782 = vmatprep.subr.mxu0 0.0
    %2783 = vmatpush1.msra.mxu0 0.0
    %2784 = vmatprep.subr.mxu0 0.0
    %2785 = vmatpush1.msra.mxu0 0.0
    %2786 = vmatprep.subr.mxu0 0.0
    %2787 = vmatpush1.msra.mxu0 0.0
    %2788 = vmatprep.subr.mxu0 0.0
    %2789 = vmatpush1.msra.mxu0 0.0
    %2790 = vmatprep.subr.mxu0 0.0
    %2791 = vmatpush1.msra.mxu0 0.0
    %2792 = vmatprep.subr.mxu0 0.0
    %2793 = vmatpush1.msra.mxu0 0.0
    %2794 = vmatprep.subr.mxu0 0.0
    %2795 = vmatpush1.msra.mxu0 0.0
    %2796 = vmatprep.subr.mxu0 0.0
    %2797 = vmatpush1.msra.mxu0 0.0
    %2798 = vmatprep.subr.mxu0 0.0
    %2799 = vmatpush1.msra.mxu0 0.0
    %2800 = vmatprep.subr.mxu0 0.0
    %2801 = vmatpush1.msra.mxu0 0.0
    %2802 = vmatprep.subr.mxu0 0.0
    %2803 = vmatpush1.msra.mxu0 0.0
    %2804 = vmatprep.subr.mxu0 0.0
    %2805 = vmatpush1.msra.mxu0 0.0
    %2806 = vmatprep.subr.mxu0 0.0
    %2807 = vmatpush1.msra.mxu0 0.0
    %2808 = vmatprep.subr.mxu0 0.0
    %2809 = vmatpush1.msra.mxu0 0.0
    %2810 = vmatprep.subr.mxu0 0.0
    %2811 = vmatpush1.msra.mxu0 0.0
    %2812 = vmatprep.subr.mxu0 0.0
    %2813 = vmatpush1.msra.mxu0 0.0
    %2814 = vmatprep.subr.mxu0 0.0
    %2815 = vmatpush1.msra.mxu0 0.0
    %2816 = vmatprep.subr.mxu0 0.0
    %2817 = vmatpush1.msra.mxu0 0.0
    %2818 = vmatprep.mubr.f32.mxu0 0.0
    %2819 = vmatmul.mubr.f32.gmra.mrb[0].mxu0 %v2612
    %v2820 = vpop.f32.mrb[0].mxu0
    %v2821 = vadd.f32 0.0, %v2820
    %v2822 = vpop.f32.mrb[0].mxu0
    %2823 = vmatprep.mubr.f32.mxu0 0.0
    %2824 = vmatmul.mubr.f32.gmra.mrb[0].mxu0 %v2615
    %v2825 = vpop.f32.mrb[0].mxu0
    %v2826 = vadd.f32 0.0, %v2825
    %v2827 = vpop.f32.mrb[0].mxu0
    %2828 = vmatprep.mubr.f32.mxu0 0.0
    %2829 = vmatmul.mubr.f32.gmra.mrb[0].mxu0 %v2618
    %v2830 = vpop.f32.mrb[0].mxu0
    %v2831 = vadd.f32 0.0, %v2830
    %v2832 = vpop.f32.mrb[0].mxu0
    %2833 = vmatprep.mubr.f32.mxu0 0.0
    %2834 = vmatmul.mubr.f32.gmra.mrb[0].mxu0 %v2621
    %v2835 = vpop.f32.mrb[0].mxu0
    %v2836 = vadd.f32 0.0, %v2835
    %v2837 = vpop.f32.mrb[0].mxu0
    %2838 = vmatprep.mubr.f32.mxu0 0.0
    %2839 = vmatmul.mubr.f32.gmra.mrb[0].mxu0 %v2624
    %v2840 = vpop.f32.mrb[0].mxu0
    %v2841 = vadd.f32 0.0, %v2840
    %v2842 = vpop.f32.mrb[0].mxu0
    %2843 = vmatprep.mubr.f32.mxu0 0.0
    %2844 = vmatmul.mubr.f32.gmra.mrb[0].mxu0 %v2627
    %v2845 = vpop.f32.mrb[0].mxu0
    %v2846 = vadd.f32 0.0, %v2845
    %v2847 = vpop.f32.mrb[0].mxu0
    %2848 = vmatprep.mubr.f32.mxu0 0.0
    %2849 = vmatmul.mubr.f32.gmra.mrb[0].mxu0 %v2630
    %v2850 = vpop.f32.mrb[0].mxu0
    %v2851 = vadd.f32 0.0, %v2850
    %v2852 = vpop.f32.mrb[0].mxu0
    %2853 = vmatprep.mubr.f32.mxu0 0.0
    %2854 = vmatmul.mubr.f32.gmra.mrb[0].mxu0 %v2633
    %v2855 = vpop.f32.mrb[0].mxu0
    %v2856 = vadd.f32 0.0, %v2855
    %v2857 = vpop.f32.mrb[0].mxu0
    %2858 = vdwg.mxu0
    %v2860 = vlaneseq
    %v2861 = vshrl.u32 %v2860, 7
    %v2862 = vsub.s32 0, %v2861
    %v2863 = vrot.slane %v2602, %v2862
    %v2865 = vadd.f32 %v2863, %v2821
    %v2866 = vadd.f32 %v2863, %v2826
    %v2867 = vadd.f32 %v2863, %v2831
    %v2868 = vadd.f32 %v2863, %v2836
    %v2869 = vadd.f32 %v2863, %v2841
    %v2870 = vadd.f32 %v2863, %v2846
    %v2871 = vadd.f32 %v2863, %v2851
    %v2872 = vadd.f32 %v2863, %v2856
    %2873 = vmatprep.subr.mxu0 0.0
    %2874 = vmatpush1.msra.mxu0 %v2865
    %2875 = vmatprep.subr.mxu0 0.0
    %2876 = vmatpush1.msra.mxu0 %v2866
    %2877 = vmatprep.subr.mxu0 0.0
    %2878 = vmatpush1.msra.mxu0 %v2867
    %2879 = vmatprep.subr.mxu0 0.0
    %2880 = vmatpush1.msra.mxu0 %v2868
    %2881 = vmatprep.subr.mxu0 0.0
    %2882 = vmatpush1.msra.mxu0 %v2869
    %2883 = vmatprep.subr.mxu0 0.0
    %2884 = vmatpush1.msra.mxu0 %v2870
    %2885 = vmatprep.subr.mxu0 0.0
    %2886 = vmatpush1.msra.mxu0 %v2871
    %2887 = vmatprep.subr.mxu0 0.0
    %2888 = vmatpush1.msra.mxu0 %v2872
    %2889 = vmatprep.subr.mxu0 0.0
    %2890 = vmatpush1.msra.mxu0 0.0
    %2891 = vmatprep.subr.mxu0 0.0
    %2892 = vmatpush1.msra.mxu0 0.0
    %2893 = vmatprep.subr.mxu0 0.0
    %2894 = vmatpush1.msra.mxu0 0.0
    %2895 = vmatprep.subr.mxu0 0.0
    %2896 = vmatpush1.msra.mxu0 0.0
    %2897 = vmatprep.subr.mxu0 0.0
    %2898 = vmatpush1.msra.mxu0 0.0
    %2899 = vmatprep.subr.mxu0 0.0
    %2900 = vmatpush1.msra.mxu0 0.0
    %2901 = vmatprep.subr.mxu0 0.0
    %2902 = vmatpush1.msra.mxu0 0.0
    %2903 = vmatprep.subr.mxu0 0.0
    %2904 = vmatpush1.msra.mxu0 0.0
    %2905 = vmatprep.subr.mxu0 0.0
    %2906 = vmatpush1.msra.mxu0 0.0
    %2907 = vmatprep.subr.mxu0 0.0
    %2908 = vmatpush1.msra.mxu0 0.0
    %2909 = vmatprep.subr.mxu0 0.0
    %2910 = vmatpush1.msra.mxu0 0.0
    %2911 = vmatprep.subr.mxu0 0.0
    %2912 = vmatpush1.msra.mxu0 0.0
    %2913 = vmatprep.subr.mxu0 0.0
    %2914 = vmatpush1.msra.mxu0 0.0
    %2915 = vmatprep.subr.mxu0 0.0
    %2916 = vmatpush1.msra.mxu0 0.0
    %2917 = vmatprep.subr.mxu0 0.0
    %2918 = vmatpush1.msra.mxu0 0.0
    %2919 = vmatprep.subr.mxu0 0.0
    %2920 = vmatpush1.msra.mxu0 0.0
    %2921 = vmatprep.subr.mxu0 0.0
    %2922 = vmatpush1.msra.mxu0 0.0
    %2923 = vmatprep.subr.mxu0 0.0
    %2924 = vmatpush1.msra.mxu0 0.0
    %2925 = vmatprep.subr.mxu0 0.0
    %2926 = vmatpush1.msra.mxu0 0.0
    %2927 = vmatprep.subr.mxu0 0.0
    %2928 = vmatpush1.msra.mxu0 0.0
    %2929 = vmatprep.subr.mxu0 0.0
    %2930 = vmatpush1.msra.mxu0 0.0
    %2931 = vmatprep.subr.mxu0 0.0
    %2932 = vmatpush1.msra.mxu0 0.0
    %2933 = vmatprep.subr.mxu0 0.0
    %2934 = vmatpush1.msra.mxu0 0.0
    %2935 = vmatprep.subr.mxu0 0.0
    %2936 = vmatpush1.msra.mxu0 0.0
    %2937 = vmatprep.mubr.f32.mxu0 0.0
    %2938 = vmatmul.mubr.f32.gmra.mrb[0].mxu0 %v1305
    %v2939 = vpop.f32.mrb[0].mxu0
    %v2940 = vadd.f32 0.0, %v2939
    %v2941 = vpop.f32.mrb[0].mxu0
    %2942 = vmatprep.mubr.f32.mxu0 0.0
    %2943 = vmatmul.mubr.f32.gmra.mrb[0].mxu0 %v1308
    %v2944 = vpop.f32.mrb[0].mxu0
    %v2945 = vadd.f32 0.0, %v2944
    %v2946 = vpop.f32.mrb[0].mxu0
    %2947 = vmatprep.mubr.f32.mxu0 0.0
    %2948 = vmatmul.mubr.f32.gmra.mrb[0].mxu0 %v1311
    %v2949 = vpop.f32.mrb[0].mxu0
    %v2950 = vadd.f32 0.0, %v2949
    %v2951 = vpop.f32.mrb[0].mxu0
    %2952 = vmatprep.mubr.f32.mxu0 0.0
    %2953 = vmatmul.mubr.f32.gmra.mrb[0].mxu0 %v1314
    %v2954 = vpop.f32.mrb[0].mxu0
    %v2955 = vadd.f32 0.0, %v2954
    %v2956 = vpop.f32.mrb[0].mxu0
    %2957 = vmatprep.mubr.f32.mxu0 0.0
    %2958 = vmatmul.mubr.f32.gmra.mrb[0].mxu0 %v1317
    %v2959 = vpop.f32.mrb[0].mxu0
    %v2960 = vadd.f32 0.0, %v2959
    %v2961 = vpop.f32.mrb[0].mxu0
    %2962 = vmatprep.mubr.f32.mxu0 0.0
    %2963 = vmatmul.mubr.f32.gmra.mrb[0].mxu0 %v1320
    %v2964 = vpop.f32.mrb[0].mxu0
    %v2965 = vadd.f32 0.0, %v2964
    %v2966 = vpop.f32.mrb[0].mxu0
    %2967 = vmatprep.mubr.f32.mxu0 0.0
    %2968 = vmatmul.mubr.f32.gmra.mrb[0].mxu0 %v1323
    %v2969 = vpop.f32.mrb[0].mxu0
    %v2970 = vadd.f32 0.0, %v2969
    %v2971 = vpop.f32.mrb[0].mxu0
    %2972 = vmatprep.mubr.f32.mxu0 0.0
    %2973 = vmatmul.mubr.f32.gmra.mrb[0].mxu0 %v1326
    %v2974 = vpop.f32.mrb[0].mxu0
    %v2975 = vadd.f32 0.0, %v2974
    %v2976 = vpop.f32.mrb[0].mxu0
    %2977 = vdwg.mxu0
    %v2978 = vadd.f32 %v2746, %v2940
    %v2979 = vadd.f32 %v2747, %v2945
    %v2980 = vadd.f32 %v2748, %v2950
    %v2981 = vadd.f32 %v2749, %v2955
    %v2982 = vadd.f32 %v2750, %v2960
    %v2983 = vadd.f32 %v2751, %v2965
    %v2984 = vadd.f32 %v2752, %v2970
    %v2985 = vadd.f32 %v2753, %v2975
    %v2986 = vadd.f32 %v2978, %v2200
    %v2987 = vadd.f32 %v2979, %v2201
    %v2988 = vadd.f32 %v2980, %v2202
    %v2989 = vadd.f32 %v2981, %v2203
    %v2990 = vadd.f32 %v2982, %v2204
    %v2991 = vadd.f32 %v2983, %v2205
    %v2992 = vadd.f32 %v2984, %v2206
    %v2993 = vadd.f32 %v2985, %v2207
    %v2994 = vld [vmem:[%s63] sm:$0xff]
    %v2995 = vld [vmem:[%s63 + $0x8] sm:$0xff]
    %v2996 = vld [vmem:[%s63 + $0x10] sm:$0xff]
    %v2997 = vld [vmem:[%s63 + $0x18] sm:$0xff]
    %v2998 = vld [vmem:[%s65] sm:$0x1]
    %v2999 = vld [vmem:[%s67] sm:$0xff]
    %v3000 = vld [vmem:[%s67 + $0x8] sm:$0xff]
    %v3001 = vld [vmem:[%s67 + $0x10] sm:$0xff]
    %v3002 = vld [vmem:[%s67 + $0x18] sm:$0xff]
    %v3003 = vld [vmem:[%s69] sm:$0x1]
    %v3005 = vsel %vm532, %v2986, 0
    %v3008 = vsel %vm532, %v2987, 0
    %v3011 = vsel %vm532, %v2988, 0
    %v3014 = vsel %vm532, %v2989, 0
    %v3017 = vsel %vm532, %v2990, 0
    %v3020 = vsel %vm532, %v2991, 0
    %v3023 = vsel %vm532, %v2992, 0
    %v3026 = vsel %vm532, %v2993, 0
    %3028 = vmatprep.subr.mxu0 0.0
    %3029 = vmatpush1.msra.mxu0 %v2994
    %3030 = vmatprep.subr.mxu0 0.0
    %3031 = vmatpush1.msra.mxu0 %v2995
    %3032 = vmatprep.subr.mxu0 0.0
    %3033 = vmatpush1.msra.mxu0 %v2996
    %3034 = vmatprep.subr.mxu0 0.0
    %3035 = vmatpush1.msra.mxu0 %v2997
    %3036 = vmatprep.subr.mxu0 0.0
    %3037 = vmatpush1.msra.mxu0 0.0
    %3038 = vmatprep.subr.mxu0 0.0
    %3039 = vmatpush1.msra.mxu0 0.0
    %3040 = vmatprep.subr.mxu0 0.0
    %3041 = vmatpush1.msra.mxu0 0.0
    %3042 = vmatprep.subr.mxu0 0.0
    %3043 = vmatpush1.msra.mxu0 0.0
    %3044 = vmatprep.subr.mxu0 0.0
    %3045 = vmatpush1.msra.mxu0 0.0
    %3046 = vmatprep.subr.mxu0 0.0
    %3047 = vmatpush1.msra.mxu0 0.0
    %3048 = vmatprep.subr.mxu0 0.0
    %3049 = vmatpush1.msra.mxu0 0.0
    %3050 = vmatprep.subr.mxu0 0.0
    %3051 = vmatpush1.msra.mxu0 0.0
    %3052 = vmatprep.subr.mxu0 0.0
    %3053 = vmatpush1.msra.mxu0 0.0
    %3054 = vmatprep.subr.mxu0 0.0
    %3055 = vmatpush1.msra.mxu0 0.0
    %3056 = vmatprep.subr.mxu0 0.0
    %3057 = vmatpush1.msra.mxu0 0.0
    %3058 = vmatprep.subr.mxu0 0.0
    %3059 = vmatpush1.msra.mxu0 0.0
    %3060 = vmatprep.subr.mxu0 0.0
    %3061 = vmatpush1.msra.mxu0 0.0
    %3062 = vmatprep.subr.mxu0 0.0
    %3063 = vmatpush1.msra.mxu0 0.0
    %3064 = vmatprep.subr.mxu0 0.0
    %3065 = vmatpush1.msra.mxu0 0.0
    %3066 = vmatprep.subr.mxu0 0.0
    %3067 = vmatpush1.msra.mxu0 0.0
    %3068 = vmatprep.subr.mxu0 0.0
    %3069 = vmatpush1.msra.mxu0 0.0
    %3070 = vmatprep.subr.mxu0 0.0
    %3071 = vmatpush1.msra.mxu0 0.0
    %3072 = vmatprep.subr.mxu0 0.0
    %3073 = vmatpush1.msra.mxu0 0.0
    %3074 = vmatprep.subr.mxu0 0.0
    %3075 = vmatpush1.msra.mxu0 0.0
    %3076 = vmatprep.subr.mxu0 0.0
    %3077 = vmatpush1.msra.mxu0 0.0
    %3078 = vmatprep.subr.mxu0 0.0
    %3079 = vmatpush1.msra.mxu0 0.0
    %3080 = vmatprep.subr.mxu0 0.0
    %3081 = vmatpush1.msra.mxu0 0.0
    %3082 = vmatprep.subr.mxu0 0.0
    %3083 = vmatpush1.msra.mxu0 0.0
    %3084 = vmatprep.subr.mxu0 0.0
    %3085 = vmatpush1.msra.mxu0 0.0
    %3086 = vmatprep.subr.mxu0 0.0
    %3087 = vmatpush1.msra.mxu0 0.0
    %3088 = vmatprep.subr.mxu0 0.0
    %3089 = vmatpush1.msra.mxu0 0.0
    %3090 = vmatprep.subr.mxu0 0.0
    %3091 = vmatpush1.msra.mxu0 0.0
    %3092 = vmatprep.mubr.f32.mxu0 0.0
    %3093 = vmatmul.mubr.f32.gmra.mrb[0].mxu0 %v3005
    %v3094 = vpop.f32.mrb[0].mxu0
    %v3095 = vadd.f32 0.0, %v3094
    %v3096 = vpop.f32.mrb[0].mxu0
    %3097 = vmatprep.mubr.f32.mxu0 0.0
    %3098 = vmatmul.mubr.f32.gmra.mrb[0].mxu0 %v3008
    %v3099 = vpop.f32.mrb[0].mxu0
    %v3100 = vadd.f32 0.0, %v3099
    %v3101 = vpop.f32.mrb[0].mxu0
    %3102 = vmatprep.mubr.f32.mxu0 0.0
    %3103 = vmatmul.mubr.f32.gmra.mrb[0].mxu0 %v3011
    %v3104 = vpop.f32.mrb[0].mxu0
    %v3105 = vadd.f32 0.0, %v3104
    %v3106 = vpop.f32.mrb[0].mxu0
    %3107 = vmatprep.mubr.f32.mxu0 0.0
    %3108 = vmatmul.mubr.f32.gmra.mrb[0].mxu0 %v3014
    %v3109 = vpop.f32.mrb[0].mxu0
    %v3110 = vadd.f32 0.0, %v3109
    %v3111 = vpop.f32.mrb[0].mxu0
    %3112 = vmatprep.mubr.f32.mxu0 0.0
    %3113 = vmatmul.mubr.f32.gmra.mrb[0].mxu0 %v3017
    %v3114 = vpop.f32.mrb[0].mxu0
    %v3115 = vadd.f32 0.0, %v3114
    %v3116 = vpop.f32.mrb[0].mxu0
    %3117 = vmatprep.mubr.f32.mxu0 0.0
    %3118 = vmatmul.mubr.f32.gmra.mrb[0].mxu0 %v3020
    %v3119 = vpop.f32.mrb[0].mxu0
    %v3120 = vadd.f32 0.0, %v3119
    %v3121 = vpop.f32.mrb[0].mxu0
    %3122 = vmatprep.mubr.f32.mxu0 0.0
    %3123 = vmatmul.mubr.f32.gmra.mrb[0].mxu0 %v3023
    %v3124 = vpop.f32.mrb[0].mxu0
    %v3125 = vadd.f32 0.0, %v3124
    %v3126 = vpop.f32.mrb[0].mxu0
    %3127 = vmatprep.mubr.f32.mxu0 0.0
    %3128 = vmatmul.mubr.f32.gmra.mrb[0].mxu0 %v3026
    %v3129 = vpop.f32.mrb[0].mxu0
    %v3130 = vadd.f32 0.0, %v3129
    %v3131 = vpop.f32.mrb[0].mxu0
    %3132 = vdwg.mxu0
    %v3134 = vlaneseq
    %v3135 = vshrl.u32 %v3134, 7
    %v3136 = vsub.s32 0, %v3135
    %v3137 = vrot.slane %v2998, %v3136
    %v3139 = vadd.f32 %v3137, %v3095
    %v3140 = vadd.f32 %v3137, %v3100
    %v3141 = vadd.f32 %v3137, %v3105
    %v3142 = vadd.f32 %v3137, %v3110
    %v3143 = vadd.f32 %v3137, %v3115
    %v3144 = vadd.f32 %v3137, %v3120
    %v3145 = vadd.f32 %v3137, %v3125
    %v3146 = vadd.f32 %v3137, %v3130
    %3147 = vmatprep.subr.mxu0 0.0
    %3148 = vmatpush1.msra.mxu0 %v2999
    %3149 = vmatprep.subr.mxu0 0.0
    %3150 = vmatpush1.msra.mxu0 %v3000
    %3151 = vmatprep.subr.mxu0 0.0
    %3152 = vmatpush1.msra.mxu0 %v3001
    %3153 = vmatprep.subr.mxu0 0.0
    %3154 = vmatpush1.msra.mxu0 %v3002
    %3155 = vmatprep.subr.mxu0 0.0
    %3156 = vmatpush1.msra.mxu0 0.0
    %3157 = vmatprep.subr.mxu0 0.0
    %3158 = vmatpush1.msra.mxu0 0.0
    %3159 = vmatprep.subr.mxu0 0.0
    %3160 = vmatpush1.msra.mxu0 0.0
    %3161 = vmatprep.subr.mxu0 0.0
    %3162 = vmatpush1.msra.mxu0 0.0
    %3163 = vmatprep.subr.mxu0 0.0
    %3164 = vmatpush1.msra.mxu0 0.0
    %3165 = vmatprep.subr.mxu0 0.0
    %3166 = vmatpush1.msra.mxu0 0.0
    %3167 = vmatprep.subr.mxu0 0.0
    %3168 = vmatpush1.msra.mxu0 0.0
    %3169 = vmatprep.subr.mxu0 0.0
    %3170 = vmatpush1.msra.mxu0 0.0
    %3171 = vmatprep.subr.mxu0 0.0
    %3172 = vmatpush1.msra.mxu0 0.0
    %3173 = vmatprep.subr.mxu0 0.0
    %3174 = vmatpush1.msra.mxu0 0.0
    %3175 = vmatprep.subr.mxu0 0.0
    %3176 = vmatpush1.msra.mxu0 0.0
    %3177 = vmatprep.subr.mxu0 0.0
    %3178 = vmatpush1.msra.mxu0 0.0
    %3179 = vmatprep.subr.mxu0 0.0
    %3180 = vmatpush1.msra.mxu0 0.0
    %3181 = vmatprep.subr.mxu0 0.0
    %3182 = vmatpush1.msra.mxu0 0.0
    %3183 = vmatprep.subr.mxu0 0.0
    %3184 = vmatpush1.msra.mxu0 0.0
    %3185 = vmatprep.subr.mxu0 0.0
    %3186 = vmatpush1.msra.mxu0 0.0
    %3187 = vmatprep.subr.mxu0 0.0
    %3188 = vmatpush1.msra.mxu0 0.0
    %3189 = vmatprep.subr.mxu0 0.0
    %3190 = vmatpush1.msra.mxu0 0.0
    %3191 = vmatprep.subr.mxu0 0.0
    %3192 = vmatpush1.msra.mxu0 0.0
    %3193 = vmatprep.subr.mxu0 0.0
    %3194 = vmatpush1.msra.mxu0 0.0
    %3195 = vmatprep.subr.mxu0 0.0
    %3196 = vmatpush1.msra.mxu0 0.0
    %3197 = vmatprep.subr.mxu0 0.0
    %3198 = vmatpush1.msra.mxu0 0.0
    %3199 = vmatprep.subr.mxu0 0.0
    %3200 = vmatpush1.msra.mxu0 0.0
    %3201 = vmatprep.subr.mxu0 0.0
    %3202 = vmatpush1.msra.mxu0 0.0
    %3203 = vmatprep.subr.mxu0 0.0
    %3204 = vmatpush1.msra.mxu0 0.0
    %3205 = vmatprep.subr.mxu0 0.0
    %3206 = vmatpush1.msra.mxu0 0.0
    %3207 = vmatprep.subr.mxu0 0.0
    %3208 = vmatpush1.msra.mxu0 0.0
    %3209 = vmatprep.subr.mxu0 0.0
    %3210 = vmatpush1.msra.mxu0 0.0
    %3211 = vmatprep.mubr.f32.mxu0 0.0
    %3212 = vmatmul.mubr.f32.gmra.mrb[0].mxu0 %v3005
    %v3213 = vpop.f32.mrb[0].mxu0
    %v3214 = vadd.f32 0.0, %v3213
    %v3215 = vpop.f32.mrb[0].mxu0
    %3216 = vmatprep.mubr.f32.mxu0 0.0
    %3217 = vmatmul.mubr.f32.gmra.mrb[0].mxu0 %v3008
    %v3218 = vpop.f32.mrb[0].mxu0
    %v3219 = vadd.f32 0.0, %v3218
    %v3220 = vpop.f32.mrb[0].mxu0
    %3221 = vmatprep.mubr.f32.mxu0 0.0
    %3222 = vmatmul.mubr.f32.gmra.mrb[0].mxu0 %v3011
    %v3223 = vpop.f32.mrb[0].mxu0
    %v3224 = vadd.f32 0.0, %v3223
    %v3225 = vpop.f32.mrb[0].mxu0
    %3226 = vmatprep.mubr.f32.mxu0 0.0
    %3227 = vmatmul.mubr.f32.gmra.mrb[0].mxu0 %v3014
    %v3228 = vpop.f32.mrb[0].mxu0
    %v3229 = vadd.f32 0.0, %v3228
    %v3230 = vpop.f32.mrb[0].mxu0
    %3231 = vmatprep.mubr.f32.mxu0 0.0
    %3232 = vmatmul.mubr.f32.gmra.mrb[0].mxu0 %v3017
    %v3233 = vpop.f32.mrb[0].mxu0
    %v3234 = vadd.f32 0.0, %v3233
    %v3235 = vpop.f32.mrb[0].mxu0
    %3236 = vmatprep.mubr.f32.mxu0 0.0
    %3237 = vmatmul.mubr.f32.gmra.mrb[0].mxu0 %v3020
    %v3238 = vpop.f32.mrb[0].mxu0
    %v3239 = vadd.f32 0.0, %v3238
    %v3240 = vpop.f32.mrb[0].mxu0
    %3241 = vmatprep.mubr.f32.mxu0 0.0
    %3242 = vmatmul.mubr.f32.gmra.mrb[0].mxu0 %v3023
    %v3243 = vpop.f32.mrb[0].mxu0
    %v3244 = vadd.f32 0.0, %v3243
    %v3245 = vpop.f32.mrb[0].mxu0
    %3246 = vmatprep.mubr.f32.mxu0 0.0
    %3247 = vmatmul.mubr.f32.gmra.mrb[0].mxu0 %v3026
    %v3248 = vpop.f32.mrb[0].mxu0
    %v3249 = vadd.f32 0.0, %v3248
    %v3250 = vpop.f32.mrb[0].mxu0
    %3251 = vdwg.mxu0
    %v3253 = vlaneseq
    %v3254 = vshrl.u32 %v3253, 7
    %v3255 = vsub.s32 0, %v3254
    %v3256 = vrot.slane %v3003, %v3255
    %v3258 = vadd.f32 %v3256, %v3214
    %v3259 = vadd.f32 %v3256, %v3219
    %v3260 = vadd.f32 %v3256, %v3224
    %v3261 = vadd.f32 %v3256, %v3229
    %v3262 = vadd.f32 %v3256, %v3234
    %v3263 = vadd.f32 %v3256, %v3239
    %v3264 = vadd.f32 %v3256, %v3244
    %v3265 = vadd.f32 %v3256, %v3249
    %3266 = vmatprep.subr.mxu0 0.0
    %3267 = vmatpush1.msra.mxu0 %v3258
    %3268 = vmatprep.subr.mxu0 0.0
    %3269 = vmatpush1.msra.mxu0 %v3259
    %3270 = vmatprep.subr.mxu0 0.0
    %3271 = vmatpush1.msra.mxu0 %v3260
    %3272 = vmatprep.subr.mxu0 0.0
    %3273 = vmatpush1.msra.mxu0 %v3261
    %3274 = vmatprep.subr.mxu0 0.0
    %3275 = vmatpush1.msra.mxu0 %v3262
    %3276 = vmatprep.subr.mxu0 0.0
    %3277 = vmatpush1.msra.mxu0 %v3263
    %3278 = vmatprep.subr.mxu0 0.0
    %3279 = vmatpush1.msra.mxu0 %v3264
    %3280 = vmatprep.subr.mxu0 0.0
    %3281 = vmatpush1.msra.mxu0 %v3265
    %3282 = vmatprep.subr.mxu0 0.0
    %3283 = vmatpush1.msra.mxu0 0.0
    %3284 = vmatprep.subr.mxu0 0.0
    %3285 = vmatpush1.msra.mxu0 0.0
    %3286 = vmatprep.subr.mxu0 0.0
    %3287 = vmatpush1.msra.mxu0 0.0
    %3288 = vmatprep.subr.mxu0 0.0
    %3289 = vmatpush1.msra.mxu0 0.0
    %3290 = vmatprep.subr.mxu0 0.0
    %3291 = vmatpush1.msra.mxu0 0.0
    %3292 = vmatprep.subr.mxu0 0.0
    %3293 = vmatpush1.msra.mxu0 0.0
    %3294 = vmatprep.subr.mxu0 0.0
    %3295 = vmatpush1.msra.mxu0 0.0
    %3296 = vmatprep.subr.mxu0 0.0
    %3297 = vmatpush1.msra.mxu0 0.0
    %3298 = vmatprep.subr.mxu0 0.0
    %3299 = vmatpush1.msra.mxu0 0.0
    %3300 = vmatprep.subr.mxu0 0.0
    %3301 = vmatpush1.msra.mxu0 0.0
    %3302 = vmatprep.subr.mxu0 0.0
    %3303 = vmatpush1.msra.mxu0 0.0
    %3304 = vmatprep.subr.mxu0 0.0
    %3305 = vmatpush1.msra.mxu0 0.0
    %3306 = vmatprep.subr.mxu0 0.0
    %3307 = vmatpush1.msra.mxu0 0.0
    %3308 = vmatprep.subr.mxu0 0.0
    %3309 = vmatpush1.msra.mxu0 0.0
    %3310 = vmatprep.subr.mxu0 0.0
    %3311 = vmatpush1.msra.mxu0 0.0
    %3312 = vmatprep.subr.mxu0 0.0
    %3313 = vmatpush1.msra.mxu0 0.0
    %3314 = vmatprep.subr.mxu0 0.0
    %3315 = vmatpush1.msra.mxu0 0.0
    %3316 = vmatprep.subr.mxu0 0.0
    %3317 = vmatpush1.msra.mxu0 0.0
    %3318 = vmatprep.subr.mxu0 0.0
    %3319 = vmatpush1.msra.mxu0 0.0
    %3320 = vmatprep.subr.mxu0 0.0
    %3321 = vmatpush1.msra.mxu0 0.0
    %3322 = vmatprep.subr.mxu0 0.0
    %3323 = vmatpush1.msra.mxu0 0.0
    %3324 = vmatprep.subr.mxu0 0.0
    %3325 = vmatpush1.msra.mxu0 0.0
    %3326 = vmatprep.subr.mxu0 0.0
    %3327 = vmatpush1.msra.mxu0 0.0
    %3328 = vmatprep.subr.mxu0 0.0
    %3329 = vmatpush1.msra.mxu0 0.0
    %3330 = vmatprep.mubr.f32.mxu0 0.0
    %3331 = vmatmul.mubr.f32.gmra.mrb[0].mxu0 %v1305
    %v3332 = vpop.f32.mrb[0].mxu0
    %v3333 = vadd.f32 0.0, %v3332
    %v3334 = vpop.f32.mrb[0].mxu0
    %3335 = vmatprep.mubr.f32.mxu0 0.0
    %3336 = vmatmul.mubr.f32.gmra.mrb[0].mxu0 %v1308
    %v3337 = vpop.f32.mrb[0].mxu0
    %v3338 = vadd.f32 0.0, %v3337
    %v3339 = vpop.f32.mrb[0].mxu0
    %3340 = vmatprep.mubr.f32.mxu0 0.0
    %3341 = vmatmul.mubr.f32.gmra.mrb[0].mxu0 %v1311
    %v3342 = vpop.f32.mrb[0].mxu0
    %v3343 = vadd.f32 0.0, %v3342
    %v3344 = vpop.f32.mrb[0].mxu0
    %3345 = vmatprep.mubr.f32.mxu0 0.0
    %3346 = vmatmul.mubr.f32.gmra.mrb[0].mxu0 %v1314
    %v3347 = vpop.f32.mrb[0].mxu0
    %v3348 = vadd.f32 0.0, %v3347
    %v3349 = vpop.f32.mrb[0].mxu0
    %3350 = vmatprep.mubr.f32.mxu0 0.0
    %3351 = vmatmul.mubr.f32.gmra.mrb[0].mxu0 %v1317
    %v3352 = vpop.f32.mrb[0].mxu0
    %v3353 = vadd.f32 0.0, %v3352
    %v3354 = vpop.f32.mrb[0].mxu0
    %3355 = vmatprep.mubr.f32.mxu0 0.0
    %3356 = vmatmul.mubr.f32.gmra.mrb[0].mxu0 %v1320
    %v3357 = vpop.f32.mrb[0].mxu0
    %v3358 = vadd.f32 0.0, %v3357
    %v3359 = vpop.f32.mrb[0].mxu0
    %3360 = vmatprep.mubr.f32.mxu0 0.0
    %3361 = vmatmul.mubr.f32.gmra.mrb[0].mxu0 %v1323
    %v3362 = vpop.f32.mrb[0].mxu0
    %v3363 = vadd.f32 0.0, %v3362
    %v3364 = vpop.f32.mrb[0].mxu0
    %3365 = vmatprep.mubr.f32.mxu0 0.0
    %3366 = vmatmul.mubr.f32.gmra.mrb[0].mxu0 %v1326
    %v3367 = vpop.f32.mrb[0].mxu0
    %v3368 = vadd.f32 0.0, %v3367
    %v3369 = vpop.f32.mrb[0].mxu0
    %3370 = vdwg.mxu0
    %v3371 = vadd.f32 %v3139, %v3333
    %v3372 = vadd.f32 %v3140, %v3338
    %v3373 = vadd.f32 %v3141, %v3343
    %v3374 = vadd.f32 %v3142, %v3348
    %v3375 = vadd.f32 %v3143, %v3353
    %v3376 = vadd.f32 %v3144, %v3358
    %v3377 = vadd.f32 %v3145, %v3363
    %v3378 = vadd.f32 %v3146, %v3368
    %v3379 = vtanh.pop %v3371
    %v3380 = vtanh.pop %v3372
    %v3381 = vtanh.pop %v3373
    %v3382 = vtanh.pop %v3374
    %v3383 = vtanh.pop %v3375
    %v3384 = vtanh.pop %v3376
    %v3385 = vtanh.pop %v3377
    %v3386 = vtanh.pop %v3378
    %v3387 = vadd.f32 %v164, %v3379
    %v3388 = vadd.f32 %v165, %v3380
    %v3389 = vadd.f32 %v166, %v3381
    %v3390 = vadd.f32 %v167, %v3382
    %v3391 = vadd.f32 %v168, %v3383
    %v3392 = vadd.f32 %v169, %v3384
    %v3393 = vadd.f32 %v170, %v3385
    %v3394 = vadd.f32 %v171, %v3386
    %3395 = vst.msk [vmem:[%s71] sm:$0xff] %vm1045, %v3387
    %3396 = vst.msk [vmem:[%s71 + $0x8] sm:$0xff] %vm1045, %v3388
    %3397 = vst.msk [vmem:[%s71 + $0x10] sm:$0xff] %vm1045, %v3389
    %3398 = vst.msk [vmem:[%s71 + $0x18] sm:$0xff] %vm1045, %v3390
    %3399 = vst.msk [vmem:[%s71 + $0x20] sm:$0xff] %vm1045, %v3391
    %3400 = vst.msk [vmem:[%s71 + $0x28] sm:$0xff] %vm1045, %v3392
    %3401 = vst.msk [vmem:[%s71 + $0x30] sm:$0xff] %vm1045, %v3393
    %3402 = vst.msk [vmem:[%s71 + $0x38] sm:$0xff] %vm1045, %v3394
    %3403 = vst.msk [vmem:[#allocation5] sm:$0xff] %vm532, %v2986
    %3404 = vst.msk [vmem:[#allocation5 + $0x8] sm:$0xff] %vm532, %v2987
    %3405 = vst.msk [vmem:[#allocation5 + $0x10] sm:$0xff] %vm532, %v2988
    %3406 = vst.msk [vmem:[#allocation5 + $0x18] sm:$0xff] %vm532, %v2989
    %3407 = vst.msk [vmem:[#allocation5 + $0x20] sm:$0xff] %vm532, %v2990
    %3408 = vst.msk [vmem:[#allocation5 + $0x28] sm:$0xff] %vm532, %v2991
    %3409 = vst.msk [vmem:[#allocation5 + $0x30] sm:$0xff] %vm532, %v2992
    %3410 = vst.msk [vmem:[#allocation5 + $0x38] sm:$0xff] %vm532, %v2993
    // Predicated region
    $region146: #{mesh_head_forward.3} parent=1 // pred_check
      _
    $region147: #{mesh_head_forward.3} parent=1 // pred_check_branch
      %3412 = sbr.rel (0) target = $region149
    $region148: #{mesh_head_forward.3} parent=1 // pred_region
      _
    $region149: #{mesh_head_forward.3} parent=1 // pred_fallthru
      _
    // Predicated region
    $region150: #{mesh_head_forward.3} parent=1 // pred_check
      _
    $region151: #{mesh_head_forward.3} parent=1 // pred_check_branch
      %3414 = sbr.rel (0) target = $region153
    $region152: #{mesh_head_forward.3} parent=1 // pred_region
      %s3416 = ssub.s32 1024, 1024
      %3417 = vsyncadd [#allocation4], %s3416
      %s3418 = sshll.u32 [#allocation5], 4
      %s3419 = int_to_ptr.vmem [resolvable:$true] %s3418
      %3424 = dma.vmem_to_hbm [thread:$0]  %s3419, 1024, %s73, [#allocation4], 128, 128, 8
    $region153: #{mesh_head_forward.3} parent=1 // pred_fallthru
      _
    // Predicated region
    $region154: #{mesh_head_forward.3} parent=1 // pred_check
      _
    $region155: #{mesh_head_forward.3} parent=1 // pred_check_branch
      %3426 = sbr.rel (0) target = $region157
    $region156: #{mesh_head_forward.3} parent=1 // pred_region
      _
    $region157: #{mesh_head_forward.3} parent=1 // pred_fallthru
      _
    // Predicated region
    $region158: #{mesh_head_forward.3} parent=1 // pred_check
      _
    $region159: #{mesh_head_forward.3} parent=1 // pred_check_branch
      %3428 = sbr.rel (0) target = $region161
    $region160: #{mesh_head_forward.3} parent=1 // pred_region
      %3429 = dma.done [#allocation4], 1024
    $region161: #{mesh_head_forward.3} parent=1 // pred_fallthru
      _
    %3430 = vsyncpa [#allocation3], 1
    %3431 = vsyncpa [#allocation4], 1

</llo_original>
